<compile_context>
chip_gen: v7x
topology: tpu7x:2x2x1
jax: 0.10.0
libtpu: 0.0.40
codegen_flags: <defaults>
</compile_context>

<pallas_src>
import math

import jax
import jax.numpy as jnp
from jax.experimental import pallas as pl
from jax.experimental.pallas import tpu as pltpu

GELU_APPROXIMATE = True   # tanh GELU -> EUP slot; False = exact erf (HF default)


# --------------------------------------------------------------------------
# In-kernel helpers (fp32 epilogue math)
# --------------------------------------------------------------------------
def _layernorm(x, g, b, eps=1e-5):
    mu = jnp.mean(x, axis=-1, keepdims=True)
    var = jnp.mean(jnp.square(x - mu), axis=-1, keepdims=True)
    return (x - mu) * jax.lax.rsqrt(var + eps) * g + b


# --------------------------------------------------------------------------
# Fused kernel: all encoder layers + GraphormerModel head + color head
#   grid = (batch_tile, layer); layer axis is a sequential ("arbitrary")
#   sweep over the VMEM-resident residual stream x_acc of shape (Bt*Tp, H).
# --------------------------------------------------------------------------
def fused_graphormer_kernel(
    # inputs
    x_ref, bias_ref,
    wq_ref, bq_ref, wk_ref, bk_ref, wv_ref, bv_ref, wo_ref, bo_ref,
    ln1g_ref, ln1b_ref, w1_ref, b1_ref, w2_ref, b2_ref, ln2g_ref, ln2b_ref,
    lmw_ref, lmb_ref, flng_ref, flnb_ref, clsw_ref, clsb_ref,
    # output
    o_ref,
    # scratch
    x_acc,
):
    l = pl.program_id(1)
    n_layers = pl.num_programs(1)
    bt, tp, hid = x_ref.shape
    n_heads = bias_ref.shape[0]
    dh = hid // n_heads
    m = bt * tp
    cp = clsw_ref.shape[1]

    @pl.when(l == 0)
    def _():
        x_acc[...] = x_ref[...].astype(jnp.float32).reshape(m, hid)

    x = x_acc[...]                       # (M, H) fp32 residual stream
    xb = x.astype(jnp.bfloat16)

    # ---- Q/K/V: three (M,H)x(H,H) bf16 matmuls, fp32 accumulation.
    #      1/sqrt(dh) is pre-folded into Wq / bq at parameter-prep time.
    q = (jnp.dot(xb, wq_ref[0], preferred_element_type=jnp.float32)
         + bq_ref[0]).reshape(bt, tp, hid)
    k = (jnp.dot(xb, wk_ref[0], preferred_element_type=jnp.float32)
         + bk_ref[0]).reshape(bt, tp, hid)
    v = (jnp.dot(xb, wv_ref[0], preferred_element_type=jnp.float32)
         + bv_ref[0]).reshape(bt, tp, hid)

    # ---- per-head attention: heads are in-register lane slices (no VMEM
    #      staging), 3-D leading-batch einsums; the per-head loop also bounds
    #      the live range of the fp32 (Bt,Tp,Tp) score tensor.
    ctx_parts = []
    for h in range(n_heads):
        sl = slice(h * dh, (h + 1) * dh)
        qh = q[:, :, sl].astype(jnp.bfloat16)          # (Bt, Tp, dh)
        kh = k[:, :, sl].astype(jnp.bfloat16)
        vh = v[:, :, sl].astype(jnp.bfloat16)
        s = jnp.einsum('bqd,bkd->bqk', qh, kh,
                       preferred_element_type=jnp.float32)
        s = s + bias_ref[h]                            # (Bt, Tp, Tp) fp32
        mx = jnp.max(s, axis=-1, keepdims=True)
        e = jnp.exp(s - mx)
        p = e * pl.reciprocal(jnp.sum(e, axis=-1, keepdims=True), approx=True)
        ctx_parts.append(
            jnp.einsum('bqk,bkd->bqd', p.astype(jnp.bfloat16), vh,
                       preferred_element_type=jnp.float32))
    ctx = jnp.concatenate(ctx_parts, axis=-1).reshape(m, hid)

    attn = jnp.dot(ctx.astype(jnp.bfloat16), wo_ref[0],
                   preferred_element_type=jnp.float32) + bo_ref[0]
    x = _layernorm(x + attn, ln1g_ref[0], ln1b_ref[0])

    # ---- feed-forward (bf16 matmuls on the (M, ·) slab, fp32 epilogue)
    hdn = jnp.dot(x.astype(jnp.bfloat16), w1_ref[0],
                  preferred_element_type=jnp.float32) + b1_ref[0]
    hdn = jax.nn.gelu(hdn, approximate=GELU_APPROXIMATE)
    hdn = jnp.dot(hdn.astype(jnp.bfloat16), w2_ref[0],
                  preferred_element_type=jnp.float32) + b2_ref[0]
    x = _layernorm(x + hdn, ln2g_ref[0], ln2b_ref[0])

    x_acc[...] = x

    # ---- last layer: GraphormerModel head + color linear (lane-padded out)
    @pl.when(l == n_layers - 1)
    def _():
        hh = jnp.dot(x.astype(jnp.bfloat16), lmw_ref[...],
                     preferred_element_type=jnp.float32) + lmb_ref[...]
        hh = jax.nn.gelu(hh, approximate=GELU_APPROXIMATE)
        hh = _layernorm(hh, flng_ref[...], flnb_ref[...])
        logits = jnp.dot(hh.astype(jnp.bfloat16), clsw_ref[...],
                         preferred_element_type=jnp.float32) + clsb_ref[...]
        o_ref[...] = logits.reshape(bt, tp, cp)


# --------------------------------------------------------------------------
# pallas_call wrapper
# --------------------------------------------------------------------------
def graphormer_encoder_and_head(x, bias, kp, *, bt, single_buffer_consts=True):
    Bp, Tp, H = x.shape
    nH = bias.shape[0]
    L = kp["wq"].shape[0]
    F = kp["w1"].shape[2]
    Cp = kp["cls_w"].shape[1]

    def layer_spec(shape):                       # stacked per-layer tensors
        nd = len(shape)
        return pl.BlockSpec((1,) + tuple(shape[1:]),
                            lambda b, l, _nd=nd: (l,) + (0,) * (_nd - 1))

    def const_spec(shape):                       # layer-invariant head tensors
        nd = len(shape)
        idx = lambda b, l, _nd=nd: (0,) * _nd
        if single_buffer_consts:
            return pl.BlockSpec(shape, idx, pipeline_mode=pl.Buffered(1))
        return pl.BlockSpec(shape, idx)

    bias_block = (nH, bt, Tp, Tp)
    if single_buffer_consts:
        bias_spec = pl.BlockSpec(bias_block, lambda b, l: (0, b, 0, 0),
                                 pipeline_mode=pl.Buffered(1))
    else:
        bias_spec = pl.BlockSpec(bias_block, lambda b, l: (0, b, 0, 0))

    in_specs = [
        pl.BlockSpec((bt, Tp, H), lambda b, l: (b, 0, 0)),      # x (read at l==0)
        bias_spec,                                              # bias (resident over l)
        layer_spec((L, H, H)), layer_spec((L, 1, H)),   # wq, bq
        layer_spec((L, H, H)), layer_spec((L, 1, H)),   # wk, bk
        layer_spec((L, H, H)), layer_spec((L, 1, H)),   # wv, bv
        layer_spec((L, H, H)), layer_spec((L, 1, H)),   # wo, bo
        layer_spec((L, 1, H)), layer_spec((L, 1, H)),   # ln1 g, b
        layer_spec((L, H, F)), layer_spec((L, 1, F)),   # fc1 w, b
        layer_spec((L, F, H)), layer_spec((L, 1, H)),   # fc2 w, b
        layer_spec((L, 1, H)), layer_spec((L, 1, H)),   # ln2 g, b
        const_spec((H, H)), const_spec((1, H)),         # lm_w, lm_b
        const_spec((1, H)), const_spec((1, H)),         # final LN g, b
        const_spec((H, Cp)), const_spec((1, Cp)),       # cls_w, cls_b (padded)
    ]

    # ---- VMEM budget derived from the actual block sizes (review item) -----
    def nbytes(shape, itemsize):
        return math.prod(shape) * itemsize

    two_buf = (
        nbytes((bt, Tp, H), 4)                                   # x
        + 4 * nbytes((H, H), 2) + 4 * nbytes((1, H), 4)          # wq/wk/wv/wo (+b)
        + 2 * nbytes((1, H), 4)                                  # ln1
        + nbytes((H, F), 2) + nbytes((1, F), 4)                  # fc1
        + nbytes((F, H), 2) + nbytes((1, H), 4)                  # fc2
        + 2 * nbytes((1, H), 4)                                  # ln2
        + nbytes((bt, Tp, Cp), 4)                                # out
    )
    nb_const = 1 if single_buffer_consts else 2
    const_bytes = (nbytes(bias_block, 4)
                   + nbytes((H, H), 2) + 3 * nbytes((1, H), 4)
                   + nbytes((H, Cp), 2) + nbytes((1, Cp), 4))
    scratch_bytes = nbytes((bt * Tp, H), 4)
    needed = 2 * two_buf + nb_const * const_bytes + scratch_bytes
    # TODO(synk): on v7x (64 MiB VMEM) at production H/F, split the FFN weights
    # along F (extra inner grid axis) instead of shrinking bt if `needed` > ~48 MiB.
    vmem_limit = int(min(max(1.5 * needed + (4 << 20), 32 << 20), 96 << 20))

    return pl.pallas_call(
        fused_graphormer_kernel,
        out_shape=jax.ShapeDtypeStruct((Bp, Tp, Cp), jnp.float32),
        grid=(Bp // bt, L),
        in_specs=in_specs,
        out_specs=pl.BlockSpec((bt, Tp, Cp), lambda b, l: (b, 0, 0)),
        scratch_shapes=[pltpu.VMEM((bt * Tp, H), jnp.float32)],   # residual stream
        compiler_params=pltpu.CompilerParams(
            dimension_semantics=("parallel", "arbitrary"),
            vmem_limit_bytes=vmem_limit),
    )(x, bias,
      kp["wq"], kp["bq"], kp["wk"], kp["bk"], kp["wv"], kp["bv"],
      kp["wo"], kp["bo"], kp["ln1_g"], kp["ln1_b"],
      kp["w1"], kp["b1"], kp["w2"], kp["b2"], kp["ln2_g"], kp["ln2_b"],
      kp["lm_w"], kp["lm_b"], kp["final_ln_g"], kp["final_ln_b"],
      kp["cls_w"], kp["cls_b"])


# --------------------------------------------------------------------------
# Plain-JAX glue: embeddings / attention-bias assembly (pure gathers)
# --------------------------------------------------------------------------
def build_node_features(params, input_nodes, in_degree, out_degree):
    B, N, _ = input_nodes.shape
    H = params["atom_encoder"].shape[1]
    atom = params["atom_encoder"][input_nodes].sum(axis=-2)
    feat = (atom
            + params["in_degree_encoder"][in_degree]
            + params["out_degree_encoder"][out_degree])
    gtok = jnp.broadcast_to(params["graph_token"][None], (B, 1, H))
    return jnp.concatenate([gtok, feat], axis=1).astype(jnp.float32)   # (B, T, H)


def build_attn_bias(params, attn_bias, spatial_pos, input_nodes):
    """fp32 attention bias (review: keep fp32 for accuracy + no per-layer converts)."""
    B, N = spatial_pos.shape[0], spatial_pos.shape[1]
    nH = params["spatial_pos_encoder"].shape[1]
    T = N + 1
    gb = jnp.broadcast_to(attn_bias[:, None, :, :], (B, nH, T, T)).astype(jnp.float32)
    sp = jnp.transpose(params["spatial_pos_encoder"][spatial_pos], (0, 3, 1, 2))
    gb = gb.at[:, :, 1:, 1:].add(sp)
    t = params["graph_token_virtual_distance"].reshape(1, nH, 1)
    gb = gb.at[:, :, 1:, 0].add(t)
    gb = gb.at[:, :, 0, :].add(t)
    # TODO(synk): multi-hop edge encoding (input_edges / attn_edge_type /
    # edge_dis_encoder) of GraphormerGraphAttnBias is omitted.
    gb = gb + attn_bias[:, None, :, :]          # "reset" add, mirroring the HF code
    key_pad = jnp.concatenate(
        [jnp.zeros((B, 1), dtype=bool), input_nodes[:, :, 0] == 0], axis=1)
    gb = jnp.where(key_pad[:, None, None, :], -jnp.inf, gb)
    return gb                                    # (B, nH, T, T) fp32


def graphormer_for_color_prediction(params, input_nodes, attn_bias, spatial_pos,
                                    in_degree, out_degree, *,
                                    target_rows=256, single_buffer_consts=True):
    x = build_node_features(params, input_nodes, in_degree, out_degree)   # (B,T,H)
    bias = build_attn_bias(params, attn_bias, spatial_pos, input_nodes)   # (B,nH,T,T)
    B, T, H = x.shape

    # ---- pad T to a sublane multiple; padded keys masked with -inf --------
    Tp = ((T + 7) // 8) * 8
    if Tp != T:
        x = jnp.pad(x, ((0, 0), (0, Tp - T), (0, 0)))
        bias = jnp.pad(bias, ((0, 0), (0, 0), (0, Tp - T), (0, Tp - T)))
        key_is_pad = jnp.arange(Tp) >= T
        bias = jnp.where(key_is_pad[None, None, None, :], -jnp.inf, bias)

    # ---- batch-tile the MXU M dimension (target Bt*Tp >= 128/256) ---------
    bt = max(1, min(B, target_rows // Tp))
    Bp = ((B + bt - 1) // bt) * bt
    if Bp != B:
        x = jnp.pad(x, ((0, Bp - B), (0, 0), (0, 0)))
        bias = jnp.pad(bias, ((0, Bp - B), (0, 0), (0, 0), (0, 0)))  # zero bias, discarded

    bias = jnp.transpose(bias, (1, 0, 2, 3))     # (nH, Bp, Tp, Tp): head-leading

    logits = graphormer_encoder_and_head(
        x, bias, params["kernel"], bt=bt,
        single_buffer_consts=single_buffer_consts)
    return logits[:B, :T, :params["num_classes"]]                        # (B,T,6)


# --------------------------------------------------------------------------
# Parameter init (logical fp32) + host-side prep for the fused kernel
# --------------------------------------------------------------------------
def init_params(key, *, hidden, heads, ffn, layers, num_atoms, num_in_degree,
                num_out_degree, num_spatial, num_classes=6):
    keys = iter(jax.random.split(key, 16 + 16 * layers))

    def nrm(shape, scale=0.02):
        return (jax.random.normal(next(keys), shape) * scale).astype(jnp.float32)

    zeros = lambda s: jnp.zeros(s, jnp.float32)
    ones = lambda s: jnp.ones(s, jnp.float32)

    params = {
        "atom_encoder": nrm((num_atoms + 1, hidden)).at[0].set(0.0),
        "in_degree_encoder": nrm((num_in_degree, hidden)).at[0].set(0.0),
        "out_degree_encoder": nrm((num_out_degree, hidden)).at[0].set(0.0),
        "graph_token": nrm((1, hidden)),
        "spatial_pos_encoder": nrm((num_spatial, heads)).at[0].set(0.0),
        "graph_token_virtual_distance": nrm((1, heads)),
        "lm_w": nrm((hidden, hidden)), "lm_b": zeros((1, hidden)),
        "final_ln_g": ones((1, hidden)), "final_ln_b": zeros((1, hidden)),
        "cls_w": nrm((hidden, num_classes)), "cls_b": zeros((1, num_classes)),
        "layers": [],
    }
    for _ in range(layers):
        params["layers"].append({
            "wq": nrm((hidden, hidden)), "bq": zeros((1, hidden)),
            "wk": nrm((hidden, hidden)), "bk": zeros((1, hidden)),
            "wv": nrm((hidden, hidden)), "bv": zeros((1, hidden)),
            "wo": nrm((hidden, hidden)), "bo": zeros((1, hidden)),
            "ln1_g": ones((1, hidden)), "ln1_b": zeros((1, hidden)),
            "w_fc1": nrm((hidden, ffn)), "b_fc1": zeros((1, ffn)),
            "w_fc2": nrm((ffn, hidden)), "b_fc2": zeros((1, hidden)),
            "ln2_g": ones((1, hidden)), "ln2_b": zeros((1, hidden)),
        })
    return params


def prepare_params(p, *, heads, num_classes, lane_pad=128):
    """Stack layers (leading L axis), fold 1/sqrt(dh) into Wq/bq, cast matmul
    weights to bf16 (biases/LN stay fp32), pad the color head to 128 lanes."""
    hidden = p["lm_w"].shape[0]
    scale = float(hidden // heads) ** -0.5
    stack = lambda name: jnp.stack([lw[name] for lw in p["layers"]], axis=0)

    kp = {
        "wq": (stack("wq") * scale).astype(jnp.bfloat16), "bq": stack("bq") * scale,
        "wk": stack("wk").astype(jnp.bfloat16), "bk": stack("bk"),
        "wv": stack("wv").astype(jnp.bfloat16), "bv": stack("bv"),
        "wo": stack("wo").astype(jnp.bfloat16), "bo": stack("bo"),
        "ln1_g": stack("ln1_g"), "ln1_b": stack("ln1_b"),
        "w1": stack("w_fc1").astype(jnp.bfloat16), "b1": stack("b_fc1"),
        "w2": stack("w_fc2").astype(jnp.bfloat16), "b2": stack("b_fc2"),
        "ln2_g": stack("ln2_g"), "ln2_b": stack("ln2_b"),
        "lm_w": p["lm_w"].astype(jnp.bfloat16), "lm_b": p["lm_b"],
        "final_ln_g": p["final_ln_g"], "final_ln_b": p["final_ln_b"],
    }
    cpad = ((num_classes + lane_pad - 1) // lane_pad) * lane_pad
    cls_w = jnp.zeros((hidden, cpad), jnp.float32).at[:, :num_classes].set(p["cls_w"])
    cls_b = jnp.zeros((1, cpad), jnp.float32).at[:, :num_classes].set(p["cls_b"])
    kp["cls_w"] = cls_w.astype(jnp.bfloat16)
    kp["cls_b"] = cls_b

    out = dict(p)
    out.pop("layers")
    out["kernel"] = kp
    out["num_classes"] = int(num_classes)
    return out


# --------------------------------------------------------------------------
if __name__ == "__main__":
    B, N, H, NH, FF, L = 2, 8, 32, 4, 64, 2
    NUM_ATOMS, NUM_ATOM_FEATS = 16, 3
    NUM_IN_DEG = NUM_OUT_DEG = 8
    NUM_SPATIAL = 8
    T = N + 1

    key = jax.random.PRNGKey(0)
    k_par, k_nodes, k_in, k_out, k_sp = jax.random.split(key, 5)

    logical = init_params(k_par, hidden=H, heads=NH, ffn=FF, layers=L,
                          num_atoms=NUM_ATOMS, num_in_degree=NUM_IN_DEG,
                          num_out_degree=NUM_OUT_DEG, num_spatial=NUM_SPATIAL,
                          num_classes=6)
    params = prepare_params(logical, heads=NH, num_classes=6)

    input_nodes = jax.random.randint(k_nodes, (B, N, NUM_ATOM_FEATS),
                                     1, NUM_ATOMS + 1, dtype=jnp.int32)
    in_degree = jax.random.randint(k_in, (B, N), 1, NUM_IN_DEG, dtype=jnp.int32)
    out_degree = jax.random.randint(k_out, (B, N), 1, NUM_OUT_DEG, dtype=jnp.int32)
    spatial_pos = jax.random.randint(k_sp, (B, N, N), 1, NUM_SPATIAL, dtype=jnp.int32)
    attn_bias = jnp.zeros((B, T, T), jnp.float32)

    def run(single_buffer):
        return graphormer_for_color_prediction(
            params, input_nodes, attn_bias, spatial_pos, in_degree, out_degree,
            single_buffer_consts=single_buffer)

    try:
        out = jax.block_until_ready(run(True))
    except Exception:
        # Fallback if this jax build rejects pl.Buffered(1) single-buffering.
        out = jax.block_until_ready(run(False))

    assert out.shape == (B, T, 6) and out.dtype == jnp.float32
    print("KERNEL_OK")
</pallas_src>

<mosaic_0001>
module attributes {stable_mosaic.version = 11 : i64} {
  func.func @fused_graphormer_kernel(%arg0: i32, %arg1: i32, %arg2: memref<2x16x32xf32, #tpu.memory_space<vmem>>, %arg3: memref<4x2x16x16xf32, #tpu.memory_space<vmem>>, %arg4: memref<1x32x32xbf16, #tpu.memory_space<vmem>>, %arg5: memref<1x1x32xf32, #tpu.memory_space<vmem>>, %arg6: memref<1x32x32xbf16, #tpu.memory_space<vmem>>, %arg7: memref<1x1x32xf32, #tpu.memory_space<vmem>>, %arg8: memref<1x32x32xbf16, #tpu.memory_space<vmem>>, %arg9: memref<1x1x32xf32, #tpu.memory_space<vmem>>, %arg10: memref<1x32x32xbf16, #tpu.memory_space<vmem>>, %arg11: memref<1x1x32xf32, #tpu.memory_space<vmem>>, %arg12: memref<1x1x32xf32, #tpu.memory_space<vmem>>, %arg13: memref<1x1x32xf32, #tpu.memory_space<vmem>>, %arg14: memref<1x32x64xbf16, #tpu.memory_space<vmem>>, %arg15: memref<1x1x64xf32, #tpu.memory_space<vmem>>, %arg16: memref<1x64x32xbf16, #tpu.memory_space<vmem>>, %arg17: memref<1x1x32xf32, #tpu.memory_space<vmem>>, %arg18: memref<1x1x32xf32, #tpu.memory_space<vmem>>, %arg19: memref<1x1x32xf32, #tpu.memory_space<vmem>>, %arg20: memref<32x32xbf16, #tpu.memory_space<vmem>>, %arg21: memref<1x32xf32, #tpu.memory_space<vmem>>, %arg22: memref<1x32xf32, #tpu.memory_space<vmem>>, %arg23: memref<1x32xf32, #tpu.memory_space<vmem>>, %arg24: memref<32x128xbf16, #tpu.memory_space<vmem>>, %arg25: memref<1x128xf32, #tpu.memory_space<vmem>>, %arg26: memref<2x16x128xf32, #tpu.memory_space<vmem>>, %arg27: memref<32x32xf32, #tpu.memory_space<vmem>>) attributes {dimension_semantics = [#tpu.dimension_semantics<parallel>, #tpu.dimension_semantics<arbitrary>], iteration_bounds = array<i64: 1, 2>, scalar_prefetch = 0 : i64, scratch_operands = 1 : i64, tpu.core_type = #tpu.core_type<tc>, window_params = [{transform_indices = @transform_0, window_bounds = array<i64: 2, 16, 32>}, {pipeline_mode = #tpu.pipeline_mode<synchronous>, transform_indices = @transform_1, window_bounds = array<i64: 4, 2, 16, 16>}, {transform_indices = @transform_2, window_bounds = array<i64: 1, 32, 32>}, {transform_indices = @transform_3, window_bounds = array<i64: 1, 1, 32>}, {transform_indices = @transform_4, window_bounds = array<i64: 1, 32, 32>}, {transform_indices = @transform_5, window_bounds = array<i64: 1, 1, 32>}, {transform_indices = @transform_6, window_bounds = array<i64: 1, 32, 32>}, {transform_indices = @transform_7, window_bounds = array<i64: 1, 1, 32>}, {transform_indices = @transform_8, window_bounds = array<i64: 1, 32, 32>}, {transform_indices = @transform_9, window_bounds = array<i64: 1, 1, 32>}, {transform_indices = @transform_10, window_bounds = array<i64: 1, 1, 32>}, {transform_indices = @transform_11, window_bounds = array<i64: 1, 1, 32>}, {transform_indices = @transform_12, window_bounds = array<i64: 1, 32, 64>}, {transform_indices = @transform_13, window_bounds = array<i64: 1, 1, 64>}, {transform_indices = @transform_14, window_bounds = array<i64: 1, 64, 32>}, {transform_indices = @transform_15, window_bounds = array<i64: 1, 1, 32>}, {transform_indices = @transform_16, window_bounds = array<i64: 1, 1, 32>}, {transform_indices = @transform_17, window_bounds = array<i64: 1, 1, 32>}, {pipeline_mode = #tpu.pipeline_mode<synchronous>, transform_indices = @transform_18, window_bounds = array<i64: 32, 32>}, {pipeline_mode = #tpu.pipeline_mode<synchronous>, transform_indices = @transform_19, window_bounds = array<i64: 1, 32>}, {pipeline_mode = #tpu.pipeline_mode<synchronous>, transform_indices = @transform_20, window_bounds = array<i64: 1, 32>}, {pipeline_mode = #tpu.pipeline_mode<synchronous>, transform_indices = @transform_21, window_bounds = array<i64: 1, 32>}, {pipeline_mode = #tpu.pipeline_mode<synchronous>, transform_indices = @transform_22, window_bounds = array<i64: 32, 128>}, {pipeline_mode = #tpu.pipeline_mode<synchronous>, transform_indices = @transform_23, window_bounds = array<i64: 1, 128>}, {transform_indices = @transform_24, window_bounds = array<i64: 2, 16, 128>}]} {
    %c0_i32 = arith.constant 0 : i32
    %0 = arith.cmpi eq, %arg1, %c0_i32 : i32
    %1 = arith.extui %0 : i1 to i32
    %c0_i32_0 = arith.constant 0 : i32
    %2 = arith.cmpi ne, %1, %c0_i32_0 : i32
    scf.if %2 {
      %c0_101 = arith.constant 0 : index
      %c0_102 = arith.constant 0 : index
      %c0_103 = arith.constant 0 : index
      %214 = vector.load %arg2[%c0_101, %c0_102, %c0_103] : memref<2x16x32xf32, #tpu.memory_space<vmem>>, vector<2x16x32xf32>
      %215 = vector.shape_cast %214 : vector<2x16x32xf32> to vector<32x32xf32>
      %c0_104 = arith.constant 0 : index
      %c0_105 = arith.constant 0 : index
      %216 = vector.load %arg27[%c0_104, %c0_105] : memref<32x32xf32, #tpu.memory_space<vmem>>, vector<32x32xf32>
      tpu.vector_store %arg27[%c0_104, %c0_105], %215 {strides = array<i32>} : memref<32x32xf32, #tpu.memory_space<vmem>>, vector<32x32xf32>,
    } else {
    }
    %c0 = arith.constant 0 : index
    %c0_1 = arith.constant 0 : index
    %3 = vector.load %arg27[%c0, %c0_1] : memref<32x32xf32, #tpu.memory_space<vmem>>, vector<32x32xf32>
    %4 = arith.truncf %3 : vector<32x32xf32> to vector<32x32xbf16>
    %c0_2 = arith.constant 0 : index
    %c0_3 = arith.constant 0 : index
    %c0_4 = arith.constant 0 : index
    %5 = vector.load %arg4[%c0_2, %c0_3, %c0_4] : memref<1x32x32xbf16, #tpu.memory_space<vmem>>, vector<1x32x32xbf16>
    %6 = vector.shape_cast %5 : vector<1x32x32xbf16> to vector<32x32xbf16>
    %cst = arith.constant dense<0.000000e+00> : vector<32x32xf32>
    %7 = tpu.matmul %4, %6, %cst {dimension_numbers = #tpu.dot_dimension_numbers<[1], [0], [0], [1], [0, 0, 1, 1], [], []>} : vector<32x32xbf16>, vector<32x32xbf16>, vector<32x32xf32> -> vector<32x32xf32>
    %c0_5 = arith.constant 0 : index
    %c0_6 = arith.constant 0 : index
    %c0_7 = arith.constant 0 : index
    %8 = vector.load %arg5[%c0_5, %c0_6, %c0_7] : memref<1x1x32xf32, #tpu.memory_space<vmem>>, vector<1x1x32xf32>
    %9 = vector.shape_cast %8 : vector<1x1x32xf32> to vector<1x32xf32>
    %10 = vector.broadcast %9 : vector<1x32xf32> to vector<32x32xf32>
    %11 = arith.addf %7, %10 : vector<32x32xf32>
    %12 = vector.shape_cast %11 : vector<32x32xf32> to vector<2x16x32xf32>
    %c0_8 = arith.constant 0 : index
    %c0_9 = arith.constant 0 : index
    %c0_10 = arith.constant 0 : index
    %13 = vector.load %arg6[%c0_8, %c0_9, %c0_10] : memref<1x32x32xbf16, #tpu.memory_space<vmem>>, vector<1x32x32xbf16>
    %14 = vector.shape_cast %13 : vector<1x32x32xbf16> to vector<32x32xbf16>
    %cst_11 = arith.constant dense<0.000000e+00> : vector<32x32xf32>
    %15 = tpu.matmul %4, %14, %cst_11 {dimension_numbers = #tpu.dot_dimension_numbers<[1], [0], [0], [1], [0, 0, 1, 1], [], []>} : vector<32x32xbf16>, vector<32x32xbf16>, vector<32x32xf32> -> vector<32x32xf32>
    %c0_12 = arith.constant 0 : index
    %c0_13 = arith.constant 0 : index
    %c0_14 = arith.constant 0 : index
    %16 = vector.load %arg7[%c0_12, %c0_13, %c0_14] : memref<1x1x32xf32, #tpu.memory_space<vmem>>, vector<1x1x32xf32>
    %17 = vector.shape_cast %16 : vector<1x1x32xf32> to vector<1x32xf32>
    %18 = vector.broadcast %17 : vector<1x32xf32> to vector<32x32xf32>
    %19 = arith.addf %15, %18 : vector<32x32xf32>
    %20 = vector.shape_cast %19 : vector<32x32xf32> to vector<2x16x32xf32>
    %c0_15 = arith.constant 0 : index
    %c0_16 = arith.constant 0 : index
    %c0_17 = arith.constant 0 : index
    %21 = vector.load %arg8[%c0_15, %c0_16, %c0_17] : memref<1x32x32xbf16, #tpu.memory_space<vmem>>, vector<1x32x32xbf16>
    %22 = vector.shape_cast %21 : vector<1x32x32xbf16> to vector<32x32xbf16>
    %cst_18 = arith.constant dense<0.000000e+00> : vector<32x32xf32>
    %23 = tpu.matmul %4, %22, %cst_18 {dimension_numbers = #tpu.dot_dimension_numbers<[1], [0], [0], [1], [0, 0, 1, 1], [], []>} : vector<32x32xbf16>, vector<32x32xbf16>, vector<32x32xf32> -> vector<32x32xf32>
    %c0_19 = arith.constant 0 : index
    %c0_20 = arith.constant 0 : index
    %c0_21 = arith.constant 0 : index
    %24 = vector.load %arg9[%c0_19, %c0_20, %c0_21] : memref<1x1x32xf32, #tpu.memory_space<vmem>>, vector<1x1x32xf32>
    %25 = vector.shape_cast %24 : vector<1x1x32xf32> to vector<1x32xf32>
    %26 = vector.broadcast %25 : vector<1x32xf32> to vector<32x32xf32>
    %27 = arith.addf %23, %26 : vector<32x32xf32>
    %28 = vector.shape_cast %27 : vector<32x32xf32> to vector<2x16x32xf32>
    %29 = vector.extract_strided_slice %12 {offsets = [0, 0, 0], sizes = [2, 16, 8], strides = [1, 1, 1]} : vector<2x16x32xf32> to vector<2x16x8xf32>
    %30 = arith.truncf %29 : vector<2x16x8xf32> to vector<2x16x8xbf16>
    %31 = vector.extract_strided_slice %20 {offsets = [0, 0, 0], sizes = [2, 16, 8], strides = [1, 1, 1]} : vector<2x16x32xf32> to vector<2x16x8xf32>
    %32 = arith.truncf %31 : vector<2x16x8xf32> to vector<2x16x8xbf16>
    %33 = vector.extract_strided_slice %28 {offsets = [0, 0, 0], sizes = [2, 16, 8], strides = [1, 1, 1]} : vector<2x16x32xf32> to vector<2x16x8xf32>
    %34 = arith.truncf %33 : vector<2x16x8xf32> to vector<2x16x8xbf16>
    "tpu.trace_start"() <{level = 10 : i32, message = "bqd,bkd->bqk"}> : () -> ()
    %cst_22 = arith.constant dense<0.000000e+00> : vector<2x16x16xf32>
    %35 = tpu.matmul %30, %32, %cst_22 {dimension_numbers = #tpu.dot_dimension_numbers<[2], [2], [1], [1], [0, 0, 0, 1, 1, 1], [0], [0]>} : vector<2x16x8xbf16>, vector<2x16x8xbf16>, vector<2x16x16xf32> -> vector<2x16x16xf32>
    "tpu.trace_stop"() : () -> ()
    %c0_23 = arith.constant 0 : index
    %c0_24 = arith.constant 0 : index
    %c0_25 = arith.constant 0 : index
    %c0_26 = arith.constant 0 : index
    %36 = vector.load %arg3[%c0_23, %c0_24, %c0_25, %c0_26] : memref<4x2x16x16xf32, #tpu.memory_space<vmem>>, vector<1x2x16x16xf32>
    %37 = vector.shape_cast %36 : vector<1x2x16x16xf32> to vector<2x16x16xf32>
    %38 = arith.addf %35, %37 : vector<2x16x16xf32>
    %cst_27 = arith.constant dense<0xFF800000> : vector<2x16xf32>
    %39 = vector.multi_reduction <maximumf>, %38, %cst_27 [2] : vector<2x16x16xf32> to vector<2x16xf32>
    %40 = vector.shape_cast %39 : vector<2x16xf32> to vector<2x16x1xf32>
    %41 = vector.broadcast %40 : vector<2x16x1xf32> to vector<2x16x16xf32>
    %42 = arith.subf %38, %41 : vector<2x16x16xf32>
    %43 = math.exp %42 : vector<2x16x16xf32>
    %cst_28 = arith.constant dense<0.000000e+00> : vector<2x16xf32>
    %44 = vector.multi_reduction <add>, %43, %cst_28 [2] : vector<2x16x16xf32> to vector<2x16xf32>
    %45 = vector.shape_cast %44 : vector<2x16xf32> to vector<2x16x1xf32>
    %46 = tpu.reciprocal %45 {approx = true} : vector<2x16x1xf32> -> vector<2x16x1xf32>
    %47 = vector.broadcast %46 : vector<2x16x1xf32> to vector<2x16x16xf32>
    %48 = arith.mulf %43, %47 : vector<2x16x16xf32>
    %49 = arith.truncf %48 : vector<2x16x16xf32> to vector<2x16x16xbf16>
    "tpu.trace_start"() <{level = 10 : i32, message = "bqk,bkd->bqd"}> : () -> ()
    %cst_29 = arith.constant dense<0.000000e+00> : vector<2x16x8xf32>
    %50 = tpu.matmul %49, %34, %cst_29 {dimension_numbers = #tpu.dot_dimension_numbers<[2], [1], [1], [2], [0, 0, 0, 1, 1, 2], [0], [0]>} : vector<2x16x16xbf16>, vector<2x16x8xbf16>, vector<2x16x8xf32> -> vector<2x16x8xf32>
    "tpu.trace_stop"() : () -> ()
    %51 = vector.extract_strided_slice %12 {offsets = [0, 0, 8], sizes = [2, 16, 8], strides = [1, 1, 1]} : vector<2x16x32xf32> to vector<2x16x8xf32>
    %52 = arith.truncf %51 : vector<2x16x8xf32> to vector<2x16x8xbf16>
    %53 = vector.extract_strided_slice %20 {offsets = [0, 0, 8], sizes = [2, 16, 8], strides = [1, 1, 1]} : vector<2x16x32xf32> to vector<2x16x8xf32>
    %54 = arith.truncf %53 : vector<2x16x8xf32> to vector<2x16x8xbf16>
    %55 = vector.extract_strided_slice %28 {offsets = [0, 0, 8], sizes = [2, 16, 8], strides = [1, 1, 1]} : vector<2x16x32xf32> to vector<2x16x8xf32>
    %56 = arith.truncf %55 : vector<2x16x8xf32> to vector<2x16x8xbf16>
    "tpu.trace_start"() <{level = 10 : i32, message = "bqd,bkd->bqk"}> : () -> ()
    %cst_30 = arith.constant dense<0.000000e+00> : vector<2x16x16xf32>
    %57 = tpu.matmul %52, %54, %cst_30 {dimension_numbers = #tpu.dot_dimension_numbers<[2], [2], [1], [1], [0, 0, 0, 1, 1, 1], [0], [0]>} : vector<2x16x8xbf16>, vector<2x16x8xbf16>, vector<2x16x16xf32> -> vector<2x16x16xf32>
    "tpu.trace_stop"() : () -> ()
    %c1 = arith.constant 1 : index
    %c0_31 = arith.constant 0 : index
    %c0_32 = arith.constant 0 : index
    %c0_33 = arith.constant 0 : index
    %58 = vector.load %arg3[%c1, %c0_31, %c0_32, %c0_33] : memref<4x2x16x16xf32, #tpu.memory_space<vmem>>, vector<1x2x16x16xf32>
    %59 = vector.shape_cast %58 : vector<1x2x16x16xf32> to vector<2x16x16xf32>
    %60 = arith.addf %57, %59 : vector<2x16x16xf32>
    %cst_34 = arith.constant dense<0xFF800000> : vector<2x16xf32>
    %61 = vector.multi_reduction <maximumf>, %60, %cst_34 [2] : vector<2x16x16xf32> to vector<2x16xf32>
    %62 = vector.shape_cast %61 : vector<2x16xf32> to vector<2x16x1xf32>
    %63 = vector.broadcast %62 : vector<2x16x1xf32> to vector<2x16x16xf32>
    %64 = arith.subf %60, %63 : vector<2x16x16xf32>
    %65 = math.exp %64 : vector<2x16x16xf32>
    %cst_35 = arith.constant dense<0.000000e+00> : vector<2x16xf32>
    %66 = vector.multi_reduction <add>, %65, %cst_35 [2] : vector<2x16x16xf32> to vector<2x16xf32>
    %67 = vector.shape_cast %66 : vector<2x16xf32> to vector<2x16x1xf32>
    %68 = tpu.reciprocal %67 {approx = true} : vector<2x16x1xf32> -> vector<2x16x1xf32>
    %69 = vector.broadcast %68 : vector<2x16x1xf32> to vector<2x16x16xf32>
    %70 = arith.mulf %65, %69 : vector<2x16x16xf32>
    %71 = arith.truncf %70 : vector<2x16x16xf32> to vector<2x16x16xbf16>
    "tpu.trace_start"() <{level = 10 : i32, message = "bqk,bkd->bqd"}> : () -> ()
    %cst_36 = arith.constant dense<0.000000e+00> : vector<2x16x8xf32>
    %72 = tpu.matmul %71, %56, %cst_36 {dimension_numbers = #tpu.dot_dimension_numbers<[2], [1], [1], [2], [0, 0, 0, 1, 1, 2], [0], [0]>} : vector<2x16x16xbf16>, vector<2x16x8xbf16>, vector<2x16x8xf32> -> vector<2x16x8xf32>
    "tpu.trace_stop"() : () -> ()
    %73 = vector.extract_strided_slice %12 {offsets = [0, 0, 16], sizes = [2, 16, 8], strides = [1, 1, 1]} : vector<2x16x32xf32> to vector<2x16x8xf32>
    %74 = arith.truncf %73 : vector<2x16x8xf32> to vector<2x16x8xbf16>
    %75 = vector.extract_strided_slice %20 {offsets = [0, 0, 16], sizes = [2, 16, 8], strides = [1, 1, 1]} : vector<2x16x32xf32> to vector<2x16x8xf32>
    %76 = arith.truncf %75 : vector<2x16x8xf32> to vector<2x16x8xbf16>
    %77 = vector.extract_strided_slice %28 {offsets = [0, 0, 16], sizes = [2, 16, 8], strides = [1, 1, 1]} : vector<2x16x32xf32> to vector<2x16x8xf32>
    %78 = arith.truncf %77 : vector<2x16x8xf32> to vector<2x16x8xbf16>
    "tpu.trace_start"() <{level = 10 : i32, message = "bqd,bkd->bqk"}> : () -> ()
    %cst_37 = arith.constant dense<0.000000e+00> : vector<2x16x16xf32>
    %79 = tpu.matmul %74, %76, %cst_37 {dimension_numbers = #tpu.dot_dimension_numbers<[2], [2], [1], [1], [0, 0, 0, 1, 1, 1], [0], [0]>} : vector<2x16x8xbf16>, vector<2x16x8xbf16>, vector<2x16x16xf32> -> vector<2x16x16xf32>
    "tpu.trace_stop"() : () -> ()
    %c2 = arith.constant 2 : index
    %c0_38 = arith.constant 0 : index
    %c0_39 = arith.constant 0 : index
    %c0_40 = arith.constant 0 : index
    %80 = vector.load %arg3[%c2, %c0_38, %c0_39, %c0_40] : memref<4x2x16x16xf32, #tpu.memory_space<vmem>>, vector<1x2x16x16xf32>
    %81 = vector.shape_cast %80 : vector<1x2x16x16xf32> to vector<2x16x16xf32>
    %82 = arith.addf %79, %81 : vector<2x16x16xf32>
    %cst_41 = arith.constant dense<0xFF800000> : vector<2x16xf32>
    %83 = vector.multi_reduction <maximumf>, %82, %cst_41 [2] : vector<2x16x16xf32> to vector<2x16xf32>
    %84 = vector.shape_cast %83 : vector<2x16xf32> to vector<2x16x1xf32>
    %85 = vector.broadcast %84 : vector<2x16x1xf32> to vector<2x16x16xf32>
    %86 = arith.subf %82, %85 : vector<2x16x16xf32>
    %87 = math.exp %86 : vector<2x16x16xf32>
    %cst_42 = arith.constant dense<0.000000e+00> : vector<2x16xf32>
    %88 = vector.multi_reduction <add>, %87, %cst_42 [2] : vector<2x16x16xf32> to vector<2x16xf32>
    %89 = vector.shape_cast %88 : vector<2x16xf32> to vector<2x16x1xf32>
    %90 = tpu.reciprocal %89 {approx = true} : vector<2x16x1xf32> -> vector<2x16x1xf32>
    %91 = vector.broadcast %90 : vector<2x16x1xf32> to vector<2x16x16xf32>
    %92 = arith.mulf %87, %91 : vector<2x16x16xf32>
    %93 = arith.truncf %92 : vector<2x16x16xf32> to vector<2x16x16xbf16>
    "tpu.trace_start"() <{level = 10 : i32, message = "bqk,bkd->bqd"}> : () -> ()
    %cst_43 = arith.constant dense<0.000000e+00> : vector<2x16x8xf32>
    %94 = tpu.matmul %93, %78, %cst_43 {dimension_numbers = #tpu.dot_dimension_numbers<[2], [1], [1], [2], [0, 0, 0, 1, 1, 2], [0], [0]>} : vector<2x16x16xbf16>, vector<2x16x8xbf16>, vector<2x16x8xf32> -> vector<2x16x8xf32>
    "tpu.trace_stop"() : () -> ()
    %95 = vector.extract_strided_slice %12 {offsets = [0, 0, 24], sizes = [2, 16, 8], strides = [1, 1, 1]} : vector<2x16x32xf32> to vector<2x16x8xf32>
    %96 = arith.truncf %95 : vector<2x16x8xf32> to vector<2x16x8xbf16>
    %97 = vector.extract_strided_slice %20 {offsets = [0, 0, 24], sizes = [2, 16, 8], strides = [1, 1, 1]} : vector<2x16x32xf32> to vector<2x16x8xf32>
    %98 = arith.truncf %97 : vector<2x16x8xf32> to vector<2x16x8xbf16>
    %99 = vector.extract_strided_slice %28 {offsets = [0, 0, 24], sizes = [2, 16, 8], strides = [1, 1, 1]} : vector<2x16x32xf32> to vector<2x16x8xf32>
    %100 = arith.truncf %99 : vector<2x16x8xf32> to vector<2x16x8xbf16>
    "tpu.trace_start"() <{level = 10 : i32, message = "bqd,bkd->bqk"}> : () -> ()
    %cst_44 = arith.constant dense<0.000000e+00> : vector<2x16x16xf32>
    %101 = tpu.matmul %96, %98, %cst_44 {dimension_numbers = #tpu.dot_dimension_numbers<[2], [2], [1], [1], [0, 0, 0, 1, 1, 1], [0], [0]>} : vector<2x16x8xbf16>, vector<2x16x8xbf16>, vector<2x16x16xf32> -> vector<2x16x16xf32>
    "tpu.trace_stop"() : () -> ()
    %c3 = arith.constant 3 : index
    %c0_45 = arith.constant 0 : index
    %c0_46 = arith.constant 0 : index
    %c0_47 = arith.constant 0 : index
    %102 = vector.load %arg3[%c3, %c0_45, %c0_46, %c0_47] : memref<4x2x16x16xf32, #tpu.memory_space<vmem>>, vector<1x2x16x16xf32>
    %103 = vector.shape_cast %102 : vector<1x2x16x16xf32> to vector<2x16x16xf32>
    %104 = arith.addf %101, %103 : vector<2x16x16xf32>
    %cst_48 = arith.constant dense<0xFF800000> : vector<2x16xf32>
    %105 = vector.multi_reduction <maximumf>, %104, %cst_48 [2] : vector<2x16x16xf32> to vector<2x16xf32>
    %106 = vector.shape_cast %105 : vector<2x16xf32> to vector<2x16x1xf32>
    %107 = vector.broadcast %106 : vector<2x16x1xf32> to vector<2x16x16xf32>
    %108 = arith.subf %104, %107 : vector<2x16x16xf32>
    %109 = math.exp %108 : vector<2x16x16xf32>
    %cst_49 = arith.constant dense<0.000000e+00> : vector<2x16xf32>
    %110 = vector.multi_reduction <add>, %109, %cst_49 [2] : vector<2x16x16xf32> to vector<2x16xf32>
    %111 = vector.shape_cast %110 : vector<2x16xf32> to vector<2x16x1xf32>
    %112 = tpu.reciprocal %111 {approx = true} : vector<2x16x1xf32> -> vector<2x16x1xf32>
    %113 = vector.broadcast %112 : vector<2x16x1xf32> to vector<2x16x16xf32>
    %114 = arith.mulf %109, %113 : vector<2x16x16xf32>
    %115 = arith.truncf %114 : vector<2x16x16xf32> to vector<2x16x16xbf16>
    "tpu.trace_start"() <{level = 10 : i32, message = "bqk,bkd->bqd"}> : () -> ()
    %cst_50 = arith.constant dense<0.000000e+00> : vector<2x16x8xf32>
    %116 = tpu.matmul %115, %100, %cst_50 {dimension_numbers = #tpu.dot_dimension_numbers<[2], [1], [1], [2], [0, 0, 0, 1, 1, 2], [0], [0]>} : vector<2x16x16xbf16>, vector<2x16x8xbf16>, vector<2x16x8xf32> -> vector<2x16x8xf32>
    "tpu.trace_stop"() : () -> ()
    %117 = tpu.concatenate %50, %72, %94, %116 in 2 : vector<2x16x8xf32>, vector<2x16x8xf32>, vector<2x16x8xf32>, vector<2x16x8xf32> -> vector<2x16x32xf32>
    %118 = vector.shape_cast %117 : vector<2x16x32xf32> to vector<32x32xf32>
    %119 = arith.truncf %118 : vector<32x32xf32> to vector<32x32xbf16>
    %c0_51 = arith.constant 0 : index
    %c0_52 = arith.constant 0 : index
    %c0_53 = arith.constant 0 : index
    %120 = vector.load %arg10[%c0_51, %c0_52, %c0_53] : memref<1x32x32xbf16, #tpu.memory_space<vmem>>, vector<1x32x32xbf16>
    %121 = vector.shape_cast %120 : vector<1x32x32xbf16> to vector<32x32xbf16>
    %cst_54 = arith.constant dense<0.000000e+00> : vector<32x32xf32>
    %122 = tpu.matmul %119, %121, %cst_54 {dimension_numbers = #tpu.dot_dimension_numbers<[1], [0], [0], [1], [0, 0, 1, 1], [], []>} : vector<32x32xbf16>, vector<32x32xbf16>, vector<32x32xf32> -> vector<32x32xf32>
    %c0_55 = arith.constant 0 : index
    %c0_56 = arith.constant 0 : index
    %c0_57 = arith.constant 0 : index
    %123 = vector.load %arg11[%c0_55, %c0_56, %c0_57] : memref<1x1x32xf32, #tpu.memory_space<vmem>>, vector<1x1x32xf32>
    %124 = vector.shape_cast %123 : vector<1x1x32xf32> to vector<1x32xf32>
    %125 = vector.broadcast %124 : vector<1x32xf32> to vector<32x32xf32>
    %126 = arith.addf %122, %125 : vector<32x32xf32>
    %127 = arith.addf %3, %126 : vector<32x32xf32>
    %c0_58 = arith.constant 0 : index
    %c0_59 = arith.constant 0 : index
    %c0_60 = arith.constant 0 : index
    %128 = vector.load %arg12[%c0_58, %c0_59, %c0_60] : memref<1x1x32xf32, #tpu.memory_space<vmem>>, vector<1x1x32xf32>
    %129 = vector.shape_cast %128 : vector<1x1x32xf32> to vector<1x32xf32>
    %c0_61 = arith.constant 0 : index
    %c0_62 = arith.constant 0 : index
    %c0_63 = arith.constant 0 : index
    %130 = vector.load %arg13[%c0_61, %c0_62, %c0_63] : memref<1x1x32xf32, #tpu.memory_space<vmem>>, vector<1x1x32xf32>
    %131 = vector.shape_cast %130 : vector<1x1x32xf32> to vector<1x32xf32>
    %cst_64 = arith.constant dense<0.000000e+00> : vector<32xf32>
    %132 = vector.multi_reduction <add>, %127, %cst_64 [1] : vector<32x32xf32> to vector<32xf32>
    %133 = vector.shape_cast %132 : vector<32xf32> to vector<32x1xf32>
    %cst_65 = arith.constant 3.200000e+01 : f32
    %134 = vector.broadcast %cst_65 : f32 to vector<32x1xf32>
    %135 = arith.divf %133, %134 : vector<32x1xf32>
    %136 = vector.broadcast %135 : vector<32x1xf32> to vector<32x32xf32>
    %137 = arith.subf %127, %136 : vector<32x32xf32>
    %138 = arith.mulf %137, %137 : vector<32x32xf32>
    %cst_66 = arith.constant dense<0.000000e+00> : vector<32xf32>
    %139 = vector.multi_reduction <add>, %138, %cst_66 [1] : vector<32x32xf32> to vector<32xf32>
    %140 = vector.shape_cast %139 : vector<32xf32> to vector<32x1xf32>
    %cst_67 = arith.constant 3.200000e+01 : f32
    %141 = vector.broadcast %cst_67 : f32 to vector<32x1xf32>
    %142 = arith.divf %140, %141 : vector<32x1xf32>
    %143 = vector.broadcast %135 : vector<32x1xf32> to vector<32x32xf32>
    %144 = arith.subf %127, %143 : vector<32x32xf32>
    %cst_68 = arith.constant 9.99999974E-6 : f32
    %145 = vector.broadcast %cst_68 : f32 to vector<32x1xf32>
    %146 = arith.addf %142, %145 : vector<32x1xf32>
    %147 = math.rsqrt %146 : vector<32x1xf32>
    %148 = vector.broadcast %147 : vector<32x1xf32> to vector<32x32xf32>
    %149 = arith.mulf %144, %148 : vector<32x32xf32>
    %150 = vector.broadcast %129 : vector<1x32xf32> to vector<32x32xf32>
    %151 = arith.mulf %149, %150 : vector<32x32xf32>
    %152 = vector.broadcast %131 : vector<1x32xf32> to vector<32x32xf32>
    %153 = arith.addf %151, %152 : vector<32x32xf32>
    %154 = arith.truncf %153 : vector<32x32xf32> to vector<32x32xbf16>
    %c0_69 = arith.constant 0 : index
    %c0_70 = arith.constant 0 : index
    %c0_71 = arith.constant 0 : index
    %155 = vector.load %arg14[%c0_69, %c0_70, %c0_71] : memref<1x32x64xbf16, #tpu.memory_space<vmem>>, vector<1x32x64xbf16>
    %156 = vector.shape_cast %155 : vector<1x32x64xbf16> to vector<32x64xbf16>
    %cst_72 = arith.constant dense<0.000000e+00> : vector<32x64xf32>
    %157 = tpu.matmul %154, %156, %cst_72 {dimension_numbers = #tpu.dot_dimension_numbers<[1], [0], [0], [1], [0, 0, 1, 1], [], []>} : vector<32x32xbf16>, vector<32x64xbf16>, vector<32x64xf32> -> vector<32x64xf32>
    %c0_73 = arith.constant 0 : index
    %c0_74 = arith.constant 0 : index
    %c0_75 = arith.constant 0 : index
    %158 = vector.load %arg15[%c0_73, %c0_74, %c0_75] : memref<1x1x64xf32, #tpu.memory_space<vmem>>, vector<1x1x64xf32>
    %159 = vector.shape_cast %158 : vector<1x1x64xf32> to vector<1x64xf32>
    %160 = vector.broadcast %159 : vector<1x64xf32> to vector<32x64xf32>
    %161 = arith.addf %157, %160 : vector<32x64xf32>
    %162 = arith.mulf %161, %161 : vector<32x64xf32>
    %163 = arith.mulf %161, %162 : vector<32x64xf32>
    %cst_76 = arith.constant 4.471500e-02 : f32
    %164 = vector.broadcast %cst_76 : f32 to vector<32x64xf32>
    %165 = arith.mulf %164, %163 : vector<32x64xf32>
    %166 = arith.addf %161, %165 : vector<32x64xf32>
    %cst_77 = arith.constant 0.797884583 : f32
    %167 = vector.broadcast %cst_77 : f32 to vector<32x64xf32>
    %168 = arith.mulf %167, %166 : vector<32x64xf32>
    %169 = math.tanh %168 : vector<32x64xf32>
    %cst_78 = arith.constant 1.000000e+00 : f32
    %170 = vector.broadcast %cst_78 : f32 to vector<32x64xf32>
    %171 = arith.addf %170, %169 : vector<32x64xf32>
    %cst_79 = arith.constant 5.000000e-01 : f32
    %172 = vector.broadcast %cst_79 : f32 to vector<32x64xf32>
    %173 = arith.mulf %172, %171 : vector<32x64xf32>
    %174 = arith.mulf %161, %173 : vector<32x64xf32>
    %175 = arith.truncf %174 : vector<32x64xf32> to vector<32x64xbf16>
    %c0_80 = arith.constant 0 : index
    %c0_81 = arith.constant 0 : index
    %c0_82 = arith.constant 0 : index
    %176 = vector.load %arg16[%c0_80, %c0_81, %c0_82] : memref<1x64x32xbf16, #tpu.memory_space<vmem>>, vector<1x64x32xbf16>
    %177 = vector.shape_cast %176 : vector<1x64x32xbf16> to vector<64x32xbf16>
    %cst_83 = arith.constant dense<0.000000e+00> : vector<32x32xf32>
    %178 = tpu.matmul %175, %177, %cst_83 {dimension_numbers = #tpu.dot_dimension_numbers<[1], [0], [0], [1], [0, 0, 1, 1], [], []>} : vector<32x64xbf16>, vector<64x32xbf16>, vector<32x32xf32> -> vector<32x32xf32>
    %c0_84 = arith.constant 0 : index
    %c0_85 = arith.constant 0 : index
    %c0_86 = arith.constant 0 : index
    %179 = vector.load %arg17[%c0_84, %c0_85, %c0_86] : memref<1x1x32xf32, #tpu.memory_space<vmem>>, vector<1x1x32xf32>
    %180 = vector.shape_cast %179 : vector<1x1x32xf32> to vector<1x32xf32>
    %181 = vector.broadcast %180 : vector<1x32xf32> to vector<32x32xf32>
    %182 = arith.addf %178, %181 : vector<32x32xf32>
    %183 = arith.addf %153, %182 : vector<32x32xf32>
    %c0_87 = arith.constant 0 : index
    %c0_88 = arith.constant 0 : index
    %c0_89 = arith.constant 0 : index
    %184 = vector.load %arg18[%c0_87, %c0_88, %c0_89] : memref<1x1x32xf32, #tpu.memory_space<vmem>>, vector<1x1x32xf32>
    %185 = vector.shape_cast %184 : vector<1x1x32xf32> to vector<1x32xf32>
    %c0_90 = arith.constant 0 : index
    %c0_91 = arith.constant 0 : index
    %c0_92 = arith.constant 0 : index
    %186 = vector.load %arg19[%c0_90, %c0_91, %c0_92] : memref<1x1x32xf32, #tpu.memory_space<vmem>>, vector<1x1x32xf32>
    %187 = vector.shape_cast %186 : vector<1x1x32xf32> to vector<1x32xf32>
    %cst_93 = arith.constant dense<0.000000e+00> : vector<32xf32>
    %188 = vector.multi_reduction <add>, %183, %cst_93 [1] : vector<32x32xf32> to vector<32xf32>
    %189 = vector.shape_cast %188 : vector<32xf32> to vector<32x1xf32>
    %cst_94 = arith.constant 3.200000e+01 : f32
    %190 = vector.broadcast %cst_94 : f32 to vector<32x1xf32>
    %191 = arith.divf %189, %190 : vector<32x1xf32>
    %192 = vector.broadcast %191 : vector<32x1xf32> to vector<32x32xf32>
    %193 = arith.subf %183, %192 : vector<32x32xf32>
    %194 = arith.mulf %193, %193 : vector<32x32xf32>
    %cst_95 = arith.constant dense<0.000000e+00> : vector<32xf32>
    %195 = vector.multi_reduction <add>, %194, %cst_95 [1] : vector<32x32xf32> to vector<32xf32>
    %196 = vector.shape_cast %195 : vector<32xf32> to vector<32x1xf32>
    %cst_96 = arith.constant 3.200000e+01 : f32
    %197 = vector.broadcast %cst_96 : f32 to vector<32x1xf32>
    %198 = arith.divf %196, %197 : vector<32x1xf32>
    %199 = vector.broadcast %191 : vector<32x1xf32> to vector<32x32xf32>
    %200 = arith.subf %183, %199 : vector<32x32xf32>
    %cst_97 = arith.constant 9.99999974E-6 : f32
    %201 = vector.broadcast %cst_97 : f32 to vector<32x1xf32>
    %202 = arith.addf %198, %201 : vector<32x1xf32>
    %203 = math.rsqrt %202 : vector<32x1xf32>
    %204 = vector.broadcast %203 : vector<32x1xf32> to vector<32x32xf32>
    %205 = arith.mulf %200, %204 : vector<32x32xf32>
    %206 = vector.broadcast %185 : vector<1x32xf32> to vector<32x32xf32>
    %207 = arith.mulf %205, %206 : vector<32x32xf32>
    %208 = vector.broadcast %187 : vector<1x32xf32> to vector<32x32xf32>
    %209 = arith.addf %207, %208 : vector<32x32xf32>
    %c0_98 = arith.constant 0 : index
    %c0_99 = arith.constant 0 : index
    %210 = vector.load %arg27[%c0_98, %c0_99] : memref<32x32xf32, #tpu.memory_space<vmem>>, vector<32x32xf32>
    tpu.vector_store %arg27[%c0_98, %c0_99], %209 {strides = array<i32>} : memref<32x32xf32, #tpu.memory_space<vmem>>, vector<32x32xf32>,
    %c1_i32 = arith.constant 1 : i32
    %211 = arith.cmpi eq, %arg1, %c1_i32 : i32
    %212 = arith.extui %211 : i1 to i32
    %c0_i32_100 = arith.constant 0 : i32
    %213 = arith.cmpi ne, %212, %c0_i32_100 : i32
    scf.if %213 {
      %214 = arith.truncf %209 : vector<32x32xf32> to vector<32x32xbf16>
      %c0_101 = arith.constant 0 : index
      %c0_102 = arith.constant 0 : index
      %215 = vector.load %arg20[%c0_101, %c0_102] : memref<32x32xbf16, #tpu.memory_space<vmem>>, vector<32x32xbf16>
      %cst_103 = arith.constant dense<0.000000e+00> : vector<32x32xf32>
      %216 = tpu.matmul %214, %215, %cst_103 {dimension_numbers = #tpu.dot_dimension_numbers<[1], [0], [0], [1], [0, 0, 1, 1], [], []>} : vector<32x32xbf16>, vector<32x32xbf16>, vector<32x32xf32> -> vector<32x32xf32>
      %c0_104 = arith.constant 0 : index
      %c0_105 = arith.constant 0 : index
      %217 = vector.load %arg21[%c0_104, %c0_105] : memref<1x32xf32, #tpu.memory_space<vmem>>, vector<1x32xf32>
      %218 = vector.broadcast %217 : vector<1x32xf32> to vector<32x32xf32>
      %219 = arith.addf %216, %218 : vector<32x32xf32>
      %220 = arith.mulf %219, %219 : vector<32x32xf32>
      %221 = arith.mulf %219, %220 : vector<32x32xf32>
      %cst_106 = arith.constant 4.471500e-02 : f32
      %222 = vector.broadcast %cst_106 : f32 to vector<32x32xf32>
      %223 = arith.mulf %222, %221 : vector<32x32xf32>
      %224 = arith.addf %219, %223 : vector<32x32xf32>
      %cst_107 = arith.constant 0.797884583 : f32
      %225 = vector.broadcast %cst_107 : f32 to vector<32x32xf32>
      %226 = arith.mulf %225, %224 : vector<32x32xf32>
      %227 = math.tanh %226 : vector<32x32xf32>
      %cst_108 = arith.constant 1.000000e+00 : f32
      %228 = vector.broadcast %cst_108 : f32 to vector<32x32xf32>
      %229 = arith.addf %228, %227 : vector<32x32xf32>
      %cst_109 = arith.constant 5.000000e-01 : f32
      %230 = vector.broadcast %cst_109 : f32 to vector<32x32xf32>
      %231 = arith.mulf %230, %229 : vector<32x32xf32>
      %232 = arith.mulf %219, %231 : vector<32x32xf32>
      %c0_110 = arith.constant 0 : index
      %c0_111 = arith.constant 0 : index
      %233 = vector.load %arg22[%c0_110, %c0_111] : memref<1x32xf32, #tpu.memory_space<vmem>>, vector<1x32xf32>
      %c0_112 = arith.constant 0 : index
      %c0_113 = arith.constant 0 : index
      %234 = vector.load %arg23[%c0_112, %c0_113] : memref<1x32xf32, #tpu.memory_space<vmem>>, vector<1x32xf32>
      %cst_114 = arith.constant dense<0.000000e+00> : vector<32xf32>
      %235 = vector.multi_reduction <add>, %232, %cst_114 [1] : vector<32x32xf32> to vector<32xf32>
      %236 = vector.shape_cast %235 : vector<32xf32> to vector<32x1xf32>
      %cst_115 = arith.constant 3.200000e+01 : f32
      %237 = vector.broadcast %cst_115 : f32 to vector<32x1xf32>
      %238 = arith.divf %236, %237 : vector<32x1xf32>
      %239 = vector.broadcast %238 : vector<32x1xf32> to vector<32x32xf32>
      %240 = arith.subf %232, %239 : vector<32x32xf32>
      %241 = arith.mulf %240, %240 : vector<32x32xf32>
      %cst_116 = arith.constant dense<0.000000e+00> : vector<32xf32>
      %242 = vector.multi_reduction <add>, %241, %cst_116 [1] : vector<32x32xf32> to vector<32xf32>
      %243 = vector.shape_cast %242 : vector<32xf32> to vector<32x1xf32>
      %cst_117 = arith.constant 3.200000e+01 : f32
      %244 = vector.broadcast %cst_117 : f32 to vector<32x1xf32>
      %245 = arith.divf %243, %244 : vector<32x1xf32>
      %246 = vector.broadcast %238 : vector<32x1xf32> to vector<32x32xf32>
      %247 = arith.subf %232, %246 : vector<32x32xf32>
      %cst_118 = arith.constant 9.99999974E-6 : f32
      %248 = vector.broadcast %cst_118 : f32 to vector<32x1xf32>
      %249 = arith.addf %245, %248 : vector<32x1xf32>
      %250 = math.rsqrt %249 : vector<32x1xf32>
      %251 = vector.broadcast %250 : vector<32x1xf32> to vector<32x32xf32>
      %252 = arith.mulf %247, %251 : vector<32x32xf32>
      %253 = vector.broadcast %233 : vector<1x32xf32> to vector<32x32xf32>
      %254 = arith.mulf %252, %253 : vector<32x32xf32>
      %255 = vector.broadcast %234 : vector<1x32xf32> to vector<32x32xf32>
      %256 = arith.addf %254, %255 : vector<32x32xf32>
      %257 = arith.truncf %256 : vector<32x32xf32> to vector<32x32xbf16>
      %c0_119 = arith.constant 0 : index
      %c0_120 = arith.constant 0 : index
      %258 = vector.load %arg24[%c0_119, %c0_120] : memref<32x128xbf16, #tpu.memory_space<vmem>>, vector<32x128xbf16>
      %cst_121 = arith.constant dense<0.000000e+00> : vector<32x128xf32>
      %259 = tpu.matmul %257, %258, %cst_121 {dimension_numbers = #tpu.dot_dimension_numbers<[1], [0], [0], [1], [0, 0, 1, 1], [], []>} : vector<32x32xbf16>, vector<32x128xbf16>, vector<32x128xf32> -> vector<32x128xf32>
      %c0_122 = arith.constant 0 : index
      %c0_123 = arith.constant 0 : index
      %260 = vector.load %arg25[%c0_122, %c0_123] : memref<1x128xf32, #tpu.memory_space<vmem>>, vector<1x128xf32>
      %261 = vector.broadcast %260 : vector<1x128xf32> to vector<32x128xf32>
      %262 = arith.addf %259, %261 : vector<32x128xf32>
      %263 = vector.shape_cast %262 : vector<32x128xf32> to vector<2x16x128xf32>
      %c0_124 = arith.constant 0 : index
      %c0_125 = arith.constant 0 : index
      %c0_126 = arith.constant 0 : index
      %264 = vector.load %arg26[%c0_124, %c0_125, %c0_126] : memref<2x16x128xf32, #tpu.memory_space<vmem>>, vector<2x16x128xf32>
      tpu.vector_store %arg26[%c0_124, %c0_125, %c0_126], %263 {strides = array<i32>} : memref<2x16x128xf32, #tpu.memory_space<vmem>>, vector<2x16x128xf32>,
    } else {
    }
    return
  }
  func.func @transform_0(%arg0: i32, %arg1: i32) -> (i32, i32, i32) {
    %c0_i32 = arith.constant 0 : i32
    %c0_i32_0 = arith.constant 0 : i32
    %c0_i32_1 = arith.constant 0 : i32
    return %arg0, %c0_i32, %c0_i32_0 : i32, i32, i32
  }
  func.func @transform_1(%arg0: i32, %arg1: i32) -> (i32, i32, i32, i32) {
    %c0_i32 = arith.constant 0 : i32
    %c0_i32_0 = arith.constant 0 : i32
    %c0_i32_1 = arith.constant 0 : i32
    %c0_i32_2 = arith.constant 0 : i32
    return %c0_i32, %arg0, %c0_i32_0, %c0_i32_1 : i32, i32, i32, i32
  }
  func.func @transform_2(%arg0: i32, %arg1: i32) -> (i32, i32, i32) {
    %c0_i32 = arith.constant 0 : i32
    %c0_i32_0 = arith.constant 0 : i32
    %c0_i32_1 = arith.constant 0 : i32
    return %arg1, %c0_i32, %c0_i32_0 : i32, i32, i32
  }
  func.func @transform_3(%arg0: i32, %arg1: i32) -> (i32, i32, i32) {
    %c0_i32 = arith.constant 0 : i32
    %c0_i32_0 = arith.constant 0 : i32
    %c0_i32_1 = arith.constant 0 : i32
    return %arg1, %c0_i32, %c0_i32_0 : i32, i32, i32
  }
  func.func @transform_4(%arg0: i32, %arg1: i32) -> (i32, i32, i32) {
    %c0_i32 = arith.constant 0 : i32
    %c0_i32_0 = arith.constant 0 : i32
    %c0_i32_1 = arith.constant 0 : i32
    return %arg1, %c0_i32, %c0_i32_0 : i32, i32, i32
  }
  func.func @transform_5(%arg0: i32, %arg1: i32) -> (i32, i32, i32) {
    %c0_i32 = arith.constant 0 : i32
    %c0_i32_0 = arith.constant 0 : i32
    %c0_i32_1 = arith.constant 0 : i32
    return %arg1, %c0_i32, %c0_i32_0 : i32, i32, i32
  }
  func.func @transform_6(%arg0: i32, %arg1: i32) -> (i32, i32, i32) {
    %c0_i32 = arith.constant 0 : i32
    %c0_i32_0 = arith.constant 0 : i32
    %c0_i32_1 = arith.constant 0 : i32
    return %arg1, %c0_i32, %c0_i32_0 : i32, i32, i32
  }
  func.func @transform_7(%arg0: i32, %arg1: i32) -> (i32, i32, i32) {
    %c0_i32 = arith.constant 0 : i32
    %c0_i32_0 = arith.constant 0 : i32
    %c0_i32_1 = arith.constant 0 : i32
    return %arg1, %c0_i32, %c0_i32_0 : i32, i32, i32
  }
  func.func @transform_8(%arg0: i32, %arg1: i32) -> (i32, i32, i32) {
    %c0_i32 = arith.constant 0 : i32
    %c0_i32_0 = arith.constant 0 : i32
    %c0_i32_1 = arith.constant 0 : i32
    return %arg1, %c0_i32, %c0_i32_0 : i32, i32, i32
  }
  func.func @transform_9(%arg0: i32, %arg1: i32) -> (i32, i32, i32) {
    %c0_i32 = arith.constant 0 : i32
    %c0_i32_0 = arith.constant 0 : i32
    %c0_i32_1 = arith.constant 0 : i32
    return %arg1, %c0_i32, %c0_i32_0 : i32, i32, i32
  }
  func.func @transform_10(%arg0: i32, %arg1: i32) -> (i32, i32, i32) {
    %c0_i32 = arith.constant 0 : i32
    %c0_i32_0 = arith.constant 0 : i32
    %c0_i32_1 = arith.constant 0 : i32
    return %arg1, %c0_i32, %c0_i32_0 : i32, i32, i32
  }
  func.func @transform_11(%arg0: i32, %arg1: i32) -> (i32, i32, i32) {
    %c0_i32 = arith.constant 0 : i32
    %c0_i32_0 = arith.constant 0 : i32
    %c0_i32_1 = arith.constant 0 : i32
    return %arg1, %c0_i32, %c0_i32_0 : i32, i32, i32
  }
  func.func @transform_12(%arg0: i32, %arg1: i32) -> (i32, i32, i32) {
    %c0_i32 = arith.constant 0 : i32
    %c0_i32_0 = arith.constant 0 : i32
    %c0_i32_1 = arith.constant 0 : i32
    return %arg1, %c0_i32, %c0_i32_0 : i32, i32, i32
  }
  func.func @transform_13(%arg0: i32, %arg1: i32) -> (i32, i32, i32) {
    %c0_i32 = arith.constant 0 : i32
    %c0_i32_0 = arith.constant 0 : i32
    %c0_i32_1 = arith.constant 0 : i32
    return %arg1, %c0_i32, %c0_i32_0 : i32, i32, i32
  }
  func.func @transform_14(%arg0: i32, %arg1: i32) -> (i32, i32, i32) {
    %c0_i32 = arith.constant 0 : i32
    %c0_i32_0 = arith.constant 0 : i32
    %c0_i32_1 = arith.constant 0 : i32
    return %arg1, %c0_i32, %c0_i32_0 : i32, i32, i32
  }
  func.func @transform_15(%arg0: i32, %arg1: i32) -> (i32, i32, i32) {
    %c0_i32 = arith.constant 0 : i32
    %c0_i32_0 = arith.constant 0 : i32
    %c0_i32_1 = arith.constant 0 : i32
    return %arg1, %c0_i32, %c0_i32_0 : i32, i32, i32
  }
  func.func @transform_16(%arg0: i32, %arg1: i32) -> (i32, i32, i32) {
    %c0_i32 = arith.constant 0 : i32
    %c0_i32_0 = arith.constant 0 : i32
    %c0_i32_1 = arith.constant 0 : i32
    return %arg1, %c0_i32, %c0_i32_0 : i32, i32, i32
  }
  func.func @transform_17(%arg0: i32, %arg1: i32) -> (i32, i32, i32) {
    %c0_i32 = arith.constant 0 : i32
    %c0_i32_0 = arith.constant 0 : i32
    %c0_i32_1 = arith.constant 0 : i32
    return %arg1, %c0_i32, %c0_i32_0 : i32, i32, i32
  }
  func.func @transform_18(%arg0: i32, %arg1: i32) -> (i32, i32) {
    %c0_i32 = arith.constant 0 : i32
    %c0_i32_0 = arith.constant 0 : i32
    %c0_i32_1 = arith.constant 0 : i32
    return %c0_i32, %c0_i32_0 : i32, i32
  }
  func.func @transform_19(%arg0: i32, %arg1: i32) -> (i32, i32) {
    %c0_i32 = arith.constant 0 : i32
    %c0_i32_0 = arith.constant 0 : i32
    %c0_i32_1 = arith.constant 0 : i32
    return %c0_i32, %c0_i32_0 : i32, i32
  }
  func.func @transform_20(%arg0: i32, %arg1: i32) -> (i32, i32) {
    %c0_i32 = arith.constant 0 : i32
    %c0_i32_0 = arith.constant 0 : i32
    %c0_i32_1 = arith.constant 0 : i32
    return %c0_i32, %c0_i32_0 : i32, i32
  }
  func.func @transform_21(%arg0: i32, %arg1: i32) -> (i32, i32) {
    %c0_i32 = arith.constant 0 : i32
    %c0_i32_0 = arith.constant 0 : i32
    %c0_i32_1 = arith.constant 0 : i32
    return %c0_i32, %c0_i32_0 : i32, i32
  }
  func.func @transform_22(%arg0: i32, %arg1: i32) -> (i32, i32) {
    %c0_i32 = arith.constant 0 : i32
    %c0_i32_0 = arith.constant 0 : i32
    %c0_i32_1 = arith.constant 0 : i32
    return %c0_i32, %c0_i32_0 : i32, i32
  }
  func.func @transform_23(%arg0: i32, %arg1: i32) -> (i32, i32) {
    %c0_i32 = arith.constant 0 : i32
    %c0_i32_0 = arith.constant 0 : i32
    %c0_i32_1 = arith.constant 0 : i32
    return %c0_i32, %c0_i32_0 : i32, i32
  }
  func.func @transform_24(%arg0: i32, %arg1: i32) -> (i32, i32, i32) {
    %c0_i32 = arith.constant 0 : i32
    %c0_i32_0 = arith.constant 0 : i32
    %c0_i32_1 = arith.constant 0 : i32
    return %arg0, %c0_i32, %c0_i32_0 : i32, i32, i32
  }
}

module attributes {stable_mosaic.version = 11 : i64} {
  func.func @fused_graphormer_kernel(%arg0: i32, %arg1: i32, %arg2: memref<2x16x32xf32, #tpu.memory_space<vmem>>, %arg3: memref<4x2x16x16xf32, #tpu.memory_space<vmem>>, %arg4: memref<1x32x32xbf16, #tpu.memory_space<vmem>>, %arg5: memref<1x1x32xf32, #tpu.memory_space<vmem>>, %arg6: memref<1x32x32xbf16, #tpu.memory_space<vmem>>, %arg7: memref<1x1x32xf32, #tpu.memory_space<vmem>>, %arg8: memref<1x32x32xbf16, #tpu.memory_space<vmem>>, %arg9: memref<1x1x32xf32, #tpu.memory_space<vmem>>, %arg10: memref<1x32x32xbf16, #tpu.memory_space<vmem>>, %arg11: memref<1x1x32xf32, #tpu.memory_space<vmem>>, %arg12: memref<1x1x32xf32, #tpu.memory_space<vmem>>, %arg13: memref<1x1x32xf32, #tpu.memory_space<vmem>>, %arg14: memref<1x32x64xbf16, #tpu.memory_space<vmem>>, %arg15: memref<1x1x64xf32, #tpu.memory_space<vmem>>, %arg16: memref<1x64x32xbf16, #tpu.memory_space<vmem>>, %arg17: memref<1x1x32xf32, #tpu.memory_space<vmem>>, %arg18: memref<1x1x32xf32, #tpu.memory_space<vmem>>, %arg19: memref<1x1x32xf32, #tpu.memory_space<vmem>>, %arg20: memref<32x32xbf16, #tpu.memory_space<vmem>>, %arg21: memref<1x32xf32, #tpu.memory_space<vmem>>, %arg22: memref<1x32xf32, #tpu.memory_space<vmem>>, %arg23: memref<1x32xf32, #tpu.memory_space<vmem>>, %arg24: memref<32x128xbf16, #tpu.memory_space<vmem>>, %arg25: memref<1x128xf32, #tpu.memory_space<vmem>>, %arg26: memref<2x16x128xf32, #tpu.memory_space<vmem>>, %arg27: memref<32x32xf32, #tpu.memory_space<vmem>>) attributes {dimension_semantics = [#tpu.dimension_semantics<parallel>, #tpu.dimension_semantics<arbitrary>], iteration_bounds = array<i64: 1, 2>, scalar_prefetch = 0 : i64, scratch_operands = 1 : i64, tpu.core_type = #tpu.core_type<tc>, window_params = [{transform_indices = @transform_0, window_bounds = array<i64: 2, 16, 32>}, {transform_indices = @transform_1, window_bounds = array<i64: 4, 2, 16, 16>}, {transform_indices = @transform_2, window_bounds = array<i64: 1, 32, 32>}, {transform_indices = @transform_3, window_bounds = array<i64: 1, 1, 32>}, {transform_indices = @transform_4, window_bounds = array<i64: 1, 32, 32>}, {transform_indices = @transform_5, window_bounds = array<i64: 1, 1, 32>}, {transform_indices = @transform_6, window_bounds = array<i64: 1, 32, 32>}, {transform_indices = @transform_7, window_bounds = array<i64: 1, 1, 32>}, {transform_indices = @transform_8, window_bounds = array<i64: 1, 32, 32>}, {transform_indices = @transform_9, window_bounds = array<i64: 1, 1, 32>}, {transform_indices = @transform_10, window_bounds = array<i64: 1, 1, 32>}, {transform_indices = @transform_11, window_bounds = array<i64: 1, 1, 32>}, {transform_indices = @transform_12, window_bounds = array<i64: 1, 32, 64>}, {transform_indices = @transform_13, window_bounds = array<i64: 1, 1, 64>}, {transform_indices = @transform_14, window_bounds = array<i64: 1, 64, 32>}, {transform_indices = @transform_15, window_bounds = array<i64: 1, 1, 32>}, {transform_indices = @transform_16, window_bounds = array<i64: 1, 1, 32>}, {transform_indices = @transform_17, window_bounds = array<i64: 1, 1, 32>}, {pipeline_mode = #tpu.pipeline_mode<synchronous>, transform_indices = @transform_18, window_bounds = array<i64: 32, 32>}, {pipeline_mode = #tpu.pipeline_mode<synchronous>, transform_indices = @transform_19, window_bounds = array<i64: 1, 32>}, {pipeline_mode = #tpu.pipeline_mode<synchronous>, transform_indices = @transform_20, window_bounds = array<i64: 1, 32>}, {pipeline_mode = #tpu.pipeline_mode<synchronous>, transform_indices = @transform_21, window_bounds = array<i64: 1, 32>}, {pipeline_mode = #tpu.pipeline_mode<synchronous>, transform_indices = @transform_22, window_bounds = array<i64: 32, 128>}, {pipeline_mode = #tpu.pipeline_mode<synchronous>, transform_indices = @transform_23, window_bounds = array<i64: 1, 128>}, {transform_indices = @transform_24, window_bounds = array<i64: 2, 16, 128>}]} {
    %c0_i32 = arith.constant 0 : i32
    %0 = arith.cmpi eq, %arg1, %c0_i32 : i32
    %1 = arith.extui %0 : i1 to i32
    %c0_i32_0 = arith.constant 0 : i32
    %2 = arith.cmpi ne, %1, %c0_i32_0 : i32
    scf.if %2 {
      %c0_101 = arith.constant 0 : index
      %c0_102 = arith.constant 0 : index
      %c0_103 = arith.constant 0 : index
      %214 = vector.load %arg2[%c0_101, %c0_102, %c0_103] : memref<2x16x32xf32, #tpu.memory_space<vmem>>, vector<2x16x32xf32>
      %215 = vector.shape_cast %214 : vector<2x16x32xf32> to vector<32x32xf32>
      %c0_104 = arith.constant 0 : index
      %c0_105 = arith.constant 0 : index
      %216 = vector.load %arg27[%c0_104, %c0_105] : memref<32x32xf32, #tpu.memory_space<vmem>>, vector<32x32xf32>
      tpu.vector_store %arg27[%c0_104, %c0_105], %215 {strides = array<i32>} : memref<32x32xf32, #tpu.memory_space<vmem>>, vector<32x32xf32>,
    } else {
    }
    %c0 = arith.constant 0 : index
    %c0_1 = arith.constant 0 : index
    %3 = vector.load %arg27[%c0, %c0_1] : memref<32x32xf32, #tpu.memory_space<vmem>>, vector<32x32xf32>
    %4 = arith.truncf %3 : vector<32x32xf32> to vector<32x32xbf16>
    %c0_2 = arith.constant 0 : index
    %c0_3 = arith.constant 0 : index
    %c0_4 = arith.constant 0 : index
    %5 = vector.load %arg4[%c0_2, %c0_3, %c0_4] : memref<1x32x32xbf16, #tpu.memory_space<vmem>>, vector<1x32x32xbf16>
    %6 = vector.shape_cast %5 : vector<1x32x32xbf16> to vector<32x32xbf16>
    %cst = arith.constant dense<0.000000e+00> : vector<32x32xf32>
    %7 = tpu.matmul %4, %6, %cst {dimension_numbers = #tpu.dot_dimension_numbers<[1], [0], [0], [1], [0, 0, 1, 1], [], []>} : vector<32x32xbf16>, vector<32x32xbf16>, vector<32x32xf32> -> vector<32x32xf32>
    %c0_5 = arith.constant 0 : index
    %c0_6 = arith.constant 0 : index
    %c0_7 = arith.constant 0 : index
    %8 = vector.load %arg5[%c0_5, %c0_6, %c0_7] : memref<1x1x32xf32, #tpu.memory_space<vmem>>, vector<1x1x32xf32>
    %9 = vector.shape_cast %8 : vector<1x1x32xf32> to vector<1x32xf32>
    %10 = vector.broadcast %9 : vector<1x32xf32> to vector<32x32xf32>
    %11 = arith.addf %7, %10 : vector<32x32xf32>
    %12 = vector.shape_cast %11 : vector<32x32xf32> to vector<2x16x32xf32>
    %c0_8 = arith.constant 0 : index
    %c0_9 = arith.constant 0 : index
    %c0_10 = arith.constant 0 : index
    %13 = vector.load %arg6[%c0_8, %c0_9, %c0_10] : memref<1x32x32xbf16, #tpu.memory_space<vmem>>, vector<1x32x32xbf16>
    %14 = vector.shape_cast %13 : vector<1x32x32xbf16> to vector<32x32xbf16>
    %cst_11 = arith.constant dense<0.000000e+00> : vector<32x32xf32>
    %15 = tpu.matmul %4, %14, %cst_11 {dimension_numbers = #tpu.dot_dimension_numbers<[1], [0], [0], [1], [0, 0, 1, 1], [], []>} : vector<32x32xbf16>, vector<32x32xbf16>, vector<32x32xf32> -> vector<32x32xf32>
    %c0_12 = arith.constant 0 : index
    %c0_13 = arith.constant 0 : index
    %c0_14 = arith.constant 0 : index
    %16 = vector.load %arg7[%c0_12, %c0_13, %c0_14] : memref<1x1x32xf32, #tpu.memory_space<vmem>>, vector<1x1x32xf32>
    %17 = vector.shape_cast %16 : vector<1x1x32xf32> to vector<1x32xf32>
    %18 = vector.broadcast %17 : vector<1x32xf32> to vector<32x32xf32>
    %19 = arith.addf %15, %18 : vector<32x32xf32>
    %20 = vector.shape_cast %19 : vector<32x32xf32> to vector<2x16x32xf32>
    %c0_15 = arith.constant 0 : index
    %c0_16 = arith.constant 0 : index
    %c0_17 = arith.constant 0 : index
    %21 = vector.load %arg8[%c0_15, %c0_16, %c0_17] : memref<1x32x32xbf16, #tpu.memory_space<vmem>>, vector<1x32x32xbf16>
    %22 = vector.shape_cast %21 : vector<1x32x32xbf16> to vector<32x32xbf16>
    %cst_18 = arith.constant dense<0.000000e+00> : vector<32x32xf32>
    %23 = tpu.matmul %4, %22, %cst_18 {dimension_numbers = #tpu.dot_dimension_numbers<[1], [0], [0], [1], [0, 0, 1, 1], [], []>} : vector<32x32xbf16>, vector<32x32xbf16>, vector<32x32xf32> -> vector<32x32xf32>
    %c0_19 = arith.constant 0 : index
    %c0_20 = arith.constant 0 : index
    %c0_21 = arith.constant 0 : index
    %24 = vector.load %arg9[%c0_19, %c0_20, %c0_21] : memref<1x1x32xf32, #tpu.memory_space<vmem>>, vector<1x1x32xf32>
    %25 = vector.shape_cast %24 : vector<1x1x32xf32> to vector<1x32xf32>
    %26 = vector.broadcast %25 : vector<1x32xf32> to vector<32x32xf32>
    %27 = arith.addf %23, %26 : vector<32x32xf32>
    %28 = vector.shape_cast %27 : vector<32x32xf32> to vector<2x16x32xf32>
    %29 = vector.extract_strided_slice %12 {offsets = [0, 0, 0], sizes = [2, 16, 8], strides = [1, 1, 1]} : vector<2x16x32xf32> to vector<2x16x8xf32>
    %30 = arith.truncf %29 : vector<2x16x8xf32> to vector<2x16x8xbf16>
    %31 = vector.extract_strided_slice %20 {offsets = [0, 0, 0], sizes = [2, 16, 8], strides = [1, 1, 1]} : vector<2x16x32xf32> to vector<2x16x8xf32>
    %32 = arith.truncf %31 : vector<2x16x8xf32> to vector<2x16x8xbf16>
    %33 = vector.extract_strided_slice %28 {offsets = [0, 0, 0], sizes = [2, 16, 8], strides = [1, 1, 1]} : vector<2x16x32xf32> to vector<2x16x8xf32>
    %34 = arith.truncf %33 : vector<2x16x8xf32> to vector<2x16x8xbf16>
    "tpu.trace_start"() <{level = 10 : i32, message = "bqd,bkd->bqk"}> : () -> ()
    %cst_22 = arith.constant dense<0.000000e+00> : vector<2x16x16xf32>
    %35 = tpu.matmul %30, %32, %cst_22 {dimension_numbers = #tpu.dot_dimension_numbers<[2], [2], [1], [1], [0, 0, 0, 1, 1, 1], [0], [0]>} : vector<2x16x8xbf16>, vector<2x16x8xbf16>, vector<2x16x16xf32> -> vector<2x16x16xf32>
    "tpu.trace_stop"() : () -> ()
    %c0_23 = arith.constant 0 : index
    %c0_24 = arith.constant 0 : index
    %c0_25 = arith.constant 0 : index
    %c0_26 = arith.constant 0 : index
    %36 = vector.load %arg3[%c0_23, %c0_24, %c0_25, %c0_26] : memref<4x2x16x16xf32, #tpu.memory_space<vmem>>, vector<1x2x16x16xf32>
    %37 = vector.shape_cast %36 : vector<1x2x16x16xf32> to vector<2x16x16xf32>
    %38 = arith.addf %35, %37 : vector<2x16x16xf32>
    %cst_27 = arith.constant dense<0xFF800000> : vector<2x16xf32>
    %39 = vector.multi_reduction <maximumf>, %38, %cst_27 [2] : vector<2x16x16xf32> to vector<2x16xf32>
    %40 = vector.shape_cast %39 : vector<2x16xf32> to vector<2x16x1xf32>
    %41 = vector.broadcast %40 : vector<2x16x1xf32> to vector<2x16x16xf32>
    %42 = arith.subf %38, %41 : vector<2x16x16xf32>
    %43 = math.exp %42 : vector<2x16x16xf32>
    %cst_28 = arith.constant dense<0.000000e+00> : vector<2x16xf32>
    %44 = vector.multi_reduction <add>, %43, %cst_28 [2] : vector<2x16x16xf32> to vector<2x16xf32>
    %45 = vector.shape_cast %44 : vector<2x16xf32> to vector<2x16x1xf32>
    %46 = tpu.reciprocal %45 {approx = true} : vector<2x16x1xf32> -> vector<2x16x1xf32>
    %47 = vector.broadcast %46 : vector<2x16x1xf32> to vector<2x16x16xf32>
    %48 = arith.mulf %43, %47 : vector<2x16x16xf32>
    %49 = arith.truncf %48 : vector<2x16x16xf32> to vector<2x16x16xbf16>
    "tpu.trace_start"() <{level = 10 : i32, message = "bqk,bkd->bqd"}> : () -> ()
    %cst_29 = arith.constant dense<0.000000e+00> : vector<2x16x8xf32>
    %50 = tpu.matmul %49, %34, %cst_29 {dimension_numbers = #tpu.dot_dimension_numbers<[2], [1], [1], [2], [0, 0, 0, 1, 1, 2], [0], [0]>} : vector<2x16x16xbf16>, vector<2x16x8xbf16>, vector<2x16x8xf32> -> vector<2x16x8xf32>
    "tpu.trace_stop"() : () -> ()
    %51 = vector.extract_strided_slice %12 {offsets = [0, 0, 8], sizes = [2, 16, 8], strides = [1, 1, 1]} : vector<2x16x32xf32> to vector<2x16x8xf32>
    %52 = arith.truncf %51 : vector<2x16x8xf32> to vector<2x16x8xbf16>
    %53 = vector.extract_strided_slice %20 {offsets = [0, 0, 8], sizes = [2, 16, 8], strides = [1, 1, 1]} : vector<2x16x32xf32> to vector<2x16x8xf32>
    %54 = arith.truncf %53 : vector<2x16x8xf32> to vector<2x16x8xbf16>
    %55 = vector.extract_strided_slice %28 {offsets = [0, 0, 8], sizes = [2, 16, 8], strides = [1, 1, 1]} : vector<2x16x32xf32> to vector<2x16x8xf32>
    %56 = arith.truncf %55 : vector<2x16x8xf32> to vector<2x16x8xbf16>
    "tpu.trace_start"() <{level = 10 : i32, message = "bqd,bkd->bqk"}> : () -> ()
    %cst_30 = arith.constant dense<0.000000e+00> : vector<2x16x16xf32>
    %57 = tpu.matmul %52, %54, %cst_30 {dimension_numbers = #tpu.dot_dimension_numbers<[2], [2], [1], [1], [0, 0, 0, 1, 1, 1], [0], [0]>} : vector<2x16x8xbf16>, vector<2x16x8xbf16>, vector<2x16x16xf32> -> vector<2x16x16xf32>
    "tpu.trace_stop"() : () -> ()
    %c1 = arith.constant 1 : index
    %c0_31 = arith.constant 0 : index
    %c0_32 = arith.constant 0 : index
    %c0_33 = arith.constant 0 : index
    %58 = vector.load %arg3[%c1, %c0_31, %c0_32, %c0_33] : memref<4x2x16x16xf32, #tpu.memory_space<vmem>>, vector<1x2x16x16xf32>
    %59 = vector.shape_cast %58 : vector<1x2x16x16xf32> to vector<2x16x16xf32>
    %60 = arith.addf %57, %59 : vector<2x16x16xf32>
    %cst_34 = arith.constant dense<0xFF800000> : vector<2x16xf32>
    %61 = vector.multi_reduction <maximumf>, %60, %cst_34 [2] : vector<2x16x16xf32> to vector<2x16xf32>
    %62 = vector.shape_cast %61 : vector<2x16xf32> to vector<2x16x1xf32>
    %63 = vector.broadcast %62 : vector<2x16x1xf32> to vector<2x16x16xf32>
    %64 = arith.subf %60, %63 : vector<2x16x16xf32>
    %65 = math.exp %64 : vector<2x16x16xf32>
    %cst_35 = arith.constant dense<0.000000e+00> : vector<2x16xf32>
    %66 = vector.multi_reduction <add>, %65, %cst_35 [2] : vector<2x16x16xf32> to vector<2x16xf32>
    %67 = vector.shape_cast %66 : vector<2x16xf32> to vector<2x16x1xf32>
    %68 = tpu.reciprocal %67 {approx = true} : vector<2x16x1xf32> -> vector<2x16x1xf32>
    %69 = vector.broadcast %68 : vector<2x16x1xf32> to vector<2x16x16xf32>
    %70 = arith.mulf %65, %69 : vector<2x16x16xf32>
    %71 = arith.truncf %70 : vector<2x16x16xf32> to vector<2x16x16xbf16>
    "tpu.trace_start"() <{level = 10 : i32, message = "bqk,bkd->bqd"}> : () -> ()
    %cst_36 = arith.constant dense<0.000000e+00> : vector<2x16x8xf32>
    %72 = tpu.matmul %71, %56, %cst_36 {dimension_numbers = #tpu.dot_dimension_numbers<[2], [1], [1], [2], [0, 0, 0, 1, 1, 2], [0], [0]>} : vector<2x16x16xbf16>, vector<2x16x8xbf16>, vector<2x16x8xf32> -> vector<2x16x8xf32>
    "tpu.trace_stop"() : () -> ()
    %73 = vector.extract_strided_slice %12 {offsets = [0, 0, 16], sizes = [2, 16, 8], strides = [1, 1, 1]} : vector<2x16x32xf32> to vector<2x16x8xf32>
    %74 = arith.truncf %73 : vector<2x16x8xf32> to vector<2x16x8xbf16>
    %75 = vector.extract_strided_slice %20 {offsets = [0, 0, 16], sizes = [2, 16, 8], strides = [1, 1, 1]} : vector<2x16x32xf32> to vector<2x16x8xf32>
    %76 = arith.truncf %75 : vector<2x16x8xf32> to vector<2x16x8xbf16>
    %77 = vector.extract_strided_slice %28 {offsets = [0, 0, 16], sizes = [2, 16, 8], strides = [1, 1, 1]} : vector<2x16x32xf32> to vector<2x16x8xf32>
    %78 = arith.truncf %77 : vector<2x16x8xf32> to vector<2x16x8xbf16>
    "tpu.trace_start"() <{level = 10 : i32, message = "bqd,bkd->bqk"}> : () -> ()
    %cst_37 = arith.constant dense<0.000000e+00> : vector<2x16x16xf32>
    %79 = tpu.matmul %74, %76, %cst_37 {dimension_numbers = #tpu.dot_dimension_numbers<[2], [2], [1], [1], [0, 0, 0, 1, 1, 1], [0], [0]>} : vector<2x16x8xbf16>, vector<2x16x8xbf16>, vector<2x16x16xf32> -> vector<2x16x16xf32>
    "tpu.trace_stop"() : () -> ()
    %c2 = arith.constant 2 : index
    %c0_38 = arith.constant 0 : index
    %c0_39 = arith.constant 0 : index
    %c0_40 = arith.constant 0 : index
    %80 = vector.load %arg3[%c2, %c0_38, %c0_39, %c0_40] : memref<4x2x16x16xf32, #tpu.memory_space<vmem>>, vector<1x2x16x16xf32>
    %81 = vector.shape_cast %80 : vector<1x2x16x16xf32> to vector<2x16x16xf32>
    %82 = arith.addf %79, %81 : vector<2x16x16xf32>
    %cst_41 = arith.constant dense<0xFF800000> : vector<2x16xf32>
    %83 = vector.multi_reduction <maximumf>, %82, %cst_41 [2] : vector<2x16x16xf32> to vector<2x16xf32>
    %84 = vector.shape_cast %83 : vector<2x16xf32> to vector<2x16x1xf32>
    %85 = vector.broadcast %84 : vector<2x16x1xf32> to vector<2x16x16xf32>
    %86 = arith.subf %82, %85 : vector<2x16x16xf32>
    %87 = math.exp %86 : vector<2x16x16xf32>
    %cst_42 = arith.constant dense<0.000000e+00> : vector<2x16xf32>
    %88 = vector.multi_reduction <add>, %87, %cst_42 [2] : vector<2x16x16xf32> to vector<2x16xf32>
    %89 = vector.shape_cast %88 : vector<2x16xf32> to vector<2x16x1xf32>
    %90 = tpu.reciprocal %89 {approx = true} : vector<2x16x1xf32> -> vector<2x16x1xf32>
    %91 = vector.broadcast %90 : vector<2x16x1xf32> to vector<2x16x16xf32>
    %92 = arith.mulf %87, %91 : vector<2x16x16xf32>
    %93 = arith.truncf %92 : vector<2x16x16xf32> to vector<2x16x16xbf16>
    "tpu.trace_start"() <{level = 10 : i32, message = "bqk,bkd->bqd"}> : () -> ()
    %cst_43 = arith.constant dense<0.000000e+00> : vector<2x16x8xf32>
    %94 = tpu.matmul %93, %78, %cst_43 {dimension_numbers = #tpu.dot_dimension_numbers<[2], [1], [1], [2], [0, 0, 0, 1, 1, 2], [0], [0]>} : vector<2x16x16xbf16>, vector<2x16x8xbf16>, vector<2x16x8xf32> -> vector<2x16x8xf32>
    "tpu.trace_stop"() : () -> ()
    %95 = vector.extract_strided_slice %12 {offsets = [0, 0, 24], sizes = [2, 16, 8], strides = [1, 1, 1]} : vector<2x16x32xf32> to vector<2x16x8xf32>
    %96 = arith.truncf %95 : vector<2x16x8xf32> to vector<2x16x8xbf16>
    %97 = vector.extract_strided_slice %20 {offsets = [0, 0, 24], sizes = [2, 16, 8], strides = [1, 1, 1]} : vector<2x16x32xf32> to vector<2x16x8xf32>
    %98 = arith.truncf %97 : vector<2x16x8xf32> to vector<2x16x8xbf16>
    %99 = vector.extract_strided_slice %28 {offsets = [0, 0, 24], sizes = [2, 16, 8], strides = [1, 1, 1]} : vector<2x16x32xf32> to vector<2x16x8xf32>
    %100 = arith.truncf %99 : vector<2x16x8xf32> to vector<2x16x8xbf16>
    "tpu.trace_start"() <{level = 10 : i32, message = "bqd,bkd->bqk"}> : () -> ()
    %cst_44 = arith.constant dense<0.000000e+00> : vector<2x16x16xf32>
    %101 = tpu.matmul %96, %98, %cst_44 {dimension_numbers = #tpu.dot_dimension_numbers<[2], [2], [1], [1], [0, 0, 0, 1, 1, 1], [0], [0]>} : vector<2x16x8xbf16>, vector<2x16x8xbf16>, vector<2x16x16xf32> -> vector<2x16x16xf32>
    "tpu.trace_stop"() : () -> ()
    %c3 = arith.constant 3 : index
    %c0_45 = arith.constant 0 : index
    %c0_46 = arith.constant 0 : index
    %c0_47 = arith.constant 0 : index
    %102 = vector.load %arg3[%c3, %c0_45, %c0_46, %c0_47] : memref<4x2x16x16xf32, #tpu.memory_space<vmem>>, vector<1x2x16x16xf32>
    %103 = vector.shape_cast %102 : vector<1x2x16x16xf32> to vector<2x16x16xf32>
    %104 = arith.addf %101, %103 : vector<2x16x16xf32>
    %cst_48 = arith.constant dense<0xFF800000> : vector<2x16xf32>
    %105 = vector.multi_reduction <maximumf>, %104, %cst_48 [2] : vector<2x16x16xf32> to vector<2x16xf32>
    %106 = vector.shape_cast %105 : vector<2x16xf32> to vector<2x16x1xf32>
    %107 = vector.broadcast %106 : vector<2x16x1xf32> to vector<2x16x16xf32>
    %108 = arith.subf %104, %107 : vector<2x16x16xf32>
    %109 = math.exp %108 : vector<2x16x16xf32>
    %cst_49 = arith.constant dense<0.000000e+00> : vector<2x16xf32>
    %110 = vector.multi_reduction <add>, %109, %cst_49 [2] : vector<2x16x16xf32> to vector<2x16xf32>
    %111 = vector.shape_cast %110 : vector<2x16xf32> to vector<2x16x1xf32>
    %112 = tpu.reciprocal %111 {approx = true} : vector<2x16x1xf32> -> vector<2x16x1xf32>
    %113 = vector.broadcast %112 : vector<2x16x1xf32> to vector<2x16x16xf32>
    %114 = arith.mulf %109, %113 : vector<2x16x16xf32>
    %115 = arith.truncf %114 : vector<2x16x16xf32> to vector<2x16x16xbf16>
    "tpu.trace_start"() <{level = 10 : i32, message = "bqk,bkd->bqd"}> : () -> ()
    %cst_50 = arith.constant dense<0.000000e+00> : vector<2x16x8xf32>
    %116 = tpu.matmul %115, %100, %cst_50 {dimension_numbers = #tpu.dot_dimension_numbers<[2], [1], [1], [2], [0, 0, 0, 1, 1, 2], [0], [0]>} : vector<2x16x16xbf16>, vector<2x16x8xbf16>, vector<2x16x8xf32> -> vector<2x16x8xf32>
    "tpu.trace_stop"() : () -> ()
    %117 = tpu.concatenate %50, %72, %94, %116 in 2 : vector<2x16x8xf32>, vector<2x16x8xf32>, vector<2x16x8xf32>, vector<2x16x8xf32> -> vector<2x16x32xf32>
    %118 = vector.shape_cast %117 : vector<2x16x32xf32> to vector<32x32xf32>
    %119 = arith.truncf %118 : vector<32x32xf32> to vector<32x32xbf16>
    %c0_51 = arith.constant 0 : index
    %c0_52 = arith.constant 0 : index
    %c0_53 = arith.constant 0 : index
    %120 = vector.load %arg10[%c0_51, %c0_52, %c0_53] : memref<1x32x32xbf16, #tpu.memory_space<vmem>>, vector<1x32x32xbf16>
    %121 = vector.shape_cast %120 : vector<1x32x32xbf16> to vector<32x32xbf16>
    %cst_54 = arith.constant dense<0.000000e+00> : vector<32x32xf32>
    %122 = tpu.matmul %119, %121, %cst_54 {dimension_numbers = #tpu.dot_dimension_numbers<[1], [0], [0], [1], [0, 0, 1, 1], [], []>} : vector<32x32xbf16>, vector<32x32xbf16>, vector<32x32xf32> -> vector<32x32xf32>
    %c0_55 = arith.constant 0 : index
    %c0_56 = arith.constant 0 : index
    %c0_57 = arith.constant 0 : index
    %123 = vector.load %arg11[%c0_55, %c0_56, %c0_57] : memref<1x1x32xf32, #tpu.memory_space<vmem>>, vector<1x1x32xf32>
    %124 = vector.shape_cast %123 : vector<1x1x32xf32> to vector<1x32xf32>
    %125 = vector.broadcast %124 : vector<1x32xf32> to vector<32x32xf32>
    %126 = arith.addf %122, %125 : vector<32x32xf32>
    %127 = arith.addf %3, %126 : vector<32x32xf32>
    %c0_58 = arith.constant 0 : index
    %c0_59 = arith.constant 0 : index
    %c0_60 = arith.constant 0 : index
    %128 = vector.load %arg12[%c0_58, %c0_59, %c0_60] : memref<1x1x32xf32, #tpu.memory_space<vmem>>, vector<1x1x32xf32>
    %129 = vector.shape_cast %128 : vector<1x1x32xf32> to vector<1x32xf32>
    %c0_61 = arith.constant 0 : index
    %c0_62 = arith.constant 0 : index
    %c0_63 = arith.constant 0 : index
    %130 = vector.load %arg13[%c0_61, %c0_62, %c0_63] : memref<1x1x32xf32, #tpu.memory_space<vmem>>, vector<1x1x32xf32>
    %131 = vector.shape_cast %130 : vector<1x1x32xf32> to vector<1x32xf32>
    %cst_64 = arith.constant dense<0.000000e+00> : vector<32xf32>
    %132 = vector.multi_reduction <add>, %127, %cst_64 [1] : vector<32x32xf32> to vector<32xf32>
    %133 = vector.shape_cast %132 : vector<32xf32> to vector<32x1xf32>
    %cst_65 = arith.constant 3.200000e+01 : f32
    %134 = vector.broadcast %cst_65 : f32 to vector<32x1xf32>
    %135 = arith.divf %133, %134 : vector<32x1xf32>
    %136 = vector.broadcast %135 : vector<32x1xf32> to vector<32x32xf32>
    %137 = arith.subf %127, %136 : vector<32x32xf32>
    %138 = arith.mulf %137, %137 : vector<32x32xf32>
    %cst_66 = arith.constant dense<0.000000e+00> : vector<32xf32>
    %139 = vector.multi_reduction <add>, %138, %cst_66 [1] : vector<32x32xf32> to vector<32xf32>
    %140 = vector.shape_cast %139 : vector<32xf32> to vector<32x1xf32>
    %cst_67 = arith.constant 3.200000e+01 : f32
    %141 = vector.broadcast %cst_67 : f32 to vector<32x1xf32>
    %142 = arith.divf %140, %141 : vector<32x1xf32>
    %143 = vector.broadcast %135 : vector<32x1xf32> to vector<32x32xf32>
    %144 = arith.subf %127, %143 : vector<32x32xf32>
    %cst_68 = arith.constant 9.99999974E-6 : f32
    %145 = vector.broadcast %cst_68 : f32 to vector<32x1xf32>
    %146 = arith.addf %142, %145 : vector<32x1xf32>
    %147 = math.rsqrt %146 : vector<32x1xf32>
    %148 = vector.broadcast %147 : vector<32x1xf32> to vector<32x32xf32>
    %149 = arith.mulf %144, %148 : vector<32x32xf32>
    %150 = vector.broadcast %129 : vector<1x32xf32> to vector<32x32xf32>
    %151 = arith.mulf %149, %150 : vector<32x32xf32>
    %152 = vector.broadcast %131 : vector<1x32xf32> to vector<32x32xf32>
    %153 = arith.addf %151, %152 : vector<32x32xf32>
    %154 = arith.truncf %153 : vector<32x32xf32> to vector<32x32xbf16>
    %c0_69 = arith.constant 0 : index
    %c0_70 = arith.constant 0 : index
    %c0_71 = arith.constant 0 : index
    %155 = vector.load %arg14[%c0_69, %c0_70, %c0_71] : memref<1x32x64xbf16, #tpu.memory_space<vmem>>, vector<1x32x64xbf16>
    %156 = vector.shape_cast %155 : vector<1x32x64xbf16> to vector<32x64xbf16>
    %cst_72 = arith.constant dense<0.000000e+00> : vector<32x64xf32>
    %157 = tpu.matmul %154, %156, %cst_72 {dimension_numbers = #tpu.dot_dimension_numbers<[1], [0], [0], [1], [0, 0, 1, 1], [], []>} : vector<32x32xbf16>, vector<32x64xbf16>, vector<32x64xf32> -> vector<32x64xf32>
    %c0_73 = arith.constant 0 : index
    %c0_74 = arith.constant 0 : index
    %c0_75 = arith.constant 0 : index
    %158 = vector.load %arg15[%c0_73, %c0_74, %c0_75] : memref<1x1x64xf32, #tpu.memory_space<vmem>>, vector<1x1x64xf32>
    %159 = vector.shape_cast %158 : vector<1x1x64xf32> to vector<1x64xf32>
    %160 = vector.broadcast %159 : vector<1x64xf32> to vector<32x64xf32>
    %161 = arith.addf %157, %160 : vector<32x64xf32>
    %162 = arith.mulf %161, %161 : vector<32x64xf32>
    %163 = arith.mulf %161, %162 : vector<32x64xf32>
    %cst_76 = arith.constant 4.471500e-02 : f32
    %164 = vector.broadcast %cst_76 : f32 to vector<32x64xf32>
    %165 = arith.mulf %164, %163 : vector<32x64xf32>
    %166 = arith.addf %161, %165 : vector<32x64xf32>
    %cst_77 = arith.constant 0.797884583 : f32
    %167 = vector.broadcast %cst_77 : f32 to vector<32x64xf32>
    %168 = arith.mulf %167, %166 : vector<32x64xf32>
    %169 = math.tanh %168 : vector<32x64xf32>
    %cst_78 = arith.constant 1.000000e+00 : f32
    %170 = vector.broadcast %cst_78 : f32 to vector<32x64xf32>
    %171 = arith.addf %170, %169 : vector<32x64xf32>
    %cst_79 = arith.constant 5.000000e-01 : f32
    %172 = vector.broadcast %cst_79 : f32 to vector<32x64xf32>
    %173 = arith.mulf %172, %171 : vector<32x64xf32>
    %174 = arith.mulf %161, %173 : vector<32x64xf32>
    %175 = arith.truncf %174 : vector<32x64xf32> to vector<32x64xbf16>
    %c0_80 = arith.constant 0 : index
    %c0_81 = arith.constant 0 : index
    %c0_82 = arith.constant 0 : index
    %176 = vector.load %arg16[%c0_80, %c0_81, %c0_82] : memref<1x64x32xbf16, #tpu.memory_space<vmem>>, vector<1x64x32xbf16>
    %177 = vector.shape_cast %176 : vector<1x64x32xbf16> to vector<64x32xbf16>
    %cst_83 = arith.constant dense<0.000000e+00> : vector<32x32xf32>
    %178 = tpu.matmul %175, %177, %cst_83 {dimension_numbers = #tpu.dot_dimension_numbers<[1], [0], [0], [1], [0, 0, 1, 1], [], []>} : vector<32x64xbf16>, vector<64x32xbf16>, vector<32x32xf32> -> vector<32x32xf32>
    %c0_84 = arith.constant 0 : index
    %c0_85 = arith.constant 0 : index
    %c0_86 = arith.constant 0 : index
    %179 = vector.load %arg17[%c0_84, %c0_85, %c0_86] : memref<1x1x32xf32, #tpu.memory_space<vmem>>, vector<1x1x32xf32>
    %180 = vector.shape_cast %179 : vector<1x1x32xf32> to vector<1x32xf32>
    %181 = vector.broadcast %180 : vector<1x32xf32> to vector<32x32xf32>
    %182 = arith.addf %178, %181 : vector<32x32xf32>
    %183 = arith.addf %153, %182 : vector<32x32xf32>
    %c0_87 = arith.constant 0 : index
    %c0_88 = arith.constant 0 : index
    %c0_89 = arith.constant 0 : index
    %184 = vector.load %arg18[%c0_87, %c0_88, %c0_89] : memref<1x1x32xf32, #tpu.memory_space<vmem>>, vector<1x1x32xf32>
    %185 = vector.shape_cast %184 : vector<1x1x32xf32> to vector<1x32xf32>
    %c0_90 = arith.constant 0 : index
    %c0_91 = arith.constant 0 : index
    %c0_92 = arith.constant 0 : index
    %186 = vector.load %arg19[%c0_90, %c0_91, %c0_92] : memref<1x1x32xf32, #tpu.memory_space<vmem>>, vector<1x1x32xf32>
    %187 = vector.shape_cast %186 : vector<1x1x32xf32> to vector<1x32xf32>
    %cst_93 = arith.constant dense<0.000000e+00> : vector<32xf32>
    %188 = vector.multi_reduction <add>, %183, %cst_93 [1] : vector<32x32xf32> to vector<32xf32>
    %189 = vector.shape_cast %188 : vector<32xf32> to vector<32x1xf32>
    %cst_94 = arith.constant 3.200000e+01 : f32
    %190 = vector.broadcast %cst_94 : f32 to vector<32x1xf32>
    %191 = arith.divf %189, %190 : vector<32x1xf32>
    %192 = vector.broadcast %191 : vector<32x1xf32> to vector<32x32xf32>
    %193 = arith.subf %183, %192 : vector<32x32xf32>
    %194 = arith.mulf %193, %193 : vector<32x32xf32>
    %cst_95 = arith.constant dense<0.000000e+00> : vector<32xf32>
    %195 = vector.multi_reduction <add>, %194, %cst_95 [1] : vector<32x32xf32> to vector<32xf32>
    %196 = vector.shape_cast %195 : vector<32xf32> to vector<32x1xf32>
    %cst_96 = arith.constant 3.200000e+01 : f32
    %197 = vector.broadcast %cst_96 : f32 to vector<32x1xf32>
    %198 = arith.divf %196, %197 : vector<32x1xf32>
    %199 = vector.broadcast %191 : vector<32x1xf32> to vector<32x32xf32>
    %200 = arith.subf %183, %199 : vector<32x32xf32>
    %cst_97 = arith.constant 9.99999974E-6 : f32
    %201 = vector.broadcast %cst_97 : f32 to vector<32x1xf32>
    %202 = arith.addf %198, %201 : vector<32x1xf32>
    %203 = math.rsqrt %202 : vector<32x1xf32>
    %204 = vector.broadcast %203 : vector<32x1xf32> to vector<32x32xf32>
    %205 = arith.mulf %200, %204 : vector<32x32xf32>
    %206 = vector.broadcast %185 : vector<1x32xf32> to vector<32x32xf32>
    %207 = arith.mulf %205, %206 : vector<32x32xf32>
    %208 = vector.broadcast %187 : vector<1x32xf32> to vector<32x32xf32>
    %209 = arith.addf %207, %208 : vector<32x32xf32>
    %c0_98 = arith.constant 0 : index
    %c0_99 = arith.constant 0 : index
    %210 = vector.load %arg27[%c0_98, %c0_99] : memref<32x32xf32, #tpu.memory_space<vmem>>, vector<32x32xf32>
    tpu.vector_store %arg27[%c0_98, %c0_99], %209 {strides = array<i32>} : memref<32x32xf32, #tpu.memory_space<vmem>>, vector<32x32xf32>,
    %c1_i32 = arith.constant 1 : i32
    %211 = arith.cmpi eq, %arg1, %c1_i32 : i32
    %212 = arith.extui %211 : i1 to i32
    %c0_i32_100 = arith.constant 0 : i32
    %213 = arith.cmpi ne, %212, %c0_i32_100 : i32
    scf.if %213 {
      %214 = arith.truncf %209 : vector<32x32xf32> to vector<32x32xbf16>
      %c0_101 = arith.constant 0 : index
      %c0_102 = arith.constant 0 : index
      %215 = vector.load %arg20[%c0_101, %c0_102] : memref<32x32xbf16, #tpu.memory_space<vmem>>, vector<32x32xbf16>
      %cst_103 = arith.constant dense<0.000000e+00> : vector<32x32xf32>
      %216 = tpu.matmul %214, %215, %cst_103 {dimension_numbers = #tpu.dot_dimension_numbers<[1], [0], [0], [1], [0, 0, 1, 1], [], []>} : vector<32x32xbf16>, vector<32x32xbf16>, vector<32x32xf32> -> vector<32x32xf32>
      %c0_104 = arith.constant 0 : index
      %c0_105 = arith.constant 0 : index
      %217 = vector.load %arg21[%c0_104, %c0_105] : memref<1x32xf32, #tpu.memory_space<vmem>>, vector<1x32xf32>
      %218 = vector.broadcast %217 : vector<1x32xf32> to vector<32x32xf32>
      %219 = arith.addf %216, %218 : vector<32x32xf32>
      %220 = arith.mulf %219, %219 : vector<32x32xf32>
      %221 = arith.mulf %219, %220 : vector<32x32xf32>
      %cst_106 = arith.constant 4.471500e-02 : f32
      %222 = vector.broadcast %cst_106 : f32 to vector<32x32xf32>
      %223 = arith.mulf %222, %221 : vector<32x32xf32>
      %224 = arith.addf %219, %223 : vector<32x32xf32>
      %cst_107 = arith.constant 0.797884583 : f32
      %225 = vector.broadcast %cst_107 : f32 to vector<32x32xf32>
      %226 = arith.mulf %225, %224 : vector<32x32xf32>
      %227 = math.tanh %226 : vector<32x32xf32>
      %cst_108 = arith.constant 1.000000e+00 : f32
      %228 = vector.broadcast %cst_108 : f32 to vector<32x32xf32>
      %229 = arith.addf %228, %227 : vector<32x32xf32>
      %cst_109 = arith.constant 5.000000e-01 : f32
      %230 = vector.broadcast %cst_109 : f32 to vector<32x32xf32>
      %231 = arith.mulf %230, %229 : vector<32x32xf32>
      %232 = arith.mulf %219, %231 : vector<32x32xf32>
      %c0_110 = arith.constant 0 : index
      %c0_111 = arith.constant 0 : index
      %233 = vector.load %arg22[%c0_110, %c0_111] : memref<1x32xf32, #tpu.memory_space<vmem>>, vector<1x32xf32>
      %c0_112 = arith.constant 0 : index
      %c0_113 = arith.constant 0 : index
      %234 = vector.load %arg23[%c0_112, %c0_113] : memref<1x32xf32, #tpu.memory_space<vmem>>, vector<1x32xf32>
      %cst_114 = arith.constant dense<0.000000e+00> : vector<32xf32>
      %235 = vector.multi_reduction <add>, %232, %cst_114 [1] : vector<32x32xf32> to vector<32xf32>
      %236 = vector.shape_cast %235 : vector<32xf32> to vector<32x1xf32>
      %cst_115 = arith.constant 3.200000e+01 : f32
      %237 = vector.broadcast %cst_115 : f32 to vector<32x1xf32>
      %238 = arith.divf %236, %237 : vector<32x1xf32>
      %239 = vector.broadcast %238 : vector<32x1xf32> to vector<32x32xf32>
      %240 = arith.subf %232, %239 : vector<32x32xf32>
      %241 = arith.mulf %240, %240 : vector<32x32xf32>
      %cst_116 = arith.constant dense<0.000000e+00> : vector<32xf32>
      %242 = vector.multi_reduction <add>, %241, %cst_116 [1] : vector<32x32xf32> to vector<32xf32>
      %243 = vector.shape_cast %242 : vector<32xf32> to vector<32x1xf32>
      %cst_117 = arith.constant 3.200000e+01 : f32
      %244 = vector.broadcast %cst_117 : f32 to vector<32x1xf32>
      %245 = arith.divf %243, %244 : vector<32x1xf32>
      %246 = vector.broadcast %238 : vector<32x1xf32> to vector<32x32xf32>
      %247 = arith.subf %232, %246 : vector<32x32xf32>
      %cst_118 = arith.constant 9.99999974E-6 : f32
      %248 = vector.broadcast %cst_118 : f32 to vector<32x1xf32>
      %249 = arith.addf %245, %248 : vector<32x1xf32>
      %250 = math.rsqrt %249 : vector<32x1xf32>
      %251 = vector.broadcast %250 : vector<32x1xf32> to vector<32x32xf32>
      %252 = arith.mulf %247, %251 : vector<32x32xf32>
      %253 = vector.broadcast %233 : vector<1x32xf32> to vector<32x32xf32>
      %254 = arith.mulf %252, %253 : vector<32x32xf32>
      %255 = vector.broadcast %234 : vector<1x32xf32> to vector<32x32xf32>
      %256 = arith.addf %254, %255 : vector<32x32xf32>
      %257 = arith.truncf %256 : vector<32x32xf32> to vector<32x32xbf16>
      %c0_119 = arith.constant 0 : index
      %c0_120 = arith.constant 0 : index
      %258 = vector.load %arg24[%c0_119, %c0_120] : memref<32x128xbf16, #tpu.memory_space<vmem>>, vector<32x128xbf16>
      %cst_121 = arith.constant dense<0.000000e+00> : vector<32x128xf32>
      %259 = tpu.matmul %257, %258, %cst_121 {dimension_numbers = #tpu.dot_dimension_numbers<[1], [0], [0], [1], [0, 0, 1, 1], [], []>} : vector<32x32xbf16>, vector<32x128xbf16>, vector<32x128xf32> -> vector<32x128xf32>
      %c0_122 = arith.constant 0 : index
      %c0_123 = arith.constant 0 : index
      %260 = vector.load %arg25[%c0_122, %c0_123] : memref<1x128xf32, #tpu.memory_space<vmem>>, vector<1x128xf32>
      %261 = vector.broadcast %260 : vector<1x128xf32> to vector<32x128xf32>
      %262 = arith.addf %259, %261 : vector<32x128xf32>
      %263 = vector.shape_cast %262 : vector<32x128xf32> to vector<2x16x128xf32>
      %c0_124 = arith.constant 0 : index
      %c0_125 = arith.constant 0 : index
      %c0_126 = arith.constant 0 : index
      %264 = vector.load %arg26[%c0_124, %c0_125, %c0_126] : memref<2x16x128xf32, #tpu.memory_space<vmem>>, vector<2x16x128xf32>
      tpu.vector_store %arg26[%c0_124, %c0_125, %c0_126], %263 {strides = array<i32>} : memref<2x16x128xf32, #tpu.memory_space<vmem>>, vector<2x16x128xf32>,
    } else {
    }
    return
  }
  func.func @transform_0(%arg0: i32, %arg1: i32) -> (i32, i32, i32) {
    %c0_i32 = arith.constant 0 : i32
    %c0_i32_0 = arith.constant 0 : i32
    %c0_i32_1 = arith.constant 0 : i32
    return %arg0, %c0_i32, %c0_i32_0 : i32, i32, i32
  }
  func.func @transform_1(%arg0: i32, %arg1: i32) -> (i32, i32, i32, i32) {
    %c0_i32 = arith.constant 0 : i32
    %c0_i32_0 = arith.constant 0 : i32
    %c0_i32_1 = arith.constant 0 : i32
    %c0_i32_2 = arith.constant 0 : i32
    return %c0_i32, %arg0, %c0_i32_0, %c0_i32_1 : i32, i32, i32, i32
  }
  func.func @transform_2(%arg0: i32, %arg1: i32) -> (i32, i32, i32) {
    %c0_i32 = arith.constant 0 : i32
    %c0_i32_0 = arith.constant 0 : i32
    %c0_i32_1 = arith.constant 0 : i32
    return %arg1, %c0_i32, %c0_i32_0 : i32, i32, i32
  }
  func.func @transform_3(%arg0: i32, %arg1: i32) -> (i32, i32, i32) {
    %c0_i32 = arith.constant 0 : i32
    %c0_i32_0 = arith.constant 0 : i32
    %c0_i32_1 = arith.constant 0 : i32
    return %arg1, %c0_i32, %c0_i32_0 : i32, i32, i32
  }
  func.func @transform_4(%arg0: i32, %arg1: i32) -> (i32, i32, i32) {
    %c0_i32 = arith.constant 0 : i32
    %c0_i32_0 = arith.constant 0 : i32
    %c0_i32_1 = arith.constant 0 : i32
    return %arg1, %c0_i32, %c0_i32_0 : i32, i32, i32
  }
  func.func @transform_5(%arg0: i32, %arg1: i32) -> (i32, i32, i32) {
    %c0_i32 = arith.constant 0 : i32
    %c0_i32_0 = arith.constant 0 : i32
    %c0_i32_1 = arith.constant 0 : i32
    return %arg1, %c0_i32, %c0_i32_0 : i32, i32, i32
  }
  func.func @transform_6(%arg0: i32, %arg1: i32) -> (i32, i32, i32) {
    %c0_i32 = arith.constant 0 : i32
    %c0_i32_0 = arith.constant 0 : i32
    %c0_i32_1 = arith.constant 0 : i32
    return %arg1, %c0_i32, %c0_i32_0 : i32, i32, i32
  }
  func.func @transform_7(%arg0: i32, %arg1: i32) -> (i32, i32, i32) {
    %c0_i32 = arith.constant 0 : i32
    %c0_i32_0 = arith.constant 0 : i32
    %c0_i32_1 = arith.constant 0 : i32
    return %arg1, %c0_i32, %c0_i32_0 : i32, i32, i32
  }
  func.func @transform_8(%arg0: i32, %arg1: i32) -> (i32, i32, i32) {
    %c0_i32 = arith.constant 0 : i32
    %c0_i32_0 = arith.constant 0 : i32
    %c0_i32_1 = arith.constant 0 : i32
    return %arg1, %c0_i32, %c0_i32_0 : i32, i32, i32
  }
  func.func @transform_9(%arg0: i32, %arg1: i32) -> (i32, i32, i32) {
    %c0_i32 = arith.constant 0 : i32
    %c0_i32_0 = arith.constant 0 : i32
    %c0_i32_1 = arith.constant 0 : i32
    return %arg1, %c0_i32, %c0_i32_0 : i32, i32, i32
  }
  func.func @transform_10(%arg0: i32, %arg1: i32) -> (i32, i32, i32) {
    %c0_i32 = arith.constant 0 : i32
    %c0_i32_0 = arith.constant 0 : i32
    %c0_i32_1 = arith.constant 0 : i32
    return %arg1, %c0_i32, %c0_i32_0 : i32, i32, i32
  }
  func.func @transform_11(%arg0: i32, %arg1: i32) -> (i32, i32, i32) {
    %c0_i32 = arith.constant 0 : i32
    %c0_i32_0 = arith.constant 0 : i32
    %c0_i32_1 = arith.constant 0 : i32
    return %arg1, %c0_i32, %c0_i32_0 : i32, i32, i32
  }
  func.func @transform_12(%arg0: i32, %arg1: i32) -> (i32, i32, i32) {
    %c0_i32 = arith.constant 0 : i32
    %c0_i32_0 = arith.constant 0 : i32
    %c0_i32_1 = arith.constant 0 : i32
    return %arg1, %c0_i32, %c0_i32_0 : i32, i32, i32
  }
  func.func @transform_13(%arg0: i32, %arg1: i32) -> (i32, i32, i32) {
    %c0_i32 = arith.constant 0 : i32
    %c0_i32_0 = arith.constant 0 : i32
    %c0_i32_1 = arith.constant 0 : i32
    return %arg1, %c0_i32, %c0_i32_0 : i32, i32, i32
  }
  func.func @transform_14(%arg0: i32, %arg1: i32) -> (i32, i32, i32) {
    %c0_i32 = arith.constant 0 : i32
    %c0_i32_0 = arith.constant 0 : i32
    %c0_i32_1 = arith.constant 0 : i32
    return %arg1, %c0_i32, %c0_i32_0 : i32, i32, i32
  }
  func.func @transform_15(%arg0: i32, %arg1: i32) -> (i32, i32, i32) {
    %c0_i32 = arith.constant 0 : i32
    %c0_i32_0 = arith.constant 0 : i32
    %c0_i32_1 = arith.constant 0 : i32
    return %arg1, %c0_i32, %c0_i32_0 : i32, i32, i32
  }
  func.func @transform_16(%arg0: i32, %arg1: i32) -> (i32, i32, i32) {
    %c0_i32 = arith.constant 0 : i32
    %c0_i32_0 = arith.constant 0 : i32
    %c0_i32_1 = arith.constant 0 : i32
    return %arg1, %c0_i32, %c0_i32_0 : i32, i32, i32
  }
  func.func @transform_17(%arg0: i32, %arg1: i32) -> (i32, i32, i32) {
    %c0_i32 = arith.constant 0 : i32
    %c0_i32_0 = arith.constant 0 : i32
    %c0_i32_1 = arith.constant 0 : i32
    return %arg1, %c0_i32, %c0_i32_0 : i32, i32, i32
  }
  func.func @transform_18(%arg0: i32, %arg1: i32) -> (i32, i32) {
    %c0_i32 = arith.constant 0 : i32
    %c0_i32_0 = arith.constant 0 : i32
    %c0_i32_1 = arith.constant 0 : i32
    return %c0_i32, %c0_i32_0 : i32, i32
  }
  func.func @transform_19(%arg0: i32, %arg1: i32) -> (i32, i32) {
    %c0_i32 = arith.constant 0 : i32
    %c0_i32_0 = arith.constant 0 : i32
    %c0_i32_1 = arith.constant 0 : i32
    return %c0_i32, %c0_i32_0 : i32, i32
  }
  func.func @transform_20(%arg0: i32, %arg1: i32) -> (i32, i32) {
    %c0_i32 = arith.constant 0 : i32
    %c0_i32_0 = arith.constant 0 : i32
    %c0_i32_1 = arith.constant 0 : i32
    return %c0_i32, %c0_i32_0 : i32, i32
  }
  func.func @transform_21(%arg0: i32, %arg1: i32) -> (i32, i32) {
    %c0_i32 = arith.constant 0 : i32
    %c0_i32_0 = arith.constant 0 : i32
    %c0_i32_1 = arith.constant 0 : i32
    return %c0_i32, %c0_i32_0 : i32, i32
  }
  func.func @transform_22(%arg0: i32, %arg1: i32) -> (i32, i32) {
    %c0_i32 = arith.constant 0 : i32
    %c0_i32_0 = arith.constant 0 : i32
    %c0_i32_1 = arith.constant 0 : i32
    return %c0_i32, %c0_i32_0 : i32, i32
  }
  func.func @transform_23(%arg0: i32, %arg1: i32) -> (i32, i32) {
    %c0_i32 = arith.constant 0 : i32
    %c0_i32_0 = arith.constant 0 : i32
    %c0_i32_1 = arith.constant 0 : i32
    return %c0_i32, %c0_i32_0 : i32, i32
  }
  func.func @transform_24(%arg0: i32, %arg1: i32) -> (i32, i32, i32) {
    %c0_i32 = arith.constant 0 : i32
    %c0_i32_0 = arith.constant 0 : i32
    %c0_i32_1 = arith.constant 0 : i32
    return %arg0, %c0_i32, %c0_i32_0 : i32, i32, i32
  }
}

</mosaic_0001>

<llo_original>
// kernel: tpu_custom_call.1
$region0: #{tpu_custom_call.1}
  #allocation0 [shape = 'u32[]', space=smem, size = 0x4, offset = 0x4, fixed_abs, tag = 'smem constant byte address 0x4 - core index']
  #allocation1 [shape = 'u32[144,128]{1,0:T(1,128)}', space=vmem, size = 0x12000, scoped, tag = 'internal scratch']
  #allocation2 [shape = 'f32[32,32]{1,0:T(8,128)}', space=vmem, size = 0x4000, scoped, tag = 'scratch operand']
  %s0 = inlined_call_operand.vmem [shape: f32[2,16,32], index: 0, kind: input, shape index: {}]
  %s1 = inlined_call_operand.hbm [shape: f32[4,2,16,16], index: 1, kind: input, shape index: {}]
  %s2 = inlined_call_operand.vmem [shape: bf16[2,32,32], index: 2, kind: input, shape index: {}]
  %s3 = inlined_call_operand.hbm [shape: f32[2,1,32], index: 3, kind: input, shape index: {}]
  %s4 = inlined_call_operand.vmem [shape: bf16[2,32,32], index: 4, kind: input, shape index: {}]
  %s5 = inlined_call_operand.hbm [shape: f32[2,1,32], index: 5, kind: input, shape index: {}]
  %s6 = inlined_call_operand.hbm [shape: bf16[2,32,32], index: 6, kind: input, shape index: {}]
  %s7 = inlined_call_operand.hbm [shape: f32[2,1,32], index: 7, kind: input, shape index: {}]
  %s8 = inlined_call_operand.hbm [shape: bf16[2,32,32], index: 8, kind: input, shape index: {}]
  %s9 = inlined_call_operand.hbm [shape: f32[2,1,32], index: 9, kind: input, shape index: {}]
  %s10 = inlined_call_operand.hbm [shape: f32[2,1,32], index: 10, kind: input, shape index: {}]
  %s11 = inlined_call_operand.hbm [shape: f32[2,1,32], index: 11, kind: input, shape index: {}]
  %s12 = inlined_call_operand.hbm [shape: bf16[2,32,64], index: 12, kind: input, shape index: {}]
  %s13 = inlined_call_operand.hbm [shape: f32[2,1,64], index: 13, kind: input, shape index: {}]
  %s14 = inlined_call_operand.vmem [shape: bf16[2,64,32], index: 14, kind: input, shape index: {}]
  %s15 = inlined_call_operand.hbm [shape: f32[2,1,32], index: 15, kind: input, shape index: {}]
  %s16 = inlined_call_operand.hbm [shape: f32[2,1,32], index: 16, kind: input, shape index: {}]
  %s17 = inlined_call_operand.hbm [shape: f32[2,1,32], index: 17, kind: input, shape index: {}]
  %s18 = inlined_call_operand.vmem [shape: bf16[32,32], index: 18, kind: input, shape index: {}]
  %s19 = inlined_call_operand.vmem [shape: f32[1,32], index: 19, kind: input, shape index: {}]
  %s20 = inlined_call_operand.vmem [shape: f32[1,32], index: 20, kind: input, shape index: {}]
  %s21 = inlined_call_operand.vmem [shape: f32[1,32], index: 21, kind: input, shape index: {}]
  %s22 = inlined_call_operand.vmem [shape: bf16[32,128], index: 22, kind: input, shape index: {}]
  %s23 = inlined_call_operand.vmem [shape: f32[1,128], index: 23, kind: input, shape index: {}]
  %s24 = inlined_call_operand.hbm [shape: f32[2,16,128], index: 24, kind: output, shape index: {}]
  %s25 = sld [smem:[#allocation0]]
  $region193: #{tpu_custom_call.1} parent=0
    _
  %s27 = ssub.s32 1, %s25
  %s28 = scalar_select 0, %s27, %s25
  $region1: #{tpu_custom_call.1} parent=0
    #allocation3 [shape = 'u8[65536]{0}', space=vmem, size = 0x10000, scoped, tag = 'input window, operand 1, single buffered']
    #allocation4 [shape = 's32[2]{0}', space=sflag, size = 0x8, scoped, tag = 'scoped memory for tpu_custom_call.1']
    #allocation5 [shape = 's32[2]{0}', space=sflag, size = 0x8, scoped, tag = 'scoped memory for tpu_custom_call.1']
    #allocation6 [shape = 'u8[1024]{0}', space=vmem, size = 0x400, scoped, tag = 'input window, operand 3']
    #allocation7 [shape = 's32[2]{0}', space=sflag, size = 0x8, scoped, tag = 'scoped memory for tpu_custom_call.1']
    #allocation8 [shape = 'u8[1024]{0}', space=vmem, size = 0x400, scoped, tag = 'input window, operand 5']
    #allocation9 [shape = 'u8[16384]{0}', space=vmem, size = 0x4000, scoped, tag = 'input window, operand 6']
    #allocation10 [shape = 's32[2]{0}', space=sflag, size = 0x8, scoped, tag = 'scoped memory for tpu_custom_call.1']
    #allocation11 [shape = 'u8[1024]{0}', space=vmem, size = 0x400, scoped, tag = 'input window, operand 7']
    #allocation12 [shape = 'u8[16384]{0}', space=vmem, size = 0x4000, scoped, tag = 'input window, operand 8']
    #allocation13 [shape = 's32[2]{0}', space=sflag, size = 0x8, scoped, tag = 'scoped memory for tpu_custom_call.1']
    #allocation14 [shape = 'u8[1024]{0}', space=vmem, size = 0x400, scoped, tag = 'input window, operand 9']
    #allocation15 [shape = 'u8[1024]{0}', space=vmem, size = 0x400, scoped, tag = 'input window, operand 10']
    #allocation16 [shape = 's32[2]{0}', space=sflag, size = 0x8, scoped, tag = 'scoped memory for tpu_custom_call.1']
    #allocation17 [shape = 'u8[1024]{0}', space=vmem, size = 0x400, scoped, tag = 'input window, operand 11']
    #allocation18 [shape = 'u8[16384]{0}', space=vmem, size = 0x4000, scoped, tag = 'input window, operand 12']
    #allocation19 [shape = 's32[2]{0}', space=sflag, size = 0x8, scoped, tag = 'scoped memory for tpu_custom_call.1']
    #allocation20 [shape = 'u8[1024]{0}', space=vmem, size = 0x400, scoped, tag = 'input window, operand 13']
    #allocation21 [shape = 'u8[1024]{0}', space=vmem, size = 0x400, scoped, tag = 'input window, operand 15']
    #allocation22 [shape = 's32[2]{0}', space=sflag, size = 0x8, scoped, tag = 'scoped memory for tpu_custom_call.1']
    #allocation23 [shape = 'u8[1024]{0}', space=vmem, size = 0x400, scoped, tag = 'input window, operand 16']
    #allocation24 [shape = 'u8[1024]{0}', space=vmem, size = 0x400, scoped, tag = 'input window, operand 17']
    #allocation25 [shape = 's32[2]{0}', space=sflag, size = 0x8, scoped, tag = 'scoped memory for tpu_custom_call.1']
    #allocation26 [shape = 'u8[16384]{0}', space=vmem, size = 0x4000, scoped, tag = 'output window, operand 0, single buffered']
    %29 = vsyncpa [#allocation4], 0
    %30 = vsyncpa [#allocation7], 0
    %s31 = scalar_lea.sflag [#allocation7], 1
    %32 = vsyncpa %s31, 0
    %33 = vsyncpa [#allocation10], 0
    %s34 = scalar_lea.sflag [#allocation10], 1
    %35 = vsyncpa %s34, 0
    %36 = vsyncpa [#allocation13], 0
    %s37 = scalar_lea.sflag [#allocation13], 1
    %38 = vsyncpa %s37, 0
    %39 = vsyncpa [#allocation16], 0
    %s40 = scalar_lea.sflag [#allocation16], 1
    %41 = vsyncpa %s40, 0
    %42 = vsyncpa [#allocation19], 0
    %s43 = scalar_lea.sflag [#allocation19], 1
    %44 = vsyncpa %s43, 0
    %45 = vsyncpa [#allocation22], 0
    %s46 = scalar_lea.sflag [#allocation22], 1
    %47 = vsyncpa %s46, 0
    %48 = vsyncpa [#allocation25], 0
    %s49 = scalar_lea.sflag [#allocation25], 1
    %50 = vsyncpa %s49, 0
    %51 = vsyncpa [#allocation5], 0
    loop: start=0, step=1, limit=4
    $region2: #{tpu_custom_call.1} parent=1 // loop_pre_header
      _
    $region3: #{tpu_custom_call.1} parent=1 // loop_header
      %s53 = sphi 0, %s57
      %p54 = scmp.ge.s32.totalorder %s53, 4
      %s60 = sphi 0, %s72
      %s61 = sphi 0, %s68
      %s62 = sphi 0, %s60
      %s63 = sphi 0, %s61
      %s64 = sphi 0, %s62
      %s65 = sphi 0, %s63
      %s75 = sphi 0, %s77
      %s78 = sphi 0, %s75
      %s79 = sphi 0, %s78
      %s95 = sphi 0, %s79
      %s101 = sphi 0, %s103
      %s104 = sphi 0, %s101
      %s105 = sphi 0, %s104
      %s121 = sphi 0, %s105
      %s127 = sphi 0, %s129
      %s130 = sphi 0, %s127
      %s131 = sphi 0, %s130
      %s147 = sphi 0, %s131
      %s153 = sphi 0, %s155
      %s156 = sphi 0, %s153
      %s157 = sphi 0, %s156
      %s173 = sphi 0, %s157
      %s179 = sphi 0, %s181
      %s182 = sphi 0, %s179
      %s183 = sphi 0, %s182
      %s199 = sphi 0, %s183
      %s205 = sphi 0, %s207
      %s208 = sphi 0, %s205
      %s209 = sphi 0, %s208
      %s225 = sphi 0, %s209
      %s231 = sphi 0, %s233
      %s234 = sphi 0, %s231
      %s235 = sphi 0, %s234
      %s251 = sphi 0, %s235
      %s257 = sphi 0, %s259
      %s260 = sphi 0, %s257
      %s261 = sphi 0, %s260
      %s277 = sphi 0, %s261
      %s283 = sphi 0, %s285
      %s286 = sphi 0, %s283
      %s287 = sphi 0, %s286
      %s303 = sphi 0, %s287
      %s309 = sphi 0, %s311
      %s312 = sphi 0, %s309
      %s313 = sphi 0, %s312
      %s329 = sphi 0, %s313
      %s335 = sphi 0, %s337
      %s338 = sphi 0, %s335
      %s339 = sphi 0, %s338
      %s355 = sphi 0, %s339
      %s361 = sphi 0, %s363
      %s364 = sphi 0, %s361
      %s365 = sphi 0, %s364
      %s381 = sphi 0, %s365
      %s387 = sphi 0, %s389
      %s390 = sphi 0, %s387
      %s391 = sphi 0, %s390
      %s407 = sphi 0, %s391
      %s413 = sphi 0, %s415
      %s416 = sphi 0, %s413
      %s417 = sphi 0, %s416
      %s433 = sphi 0, %s417
      %s439 = sphi 0, %s441
      %s442 = sphi 0, %s439
      %s443 = sphi 0, %s442
      %s459 = sphi 0, %s443
      %s465 = sphi 0, %s467
      %s468 = sphi 0, %s465
      %s469 = sphi 0, %s468
      %s485 = sphi 0, %s469
      %s491 = sphi 0, %s493
      %s494 = sphi 0, %s491
      %s495 = sphi 0, %s494
      %s511 = sphi 0, %s495
      %s517 = sphi 0, %s519
      %s520 = sphi 0, %s517
      %s521 = sphi 0, %s520
      %s537 = sphi 0, %s521
      %s541 = sphi 0, %s541
      %s543 = sphi 0, %s541
      %s544 = sphi 0, %s543
      %s558 = sphi 0, %s544
      %s562 = sphi 0, %s562
      %s564 = sphi 0, %s562
      %s565 = sphi 0, %s564
      %s579 = sphi 0, %s565
      %s583 = sphi 0, %s583
      %s585 = sphi 0, %s583
      %s586 = sphi 0, %s585
      %s600 = sphi 0, %s586
      %s604 = sphi 0, %s604
      %s606 = sphi 0, %s604
      %s607 = sphi 0, %s606
      %s621 = sphi 0, %s607
      %s625 = sphi 0, %s625
      %s627 = sphi 0, %s625
      %s628 = sphi 0, %s627
      %s642 = sphi 0, %s628
      %s646 = sphi 0, %s646
      %s648 = sphi 0, %s646
      %s649 = sphi 0, %s648
      %s663 = sphi 0, %s649
      %s669 = sphi 0, %s671
      %s672 = sphi 0, %s669
      %s673 = sphi 0, %s672
      %s689 = sphi 0, %s673
    $region4: #{tpu_custom_call.1} parent=1 // loop_header_branch
      %56 = sbr.rel (%p54) target = $region8
    $region5: #{tpu_custom_call.1} parent=1 // loop_body
      %s58 = ssub.s32 %s53, 1
      %s59 = ssub.s32 %s53, 2
      %s66 = sadd.s32 1, %s61
      %p67 = scmp.ge.s32.totalorder %s66, 2
      %s68 = scalar_select %p67, 0, %s66
      %s69 = sadd.s32 1, %s60
      %s70 = scalar_select %p67, %s69, %s60
      %p71 = scmp.ge.s32.totalorder %s70, 1
      %s72 = scalar_select %p71, 0, %s70
      %s73 = ssub.s32 %s60, %s72
      %p74 = scmp.eq.s32.totalorder %s73, 0
      %s76 = sadd.s32 %s75, 1
      %s77 = scalar_select %p74, %s75, %s76
      %p80 = pneg %p74
      %p81 = scmp.eq.s32.totalorder %s53, 1
      %p82 = por %p80, %p81
      %p83 = scmp.ne.s32.totalorder %s75, %s78
      %p84 = scmp.eq.s32.totalorder %s53, 0
      %p85 = por %p83, %p84
      %p86 = scmp.ne.s32.totalorder %s75, %s78
      %p87 = scmp.eq.s32.totalorder %s58, 1
      %p88 = por %p86, %p87
      %p89 = scmp.ne.s32.totalorder %s78, %s79
      %p90 = scmp.eq.s32.totalorder %s58, 0
      %p91 = por %p89, %p90
      %p92 = scmp.ne.s32.totalorder %s78, %s79
      %p93 = scmp.eq.s32.totalorder %s59, 1
      %p94 = por %p92, %p93
      %p96 = scmp.ne.s32.totalorder %s79, %s95
      %p97 = scmp.eq.s32.totalorder %s59, 0
      %p98 = por %p96, %p97
      %s99 = ssub.s32 %s60, %s72
      %p100 = scmp.eq.s32.totalorder %s99, 0
      %s102 = sadd.s32 %s101, 1
      %s103 = scalar_select %p100, %s101, %s102
      %p106 = pneg %p100
      %p107 = scmp.eq.s32.totalorder %s53, 1
      %p108 = por %p106, %p107
      %p109 = scmp.ne.s32.totalorder %s101, %s104
      %p110 = scmp.eq.s32.totalorder %s53, 0
      %p111 = por %p109, %p110
      %p112 = scmp.ne.s32.totalorder %s101, %s104
      %p113 = scmp.eq.s32.totalorder %s58, 1
      %p114 = por %p112, %p113
      %p115 = scmp.ne.s32.totalorder %s104, %s105
      %p116 = scmp.eq.s32.totalorder %s58, 0
      %p117 = por %p115, %p116
      %p118 = scmp.ne.s32.totalorder %s104, %s105
      %p119 = scmp.eq.s32.totalorder %s59, 1
      %p120 = por %p118, %p119
      %p122 = scmp.ne.s32.totalorder %s105, %s121
      %p123 = scmp.eq.s32.totalorder %s59, 0
      %p124 = por %p122, %p123
      %s125 = ssub.s32 %s61, %s68
      %p126 = scmp.eq.s32.totalorder %s125, 0
      %s128 = sadd.s32 %s127, 1
      %s129 = scalar_select %p126, %s127, %s128
      %p132 = pneg %p126
      %p133 = scmp.eq.s32.totalorder %s53, 1
      %p134 = por %p132, %p133
      %p135 = scmp.ne.s32.totalorder %s127, %s130
      %p136 = scmp.eq.s32.totalorder %s53, 0
      %p137 = por %p135, %p136
      %p138 = scmp.ne.s32.totalorder %s127, %s130
      %p139 = scmp.eq.s32.totalorder %s58, 1
      %p140 = por %p138, %p139
      %p141 = scmp.ne.s32.totalorder %s130, %s131
      %p142 = scmp.eq.s32.totalorder %s58, 0
      %p143 = por %p141, %p142
      %p144 = scmp.ne.s32.totalorder %s130, %s131
      %p145 = scmp.eq.s32.totalorder %s59, 1
      %p146 = por %p144, %p145
      %p148 = scmp.ne.s32.totalorder %s131, %s147
      %p149 = scmp.eq.s32.totalorder %s59, 0
      %p150 = por %p148, %p149
      %s151 = ssub.s32 %s61, %s68
      %p152 = scmp.eq.s32.totalorder %s151, 0
      %s154 = sadd.s32 %s153, 1
      %s155 = scalar_select %p152, %s153, %s154
      %p158 = pneg %p152
      %p159 = scmp.eq.s32.totalorder %s53, 1
      %p160 = por %p158, %p159
      %p161 = scmp.ne.s32.totalorder %s153, %s156
      %p162 = scmp.eq.s32.totalorder %s53, 0
      %p163 = por %p161, %p162
      %p164 = scmp.ne.s32.totalorder %s153, %s156
      %p165 = scmp.eq.s32.totalorder %s58, 1
      %p166 = por %p164, %p165
      %p167 = scmp.ne.s32.totalorder %s156, %s157
      %p168 = scmp.eq.s32.totalorder %s58, 0
      %p169 = por %p167, %p168
      %p170 = scmp.ne.s32.totalorder %s156, %s157
      %p171 = scmp.eq.s32.totalorder %s59, 1
      %p172 = por %p170, %p171
      %p174 = scmp.ne.s32.totalorder %s157, %s173
      %p175 = scmp.eq.s32.totalorder %s59, 0
      %p176 = por %p174, %p175
      %s177 = ssub.s32 %s61, %s68
      %p178 = scmp.eq.s32.totalorder %s177, 0
      %s180 = sadd.s32 %s179, 1
      %s181 = scalar_select %p178, %s179, %s180
      %p184 = pneg %p178
      %p185 = scmp.eq.s32.totalorder %s53, 1
      %p186 = por %p184, %p185
      %p187 = scmp.ne.s32.totalorder %s179, %s182
      %p188 = scmp.eq.s32.totalorder %s53, 0
      %p189 = por %p187, %p188
      %p190 = scmp.ne.s32.totalorder %s179, %s182
      %p191 = scmp.eq.s32.totalorder %s58, 1
      %p192 = por %p190, %p191
      %p193 = scmp.ne.s32.totalorder %s182, %s183
      %p194 = scmp.eq.s32.totalorder %s58, 0
      %p195 = por %p193, %p194
      %p196 = scmp.ne.s32.totalorder %s182, %s183
      %p197 = scmp.eq.s32.totalorder %s59, 1
      %p198 = por %p196, %p197
      %p200 = scmp.ne.s32.totalorder %s183, %s199
      %p201 = scmp.eq.s32.totalorder %s59, 0
      %p202 = por %p200, %p201
      %s203 = ssub.s32 %s61, %s68
      %p204 = scmp.eq.s32.totalorder %s203, 0
      %s206 = sadd.s32 %s205, 1
      %s207 = scalar_select %p204, %s205, %s206
      %p210 = pneg %p204
      %p211 = scmp.eq.s32.totalorder %s53, 1
      %p212 = por %p210, %p211
      %p213 = scmp.ne.s32.totalorder %s205, %s208
      %p214 = scmp.eq.s32.totalorder %s53, 0
      %p215 = por %p213, %p214
      %p216 = scmp.ne.s32.totalorder %s205, %s208
      %p217 = scmp.eq.s32.totalorder %s58, 1
      %p218 = por %p216, %p217
      %p219 = scmp.ne.s32.totalorder %s208, %s209
      %p220 = scmp.eq.s32.totalorder %s58, 0
      %p221 = por %p219, %p220
      %p222 = scmp.ne.s32.totalorder %s208, %s209
      %p223 = scmp.eq.s32.totalorder %s59, 1
      %p224 = por %p222, %p223
      %p226 = scmp.ne.s32.totalorder %s209, %s225
      %p227 = scmp.eq.s32.totalorder %s59, 0
      %p228 = por %p226, %p227
      %s229 = ssub.s32 %s61, %s68
      %p230 = scmp.eq.s32.totalorder %s229, 0
      %s232 = sadd.s32 %s231, 1
      %s233 = scalar_select %p230, %s231, %s232
      %p236 = pneg %p230
      %p237 = scmp.eq.s32.totalorder %s53, 1
      %p238 = por %p236, %p237
      %p239 = scmp.ne.s32.totalorder %s231, %s234
      %p240 = scmp.eq.s32.totalorder %s53, 0
      %p241 = por %p239, %p240
      %p242 = scmp.ne.s32.totalorder %s231, %s234
      %p243 = scmp.eq.s32.totalorder %s58, 1
      %p244 = por %p242, %p243
      %p245 = scmp.ne.s32.totalorder %s234, %s235
      %p246 = scmp.eq.s32.totalorder %s58, 0
      %p247 = por %p245, %p246
      %p248 = scmp.ne.s32.totalorder %s234, %s235
      %p249 = scmp.eq.s32.totalorder %s59, 1
      %p250 = por %p248, %p249
      %p252 = scmp.ne.s32.totalorder %s235, %s251
      %p253 = scmp.eq.s32.totalorder %s59, 0
      %p254 = por %p252, %p253
      %s255 = ssub.s32 %s61, %s68
      %p256 = scmp.eq.s32.totalorder %s255, 0
      %s258 = sadd.s32 %s257, 1
      %s259 = scalar_select %p256, %s257, %s258
      %p262 = pneg %p256
      %p263 = scmp.eq.s32.totalorder %s53, 1
      %p264 = por %p262, %p263
      %p265 = scmp.ne.s32.totalorder %s257, %s260
      %p266 = scmp.eq.s32.totalorder %s53, 0
      %p267 = por %p265, %p266
      %p268 = scmp.ne.s32.totalorder %s257, %s260
      %p269 = scmp.eq.s32.totalorder %s58, 1
      %p270 = por %p268, %p269
      %p271 = scmp.ne.s32.totalorder %s260, %s261
      %p272 = scmp.eq.s32.totalorder %s58, 0
      %p273 = por %p271, %p272
      %p274 = scmp.ne.s32.totalorder %s260, %s261
      %p275 = scmp.eq.s32.totalorder %s59, 1
      %p276 = por %p274, %p275
      %p278 = scmp.ne.s32.totalorder %s261, %s277
      %p279 = scmp.eq.s32.totalorder %s59, 0
      %p280 = por %p278, %p279
      %s281 = ssub.s32 %s61, %s68
      %p282 = scmp.eq.s32.totalorder %s281, 0
      %s284 = sadd.s32 %s283, 1
      %s285 = scalar_select %p282, %s283, %s284
      %p288 = pneg %p282
      %p289 = scmp.eq.s32.totalorder %s53, 1
      %p290 = por %p288, %p289
      %p291 = scmp.ne.s32.totalorder %s283, %s286
      %p292 = scmp.eq.s32.totalorder %s53, 0
      %p293 = por %p291, %p292
      %p294 = scmp.ne.s32.totalorder %s283, %s286
      %p295 = scmp.eq.s32.totalorder %s58, 1
      %p296 = por %p294, %p295
      %p297 = scmp.ne.s32.totalorder %s286, %s287
      %p298 = scmp.eq.s32.totalorder %s58, 0
      %p299 = por %p297, %p298
      %p300 = scmp.ne.s32.totalorder %s286, %s287
      %p301 = scmp.eq.s32.totalorder %s59, 1
      %p302 = por %p300, %p301
      %p304 = scmp.ne.s32.totalorder %s287, %s303
      %p305 = scmp.eq.s32.totalorder %s59, 0
      %p306 = por %p304, %p305
      %s307 = ssub.s32 %s61, %s68
      %p308 = scmp.eq.s32.totalorder %s307, 0
      %s310 = sadd.s32 %s309, 1
      %s311 = scalar_select %p308, %s309, %s310
      %p314 = pneg %p308
      %p315 = scmp.eq.s32.totalorder %s53, 1
      %p316 = por %p314, %p315
      %p317 = scmp.ne.s32.totalorder %s309, %s312
      %p318 = scmp.eq.s32.totalorder %s53, 0
      %p319 = por %p317, %p318
      %p320 = scmp.ne.s32.totalorder %s309, %s312
      %p321 = scmp.eq.s32.totalorder %s58, 1
      %p322 = por %p320, %p321
      %p323 = scmp.ne.s32.totalorder %s312, %s313
      %p324 = scmp.eq.s32.totalorder %s58, 0
      %p325 = por %p323, %p324
      %p326 = scmp.ne.s32.totalorder %s312, %s313
      %p327 = scmp.eq.s32.totalorder %s59, 1
      %p328 = por %p326, %p327
      %p330 = scmp.ne.s32.totalorder %s313, %s329
      %p331 = scmp.eq.s32.totalorder %s59, 0
      %p332 = por %p330, %p331
      %s333 = ssub.s32 %s61, %s68
      %p334 = scmp.eq.s32.totalorder %s333, 0
      %s336 = sadd.s32 %s335, 1
      %s337 = scalar_select %p334, %s335, %s336
      %p340 = pneg %p334
      %p341 = scmp.eq.s32.totalorder %s53, 1
      %p342 = por %p340, %p341
      %p343 = scmp.ne.s32.totalorder %s335, %s338
      %p344 = scmp.eq.s32.totalorder %s53, 0
      %p345 = por %p343, %p344
      %p346 = scmp.ne.s32.totalorder %s335, %s338
      %p347 = scmp.eq.s32.totalorder %s58, 1
      %p348 = por %p346, %p347
      %p349 = scmp.ne.s32.totalorder %s338, %s339
      %p350 = scmp.eq.s32.totalorder %s58, 0
      %p351 = por %p349, %p350
      %p352 = scmp.ne.s32.totalorder %s338, %s339
      %p353 = scmp.eq.s32.totalorder %s59, 1
      %p354 = por %p352, %p353
      %p356 = scmp.ne.s32.totalorder %s339, %s355
      %p357 = scmp.eq.s32.totalorder %s59, 0
      %p358 = por %p356, %p357
      %s359 = ssub.s32 %s61, %s68
      %p360 = scmp.eq.s32.totalorder %s359, 0
      %s362 = sadd.s32 %s361, 1
      %s363 = scalar_select %p360, %s361, %s362
      %p366 = pneg %p360
      %p367 = scmp.eq.s32.totalorder %s53, 1
      %p368 = por %p366, %p367
      %p369 = scmp.ne.s32.totalorder %s361, %s364
      %p370 = scmp.eq.s32.totalorder %s53, 0
      %p371 = por %p369, %p370
      %p372 = scmp.ne.s32.totalorder %s361, %s364
      %p373 = scmp.eq.s32.totalorder %s58, 1
      %p374 = por %p372, %p373
      %p375 = scmp.ne.s32.totalorder %s364, %s365
      %p376 = scmp.eq.s32.totalorder %s58, 0
      %p377 = por %p375, %p376
      %p378 = scmp.ne.s32.totalorder %s364, %s365
      %p379 = scmp.eq.s32.totalorder %s59, 1
      %p380 = por %p378, %p379
      %p382 = scmp.ne.s32.totalorder %s365, %s381
      %p383 = scmp.eq.s32.totalorder %s59, 0
      %p384 = por %p382, %p383
      %s385 = ssub.s32 %s61, %s68
      %p386 = scmp.eq.s32.totalorder %s385, 0
      %s388 = sadd.s32 %s387, 1
      %s389 = scalar_select %p386, %s387, %s388
      %p392 = pneg %p386
      %p393 = scmp.eq.s32.totalorder %s53, 1
      %p394 = por %p392, %p393
      %p395 = scmp.ne.s32.totalorder %s387, %s390
      %p396 = scmp.eq.s32.totalorder %s53, 0
      %p397 = por %p395, %p396
      %p398 = scmp.ne.s32.totalorder %s387, %s390
      %p399 = scmp.eq.s32.totalorder %s58, 1
      %p400 = por %p398, %p399
      %p401 = scmp.ne.s32.totalorder %s390, %s391
      %p402 = scmp.eq.s32.totalorder %s58, 0
      %p403 = por %p401, %p402
      %p404 = scmp.ne.s32.totalorder %s390, %s391
      %p405 = scmp.eq.s32.totalorder %s59, 1
      %p406 = por %p404, %p405
      %p408 = scmp.ne.s32.totalorder %s391, %s407
      %p409 = scmp.eq.s32.totalorder %s59, 0
      %p410 = por %p408, %p409
      %s411 = ssub.s32 %s61, %s68
      %p412 = scmp.eq.s32.totalorder %s411, 0
      %s414 = sadd.s32 %s413, 1
      %s415 = scalar_select %p412, %s413, %s414
      %p418 = pneg %p412
      %p419 = scmp.eq.s32.totalorder %s53, 1
      %p420 = por %p418, %p419
      %p421 = scmp.ne.s32.totalorder %s413, %s416
      %p422 = scmp.eq.s32.totalorder %s53, 0
      %p423 = por %p421, %p422
      %p424 = scmp.ne.s32.totalorder %s413, %s416
      %p425 = scmp.eq.s32.totalorder %s58, 1
      %p426 = por %p424, %p425
      %p427 = scmp.ne.s32.totalorder %s416, %s417
      %p428 = scmp.eq.s32.totalorder %s58, 0
      %p429 = por %p427, %p428
      %p430 = scmp.ne.s32.totalorder %s416, %s417
      %p431 = scmp.eq.s32.totalorder %s59, 1
      %p432 = por %p430, %p431
      %p434 = scmp.ne.s32.totalorder %s417, %s433
      %p435 = scmp.eq.s32.totalorder %s59, 0
      %p436 = por %p434, %p435
      %s437 = ssub.s32 %s61, %s68
      %p438 = scmp.eq.s32.totalorder %s437, 0
      %s440 = sadd.s32 %s439, 1
      %s441 = scalar_select %p438, %s439, %s440
      %p444 = pneg %p438
      %p445 = scmp.eq.s32.totalorder %s53, 1
      %p446 = por %p444, %p445
      %p447 = scmp.ne.s32.totalorder %s439, %s442
      %p448 = scmp.eq.s32.totalorder %s53, 0
      %p449 = por %p447, %p448
      %p450 = scmp.ne.s32.totalorder %s439, %s442
      %p451 = scmp.eq.s32.totalorder %s58, 1
      %p452 = por %p450, %p451
      %p453 = scmp.ne.s32.totalorder %s442, %s443
      %p454 = scmp.eq.s32.totalorder %s58, 0
      %p455 = por %p453, %p454
      %p456 = scmp.ne.s32.totalorder %s442, %s443
      %p457 = scmp.eq.s32.totalorder %s59, 1
      %p458 = por %p456, %p457
      %p460 = scmp.ne.s32.totalorder %s443, %s459
      %p461 = scmp.eq.s32.totalorder %s59, 0
      %p462 = por %p460, %p461
      %s463 = ssub.s32 %s61, %s68
      %p464 = scmp.eq.s32.totalorder %s463, 0
      %s466 = sadd.s32 %s465, 1
      %s467 = scalar_select %p464, %s465, %s466
      %p470 = pneg %p464
      %p471 = scmp.eq.s32.totalorder %s53, 1
      %p472 = por %p470, %p471
      %p473 = scmp.ne.s32.totalorder %s465, %s468
      %p474 = scmp.eq.s32.totalorder %s53, 0
      %p475 = por %p473, %p474
      %p476 = scmp.ne.s32.totalorder %s465, %s468
      %p477 = scmp.eq.s32.totalorder %s58, 1
      %p478 = por %p476, %p477
      %p479 = scmp.ne.s32.totalorder %s468, %s469
      %p480 = scmp.eq.s32.totalorder %s58, 0
      %p481 = por %p479, %p480
      %p482 = scmp.ne.s32.totalorder %s468, %s469
      %p483 = scmp.eq.s32.totalorder %s59, 1
      %p484 = por %p482, %p483
      %p486 = scmp.ne.s32.totalorder %s469, %s485
      %p487 = scmp.eq.s32.totalorder %s59, 0
      %p488 = por %p486, %p487
      %s489 = ssub.s32 %s61, %s68
      %p490 = scmp.eq.s32.totalorder %s489, 0
      %s492 = sadd.s32 %s491, 1
      %s493 = scalar_select %p490, %s491, %s492
      %p496 = pneg %p490
      %p497 = scmp.eq.s32.totalorder %s53, 1
      %p498 = por %p496, %p497
      %p499 = scmp.ne.s32.totalorder %s491, %s494
      %p500 = scmp.eq.s32.totalorder %s53, 0
      %p501 = por %p499, %p500
      %p502 = scmp.ne.s32.totalorder %s491, %s494
      %p503 = scmp.eq.s32.totalorder %s58, 1
      %p504 = por %p502, %p503
      %p505 = scmp.ne.s32.totalorder %s494, %s495
      %p506 = scmp.eq.s32.totalorder %s58, 0
      %p507 = por %p505, %p506
      %p508 = scmp.ne.s32.totalorder %s494, %s495
      %p509 = scmp.eq.s32.totalorder %s59, 1
      %p510 = por %p508, %p509
      %p512 = scmp.ne.s32.totalorder %s495, %s511
      %p513 = scmp.eq.s32.totalorder %s59, 0
      %p514 = por %p512, %p513
      %s515 = ssub.s32 %s61, %s68
      %p516 = scmp.eq.s32.totalorder %s515, 0
      %s518 = sadd.s32 %s517, 1
      %s519 = scalar_select %p516, %s517, %s518
      %p522 = pneg %p516
      %p523 = scmp.eq.s32.totalorder %s53, 1
      %p524 = por %p522, %p523
      %p525 = scmp.ne.s32.totalorder %s517, %s520
      %p526 = scmp.eq.s32.totalorder %s53, 0
      %p527 = por %p525, %p526
      %p528 = scmp.ne.s32.totalorder %s517, %s520
      %p529 = scmp.eq.s32.totalorder %s58, 1
      %p530 = por %p528, %p529
      %p531 = scmp.ne.s32.totalorder %s520, %s521
      %p532 = scmp.eq.s32.totalorder %s58, 0
      %p533 = por %p531, %p532
      %p534 = scmp.ne.s32.totalorder %s520, %s521
      %p535 = scmp.eq.s32.totalorder %s59, 1
      %p536 = por %p534, %p535
      %p538 = scmp.ne.s32.totalorder %s521, %s537
      %p539 = scmp.eq.s32.totalorder %s59, 0
      %p540 = por %p538, %p539
      %s542 = sadd.s32 %s541, 1
      %p545 = scmp.eq.s32.totalorder %s53, 1
      %p546 = scmp.ne.s32.totalorder %s541, %s543
      %p547 = scmp.eq.s32.totalorder %s53, 0
      %p548 = por %p546, %p547
      %p549 = scmp.ne.s32.totalorder %s541, %s543
      %p550 = scmp.eq.s32.totalorder %s58, 1
      %p551 = por %p549, %p550
      %p552 = scmp.ne.s32.totalorder %s543, %s544
      %p553 = scmp.eq.s32.totalorder %s58, 0
      %p554 = por %p552, %p553
      %p555 = scmp.ne.s32.totalorder %s543, %s544
      %p556 = scmp.eq.s32.totalorder %s59, 1
      %p557 = por %p555, %p556
      %p559 = scmp.ne.s32.totalorder %s544, %s558
      %p560 = scmp.eq.s32.totalorder %s59, 0
      %p561 = por %p559, %p560
      %s563 = sadd.s32 %s562, 1
      %p566 = scmp.eq.s32.totalorder %s53, 1
      %p567 = scmp.ne.s32.totalorder %s562, %s564
      %p568 = scmp.eq.s32.totalorder %s53, 0
      %p569 = por %p567, %p568
      %p570 = scmp.ne.s32.totalorder %s562, %s564
      %p571 = scmp.eq.s32.totalorder %s58, 1
      %p572 = por %p570, %p571
      %p573 = scmp.ne.s32.totalorder %s564, %s565
      %p574 = scmp.eq.s32.totalorder %s58, 0
      %p575 = por %p573, %p574
      %p576 = scmp.ne.s32.totalorder %s564, %s565
      %p577 = scmp.eq.s32.totalorder %s59, 1
      %p578 = por %p576, %p577
      %p580 = scmp.ne.s32.totalorder %s565, %s579
      %p581 = scmp.eq.s32.totalorder %s59, 0
      %p582 = por %p580, %p581
      %s584 = sadd.s32 %s583, 1
      %p587 = scmp.eq.s32.totalorder %s53, 1
      %p588 = scmp.ne.s32.totalorder %s583, %s585
      %p589 = scmp.eq.s32.totalorder %s53, 0
      %p590 = por %p588, %p589
      %p591 = scmp.ne.s32.totalorder %s583, %s585
      %p592 = scmp.eq.s32.totalorder %s58, 1
      %p593 = por %p591, %p592
      %p594 = scmp.ne.s32.totalorder %s585, %s586
      %p595 = scmp.eq.s32.totalorder %s58, 0
      %p596 = por %p594, %p595
      %p597 = scmp.ne.s32.totalorder %s585, %s586
      %p598 = scmp.eq.s32.totalorder %s59, 1
      %p599 = por %p597, %p598
      %p601 = scmp.ne.s32.totalorder %s586, %s600
      %p602 = scmp.eq.s32.totalorder %s59, 0
      %p603 = por %p601, %p602
      %s605 = sadd.s32 %s604, 1
      %p608 = scmp.eq.s32.totalorder %s53, 1
      %p609 = scmp.ne.s32.totalorder %s604, %s606
      %p610 = scmp.eq.s32.totalorder %s53, 0
      %p611 = por %p609, %p610
      %p612 = scmp.ne.s32.totalorder %s604, %s606
      %p613 = scmp.eq.s32.totalorder %s58, 1
      %p614 = por %p612, %p613
      %p615 = scmp.ne.s32.totalorder %s606, %s607
      %p616 = scmp.eq.s32.totalorder %s58, 0
      %p617 = por %p615, %p616
      %p618 = scmp.ne.s32.totalorder %s606, %s607
      %p619 = scmp.eq.s32.totalorder %s59, 1
      %p620 = por %p618, %p619
      %p622 = scmp.ne.s32.totalorder %s607, %s621
      %p623 = scmp.eq.s32.totalorder %s59, 0
      %p624 = por %p622, %p623
      %s626 = sadd.s32 %s625, 1
      %p629 = scmp.eq.s32.totalorder %s53, 1
      %p630 = scmp.ne.s32.totalorder %s625, %s627
      %p631 = scmp.eq.s32.totalorder %s53, 0
      %p632 = por %p630, %p631
      %p633 = scmp.ne.s32.totalorder %s625, %s627
      %p634 = scmp.eq.s32.totalorder %s58, 1
      %p635 = por %p633, %p634
      %p636 = scmp.ne.s32.totalorder %s627, %s628
      %p637 = scmp.eq.s32.totalorder %s58, 0
      %p638 = por %p636, %p637
      %p639 = scmp.ne.s32.totalorder %s627, %s628
      %p640 = scmp.eq.s32.totalorder %s59, 1
      %p641 = por %p639, %p640
      %p643 = scmp.ne.s32.totalorder %s628, %s642
      %p644 = scmp.eq.s32.totalorder %s59, 0
      %p645 = por %p643, %p644
      %s647 = sadd.s32 %s646, 1
      %p650 = scmp.eq.s32.totalorder %s53, 1
      %p651 = scmp.ne.s32.totalorder %s646, %s648
      %p652 = scmp.eq.s32.totalorder %s53, 0
      %p653 = por %p651, %p652
      %p654 = scmp.ne.s32.totalorder %s646, %s648
      %p655 = scmp.eq.s32.totalorder %s58, 1
      %p656 = por %p654, %p655
      %p657 = scmp.ne.s32.totalorder %s648, %s649
      %p658 = scmp.eq.s32.totalorder %s58, 0
      %p659 = por %p657, %p658
      %p660 = scmp.ne.s32.totalorder %s648, %s649
      %p661 = scmp.eq.s32.totalorder %s59, 1
      %p662 = por %p660, %p661
      %p664 = scmp.ne.s32.totalorder %s649, %s663
      %p665 = scmp.eq.s32.totalorder %s59, 0
      %p666 = por %p664, %p665
      %s667 = ssub.s32 %s60, %s72
      %p668 = scmp.eq.s32.totalorder %s667, 0
      %s670 = sadd.s32 %s669, 1
      %s671 = scalar_select %p668, %s669, %s670
      %p674 = pneg %p668
      %p675 = scmp.eq.s32.totalorder %s53, 1
      %p676 = por %p674, %p675
      %p677 = scmp.ne.s32.totalorder %s669, %s672
      %p678 = scmp.eq.s32.totalorder %s53, 0
      %p679 = por %p677, %p678
      %p680 = scmp.ne.s32.totalorder %s669, %s672
      %p681 = scmp.eq.s32.totalorder %s58, 1
      %p682 = por %p680, %p681
      %p683 = scmp.ne.s32.totalorder %s672, %s673
      %p684 = scmp.eq.s32.totalorder %s58, 0
      %p685 = por %p683, %p684
      %p686 = scmp.ne.s32.totalorder %s672, %s673
      %p687 = scmp.eq.s32.totalorder %s59, 1
      %p688 = por %p686, %p687
      %p690 = scmp.ne.s32.totalorder %s673, %s689
      %p691 = scmp.eq.s32.totalorder %s59, 0
      %p692 = por %p690, %p691
      %p693 = scmp.le.s32.totalorder 1, %s53
      %p694 = scmp.lt.s32.totalorder %s53, 3
      %p695 = pnand %p693, %p694
      %p696 = pneg %p695
      // Predicated region
      $region9: #{tpu_custom_call.1} parent=5 // pred_check
        _
      $region10: #{tpu_custom_call.1} parent=5 // pred_check_branch
        %698 = sbr.rel (%p695) target = $region12
      $region11: #{tpu_custom_call.1} parent=5 // pred_region
        %s699 = ssub.s32 %s53, 1
        // Predicated region
        $region13: #{tpu_custom_call.1} parent=11 // pred_check
          %p700 = pneg %p91
        $region14: #{tpu_custom_call.1} parent=11 // pred_check_branch
          %702 = sbr.rel (%p700) target = $region16
        $region15: #{tpu_custom_call.1} parent=11 // pred_region
          %s703 = smul.u32 2, %s62
          %p704 = scmp.lt.s32.totalorder %s703, 1
          %s705 = scalar_select %p704, %s703, 1
          %s706 = smul.addr %s705, 2
          %s707 = smul.addr %s706, 8
          %s708 = scalar_lea.vmem %s0, %s707
          %s709 = smul.u32 2, %s62
        $region16: #{tpu_custom_call.1} parent=11 // pred_fallthru
          _
        // Predicated region
        $region17: #{tpu_custom_call.1} parent=11 // pred_check
          %p710 = pneg %p117
        $region18: #{tpu_custom_call.1} parent=11 // pred_check_branch
          %712 = sbr.rel (%p710) target = $region20
        $region19: #{tpu_custom_call.1} parent=11 // pred_region
          %s713 = smul.u32 2, %s62
          %s715 = ssub.s32 2048, 2048
          %716 = vsyncadd [#allocation4], %s715
          %s717 = smul.addr %s713, 2
          %s718 = smul.addr %s717, 128
          %s719 = scalar_lea.hbm %s1, %s718
          %s720 = sshll.u32 [#allocation3], 4
          %s721 = int_to_ptr.vmem [resolvable:$true] %s720
          %726 = dma.hbm_to_vmem [thread:$0]  %s719, 2048, %s721, [#allocation4], 128, 128, 8
        $region20: #{tpu_custom_call.1} parent=11 // pred_fallthru
          _
        // Predicated region
        $region21: #{tpu_custom_call.1} parent=11 // pred_check
          %p727 = pneg %p554
        $region22: #{tpu_custom_call.1} parent=11 // pred_check_branch
          %729 = sbr.rel (%p727) target = $region24
        $region23: #{tpu_custom_call.1} parent=11 // pred_region
          _
        $region24: #{tpu_custom_call.1} parent=11 // pred_fallthru
          _
        // Predicated region
        $region25: #{tpu_custom_call.1} parent=11 // pred_check
          %p730 = pneg %p575
        $region26: #{tpu_custom_call.1} parent=11 // pred_check_branch
          %732 = sbr.rel (%p730) target = $region28
        $region27: #{tpu_custom_call.1} parent=11 // pred_region
          _
        $region28: #{tpu_custom_call.1} parent=11 // pred_fallthru
          _
        // Predicated region
        $region29: #{tpu_custom_call.1} parent=11 // pred_check
          %p733 = pneg %p596
        $region30: #{tpu_custom_call.1} parent=11 // pred_check_branch
          %735 = sbr.rel (%p733) target = $region32
        $region31: #{tpu_custom_call.1} parent=11 // pred_region
          _
        $region32: #{tpu_custom_call.1} parent=11 // pred_fallthru
          _
        // Predicated region
        $region33: #{tpu_custom_call.1} parent=11 // pred_check
          %p736 = pneg %p617
        $region34: #{tpu_custom_call.1} parent=11 // pred_check_branch
          %738 = sbr.rel (%p736) target = $region36
        $region35: #{tpu_custom_call.1} parent=11 // pred_region
          _
        $region36: #{tpu_custom_call.1} parent=11 // pred_fallthru
          _
        // Predicated region
        $region37: #{tpu_custom_call.1} parent=11 // pred_check
          %p739 = pneg %p638
        $region38: #{tpu_custom_call.1} parent=11 // pred_check_branch
          %741 = sbr.rel (%p739) target = $region40
        $region39: #{tpu_custom_call.1} parent=11 // pred_region
          _
        $region40: #{tpu_custom_call.1} parent=11 // pred_fallthru
          _
        // Predicated region
        $region41: #{tpu_custom_call.1} parent=11 // pred_check
          %p742 = pneg %p659
        $region42: #{tpu_custom_call.1} parent=11 // pred_check_branch
          %744 = sbr.rel (%p742) target = $region44
        $region43: #{tpu_custom_call.1} parent=11 // pred_region
          _
        $region44: #{tpu_custom_call.1} parent=11 // pred_fallthru
          _
      $region12: #{tpu_custom_call.1} parent=5 // pred_fallthru
        _
      %p745 = scmp.lt.s32.totalorder %s53, 2
      // Predicated region
      $region45: #{tpu_custom_call.1} parent=5 // pred_check
        %p746 = pneg %p745
      $region46: #{tpu_custom_call.1} parent=5 // pred_check_branch
        %748 = sbr.rel (%p746) target = $region48
      $region47: #{tpu_custom_call.1} parent=5 // pred_region
        // Predicated region
        $region49: #{tpu_custom_call.1} parent=47 // pred_check
          %p749 = pneg %p137
        $region50: #{tpu_custom_call.1} parent=47 // pred_check_branch
          %751 = sbr.rel (%p749) target = $region52
        $region51: #{tpu_custom_call.1} parent=47 // pred_region
          %p752 = scmp.lt.s32.totalorder %s61, 1
          %s753 = scalar_select %p752, %s61, 1
          %s754 = smul.addr %s753, 4
          %s755 = smul.addr %s754, 4
          %s756 = scalar_lea.vmem %s2, %s755
        $region52: #{tpu_custom_call.1} parent=47 // pred_fallthru
          _
        // Predicated region
        $region53: #{tpu_custom_call.1} parent=47 // pred_check
          %p757 = pneg %p163
        $region54: #{tpu_custom_call.1} parent=47 // pred_check_branch
          %759 = sbr.rel (%p757) target = $region56
        $region55: #{tpu_custom_call.1} parent=47 // pred_region
          %s760 = sand.u32 %s53, 1
          %s761 = scalar_lea.sflag [#allocation7], %s760
          %s762 = sand.u32 %s153, 1
          %s763 = scalar_lea.vmem [#allocation6], %s762
          %s765 = ssub.s32 16, 16
          %766 = vsyncadd %s761, %s765
          %s767 = smul.addr %s61, 16
          %s768 = scalar_lea.hbm %s3, %s767
          %s770 = sshll.u32 %s763, 4
          %s771 = int_to_ptr.vmem [resolvable:$true] %s770
          %773 = dma.hbm_to_vmem [thread:$0]  %s768, 16, %s771, %s761
        $region56: #{tpu_custom_call.1} parent=47 // pred_fallthru
          _
        // Predicated region
        $region57: #{tpu_custom_call.1} parent=47 // pred_check
          %p774 = pneg %p189
        $region58: #{tpu_custom_call.1} parent=47 // pred_check_branch
          %776 = sbr.rel (%p774) target = $region60
        $region59: #{tpu_custom_call.1} parent=47 // pred_region
          %p777 = scmp.lt.s32.totalorder %s61, 1
          %s778 = scalar_select %p777, %s61, 1
          %s779 = smul.addr %s778, 4
          %s780 = smul.addr %s779, 4
          %s781 = scalar_lea.vmem %s4, %s780
        $region60: #{tpu_custom_call.1} parent=47 // pred_fallthru
          _
        // Predicated region
        $region61: #{tpu_custom_call.1} parent=47 // pred_check
          %p782 = pneg %p215
        $region62: #{tpu_custom_call.1} parent=47 // pred_check_branch
          %784 = sbr.rel (%p782) target = $region64
        $region63: #{tpu_custom_call.1} parent=47 // pred_region
          %s785 = sand.u32 %s53, 1
          %s786 = scalar_lea.sflag [#allocation7], %s785
          %s787 = sand.u32 %s205, 1
          %s788 = scalar_lea.vmem [#allocation8], %s787
          %s790 = ssub.s32 16, 16
          %791 = vsyncadd %s786, %s790
          %s792 = smul.addr %s61, 16
          %s793 = scalar_lea.hbm %s5, %s792
          %s795 = sshll.u32 %s788, 4
          %s796 = int_to_ptr.vmem [resolvable:$true] %s795
          %798 = dma.hbm_to_vmem [thread:$0]  %s793, 16, %s796, %s786
        $region64: #{tpu_custom_call.1} parent=47 // pred_fallthru
          _
        // Predicated region
        $region65: #{tpu_custom_call.1} parent=47 // pred_check
          %p799 = pneg %p241
        $region66: #{tpu_custom_call.1} parent=47 // pred_check_branch
          %801 = sbr.rel (%p799) target = $region68
        $region67: #{tpu_custom_call.1} parent=47 // pred_region
          %s802 = sand.u32 %s53, 1
          %s803 = scalar_lea.sflag [#allocation10], %s802
          %s804 = sand.u32 %s231, 1
          %s805 = smul.addr %s804, 16
          %s806 = scalar_lea.vmem [#allocation9], %s805
          %s808 = ssub.s32 256, 256
          %809 = vsyncadd %s803, %s808
          %s810 = smul.addr %s61, 4
          %s811 = smul.addr %s810, 64
          %s812 = scalar_lea.hbm %s6, %s811
          %s813 = sshll.u32 %s806, 4
          %s814 = int_to_ptr.vmem [resolvable:$true] %s813
          %819 = dma.hbm_to_vmem [thread:$0]  %s812, 256, %s814, %s803, 64, 64, 4
        $region68: #{tpu_custom_call.1} parent=47 // pred_fallthru
          _
        // Predicated region
        $region69: #{tpu_custom_call.1} parent=47 // pred_check
          %p820 = pneg %p267
        $region70: #{tpu_custom_call.1} parent=47 // pred_check_branch
          %822 = sbr.rel (%p820) target = $region72
        $region71: #{tpu_custom_call.1} parent=47 // pred_region
          %s823 = sand.u32 %s53, 1
          %s824 = scalar_lea.sflag [#allocation10], %s823
          %s825 = sand.u32 %s257, 1
          %s826 = scalar_lea.vmem [#allocation11], %s825
          %s828 = ssub.s32 16, 16
          %829 = vsyncadd %s824, %s828
          %s830 = smul.addr %s61, 16
          %s831 = scalar_lea.hbm %s7, %s830
          %s833 = sshll.u32 %s826, 4
          %s834 = int_to_ptr.vmem [resolvable:$true] %s833
          %836 = dma.hbm_to_vmem [thread:$0]  %s831, 16, %s834, %s824
        $region72: #{tpu_custom_call.1} parent=47 // pred_fallthru
          _
        // Predicated region
        $region73: #{tpu_custom_call.1} parent=47 // pred_check
          %p837 = pneg %p293
        $region74: #{tpu_custom_call.1} parent=47 // pred_check_branch
          %839 = sbr.rel (%p837) target = $region76
        $region75: #{tpu_custom_call.1} parent=47 // pred_region
          %s840 = sand.u32 %s53, 1
          %s841 = scalar_lea.sflag [#allocation13], %s840
          %s842 = sand.u32 %s283, 1
          %s843 = smul.addr %s842, 16
          %s844 = scalar_lea.vmem [#allocation12], %s843
          %s846 = ssub.s32 256, 256
          %847 = vsyncadd %s841, %s846
          %s848 = smul.addr %s61, 4
          %s849 = smul.addr %s848, 64
          %s850 = scalar_lea.hbm %s8, %s849
          %s851 = sshll.u32 %s844, 4
          %s852 = int_to_ptr.vmem [resolvable:$true] %s851
          %857 = dma.hbm_to_vmem [thread:$0]  %s850, 256, %s852, %s841, 64, 64, 4
        $region76: #{tpu_custom_call.1} parent=47 // pred_fallthru
          _
        // Predicated region
        $region77: #{tpu_custom_call.1} parent=47 // pred_check
          %p858 = pneg %p319
        $region78: #{tpu_custom_call.1} parent=47 // pred_check_branch
          %860 = sbr.rel (%p858) target = $region80
        $region79: #{tpu_custom_call.1} parent=47 // pred_region
          %s861 = sand.u32 %s53, 1
          %s862 = scalar_lea.sflag [#allocation13], %s861
          %s863 = sand.u32 %s309, 1
          %s864 = scalar_lea.vmem [#allocation14], %s863
          %s866 = ssub.s32 16, 16
          %867 = vsyncadd %s862, %s866
          %s868 = smul.addr %s61, 16
          %s869 = scalar_lea.hbm %s9, %s868
          %s871 = sshll.u32 %s864, 4
          %s872 = int_to_ptr.vmem [resolvable:$true] %s871
          %874 = dma.hbm_to_vmem [thread:$0]  %s869, 16, %s872, %s862
        $region80: #{tpu_custom_call.1} parent=47 // pred_fallthru
          _
        // Predicated region
        $region81: #{tpu_custom_call.1} parent=47 // pred_check
          %p875 = pneg %p345
        $region82: #{tpu_custom_call.1} parent=47 // pred_check_branch
          %877 = sbr.rel (%p875) target = $region84
        $region83: #{tpu_custom_call.1} parent=47 // pred_region
          %s878 = sand.u32 %s53, 1
          %s879 = scalar_lea.sflag [#allocation16], %s878
          %s880 = sand.u32 %s335, 1
          %s881 = scalar_lea.vmem [#allocation15], %s880
          %s883 = ssub.s32 16, 16
          %884 = vsyncadd %s879, %s883
          %s885 = smul.addr %s61, 16
          %s886 = scalar_lea.hbm %s10, %s885
          %s888 = sshll.u32 %s881, 4
          %s889 = int_to_ptr.vmem [resolvable:$true] %s888
          %891 = dma.hbm_to_vmem [thread:$0]  %s886, 16, %s889, %s879
        $region84: #{tpu_custom_call.1} parent=47 // pred_fallthru
          _
        // Predicated region
        $region85: #{tpu_custom_call.1} parent=47 // pred_check
          %p892 = pneg %p371
        $region86: #{tpu_custom_call.1} parent=47 // pred_check_branch
          %894 = sbr.rel (%p892) target = $region88
        $region87: #{tpu_custom_call.1} parent=47 // pred_region
          %s895 = sand.u32 %s53, 1
          %s896 = scalar_lea.sflag [#allocation16], %s895
          %s897 = sand.u32 %s361, 1
          %s898 = scalar_lea.vmem [#allocation17], %s897
          %s900 = ssub.s32 16, 16
          %901 = vsyncadd %s896, %s900
          %s902 = smul.addr %s61, 16
          %s903 = scalar_lea.hbm %s11, %s902
          %s905 = sshll.u32 %s898, 4
          %s906 = int_to_ptr.vmem [resolvable:$true] %s905
          %908 = dma.hbm_to_vmem [thread:$0]  %s903, 16, %s906, %s896
        $region88: #{tpu_custom_call.1} parent=47 // pred_fallthru
          _
        // Predicated region
        $region89: #{tpu_custom_call.1} parent=47 // pred_check
          %p909 = pneg %p397
        $region90: #{tpu_custom_call.1} parent=47 // pred_check_branch
          %911 = sbr.rel (%p909) target = $region92
        $region91: #{tpu_custom_call.1} parent=47 // pred_region
          %s912 = sand.u32 %s53, 1
          %s913 = scalar_lea.sflag [#allocation19], %s912
          %s914 = sand.u32 %s387, 1
          %s915 = smul.addr %s914, 16
          %s916 = scalar_lea.vmem [#allocation18], %s915
          %s918 = ssub.s32 256, 256
          %919 = vsyncadd %s913, %s918
          %s920 = smul.addr %s61, 4
          %s921 = smul.addr %s920, 64
          %s922 = scalar_lea.hbm %s12, %s921
          %s923 = sshll.u32 %s916, 4
          %s924 = int_to_ptr.vmem [resolvable:$true] %s923
          %929 = dma.hbm_to_vmem [thread:$0]  %s922, 256, %s924, %s913, 64, 64, 4
        $region92: #{tpu_custom_call.1} parent=47 // pred_fallthru
          _
        // Predicated region
        $region93: #{tpu_custom_call.1} parent=47 // pred_check
          %p930 = pneg %p423
        $region94: #{tpu_custom_call.1} parent=47 // pred_check_branch
          %932 = sbr.rel (%p930) target = $region96
        $region95: #{tpu_custom_call.1} parent=47 // pred_region
          %s933 = sand.u32 %s53, 1
          %s934 = scalar_lea.sflag [#allocation19], %s933
          %s935 = sand.u32 %s413, 1
          %s936 = scalar_lea.vmem [#allocation20], %s935
          %s938 = ssub.s32 16, 16
          %939 = vsyncadd %s934, %s938
          %s940 = smul.addr %s61, 16
          %s941 = scalar_lea.hbm %s13, %s940
          %s943 = sshll.u32 %s936, 4
          %s944 = int_to_ptr.vmem [resolvable:$true] %s943
          %946 = dma.hbm_to_vmem [thread:$0]  %s941, 16, %s944, %s934
        $region96: #{tpu_custom_call.1} parent=47 // pred_fallthru
          _
        // Predicated region
        $region97: #{tpu_custom_call.1} parent=47 // pred_check
          %p947 = pneg %p449
        $region98: #{tpu_custom_call.1} parent=47 // pred_check_branch
          %949 = sbr.rel (%p947) target = $region100
        $region99: #{tpu_custom_call.1} parent=47 // pred_region
          %p950 = scmp.lt.s32.totalorder %s61, 1
          %s951 = scalar_select %p950, %s61, 1
          %s952 = smul.addr %s951, 8
          %s953 = smul.addr %s952, 4
          %s954 = scalar_lea.vmem %s14, %s953
        $region100: #{tpu_custom_call.1} parent=47 // pred_fallthru
          _
        // Predicated region
        $region101: #{tpu_custom_call.1} parent=47 // pred_check
          %p955 = pneg %p475
        $region102: #{tpu_custom_call.1} parent=47 // pred_check_branch
          %957 = sbr.rel (%p955) target = $region104
        $region103: #{tpu_custom_call.1} parent=47 // pred_region
          %s958 = sand.u32 %s53, 1
          %s959 = scalar_lea.sflag [#allocation22], %s958
          %s960 = sand.u32 %s465, 1
          %s961 = scalar_lea.vmem [#allocation21], %s960
          %s963 = ssub.s32 16, 16
          %964 = vsyncadd %s959, %s963
          %s965 = smul.addr %s61, 16
          %s966 = scalar_lea.hbm %s15, %s965
          %s968 = sshll.u32 %s961, 4
          %s969 = int_to_ptr.vmem [resolvable:$true] %s968
          %971 = dma.hbm_to_vmem [thread:$0]  %s966, 16, %s969, %s959
        $region104: #{tpu_custom_call.1} parent=47 // pred_fallthru
          _
        // Predicated region
        $region105: #{tpu_custom_call.1} parent=47 // pred_check
          %p972 = pneg %p501
        $region106: #{tpu_custom_call.1} parent=47 // pred_check_branch
          %974 = sbr.rel (%p972) target = $region108
        $region107: #{tpu_custom_call.1} parent=47 // pred_region
          %s975 = sand.u32 %s53, 1
          %s976 = scalar_lea.sflag [#allocation22], %s975
          %s977 = sand.u32 %s491, 1
          %s978 = scalar_lea.vmem [#allocation23], %s977
          %s980 = ssub.s32 16, 16
          %981 = vsyncadd %s976, %s980
          %s982 = smul.addr %s61, 16
          %s983 = scalar_lea.hbm %s16, %s982
          %s985 = sshll.u32 %s978, 4
          %s986 = int_to_ptr.vmem [resolvable:$true] %s985
          %988 = dma.hbm_to_vmem [thread:$0]  %s983, 16, %s986, %s976
        $region108: #{tpu_custom_call.1} parent=47 // pred_fallthru
          _
        // Predicated region
        $region109: #{tpu_custom_call.1} parent=47 // pred_check
          %p989 = pneg %p527
        $region110: #{tpu_custom_call.1} parent=47 // pred_check_branch
          %991 = sbr.rel (%p989) target = $region112
        $region111: #{tpu_custom_call.1} parent=47 // pred_region
          %s992 = sand.u32 %s517, 1
          %s993 = scalar_lea.sflag [#allocation25], %s992
          %s994 = sand.u32 %s517, 1
          %s995 = scalar_lea.vmem [#allocation24], %s994
          %s997 = ssub.s32 16, 16
          %998 = vsyncadd %s993, %s997
          %s999 = smul.addr %s61, 16
          %s1000 = scalar_lea.hbm %s17, %s999
          %s1002 = sshll.u32 %s995, 4
          %s1003 = int_to_ptr.vmem [resolvable:$true] %s1002
          %1005 = dma.hbm_to_vmem [thread:$0]  %s1000, 16, %s1003, %s993
        $region112: #{tpu_custom_call.1} parent=47 // pred_fallthru
          _
      $region48: #{tpu_custom_call.1} parent=5 // pred_fallthru
        _
      %p1006 = scmp.le.s32.totalorder 1, %s53
      %p1007 = scmp.lt.s32.totalorder %s53, 3
      %p1008 = pnand %p1006, %p1007
      %p1009 = pneg %p1008
      // Predicated region
      $region113: #{tpu_custom_call.1} parent=5 // pred_check
        _
      $region114: #{tpu_custom_call.1} parent=5 // pred_check_branch
        %1011 = sbr.rel (%p1008) target = $region116
      $region115: #{tpu_custom_call.1} parent=5 // pred_region
        %s1012 = ssub.s32 %s53, 1
        // Predicated region
        $region117: #{tpu_custom_call.1} parent=115 // pred_check
          %p1013 = pneg %p117
        $region118: #{tpu_custom_call.1} parent=115 // pred_check_branch
          %1015 = sbr.rel (%p1013) target = $region120
        $region119: #{tpu_custom_call.1} parent=115 // pred_region
          %1016 = dma.done [#allocation4], 2048
        $region120: #{tpu_custom_call.1} parent=115 // pred_fallthru
          _
        %s1017 = sand.u32 %s58, 1
        %s1018 = scalar_lea.sflag [#allocation7], %s1017
        %s1019 = sand.u32 %s156, 1
        %s1020 = scalar_lea.vmem [#allocation6], %s1019
        // Predicated region
        $region121: #{tpu_custom_call.1} parent=115 // pred_check
          %p1021 = pneg %p169
        $region122: #{tpu_custom_call.1} parent=115 // pred_check_branch
          %1023 = sbr.rel (%p1021) target = $region124
        $region123: #{tpu_custom_call.1} parent=115 // pred_region
          %1024 = dma.done %s1018, 16
        $region124: #{tpu_custom_call.1} parent=115 // pred_fallthru
          _
        %s1025 = sand.u32 %s58, 1
        %s1026 = scalar_lea.sflag [#allocation7], %s1025
        %s1027 = sand.u32 %s208, 1
        %s1028 = scalar_lea.vmem [#allocation8], %s1027
        // Predicated region
        $region125: #{tpu_custom_call.1} parent=115 // pred_check
          %p1029 = pneg %p221
        $region126: #{tpu_custom_call.1} parent=115 // pred_check_branch
          %1031 = sbr.rel (%p1029) target = $region128
        $region127: #{tpu_custom_call.1} parent=115 // pred_region
          %1032 = dma.done %s1026, 16
        $region128: #{tpu_custom_call.1} parent=115 // pred_fallthru
          _
        %s1033 = sand.u32 %s58, 1
        %s1034 = scalar_lea.sflag [#allocation10], %s1033
        %s1035 = sand.u32 %s234, 1
        %s1036 = smul.addr %s1035, 16
        %s1037 = scalar_lea.vmem [#allocation9], %s1036
        // Predicated region
        $region129: #{tpu_custom_call.1} parent=115 // pred_check
          %p1038 = pneg %p247
        $region130: #{tpu_custom_call.1} parent=115 // pred_check_branch
          %1040 = sbr.rel (%p1038) target = $region132
        $region131: #{tpu_custom_call.1} parent=115 // pred_region
          %1041 = dma.done %s1034, 256
        $region132: #{tpu_custom_call.1} parent=115 // pred_fallthru
          _
        %s1042 = sand.u32 %s58, 1
        %s1043 = scalar_lea.sflag [#allocation10], %s1042
        %s1044 = sand.u32 %s260, 1
        %s1045 = scalar_lea.vmem [#allocation11], %s1044
        // Predicated region
        $region133: #{tpu_custom_call.1} parent=115 // pred_check
          %p1046 = pneg %p273
        $region134: #{tpu_custom_call.1} parent=115 // pred_check_branch
          %1048 = sbr.rel (%p1046) target = $region136
        $region135: #{tpu_custom_call.1} parent=115 // pred_region
          %1049 = dma.done %s1043, 16
        $region136: #{tpu_custom_call.1} parent=115 // pred_fallthru
          _
        %s1050 = sand.u32 %s58, 1
        %s1051 = scalar_lea.sflag [#allocation13], %s1050
        %s1052 = sand.u32 %s286, 1
        %s1053 = smul.addr %s1052, 16
        %s1054 = scalar_lea.vmem [#allocation12], %s1053
        // Predicated region
        $region137: #{tpu_custom_call.1} parent=115 // pred_check
          %p1055 = pneg %p299
        $region138: #{tpu_custom_call.1} parent=115 // pred_check_branch
          %1057 = sbr.rel (%p1055) target = $region140
        $region139: #{tpu_custom_call.1} parent=115 // pred_region
          %1058 = dma.done %s1051, 256
        $region140: #{tpu_custom_call.1} parent=115 // pred_fallthru
          _
        %s1059 = sand.u32 %s58, 1
        %s1060 = scalar_lea.sflag [#allocation13], %s1059
        %s1061 = sand.u32 %s312, 1
        %s1062 = scalar_lea.vmem [#allocation14], %s1061
        // Predicated region
        $region141: #{tpu_custom_call.1} parent=115 // pred_check
          %p1063 = pneg %p325
        $region142: #{tpu_custom_call.1} parent=115 // pred_check_branch
          %1065 = sbr.rel (%p1063) target = $region144
        $region143: #{tpu_custom_call.1} parent=115 // pred_region
          %1066 = dma.done %s1060, 16
        $region144: #{tpu_custom_call.1} parent=115 // pred_fallthru
          _
        %s1067 = sand.u32 %s58, 1
        %s1068 = scalar_lea.sflag [#allocation16], %s1067
        %s1069 = sand.u32 %s338, 1
        %s1070 = scalar_lea.vmem [#allocation15], %s1069
        // Predicated region
        $region145: #{tpu_custom_call.1} parent=115 // pred_check
          %p1071 = pneg %p351
        $region146: #{tpu_custom_call.1} parent=115 // pred_check_branch
          %1073 = sbr.rel (%p1071) target = $region148
        $region147: #{tpu_custom_call.1} parent=115 // pred_region
          %1074 = dma.done %s1068, 16
        $region148: #{tpu_custom_call.1} parent=115 // pred_fallthru
          _
        %s1075 = sand.u32 %s58, 1
        %s1076 = scalar_lea.sflag [#allocation16], %s1075
        %s1077 = sand.u32 %s364, 1
        %s1078 = scalar_lea.vmem [#allocation17], %s1077
        // Predicated region
        $region149: #{tpu_custom_call.1} parent=115 // pred_check
          %p1079 = pneg %p377
        $region150: #{tpu_custom_call.1} parent=115 // pred_check_branch
          %1081 = sbr.rel (%p1079) target = $region152
        $region151: #{tpu_custom_call.1} parent=115 // pred_region
          %1082 = dma.done %s1076, 16
        $region152: #{tpu_custom_call.1} parent=115 // pred_fallthru
          _
        %s1083 = sand.u32 %s58, 1
        %s1084 = scalar_lea.sflag [#allocation19], %s1083
        %s1085 = sand.u32 %s390, 1
        %s1086 = smul.addr %s1085, 16
        %s1087 = scalar_lea.vmem [#allocation18], %s1086
        // Predicated region
        $region153: #{tpu_custom_call.1} parent=115 // pred_check
          %p1088 = pneg %p403
        $region154: #{tpu_custom_call.1} parent=115 // pred_check_branch
          %1090 = sbr.rel (%p1088) target = $region156
        $region155: #{tpu_custom_call.1} parent=115 // pred_region
          %1091 = dma.done %s1084, 256
        $region156: #{tpu_custom_call.1} parent=115 // pred_fallthru
          _
        %s1092 = sand.u32 %s58, 1
        %s1093 = scalar_lea.sflag [#allocation19], %s1092
        %s1094 = sand.u32 %s416, 1
        %s1095 = scalar_lea.vmem [#allocation20], %s1094
        // Predicated region
        $region157: #{tpu_custom_call.1} parent=115 // pred_check
          %p1096 = pneg %p429
        $region158: #{tpu_custom_call.1} parent=115 // pred_check_branch
          %1098 = sbr.rel (%p1096) target = $region160
        $region159: #{tpu_custom_call.1} parent=115 // pred_region
          %1099 = dma.done %s1093, 16
        $region160: #{tpu_custom_call.1} parent=115 // pred_fallthru
          _
        %s1100 = sand.u32 %s58, 1
        %s1101 = scalar_lea.sflag [#allocation22], %s1100
        %s1102 = sand.u32 %s468, 1
        %s1103 = scalar_lea.vmem [#allocation21], %s1102
        // Predicated region
        $region161: #{tpu_custom_call.1} parent=115 // pred_check
          %p1104 = pneg %p481
        $region162: #{tpu_custom_call.1} parent=115 // pred_check_branch
          %1106 = sbr.rel (%p1104) target = $region164
        $region163: #{tpu_custom_call.1} parent=115 // pred_region
          %1107 = dma.done %s1101, 16
        $region164: #{tpu_custom_call.1} parent=115 // pred_fallthru
          _
        %s1108 = sand.u32 %s58, 1
        %s1109 = scalar_lea.sflag [#allocation22], %s1108
        %s1110 = sand.u32 %s494, 1
        %s1111 = scalar_lea.vmem [#allocation23], %s1110
        // Predicated region
        $region165: #{tpu_custom_call.1} parent=115 // pred_check
          %p1112 = pneg %p507
        $region166: #{tpu_custom_call.1} parent=115 // pred_check_branch
          %1114 = sbr.rel (%p1112) target = $region168
        $region167: #{tpu_custom_call.1} parent=115 // pred_region
          %1115 = dma.done %s1109, 16
        $region168: #{tpu_custom_call.1} parent=115 // pred_fallthru
          _
        %s1116 = sand.u32 %s520, 1
        %s1117 = scalar_lea.sflag [#allocation25], %s1116
        %s1118 = sand.u32 %s520, 1
        %s1119 = scalar_lea.vmem [#allocation24], %s1118
        // Predicated region
        $region169: #{tpu_custom_call.1} parent=115 // pred_check
          %p1120 = pneg %p533
        $region170: #{tpu_custom_call.1} parent=115 // pred_check_branch
          %1122 = sbr.rel (%p1120) target = $region172
        $region171: #{tpu_custom_call.1} parent=115 // pred_region
          %1123 = dma.done %s1117, 16
        $region172: #{tpu_custom_call.1} parent=115 // pred_fallthru
          _
        %s1124 = smul.u32 2, %s62
        %p1125 = scmp.lt.s32.totalorder %s1124, 1
        %s1126 = scalar_select %p1125, %s1124, 1
        %s1127 = smul.addr %s1126, 2
        %s1128 = smul.addr %s1127, 8
        %s1129 = scalar_lea.vmem %s0, %s1128
        %p1130 = pneg %p91
        %p1131 = pneg %p88
        %p1132 = pneg %p117
        %p1133 = pneg %p114
        %p1134 = scmp.lt.s32.totalorder %s63, 1
        %s1135 = scalar_select %p1134, %s63, 1
        %s1136 = smul.addr %s1135, 4
        %s1137 = smul.addr %s1136, 4
        %s1138 = scalar_lea.vmem %s2, %s1137
        %p1139 = pneg %p143
        %p1140 = pneg %p140
        %s1141 = sand.u32 %s58, 1
        %s1142 = scalar_lea.sflag [#allocation7], %s1141
        %s1143 = sand.u32 %s156, 1
        %s1144 = scalar_lea.vmem [#allocation6], %s1143
        %p1145 = pneg %p169
        %p1146 = pneg %p166
        %p1147 = scmp.lt.s32.totalorder %s63, 1
        %s1148 = scalar_select %p1147, %s63, 1
        %s1149 = smul.addr %s1148, 4
        %s1150 = smul.addr %s1149, 4
        %s1151 = scalar_lea.vmem %s4, %s1150
        %p1152 = pneg %p195
        %p1153 = pneg %p192
        %s1154 = sand.u32 %s58, 1
        %s1155 = scalar_lea.sflag [#allocation7], %s1154
        %s1156 = sand.u32 %s208, 1
        %s1157 = scalar_lea.vmem [#allocation8], %s1156
        %p1158 = pneg %p221
        %p1159 = pneg %p218
        %s1160 = sand.u32 %s58, 1
        %s1161 = scalar_lea.sflag [#allocation10], %s1160
        %s1162 = sand.u32 %s234, 1
        %s1163 = smul.addr %s1162, 16
        %s1164 = scalar_lea.vmem [#allocation9], %s1163
        %p1165 = pneg %p247
        %p1166 = pneg %p244
        %s1167 = sand.u32 %s58, 1
        %s1168 = scalar_lea.sflag [#allocation10], %s1167
        %s1169 = sand.u32 %s260, 1
        %s1170 = scalar_lea.vmem [#allocation11], %s1169
        %p1171 = pneg %p273
        %p1172 = pneg %p270
        %s1173 = sand.u32 %s58, 1
        %s1174 = scalar_lea.sflag [#allocation13], %s1173
        %s1175 = sand.u32 %s286, 1
        %s1176 = smul.addr %s1175, 16
        %s1177 = scalar_lea.vmem [#allocation12], %s1176
        %p1178 = pneg %p299
        %p1179 = pneg %p296
        %s1180 = sand.u32 %s58, 1
        %s1181 = scalar_lea.sflag [#allocation13], %s1180
        %s1182 = sand.u32 %s312, 1
        %s1183 = scalar_lea.vmem [#allocation14], %s1182
        %p1184 = pneg %p325
        %p1185 = pneg %p322
        %s1186 = sand.u32 %s58, 1
        %s1187 = scalar_lea.sflag [#allocation16], %s1186
        %s1188 = sand.u32 %s338, 1
        %s1189 = scalar_lea.vmem [#allocation15], %s1188
        %p1190 = pneg %p351
        %p1191 = pneg %p348
        %s1192 = sand.u32 %s58, 1
        %s1193 = scalar_lea.sflag [#allocation16], %s1192
        %s1194 = sand.u32 %s364, 1
        %s1195 = scalar_lea.vmem [#allocation17], %s1194
        %p1196 = pneg %p377
        %p1197 = pneg %p374
        %s1198 = sand.u32 %s58, 1
        %s1199 = scalar_lea.sflag [#allocation19], %s1198
        %s1200 = sand.u32 %s390, 1
        %s1201 = smul.addr %s1200, 16
        %s1202 = scalar_lea.vmem [#allocation18], %s1201
        %p1203 = pneg %p403
        %p1204 = pneg %p400
        %s1205 = sand.u32 %s58, 1
        %s1206 = scalar_lea.sflag [#allocation19], %s1205
        %s1207 = sand.u32 %s416, 1
        %s1208 = scalar_lea.vmem [#allocation20], %s1207
        %p1209 = pneg %p429
        %p1210 = pneg %p426
        %p1211 = scmp.lt.s32.totalorder %s63, 1
        %s1212 = scalar_select %p1211, %s63, 1
        %s1213 = smul.addr %s1212, 8
        %s1214 = smul.addr %s1213, 4
        %s1215 = scalar_lea.vmem %s14, %s1214
        %p1216 = pneg %p455
        %p1217 = pneg %p452
        %s1218 = sand.u32 %s58, 1
        %s1219 = scalar_lea.sflag [#allocation22], %s1218
        %s1220 = sand.u32 %s468, 1
        %s1221 = scalar_lea.vmem [#allocation21], %s1220
        %p1222 = pneg %p481
        %p1223 = pneg %p478
        %s1224 = sand.u32 %s58, 1
        %s1225 = scalar_lea.sflag [#allocation22], %s1224
        %s1226 = sand.u32 %s494, 1
        %s1227 = scalar_lea.vmem [#allocation23], %s1226
        %p1228 = pneg %p507
        %p1229 = pneg %p504
        %s1230 = sand.u32 %s520, 1
        %s1231 = scalar_lea.sflag [#allocation25], %s1230
        %s1232 = sand.u32 %s520, 1
        %s1233 = scalar_lea.vmem [#allocation24], %s1232
        %p1234 = pneg %p533
        %p1235 = pneg %p530
        %p1236 = pneg %p554
        %p1237 = pneg %p551
        %p1238 = pneg %p575
        %p1239 = pneg %p572
        %p1240 = pneg %p596
        %p1241 = pneg %p593
        %p1242 = pneg %p617
        %p1243 = pneg %p614
        %p1244 = pneg %p638
        %p1245 = pneg %p635
        %p1246 = pneg %p659
        %p1247 = pneg %p656
        %p1248 = pneg %p685
        %p1249 = pneg %p682
        %s1250 = smul.u32 2, %s62
        %p1251 = scmp.lt.s32.totalorder %s1250, 1
        %s1252 = scalar_select %p1251, %s1250, 1
        %s1253 = smul.addr %s1252, 2
        %s1254 = smul.addr %s1253, 8
        %s1255 = scalar_lea.vmem %s0, %s1254
        %s1256 = smul.u32 2, %s62
        %s1257 = smul.u32 2, %s62
        %p1258 = scmp.lt.s32.totalorder %s63, 1
        %s1259 = scalar_select %p1258, %s63, 1
        %s1260 = smul.addr %s1259, 4
        %s1261 = smul.addr %s1260, 4
        %s1262 = scalar_lea.vmem %s2, %s1261
        %p1263 = scmp.lt.s32.totalorder %s63, 1
        %s1264 = scalar_select %p1263, %s63, 1
        %s1265 = smul.addr %s1264, 4
        %s1266 = smul.addr %s1265, 4
        %s1267 = scalar_lea.vmem %s4, %s1266
        %p1268 = scmp.lt.s32.totalorder %s63, 1
        %s1269 = scalar_select %p1268, %s63, 1
        %s1270 = smul.addr %s1269, 8
        %s1271 = smul.addr %s1270, 4
        %s1272 = scalar_lea.vmem %s14, %s1271
        %s1273 = smul.u32 2, %s62
        %p1275 = scmp.eq.s32.totalorder %s63, 0
        // Predicated region
        $region173: #{tpu_custom_call.1} parent=115 // pred_check
          %p1276 = pneg %p1275
        $region174: #{tpu_custom_call.1} parent=115 // pred_check_branch
          %1278 = sbr.rel (%p1276) target = $region176
        $region175: #{tpu_custom_call.1} parent=115 // pred_region
          %v1279 = vld [vmem:[%s1255] sm:$0xff]
          %v1280 = vld [vmem:[%s1255 + $0x8] sm:$0xff]
          %v1281 = vld [vmem:[%s1255 + $0x10] sm:$0xff]
          %v1282 = vld [vmem:[%s1255 + $0x18] sm:$0xff]
          %vm1283 = vcmask 261120
          %1284 = vst.msk [vmem:[#allocation2] sm:$0xff] %vm1283, %v1279
          %1285 = vst.msk [vmem:[#allocation2 + $0x8] sm:$0xff] %vm1283, %v1280
          %1286 = vst.msk [vmem:[#allocation2 + $0x10] sm:$0xff] %vm1283, %v1281
          %1287 = vst.msk [vmem:[#allocation2 + $0x18] sm:$0xff] %vm1283, %v1282
        $region176: #{tpu_custom_call.1} parent=115 // pred_fallthru
          _
        %v1288 = vld [vmem:[#allocation2] sm:$0xff]
        %v1289 = vld [vmem:[#allocation2 + $0x8] sm:$0xff]
        %v1290 = vld [vmem:[#allocation2 + $0x10] sm:$0xff]
        %v1291 = vld [vmem:[#allocation2 + $0x18] sm:$0xff]
        %v1292 = vpack.c.bf16 %v1289, %v1288
        %v1293 = vpack.c.bf16 %v1291, %v1290
        %v1294 = vld [vmem:[%s1262] sm:$0xf]
        %v1295 = vld [vmem:[%s1262 + $0x4] sm:$0xf]
        %v1296 = vld [vmem:[%s1262 + $0x8] sm:$0xf]
        %v1297 = vld [vmem:[%s1262 + $0xc] sm:$0xf]
        %v1298 = vld [vmem:[%s1020] sm:$0x1]
        %v1300 = vlaneseq
        %v1301 = vshrl.u32 %v1300, 7
        %v1302 = vsub.s32 0, %v1301
        %v1303 = vrot.slane %v1298, %v1302
        %v1309 = vunpack.c.l.b16 %v1294
        %v1310 = vunpack.c.l.b16 %v1295
        %v1311 = vunpack.c.l.b16 %v1296
        %v1312 = vunpack.c.l.b16 %v1297
        %v1313 = vpack.c.b16 %v1310, %v1309
        %v1314 = vpack.c.b16 %v1312, %v1311
        %vm1317 = vcmask 261120
        %v1319 = vsel %vm1317, %v1292, 0
        %v1322 = vsel %vm1317, %v1293, 0
        %1324 = vmatprep.subr.bf16.mxu0 0
        %1325 = vmatpush1.bf16.msra.mxu0 %v1313
        %1326 = vmatprep.subr.bf16.mxu0 0
        %1327 = vmatpush1.bf16.msra.mxu0 %v1314
        %1328 = vmatprep.subr.bf16.mxu0 0
        %1329 = vmatpush1.bf16.msra.mxu0 0
        %1330 = vmatprep.subr.bf16.mxu0 0
        %1331 = vmatpush1.bf16.msra.mxu0 0
        %1332 = vmatprep.subr.bf16.mxu0 0
        %1333 = vmatpush1.bf16.msra.mxu0 0
        %1334 = vmatprep.subr.bf16.mxu0 0
        %1335 = vmatpush1.bf16.msra.mxu0 0
        %1336 = vmatprep.subr.bf16.mxu0 0
        %1337 = vmatpush1.bf16.msra.mxu0 0
        %1338 = vmatprep.subr.bf16.mxu0 0
        %1339 = vmatpush1.bf16.msra.mxu0 0
        %1340 = vmatprep.subr.bf16.mxu0 0
        %1341 = vmatpush1.bf16.msra.mxu0 0
        %1342 = vmatprep.subr.bf16.mxu0 0
        %1343 = vmatpush1.bf16.msra.mxu0 0
        %1344 = vmatprep.subr.bf16.mxu0 0
        %1345 = vmatpush1.bf16.msra.mxu0 0
        %1346 = vmatprep.subr.bf16.mxu0 0
        %1347 = vmatpush1.bf16.msra.mxu0 0
        %1348 = vmatprep.subr.bf16.mxu0 0
        %1349 = vmatpush1.bf16.msra.mxu0 0
        %1350 = vmatprep.subr.bf16.mxu0 0
        %1351 = vmatpush1.bf16.msra.mxu0 0
        %1352 = vmatprep.subr.bf16.mxu0 0
        %1353 = vmatpush1.bf16.msra.mxu0 0
        %1354 = vmatprep.subr.bf16.mxu0 0
        %1355 = vmatpush1.bf16.msra.mxu0 0
        %1356 = vmatprep.mubr.bf16.mxu0 0
        %1357 = vmatmul.mubr.bf16.gmra.mrb[0].mxu0 %v1319
        %v1358 = vpop.f32.mrb[0].mxu0
        %v1359 = vadd.f32 %v1303, %v1358
        %v1360 = vpop.f32.mrb[0].mxu0
        %v1361 = vpop.f32.mrb[0].mxu0
        %v1362 = vadd.f32 %v1303, %v1361
        %v1363 = vpop.f32.mrb[0].mxu0
        %1364 = vmatprep.mubr.bf16.mxu0 0
        %1365 = vmatmul.mubr.bf16.gmra.mrb[0].mxu0 %v1322
        %v1366 = vpop.f32.mrb[0].mxu0
        %v1367 = vadd.f32 %v1303, %v1366
        %v1368 = vpop.f32.mrb[0].mxu0
        %v1369 = vpop.f32.mrb[0].mxu0
        %v1370 = vadd.f32 %v1303, %v1369
        %v1371 = vpop.f32.mrb[0].mxu0
        %1372 = vdwg.mxu0
        %v1373 = vld [vmem:[%s1267] sm:$0xf]
        %v1374 = vld [vmem:[%s1267 + $0x4] sm:$0xf]
        %v1375 = vld [vmem:[%s1267 + $0x8] sm:$0xf]
        %v1376 = vld [vmem:[%s1267 + $0xc] sm:$0xf]
        %v1377 = vld [vmem:[%s1028] sm:$0x1]
        %v1379 = vlaneseq
        %v1380 = vshrl.u32 %v1379, 7
        %v1381 = vsub.s32 0, %v1380
        %v1382 = vrot.slane %v1377, %v1381
        %v1388 = vunpack.c.l.b16 %v1373
        %v1389 = vunpack.c.l.b16 %v1374
        %v1390 = vunpack.c.l.b16 %v1375
        %v1391 = vunpack.c.l.b16 %v1376
        %v1392 = vpack.c.b16 %v1389, %v1388
        %v1393 = vpack.c.b16 %v1391, %v1390
        %1396 = vmatprep.subr.bf16.mxu0 0
        %1397 = vmatpush1.bf16.msra.mxu0 %v1392
        %1398 = vmatprep.subr.bf16.mxu0 0
        %1399 = vmatpush1.bf16.msra.mxu0 %v1393
        %1400 = vmatprep.subr.bf16.mxu0 0
        %1401 = vmatpush1.bf16.msra.mxu0 0
        %1402 = vmatprep.subr.bf16.mxu0 0
        %1403 = vmatpush1.bf16.msra.mxu0 0
        %1404 = vmatprep.subr.bf16.mxu0 0
        %1405 = vmatpush1.bf16.msra.mxu0 0
        %1406 = vmatprep.subr.bf16.mxu0 0
        %1407 = vmatpush1.bf16.msra.mxu0 0
        %1408 = vmatprep.subr.bf16.mxu0 0
        %1409 = vmatpush1.bf16.msra.mxu0 0
        %1410 = vmatprep.subr.bf16.mxu0 0
        %1411 = vmatpush1.bf16.msra.mxu0 0
        %1412 = vmatprep.subr.bf16.mxu0 0
        %1413 = vmatpush1.bf16.msra.mxu0 0
        %1414 = vmatprep.subr.bf16.mxu0 0
        %1415 = vmatpush1.bf16.msra.mxu0 0
        %1416 = vmatprep.subr.bf16.mxu0 0
        %1417 = vmatpush1.bf16.msra.mxu0 0
        %1418 = vmatprep.subr.bf16.mxu0 0
        %1419 = vmatpush1.bf16.msra.mxu0 0
        %1420 = vmatprep.subr.bf16.mxu0 0
        %1421 = vmatpush1.bf16.msra.mxu0 0
        %1422 = vmatprep.subr.bf16.mxu0 0
        %1423 = vmatpush1.bf16.msra.mxu0 0
        %1424 = vmatprep.subr.bf16.mxu0 0
        %1425 = vmatpush1.bf16.msra.mxu0 0
        %1426 = vmatprep.subr.bf16.mxu0 0
        %1427 = vmatpush1.bf16.msra.mxu0 0
        %1428 = vmatprep.mubr.bf16.mxu0 0
        %1429 = vmatmul.mubr.bf16.gmra.mrb[0].mxu0 %v1319
        %v1430 = vpop.f32.mrb[0].mxu0
        %v1431 = vadd.f32 %v1382, %v1430
        %v1432 = vpop.f32.mrb[0].mxu0
        %v1433 = vpop.f32.mrb[0].mxu0
        %v1434 = vadd.f32 %v1382, %v1433
        %v1435 = vpop.f32.mrb[0].mxu0
        %1436 = vmatprep.mubr.bf16.mxu0 0
        %1437 = vmatmul.mubr.bf16.gmra.mrb[0].mxu0 %v1322
        %v1438 = vpop.f32.mrb[0].mxu0
        %v1439 = vadd.f32 %v1382, %v1438
        %v1440 = vpop.f32.mrb[0].mxu0
        %v1441 = vpop.f32.mrb[0].mxu0
        %v1442 = vadd.f32 %v1382, %v1441
        %v1443 = vpop.f32.mrb[0].mxu0
        %1444 = vdwg.mxu0
        %v1445 = vld [vmem:[%s1037] sm:$0xf]
        %v1446 = vld [vmem:[%s1037 + $0x4] sm:$0xf]
        %v1447 = vld [vmem:[%s1037 + $0x8] sm:$0xf]
        %v1448 = vld [vmem:[%s1037 + $0xc] sm:$0xf]
        %v1449 = vld [vmem:[%s1045] sm:$0x1]
        %v1451 = vlaneseq
        %v1452 = vshrl.u32 %v1451, 7
        %v1453 = vsub.s32 0, %v1452
        %v1454 = vrot.slane %v1449, %v1453
        %v1460 = vunpack.c.l.b16 %v1445
        %v1461 = vunpack.c.l.b16 %v1446
        %v1462 = vunpack.c.l.b16 %v1447
        %v1463 = vunpack.c.l.b16 %v1448
        %v1464 = vpack.c.b16 %v1461, %v1460
        %v1465 = vpack.c.b16 %v1463, %v1462
        %1468 = vmatprep.subr.bf16.mxu0 0
        %1469 = vmatpush1.bf16.msra.mxu0 %v1464
        %1470 = vmatprep.subr.bf16.mxu0 0
        %1471 = vmatpush1.bf16.msra.mxu0 %v1465
        %1472 = vmatprep.subr.bf16.mxu0 0
        %1473 = vmatpush1.bf16.msra.mxu0 0
        %1474 = vmatprep.subr.bf16.mxu0 0
        %1475 = vmatpush1.bf16.msra.mxu0 0
        %1476 = vmatprep.subr.bf16.mxu0 0
        %1477 = vmatpush1.bf16.msra.mxu0 0
        %1478 = vmatprep.subr.bf16.mxu0 0
        %1479 = vmatpush1.bf16.msra.mxu0 0
        %1480 = vmatprep.subr.bf16.mxu0 0
        %1481 = vmatpush1.bf16.msra.mxu0 0
        %1482 = vmatprep.subr.bf16.mxu0 0
        %1483 = vmatpush1.bf16.msra.mxu0 0
        %1484 = vmatprep.subr.bf16.mxu0 0
        %1485 = vmatpush1.bf16.msra.mxu0 0
        %1486 = vmatprep.subr.bf16.mxu0 0
        %1487 = vmatpush1.bf16.msra.mxu0 0
        %1488 = vmatprep.subr.bf16.mxu0 0
        %1489 = vmatpush1.bf16.msra.mxu0 0
        %1490 = vmatprep.subr.bf16.mxu0 0
        %1491 = vmatpush1.bf16.msra.mxu0 0
        %1492 = vmatprep.subr.bf16.mxu0 0
        %1493 = vmatpush1.bf16.msra.mxu0 0
        %1494 = vmatprep.subr.bf16.mxu0 0
        %1495 = vmatpush1.bf16.msra.mxu0 0
        %1496 = vmatprep.subr.bf16.mxu0 0
        %1497 = vmatpush1.bf16.msra.mxu0 0
        %1498 = vmatprep.subr.bf16.mxu0 0
        %1499 = vmatpush1.bf16.msra.mxu0 0
        %1500 = vmatprep.mubr.bf16.mxu0 0
        %1501 = vmatmul.mubr.bf16.gmra.mrb[0].mxu0 %v1319
        %v1502 = vpop.f32.mrb[0].mxu0
        %v1503 = vadd.f32 %v1454, %v1502
        %v1504 = vpop.f32.mrb[0].mxu0
        %v1505 = vpop.f32.mrb[0].mxu0
        %v1506 = vadd.f32 %v1454, %v1505
        %v1507 = vpop.f32.mrb[0].mxu0
        %1508 = vmatprep.mubr.bf16.mxu0 0
        %1509 = vmatmul.mubr.bf16.gmra.mrb[0].mxu0 %v1322
        %v1510 = vpop.f32.mrb[0].mxu0
        %v1511 = vadd.f32 %v1454, %v1510
        %v1512 = vpop.f32.mrb[0].mxu0
        %v1513 = vpop.f32.mrb[0].mxu0
        %v1514 = vadd.f32 %v1454, %v1513
        %v1515 = vpop.f32.mrb[0].mxu0
        %1516 = vdwg.mxu0
        %v1517 = vpack.c.bf16 %v1362, %v1359
        %v1518 = vpack.c.bf16 %v1370, %v1367
        %v1519 = vpack.c.bf16 %v1434, %v1431
        %v1520 = vpack.c.bf16 %v1442, %v1439
        %v1521 = vpack.c.bf16 %v1506, %v1503
        %v1522 = vpack.c.bf16 %v1514, %v1511
        %v1523 = vld [vmem:[#allocation3] sm:$0xff]
        %v1524 = vld [vmem:[#allocation3 + $0x8] sm:$0xff]
        %v1525 = vld [vmem:[#allocation3 + $0x10] sm:$0xff]
        %v1526 = vld [vmem:[#allocation3 + $0x18] sm:$0xff]
        %vm1527 = vcmask 64512
        %v1529 = vsel %vm1527, %v1517, 0
        %v1532 = vsel %vm1527, %v1519, 0
        %1534 = vmatprep.subr.bf16.mxu0 0
        %1535 = vmatpush1.bf16.xpose.msra.mxu0 %v1532
        %1536 = vmatprep.subr.bf16.mxu0 0
        %1537 = vmatpush1.bf16.xpose.msra.mxu0 0
        %1538 = vmatprep.subr.bf16.mxu0 0
        %1539 = vmatpush1.bf16.xpose.msra.mxu0 0
        %1540 = vmatprep.subr.bf16.mxu0 0
        %1541 = vmatpush1.bf16.xpose.msra.mxu0 0
        %1542 = vmatprep.subr.bf16.mxu0 0
        %1543 = vmatpush1.bf16.xpose.msra.mxu0 0
        %1544 = vmatprep.subr.bf16.mxu0 0
        %1545 = vmatpush1.bf16.xpose.msra.mxu0 0
        %1546 = vmatprep.subr.bf16.mxu0 0
        %1547 = vmatpush1.bf16.xpose.msra.mxu0 0
        %1548 = vmatprep.subr.bf16.mxu0 0
        %1549 = vmatpush1.bf16.xpose.msra.mxu0 0
        %1550 = vmatprep.subr.bf16.mxu0 0
        %1551 = vmatpush1.bf16.xpose.msra.mxu0 0
        %1552 = vmatprep.subr.bf16.mxu0 0
        %1553 = vmatpush1.bf16.xpose.msra.mxu0 0
        %1554 = vmatprep.subr.bf16.mxu0 0
        %1555 = vmatpush1.bf16.xpose.msra.mxu0 0
        %1556 = vmatprep.subr.bf16.mxu0 0
        %1557 = vmatpush1.bf16.xpose.msra.mxu0 0
        %1558 = vmatprep.subr.bf16.mxu0 0
        %1559 = vmatpush1.bf16.xpose.msra.mxu0 0
        %1560 = vmatprep.subr.bf16.mxu0 0
        %1561 = vmatpush1.bf16.xpose.msra.mxu0 0
        %1562 = vmatprep.subr.bf16.mxu0 0
        %1563 = vmatpush1.bf16.xpose.msra.mxu0 0
        %1564 = vmatprep.subr.bf16.mxu0 0
        %1565 = vmatpush1.bf16.xpose.msra.mxu0 0
        %1566 = vmatprep.mubr.bf16.mxu0 0
        %1567 = vmatmul.mubr.bf16.gmra.mrb[0].mxu0 %v1529
        %v1568 = vpop.f32.mrb[0].mxu0
        %v1569 = vadd.f32 %v1523, %v1568
        %v1570 = vpop.f32.mrb[0].mxu0
        %v1571 = vpop.f32.mrb[0].mxu0
        %v1572 = vadd.f32 %v1524, %v1571
        %v1573 = vpop.f32.mrb[0].mxu0
        %1574 = vdwg.mxu0
        %v1576 = vsel %vm1527, %v1518, 0
        %v1579 = vsel %vm1527, %v1520, 0
        %1581 = vmatprep.subr.bf16.mxu0 0
        %1582 = vmatpush1.bf16.xpose.msra.mxu0 %v1579
        %1583 = vmatprep.subr.bf16.mxu0 0
        %1584 = vmatpush1.bf16.xpose.msra.mxu0 0
        %1585 = vmatprep.subr.bf16.mxu0 0
        %1586 = vmatpush1.bf16.xpose.msra.mxu0 0
        %1587 = vmatprep.subr.bf16.mxu0 0
        %1588 = vmatpush1.bf16.xpose.msra.mxu0 0
        %1589 = vmatprep.subr.bf16.mxu0 0
        %1590 = vmatpush1.bf16.xpose.msra.mxu0 0
        %1591 = vmatprep.subr.bf16.mxu0 0
        %1592 = vmatpush1.bf16.xpose.msra.mxu0 0
        %1593 = vmatprep.subr.bf16.mxu0 0
        %1594 = vmatpush1.bf16.xpose.msra.mxu0 0
        %1595 = vmatprep.subr.bf16.mxu0 0
        %1596 = vmatpush1.bf16.xpose.msra.mxu0 0
        %1597 = vmatprep.subr.bf16.mxu0 0
        %1598 = vmatpush1.bf16.xpose.msra.mxu0 0
        %1599 = vmatprep.subr.bf16.mxu0 0
        %1600 = vmatpush1.bf16.xpose.msra.mxu0 0
        %1601 = vmatprep.subr.bf16.mxu0 0
        %1602 = vmatpush1.bf16.xpose.msra.mxu0 0
        %1603 = vmatprep.subr.bf16.mxu0 0
        %1604 = vmatpush1.bf16.xpose.msra.mxu0 0
        %1605 = vmatprep.subr.bf16.mxu0 0
        %1606 = vmatpush1.bf16.xpose.msra.mxu0 0
        %1607 = vmatprep.subr.bf16.mxu0 0
        %1608 = vmatpush1.bf16.xpose.msra.mxu0 0
        %1609 = vmatprep.subr.bf16.mxu0 0
        %1610 = vmatpush1.bf16.xpose.msra.mxu0 0
        %1611 = vmatprep.subr.bf16.mxu0 0
        %1612 = vmatpush1.bf16.xpose.msra.mxu0 0
        %1613 = vmatprep.mubr.bf16.mxu0 0
        %1614 = vmatmul.mubr.bf16.gmra.mrb[0].mxu0 %v1576
        %v1615 = vpop.f32.mrb[0].mxu0
        %v1616 = vadd.f32 %v1525, %v1615
        %v1617 = vpop.f32.mrb[0].mxu0
        %v1618 = vpop.f32.mrb[0].mxu0
        %v1619 = vadd.f32 %v1526, %v1618
        %v1620 = vpop.f32.mrb[0].mxu0
        %1621 = vdwg.mxu0
        %vm1622 = vcmask 130048
        %v1623 = vsel %vm1622, %v1569, -inf
        %1624 = vmax.xlane.f32.xlu0 %v1623
        %v1625 = vpop.xlane.xlu0 %1624
        %v1626 = vsel %vm1622, %v1572, -inf
        %1627 = vmax.xlane.f32.xlu0 %v1626
        %v1628 = vpop.xlane.xlu0 %1627
        %v1629 = vsel %vm1622, %v1616, -inf
        %1630 = vmax.xlane.f32.xlu0 %v1629
        %v1631 = vpop.xlane.xlu0 %1630
        %v1632 = vsel %vm1622, %v1619, -inf
        %1633 = vmax.xlane.f32.xlu0 %v1632
        %v1634 = vpop.xlane.xlu0 %1633
        %v1635 = vsub.f32 %v1569, %v1625
        %v1636 = vsub.f32 %v1572, %v1628
        %v1637 = vsub.f32 %v1616, %v1631
        %v1638 = vsub.f32 %v1619, %v1634
        %v1639 = vmul.f32 %v1635, 1.442695
        %v1640 = vpow.pop %v1639
        %v1641 = vmul.f32 %v1636, 1.442695
        %v1642 = vpow.pop %v1641
        %v1643 = vmul.f32 %v1637, 1.442695
        %v1644 = vpow.pop %v1643
        %v1645 = vmul.f32 %v1638, 1.442695
        %v1646 = vpow.pop %v1645
        %v1647 = vsel %vm1622, %v1640, 0.0
        %1648 = vadd.xlane.f32.xlu0 %v1647
        %v1649 = vpop.xlane.xlu0 %1648
        %v1650 = vsel %vm1622, %v1642, 0.0
        %1651 = vadd.xlane.f32.xlu0 %v1650
        %v1652 = vpop.xlane.xlu0 %1651
        %v1653 = vsel %vm1622, %v1644, 0.0
        %1654 = vadd.xlane.f32.xlu0 %v1653
        %v1655 = vpop.xlane.xlu0 %1654
        %v1656 = vsel %vm1622, %v1646, 0.0
        %1657 = vadd.xlane.f32.xlu0 %v1656
        %v1658 = vpop.xlane.xlu0 %1657
        %v1659 = vrcp.pop %v1649
        %v1660 = vrcp.pop %v1652
        %v1661 = vrcp.pop %v1655
        %v1662 = vrcp.pop %v1658
        %v1663 = vmul.f32 %v1640, %v1659
        %v1664 = vmul.f32 %v1642, %v1660
        %v1665 = vmul.f32 %v1644, %v1661
        %v1666 = vmul.f32 %v1646, %v1662
        %v1667 = vpack.c.bf16 %v1664, %v1663
        %v1668 = vpack.c.bf16 %v1666, %v1665
        %v1670 = vsel %vm1622, %v1667, 0
        %1672 = vmatprep.subr.bf16.mxu0 0
        %1673 = vmatpush1.bf16.msra.mxu0 %v1521
        %1674 = vmatprep.subr.bf16.mxu0 0
        %1675 = vmatpush1.bf16.msra.mxu0 0
        %1676 = vmatprep.subr.bf16.mxu0 0
        %1677 = vmatpush1.bf16.msra.mxu0 0
        %1678 = vmatprep.subr.bf16.mxu0 0
        %1679 = vmatpush1.bf16.msra.mxu0 0
        %1680 = vmatprep.subr.bf16.mxu0 0
        %1681 = vmatpush1.bf16.msra.mxu0 0
        %1682 = vmatprep.subr.bf16.mxu0 0
        %1683 = vmatpush1.bf16.msra.mxu0 0
        %1684 = vmatprep.subr.bf16.mxu0 0
        %1685 = vmatpush1.bf16.msra.mxu0 0
        %1686 = vmatprep.subr.bf16.mxu0 0
        %1687 = vmatpush1.bf16.msra.mxu0 0
        %1688 = vmatprep.subr.bf16.mxu0 0
        %1689 = vmatpush1.bf16.msra.mxu0 0
        %1690 = vmatprep.subr.bf16.mxu0 0
        %1691 = vmatpush1.bf16.msra.mxu0 0
        %1692 = vmatprep.subr.bf16.mxu0 0
        %1693 = vmatpush1.bf16.msra.mxu0 0
        %1694 = vmatprep.subr.bf16.mxu0 0
        %1695 = vmatpush1.bf16.msra.mxu0 0
        %1696 = vmatprep.subr.bf16.mxu0 0
        %1697 = vmatpush1.bf16.msra.mxu0 0
        %1698 = vmatprep.subr.bf16.mxu0 0
        %1699 = vmatpush1.bf16.msra.mxu0 0
        %1700 = vmatprep.subr.bf16.mxu0 0
        %1701 = vmatpush1.bf16.msra.mxu0 0
        %1702 = vmatprep.subr.bf16.mxu0 0
        %1703 = vmatpush1.bf16.msra.mxu0 0
        %1704 = vmatprep.mubr.bf16.mxu0 0
        %1705 = vmatmul.mubr.bf16.gmra.mrb[0].mxu0 %v1670
        %v1706 = vpop.f32.mrb[0].mxu0
        %v1707 = vadd.f32 0.0, %v1706
        %v1708 = vpop.f32.mrb[0].mxu0
        %v1709 = vpop.f32.mrb[0].mxu0
        %v1710 = vadd.f32 0.0, %v1709
        %v1711 = vpop.f32.mrb[0].mxu0
        %1712 = vdwg.mxu0
        %v1714 = vsel %vm1622, %v1668, 0
        %1716 = vmatprep.subr.bf16.mxu0 0
        %1717 = vmatpush1.bf16.msra.mxu0 %v1522
        %1718 = vmatprep.subr.bf16.mxu0 0
        %1719 = vmatpush1.bf16.msra.mxu0 0
        %1720 = vmatprep.subr.bf16.mxu0 0
        %1721 = vmatpush1.bf16.msra.mxu0 0
        %1722 = vmatprep.subr.bf16.mxu0 0
        %1723 = vmatpush1.bf16.msra.mxu0 0
        %1724 = vmatprep.subr.bf16.mxu0 0
        %1725 = vmatpush1.bf16.msra.mxu0 0
        %1726 = vmatprep.subr.bf16.mxu0 0
        %1727 = vmatpush1.bf16.msra.mxu0 0
        %1728 = vmatprep.subr.bf16.mxu0 0
        %1729 = vmatpush1.bf16.msra.mxu0 0
        %1730 = vmatprep.subr.bf16.mxu0 0
        %1731 = vmatpush1.bf16.msra.mxu0 0
        %1732 = vmatprep.subr.bf16.mxu0 0
        %1733 = vmatpush1.bf16.msra.mxu0 0
        %1734 = vmatprep.subr.bf16.mxu0 0
        %1735 = vmatpush1.bf16.msra.mxu0 0
        %1736 = vmatprep.subr.bf16.mxu0 0
        %1737 = vmatpush1.bf16.msra.mxu0 0
        %1738 = vmatprep.subr.bf16.mxu0 0
        %1739 = vmatpush1.bf16.msra.mxu0 0
        %1740 = vmatprep.subr.bf16.mxu0 0
        %1741 = vmatpush1.bf16.msra.mxu0 0
        %1742 = vmatprep.subr.bf16.mxu0 0
        %1743 = vmatpush1.bf16.msra.mxu0 0
        %1744 = vmatprep.subr.bf16.mxu0 0
        %1745 = vmatpush1.bf16.msra.mxu0 0
        %1746 = vmatprep.subr.bf16.mxu0 0
        %1747 = vmatpush1.bf16.msra.mxu0 0
        %1748 = vmatprep.mubr.bf16.mxu0 0
        %1749 = vmatmul.mubr.bf16.gmra.mrb[0].mxu0 %v1714
        %v1750 = vpop.f32.mrb[0].mxu0
        %v1751 = vadd.f32 0.0, %v1750
        %v1752 = vpop.f32.mrb[0].mxu0
        %v1753 = vpop.f32.mrb[0].mxu0
        %v1754 = vadd.f32 0.0, %v1753
        %v1755 = vpop.f32.mrb[0].mxu0
        %1756 = vdwg.mxu0
        %s1757 = scalar_lea.vmem [#allocation3], 32
        %v1758 = vld [vmem:[%s1757] sm:$0xff]
        %v1759 = vld [vmem:[%s1757 + $0x8] sm:$0xff]
        %v1760 = vld [vmem:[%s1757 + $0x10] sm:$0xff]
        %v1761 = vld [vmem:[%s1757 + $0x18] sm:$0xff]
        %1763 = vrot.lane.b32.xlu0 %v1517, 120
        %v1764 = vpop.permute.xlu0 %1763
        %1766 = vrot.lane.b32.xlu0 %v1519, 120
        %v1767 = vpop.permute.xlu0 %1766
        %v1769 = vsel %vm1527, %v1764, 0
        %v1772 = vsel %vm1527, %v1767, 0
        %1774 = vmatprep.subr.bf16.mxu0 0
        %1775 = vmatpush1.bf16.xpose.msra.mxu0 %v1772
        %1776 = vmatprep.subr.bf16.mxu0 0
        %1777 = vmatpush1.bf16.xpose.msra.mxu0 0
        %1778 = vmatprep.subr.bf16.mxu0 0
        %1779 = vmatpush1.bf16.xpose.msra.mxu0 0
        %1780 = vmatprep.subr.bf16.mxu0 0
        %1781 = vmatpush1.bf16.xpose.msra.mxu0 0
        %1782 = vmatprep.subr.bf16.mxu0 0
        %1783 = vmatpush1.bf16.xpose.msra.mxu0 0
        %1784 = vmatprep.subr.bf16.mxu0 0
        %1785 = vmatpush1.bf16.xpose.msra.mxu0 0
        %1786 = vmatprep.subr.bf16.mxu0 0
        %1787 = vmatpush1.bf16.xpose.msra.mxu0 0
        %1788 = vmatprep.subr.bf16.mxu0 0
        %1789 = vmatpush1.bf16.xpose.msra.mxu0 0
        %1790 = vmatprep.subr.bf16.mxu0 0
        %1791 = vmatpush1.bf16.xpose.msra.mxu0 0
        %1792 = vmatprep.subr.bf16.mxu0 0
        %1793 = vmatpush1.bf16.xpose.msra.mxu0 0
        %1794 = vmatprep.subr.bf16.mxu0 0
        %1795 = vmatpush1.bf16.xpose.msra.mxu0 0
        %1796 = vmatprep.subr.bf16.mxu0 0
        %1797 = vmatpush1.bf16.xpose.msra.mxu0 0
        %1798 = vmatprep.subr.bf16.mxu0 0
        %1799 = vmatpush1.bf16.xpose.msra.mxu0 0
        %1800 = vmatprep.subr.bf16.mxu0 0
        %1801 = vmatpush1.bf16.xpose.msra.mxu0 0
        %1802 = vmatprep.subr.bf16.mxu0 0
        %1803 = vmatpush1.bf16.xpose.msra.mxu0 0
        %1804 = vmatprep.subr.bf16.mxu0 0
        %1805 = vmatpush1.bf16.xpose.msra.mxu0 0
        %1806 = vmatprep.mubr.bf16.mxu0 0
        %1807 = vmatmul.mubr.bf16.gmra.mrb[0].mxu0 %v1769
        %v1808 = vpop.f32.mrb[0].mxu0
        %v1809 = vadd.f32 %v1758, %v1808
        %v1810 = vpop.f32.mrb[0].mxu0
        %v1811 = vpop.f32.mrb[0].mxu0
        %v1812 = vadd.f32 %v1759, %v1811
        %v1813 = vpop.f32.mrb[0].mxu0
        %1814 = vdwg.mxu0
        %1816 = vrot.lane.b32.xlu0 %v1518, 120
        %v1817 = vpop.permute.xlu0 %1816
        %1819 = vrot.lane.b32.xlu0 %v1520, 120
        %v1820 = vpop.permute.xlu0 %1819
        %v1822 = vsel %vm1527, %v1817, 0
        %v1825 = vsel %vm1527, %v1820, 0
        %1827 = vmatprep.subr.bf16.mxu0 0
        %1828 = vmatpush1.bf16.xpose.msra.mxu0 %v1825
        %1829 = vmatprep.subr.bf16.mxu0 0
        %1830 = vmatpush1.bf16.xpose.msra.mxu0 0
        %1831 = vmatprep.subr.bf16.mxu0 0
        %1832 = vmatpush1.bf16.xpose.msra.mxu0 0
        %1833 = vmatprep.subr.bf16.mxu0 0
        %1834 = vmatpush1.bf16.xpose.msra.mxu0 0
        %1835 = vmatprep.subr.bf16.mxu0 0
        %1836 = vmatpush1.bf16.xpose.msra.mxu0 0
        %1837 = vmatprep.subr.bf16.mxu0 0
        %1838 = vmatpush1.bf16.xpose.msra.mxu0 0
        %1839 = vmatprep.subr.bf16.mxu0 0
        %1840 = vmatpush1.bf16.xpose.msra.mxu0 0
        %1841 = vmatprep.subr.bf16.mxu0 0
        %1842 = vmatpush1.bf16.xpose.msra.mxu0 0
        %1843 = vmatprep.subr.bf16.mxu0 0
        %1844 = vmatpush1.bf16.xpose.msra.mxu0 0
        %1845 = vmatprep.subr.bf16.mxu0 0
        %1846 = vmatpush1.bf16.xpose.msra.mxu0 0
        %1847 = vmatprep.subr.bf16.mxu0 0
        %1848 = vmatpush1.bf16.xpose.msra.mxu0 0
        %1849 = vmatprep.subr.bf16.mxu0 0
        %1850 = vmatpush1.bf16.xpose.msra.mxu0 0
        %1851 = vmatprep.subr.bf16.mxu0 0
        %1852 = vmatpush1.bf16.xpose.msra.mxu0 0
        %1853 = vmatprep.subr.bf16.mxu0 0
        %1854 = vmatpush1.bf16.xpose.msra.mxu0 0
        %1855 = vmatprep.subr.bf16.mxu0 0
        %1856 = vmatpush1.bf16.xpose.msra.mxu0 0
        %1857 = vmatprep.subr.bf16.mxu0 0
        %1858 = vmatpush1.bf16.xpose.msra.mxu0 0
        %1859 = vmatprep.mubr.bf16.mxu0 0
        %1860 = vmatmul.mubr.bf16.gmra.mrb[0].mxu0 %v1822
        %v1861 = vpop.f32.mrb[0].mxu0
        %v1862 = vadd.f32 %v1760, %v1861
        %v1863 = vpop.f32.mrb[0].mxu0
        %v1864 = vpop.f32.mrb[0].mxu0
        %v1865 = vadd.f32 %v1761, %v1864
        %v1866 = vpop.f32.mrb[0].mxu0
        %1867 = vdwg.mxu0
        %v1868 = vsel %vm1622, %v1809, -inf
        %1869 = vmax.xlane.f32.xlu0 %v1868
        %v1870 = vpop.xlane.xlu0 %1869
        %v1871 = vsel %vm1622, %v1812, -inf
        %1872 = vmax.xlane.f32.xlu0 %v1871
        %v1873 = vpop.xlane.xlu0 %1872
        %v1874 = vsel %vm1622, %v1862, -inf
        %1875 = vmax.xlane.f32.xlu0 %v1874
        %v1876 = vpop.xlane.xlu0 %1875
        %v1877 = vsel %vm1622, %v1865, -inf
        %1878 = vmax.xlane.f32.xlu0 %v1877
        %v1879 = vpop.xlane.xlu0 %1878
        %v1880 = vsub.f32 %v1809, %v1870
        %v1881 = vsub.f32 %v1812, %v1873
        %v1882 = vsub.f32 %v1862, %v1876
        %v1883 = vsub.f32 %v1865, %v1879
        %v1884 = vmul.f32 %v1880, 1.442695
        %v1885 = vpow.pop %v1884
        %v1886 = vmul.f32 %v1881, 1.442695
        %v1887 = vpow.pop %v1886
        %v1888 = vmul.f32 %v1882, 1.442695
        %v1889 = vpow.pop %v1888
        %v1890 = vmul.f32 %v1883, 1.442695
        %v1891 = vpow.pop %v1890
        %v1892 = vsel %vm1622, %v1885, 0.0
        %1893 = vadd.xlane.f32.xlu0 %v1892
        %v1894 = vpop.xlane.xlu0 %1893
        %v1895 = vsel %vm1622, %v1887, 0.0
        %1896 = vadd.xlane.f32.xlu0 %v1895
        %v1897 = vpop.xlane.xlu0 %1896
        %v1898 = vsel %vm1622, %v1889, 0.0
        %1899 = vadd.xlane.f32.xlu0 %v1898
        %v1900 = vpop.xlane.xlu0 %1899
        %v1901 = vsel %vm1622, %v1891, 0.0
        %1902 = vadd.xlane.f32.xlu0 %v1901
        %v1903 = vpop.xlane.xlu0 %1902
        %v1904 = vrcp.pop %v1894
        %v1905 = vrcp.pop %v1897
        %v1906 = vrcp.pop %v1900
        %v1907 = vrcp.pop %v1903
        %v1908 = vmul.f32 %v1885, %v1904
        %v1909 = vmul.f32 %v1887, %v1905
        %v1910 = vmul.f32 %v1889, %v1906
        %v1911 = vmul.f32 %v1891, %v1907
        %v1912 = vpack.c.bf16 %v1909, %v1908
        %v1913 = vpack.c.bf16 %v1911, %v1910
        %1915 = vrot.lane.b32.xlu0 %v1521, 120
        %v1916 = vpop.permute.xlu0 %1915
        %v1919 = vsel %vm1622, %v1912, 0
        %1921 = vmatprep.subr.bf16.mxu0 0
        %1922 = vmatpush1.bf16.msra.mxu0 %v1916
        %1923 = vmatprep.subr.bf16.mxu0 0
        %1924 = vmatpush1.bf16.msra.mxu0 0
        %1925 = vmatprep.subr.bf16.mxu0 0
        %1926 = vmatpush1.bf16.msra.mxu0 0
        %1927 = vmatprep.subr.bf16.mxu0 0
        %1928 = vmatpush1.bf16.msra.mxu0 0
        %1929 = vmatprep.subr.bf16.mxu0 0
        %1930 = vmatpush1.bf16.msra.mxu0 0
        %1931 = vmatprep.subr.bf16.mxu0 0
        %1932 = vmatpush1.bf16.msra.mxu0 0
        %1933 = vmatprep.subr.bf16.mxu0 0
        %1934 = vmatpush1.bf16.msra.mxu0 0
        %1935 = vmatprep.subr.bf16.mxu0 0
        %1936 = vmatpush1.bf16.msra.mxu0 0
        %1937 = vmatprep.subr.bf16.mxu0 0
        %1938 = vmatpush1.bf16.msra.mxu0 0
        %1939 = vmatprep.subr.bf16.mxu0 0
        %1940 = vmatpush1.bf16.msra.mxu0 0
        %1941 = vmatprep.subr.bf16.mxu0 0
        %1942 = vmatpush1.bf16.msra.mxu0 0
        %1943 = vmatprep.subr.bf16.mxu0 0
        %1944 = vmatpush1.bf16.msra.mxu0 0
        %1945 = vmatprep.subr.bf16.mxu0 0
        %1946 = vmatpush1.bf16.msra.mxu0 0
        %1947 = vmatprep.subr.bf16.mxu0 0
        %1948 = vmatpush1.bf16.msra.mxu0 0
        %1949 = vmatprep.subr.bf16.mxu0 0
        %1950 = vmatpush1.bf16.msra.mxu0 0
        %1951 = vmatprep.subr.bf16.mxu0 0
        %1952 = vmatpush1.bf16.msra.mxu0 0
        %1953 = vmatprep.mubr.bf16.mxu0 0
        %1954 = vmatmul.mubr.bf16.gmra.mrb[0].mxu0 %v1919
        %v1955 = vpop.f32.mrb[0].mxu0
        %v1956 = vadd.f32 0.0, %v1955
        %v1957 = vpop.f32.mrb[0].mxu0
        %v1958 = vpop.f32.mrb[0].mxu0
        %v1959 = vadd.f32 0.0, %v1958
        %v1960 = vpop.f32.mrb[0].mxu0
        %1961 = vdwg.mxu0
        %1963 = vrot.lane.b32.xlu0 %v1522, 120
        %v1964 = vpop.permute.xlu0 %1963
        %v1967 = vsel %vm1622, %v1913, 0
        %1969 = vmatprep.subr.bf16.mxu0 0
        %1970 = vmatpush1.bf16.msra.mxu0 %v1964
        %1971 = vmatprep.subr.bf16.mxu0 0
        %1972 = vmatpush1.bf16.msra.mxu0 0
        %1973 = vmatprep.subr.bf16.mxu0 0
        %1974 = vmatpush1.bf16.msra.mxu0 0
        %1975 = vmatprep.subr.bf16.mxu0 0
        %1976 = vmatpush1.bf16.msra.mxu0 0
        %1977 = vmatprep.subr.bf16.mxu0 0
        %1978 = vmatpush1.bf16.msra.mxu0 0
        %1979 = vmatprep.subr.bf16.mxu0 0
        %1980 = vmatpush1.bf16.msra.mxu0 0
        %1981 = vmatprep.subr.bf16.mxu0 0
        %1982 = vmatpush1.bf16.msra.mxu0 0
        %1983 = vmatprep.subr.bf16.mxu0 0
        %1984 = vmatpush1.bf16.msra.mxu0 0
        %1985 = vmatprep.subr.bf16.mxu0 0
        %1986 = vmatpush1.bf16.msra.mxu0 0
        %1987 = vmatprep.subr.bf16.mxu0 0
        %1988 = vmatpush1.bf16.msra.mxu0 0
        %1989 = vmatprep.subr.bf16.mxu0 0
        %1990 = vmatpush1.bf16.msra.mxu0 0
        %1991 = vmatprep.subr.bf16.mxu0 0
        %1992 = vmatpush1.bf16.msra.mxu0 0
        %1993 = vmatprep.subr.bf16.mxu0 0
        %1994 = vmatpush1.bf16.msra.mxu0 0
        %1995 = vmatprep.subr.bf16.mxu0 0
        %1996 = vmatpush1.bf16.msra.mxu0 0
        %1997 = vmatprep.subr.bf16.mxu0 0
        %1998 = vmatpush1.bf16.msra.mxu0 0
        %1999 = vmatprep.subr.bf16.mxu0 0
        %2000 = vmatpush1.bf16.msra.mxu0 0
        %2001 = vmatprep.mubr.bf16.mxu0 0
        %2002 = vmatmul.mubr.bf16.gmra.mrb[0].mxu0 %v1967
        %v2003 = vpop.f32.mrb[0].mxu0
        %v2004 = vadd.f32 0.0, %v2003
        %v2005 = vpop.f32.mrb[0].mxu0
        %v2006 = vpop.f32.mrb[0].mxu0
        %v2007 = vadd.f32 0.0, %v2006
        %v2008 = vpop.f32.mrb[0].mxu0
        %2009 = vdwg.mxu0
        %s2010 = scalar_lea.vmem [#allocation3], 64
        %v2011 = vld [vmem:[%s2010] sm:$0xff]
        %v2012 = vld [vmem:[%s2010 + $0x8] sm:$0xff]
        %v2013 = vld [vmem:[%s2010 + $0x10] sm:$0xff]
        %v2014 = vld [vmem:[%s2010 + $0x18] sm:$0xff]
        %2015 = vrot.lane.b32.xlu0 %v1517, 112
        %v2016 = vpop.permute.xlu0 %2015
        %2017 = vrot.lane.b32.xlu0 %v1519, 112
        %v2018 = vpop.permute.xlu0 %2017
        %v2020 = vsel %vm1527, %v2016, 0
        %v2023 = vsel %vm1527, %v2018, 0
        %2025 = vmatprep.subr.bf16.mxu0 0
        %2026 = vmatpush1.bf16.xpose.msra.mxu0 %v2023
        %2027 = vmatprep.subr.bf16.mxu0 0
        %2028 = vmatpush1.bf16.xpose.msra.mxu0 0
        %2029 = vmatprep.subr.bf16.mxu0 0
        %2030 = vmatpush1.bf16.xpose.msra.mxu0 0
        %2031 = vmatprep.subr.bf16.mxu0 0
        %2032 = vmatpush1.bf16.xpose.msra.mxu0 0
        %2033 = vmatprep.subr.bf16.mxu0 0
        %2034 = vmatpush1.bf16.xpose.msra.mxu0 0
        %2035 = vmatprep.subr.bf16.mxu0 0
        %2036 = vmatpush1.bf16.xpose.msra.mxu0 0
        %2037 = vmatprep.subr.bf16.mxu0 0
        %2038 = vmatpush1.bf16.xpose.msra.mxu0 0
        %2039 = vmatprep.subr.bf16.mxu0 0
        %2040 = vmatpush1.bf16.xpose.msra.mxu0 0
        %2041 = vmatprep.subr.bf16.mxu0 0
        %2042 = vmatpush1.bf16.xpose.msra.mxu0 0
        %2043 = vmatprep.subr.bf16.mxu0 0
        %2044 = vmatpush1.bf16.xpose.msra.mxu0 0
        %2045 = vmatprep.subr.bf16.mxu0 0
        %2046 = vmatpush1.bf16.xpose.msra.mxu0 0
        %2047 = vmatprep.subr.bf16.mxu0 0
        %2048 = vmatpush1.bf16.xpose.msra.mxu0 0
        %2049 = vmatprep.subr.bf16.mxu0 0
        %2050 = vmatpush1.bf16.xpose.msra.mxu0 0
        %2051 = vmatprep.subr.bf16.mxu0 0
        %2052 = vmatpush1.bf16.xpose.msra.mxu0 0
        %2053 = vmatprep.subr.bf16.mxu0 0
        %2054 = vmatpush1.bf16.xpose.msra.mxu0 0
        %2055 = vmatprep.subr.bf16.mxu0 0
        %2056 = vmatpush1.bf16.xpose.msra.mxu0 0
        %2057 = vmatprep.mubr.bf16.mxu0 0
        %2058 = vmatmul.mubr.bf16.gmra.mrb[0].mxu0 %v2020
        %v2059 = vpop.f32.mrb[0].mxu0
        %v2060 = vadd.f32 %v2011, %v2059
        %v2061 = vpop.f32.mrb[0].mxu0
        %v2062 = vpop.f32.mrb[0].mxu0
        %v2063 = vadd.f32 %v2012, %v2062
        %v2064 = vpop.f32.mrb[0].mxu0
        %2065 = vdwg.mxu0
        %2066 = vrot.lane.b32.xlu0 %v1518, 112
        %v2067 = vpop.permute.xlu0 %2066
        %2068 = vrot.lane.b32.xlu0 %v1520, 112
        %v2069 = vpop.permute.xlu0 %2068
        %v2071 = vsel %vm1527, %v2067, 0
        %v2074 = vsel %vm1527, %v2069, 0
        %2076 = vmatprep.subr.bf16.mxu0 0
        %2077 = vmatpush1.bf16.xpose.msra.mxu0 %v2074
        %2078 = vmatprep.subr.bf16.mxu0 0
        %2079 = vmatpush1.bf16.xpose.msra.mxu0 0
        %2080 = vmatprep.subr.bf16.mxu0 0
        %2081 = vmatpush1.bf16.xpose.msra.mxu0 0
        %2082 = vmatprep.subr.bf16.mxu0 0
        %2083 = vmatpush1.bf16.xpose.msra.mxu0 0
        %2084 = vmatprep.subr.bf16.mxu0 0
        %2085 = vmatpush1.bf16.xpose.msra.mxu0 0
        %2086 = vmatprep.subr.bf16.mxu0 0
        %2087 = vmatpush1.bf16.xpose.msra.mxu0 0
        %2088 = vmatprep.subr.bf16.mxu0 0
        %2089 = vmatpush1.bf16.xpose.msra.mxu0 0
        %2090 = vmatprep.subr.bf16.mxu0 0
        %2091 = vmatpush1.bf16.xpose.msra.mxu0 0
        %2092 = vmatprep.subr.bf16.mxu0 0
        %2093 = vmatpush1.bf16.xpose.msra.mxu0 0
        %2094 = vmatprep.subr.bf16.mxu0 0
        %2095 = vmatpush1.bf16.xpose.msra.mxu0 0
        %2096 = vmatprep.subr.bf16.mxu0 0
        %2097 = vmatpush1.bf16.xpose.msra.mxu0 0
        %2098 = vmatprep.subr.bf16.mxu0 0
        %2099 = vmatpush1.bf16.xpose.msra.mxu0 0
        %2100 = vmatprep.subr.bf16.mxu0 0
        %2101 = vmatpush1.bf16.xpose.msra.mxu0 0
        %2102 = vmatprep.subr.bf16.mxu0 0
        %2103 = vmatpush1.bf16.xpose.msra.mxu0 0
        %2104 = vmatprep.subr.bf16.mxu0 0
        %2105 = vmatpush1.bf16.xpose.msra.mxu0 0
        %2106 = vmatprep.subr.bf16.mxu0 0
        %2107 = vmatpush1.bf16.xpose.msra.mxu0 0
        %2108 = vmatprep.mubr.bf16.mxu0 0
        %2109 = vmatmul.mubr.bf16.gmra.mrb[0].mxu0 %v2071
        %v2110 = vpop.f32.mrb[0].mxu0
        %v2111 = vadd.f32 %v2013, %v2110
        %v2112 = vpop.f32.mrb[0].mxu0
        %v2113 = vpop.f32.mrb[0].mxu0
        %v2114 = vadd.f32 %v2014, %v2113
        %v2115 = vpop.f32.mrb[0].mxu0
        %2116 = vdwg.mxu0
        %v2117 = vsel %vm1622, %v2060, -inf
        %2118 = vmax.xlane.f32.xlu0 %v2117
        %v2119 = vpop.xlane.xlu0 %2118
        %v2120 = vsel %vm1622, %v2063, -inf
        %2121 = vmax.xlane.f32.xlu0 %v2120
        %v2122 = vpop.xlane.xlu0 %2121
        %v2123 = vsel %vm1622, %v2111, -inf
        %2124 = vmax.xlane.f32.xlu0 %v2123
        %v2125 = vpop.xlane.xlu0 %2124
        %v2126 = vsel %vm1622, %v2114, -inf
        %2127 = vmax.xlane.f32.xlu0 %v2126
        %v2128 = vpop.xlane.xlu0 %2127
        %v2129 = vsub.f32 %v2060, %v2119
        %v2130 = vsub.f32 %v2063, %v2122
        %v2131 = vsub.f32 %v2111, %v2125
        %v2132 = vsub.f32 %v2114, %v2128
        %v2133 = vmul.f32 %v2129, 1.442695
        %v2134 = vpow.pop %v2133
        %v2135 = vmul.f32 %v2130, 1.442695
        %v2136 = vpow.pop %v2135
        %v2137 = vmul.f32 %v2131, 1.442695
        %v2138 = vpow.pop %v2137
        %v2139 = vmul.f32 %v2132, 1.442695
        %v2140 = vpow.pop %v2139
        %v2141 = vsel %vm1622, %v2134, 0.0
        %2142 = vadd.xlane.f32.xlu0 %v2141
        %v2143 = vpop.xlane.xlu0 %2142
        %v2144 = vsel %vm1622, %v2136, 0.0
        %2145 = vadd.xlane.f32.xlu0 %v2144
        %v2146 = vpop.xlane.xlu0 %2145
        %v2147 = vsel %vm1622, %v2138, 0.0
        %2148 = vadd.xlane.f32.xlu0 %v2147
        %v2149 = vpop.xlane.xlu0 %2148
        %v2150 = vsel %vm1622, %v2140, 0.0
        %2151 = vadd.xlane.f32.xlu0 %v2150
        %v2152 = vpop.xlane.xlu0 %2151
        %v2153 = vrcp.pop %v2143
        %v2154 = vrcp.pop %v2146
        %v2155 = vrcp.pop %v2149
        %v2156 = vrcp.pop %v2152
        %v2157 = vmul.f32 %v2134, %v2153
        %v2158 = vmul.f32 %v2136, %v2154
        %v2159 = vmul.f32 %v2138, %v2155
        %v2160 = vmul.f32 %v2140, %v2156
        %v2161 = vpack.c.bf16 %v2158, %v2157
        %v2162 = vpack.c.bf16 %v2160, %v2159
        %2163 = vrot.lane.b32.xlu0 %v1521, 112
        %v2164 = vpop.permute.xlu0 %2163
        %v2167 = vsel %vm1622, %v2161, 0
        %2169 = vmatprep.subr.bf16.mxu0 0
        %2170 = vmatpush1.bf16.msra.mxu0 %v2164
        %2171 = vmatprep.subr.bf16.mxu0 0
        %2172 = vmatpush1.bf16.msra.mxu0 0
        %2173 = vmatprep.subr.bf16.mxu0 0
        %2174 = vmatpush1.bf16.msra.mxu0 0
        %2175 = vmatprep.subr.bf16.mxu0 0
        %2176 = vmatpush1.bf16.msra.mxu0 0
        %2177 = vmatprep.subr.bf16.mxu0 0
        %2178 = vmatpush1.bf16.msra.mxu0 0
        %2179 = vmatprep.subr.bf16.mxu0 0
        %2180 = vmatpush1.bf16.msra.mxu0 0
        %2181 = vmatprep.subr.bf16.mxu0 0
        %2182 = vmatpush1.bf16.msra.mxu0 0
        %2183 = vmatprep.subr.bf16.mxu0 0
        %2184 = vmatpush1.bf16.msra.mxu0 0
        %2185 = vmatprep.subr.bf16.mxu0 0
        %2186 = vmatpush1.bf16.msra.mxu0 0
        %2187 = vmatprep.subr.bf16.mxu0 0
        %2188 = vmatpush1.bf16.msra.mxu0 0
        %2189 = vmatprep.subr.bf16.mxu0 0
        %2190 = vmatpush1.bf16.msra.mxu0 0
        %2191 = vmatprep.subr.bf16.mxu0 0
        %2192 = vmatpush1.bf16.msra.mxu0 0
        %2193 = vmatprep.subr.bf16.mxu0 0
        %2194 = vmatpush1.bf16.msra.mxu0 0
        %2195 = vmatprep.subr.bf16.mxu0 0
        %2196 = vmatpush1.bf16.msra.mxu0 0
        %2197 = vmatprep.subr.bf16.mxu0 0
        %2198 = vmatpush1.bf16.msra.mxu0 0
        %2199 = vmatprep.subr.bf16.mxu0 0
        %2200 = vmatpush1.bf16.msra.mxu0 0
        %2201 = vmatprep.mubr.bf16.mxu0 0
        %2202 = vmatmul.mubr.bf16.gmra.mrb[0].mxu0 %v2167
        %v2203 = vpop.f32.mrb[0].mxu0
        %v2204 = vadd.f32 0.0, %v2203
        %v2205 = vpop.f32.mrb[0].mxu0
        %v2206 = vpop.f32.mrb[0].mxu0
        %v2207 = vadd.f32 0.0, %v2206
        %v2208 = vpop.f32.mrb[0].mxu0
        %2209 = vdwg.mxu0
        %2210 = vrot.lane.b32.xlu0 %v1522, 112
        %v2211 = vpop.permute.xlu0 %2210
        %v2214 = vsel %vm1622, %v2162, 0
        %2216 = vmatprep.subr.bf16.mxu0 0
        %2217 = vmatpush1.bf16.msra.mxu0 %v2211
        %2218 = vmatprep.subr.bf16.mxu0 0
        %2219 = vmatpush1.bf16.msra.mxu0 0
        %2220 = vmatprep.subr.bf16.mxu0 0
        %2221 = vmatpush1.bf16.msra.mxu0 0
        %2222 = vmatprep.subr.bf16.mxu0 0
        %2223 = vmatpush1.bf16.msra.mxu0 0
        %2224 = vmatprep.subr.bf16.mxu0 0
        %2225 = vmatpush1.bf16.msra.mxu0 0
        %2226 = vmatprep.subr.bf16.mxu0 0
        %2227 = vmatpush1.bf16.msra.mxu0 0
        %2228 = vmatprep.subr.bf16.mxu0 0
        %2229 = vmatpush1.bf16.msra.mxu0 0
        %2230 = vmatprep.subr.bf16.mxu0 0
        %2231 = vmatpush1.bf16.msra.mxu0 0
        %2232 = vmatprep.subr.bf16.mxu0 0
        %2233 = vmatpush1.bf16.msra.mxu0 0
        %2234 = vmatprep.subr.bf16.mxu0 0
        %2235 = vmatpush1.bf16.msra.mxu0 0
        %2236 = vmatprep.subr.bf16.mxu0 0
        %2237 = vmatpush1.bf16.msra.mxu0 0
        %2238 = vmatprep.subr.bf16.mxu0 0
        %2239 = vmatpush1.bf16.msra.mxu0 0
        %2240 = vmatprep.subr.bf16.mxu0 0
        %2241 = vmatpush1.bf16.msra.mxu0 0
        %2242 = vmatprep.subr.bf16.mxu0 0
        %2243 = vmatpush1.bf16.msra.mxu0 0
        %2244 = vmatprep.subr.bf16.mxu0 0
        %2245 = vmatpush1.bf16.msra.mxu0 0
        %2246 = vmatprep.subr.bf16.mxu0 0
        %2247 = vmatpush1.bf16.msra.mxu0 0
        %2248 = vmatprep.mubr.bf16.mxu0 0
        %2249 = vmatmul.mubr.bf16.gmra.mrb[0].mxu0 %v2214
        %v2250 = vpop.f32.mrb[0].mxu0
        %v2251 = vadd.f32 0.0, %v2250
        %v2252 = vpop.f32.mrb[0].mxu0
        %v2253 = vpop.f32.mrb[0].mxu0
        %v2254 = vadd.f32 0.0, %v2253
        %v2255 = vpop.f32.mrb[0].mxu0
        %2256 = vdwg.mxu0
        %s2257 = scalar_lea.vmem [#allocation3], 96
        %v2258 = vld [vmem:[%s2257] sm:$0xff]
        %v2259 = vld [vmem:[%s2257 + $0x8] sm:$0xff]
        %v2260 = vld [vmem:[%s2257 + $0x10] sm:$0xff]
        %v2261 = vld [vmem:[%s2257 + $0x18] sm:$0xff]
        %2262 = vrot.lane.b32.xlu0 %v1517, 104
        %v2263 = vpop.permute.xlu0 %2262
        %2264 = vrot.lane.b32.xlu0 %v1519, 104
        %v2265 = vpop.permute.xlu0 %2264
        %v2267 = vsel %vm1527, %v2263, 0
        %v2270 = vsel %vm1527, %v2265, 0
        %2272 = vmatprep.subr.bf16.mxu0 0
        %2273 = vmatpush1.bf16.xpose.msra.mxu0 %v2270
        %2274 = vmatprep.subr.bf16.mxu0 0
        %2275 = vmatpush1.bf16.xpose.msra.mxu0 0
        %2276 = vmatprep.subr.bf16.mxu0 0
        %2277 = vmatpush1.bf16.xpose.msra.mxu0 0
        %2278 = vmatprep.subr.bf16.mxu0 0
        %2279 = vmatpush1.bf16.xpose.msra.mxu0 0
        %2280 = vmatprep.subr.bf16.mxu0 0
        %2281 = vmatpush1.bf16.xpose.msra.mxu0 0
        %2282 = vmatprep.subr.bf16.mxu0 0
        %2283 = vmatpush1.bf16.xpose.msra.mxu0 0
        %2284 = vmatprep.subr.bf16.mxu0 0
        %2285 = vmatpush1.bf16.xpose.msra.mxu0 0
        %2286 = vmatprep.subr.bf16.mxu0 0
        %2287 = vmatpush1.bf16.xpose.msra.mxu0 0
        %2288 = vmatprep.subr.bf16.mxu0 0
        %2289 = vmatpush1.bf16.xpose.msra.mxu0 0
        %2290 = vmatprep.subr.bf16.mxu0 0
        %2291 = vmatpush1.bf16.xpose.msra.mxu0 0
        %2292 = vmatprep.subr.bf16.mxu0 0
        %2293 = vmatpush1.bf16.xpose.msra.mxu0 0
        %2294 = vmatprep.subr.bf16.mxu0 0
        %2295 = vmatpush1.bf16.xpose.msra.mxu0 0
        %2296 = vmatprep.subr.bf16.mxu0 0
        %2297 = vmatpush1.bf16.xpose.msra.mxu0 0
        %2298 = vmatprep.subr.bf16.mxu0 0
        %2299 = vmatpush1.bf16.xpose.msra.mxu0 0
        %2300 = vmatprep.subr.bf16.mxu0 0
        %2301 = vmatpush1.bf16.xpose.msra.mxu0 0
        %2302 = vmatprep.subr.bf16.mxu0 0
        %2303 = vmatpush1.bf16.xpose.msra.mxu0 0
        %2304 = vmatprep.mubr.bf16.mxu0 0
        %2305 = vmatmul.mubr.bf16.gmra.mrb[0].mxu0 %v2267
        %v2306 = vpop.f32.mrb[0].mxu0
        %v2307 = vadd.f32 %v2258, %v2306
        %v2308 = vpop.f32.mrb[0].mxu0
        %v2309 = vpop.f32.mrb[0].mxu0
        %v2310 = vadd.f32 %v2259, %v2309
        %v2311 = vpop.f32.mrb[0].mxu0
        %2312 = vdwg.mxu0
        %2313 = vrot.lane.b32.xlu0 %v1518, 104
        %v2314 = vpop.permute.xlu0 %2313
        %2315 = vrot.lane.b32.xlu0 %v1520, 104
        %v2316 = vpop.permute.xlu0 %2315
        %v2318 = vsel %vm1527, %v2314, 0
        %v2321 = vsel %vm1527, %v2316, 0
        %2323 = vmatprep.subr.bf16.mxu0 0
        %2324 = vmatpush1.bf16.xpose.msra.mxu0 %v2321
        %2325 = vmatprep.subr.bf16.mxu0 0
        %2326 = vmatpush1.bf16.xpose.msra.mxu0 0
        %2327 = vmatprep.subr.bf16.mxu0 0
        %2328 = vmatpush1.bf16.xpose.msra.mxu0 0
        %2329 = vmatprep.subr.bf16.mxu0 0
        %2330 = vmatpush1.bf16.xpose.msra.mxu0 0
        %2331 = vmatprep.subr.bf16.mxu0 0
        %2332 = vmatpush1.bf16.xpose.msra.mxu0 0
        %2333 = vmatprep.subr.bf16.mxu0 0
        %2334 = vmatpush1.bf16.xpose.msra.mxu0 0
        %2335 = vmatprep.subr.bf16.mxu0 0
        %2336 = vmatpush1.bf16.xpose.msra.mxu0 0
        %2337 = vmatprep.subr.bf16.mxu0 0
        %2338 = vmatpush1.bf16.xpose.msra.mxu0 0
        %2339 = vmatprep.subr.bf16.mxu0 0
        %2340 = vmatpush1.bf16.xpose.msra.mxu0 0
        %2341 = vmatprep.subr.bf16.mxu0 0
        %2342 = vmatpush1.bf16.xpose.msra.mxu0 0
        %2343 = vmatprep.subr.bf16.mxu0 0
        %2344 = vmatpush1.bf16.xpose.msra.mxu0 0
        %2345 = vmatprep.subr.bf16.mxu0 0
        %2346 = vmatpush1.bf16.xpose.msra.mxu0 0
        %2347 = vmatprep.subr.bf16.mxu0 0
        %2348 = vmatpush1.bf16.xpose.msra.mxu0 0
        %2349 = vmatprep.subr.bf16.mxu0 0
        %2350 = vmatpush1.bf16.xpose.msra.mxu0 0
        %2351 = vmatprep.subr.bf16.mxu0 0
        %2352 = vmatpush1.bf16.xpose.msra.mxu0 0
        %2353 = vmatprep.subr.bf16.mxu0 0
        %2354 = vmatpush1.bf16.xpose.msra.mxu0 0
        %2355 = vmatprep.mubr.bf16.mxu0 0
        %2356 = vmatmul.mubr.bf16.gmra.mrb[0].mxu0 %v2318
        %v2357 = vpop.f32.mrb[0].mxu0
        %v2358 = vadd.f32 %v2260, %v2357
        %v2359 = vpop.f32.mrb[0].mxu0
        %v2360 = vpop.f32.mrb[0].mxu0
        %v2361 = vadd.f32 %v2261, %v2360
        %v2362 = vpop.f32.mrb[0].mxu0
        %2363 = vdwg.mxu0
        %v2364 = vsel %vm1622, %v2307, -inf
        %2365 = vmax.xlane.f32.xlu0 %v2364
        %v2366 = vpop.xlane.xlu0 %2365
        %v2367 = vsel %vm1622, %v2310, -inf
        %2368 = vmax.xlane.f32.xlu0 %v2367
        %v2369 = vpop.xlane.xlu0 %2368
        %v2370 = vsel %vm1622, %v2358, -inf
        %2371 = vmax.xlane.f32.xlu0 %v2370
        %v2372 = vpop.xlane.xlu0 %2371
        %v2373 = vsel %vm1622, %v2361, -inf
        %2374 = vmax.xlane.f32.xlu0 %v2373
        %v2375 = vpop.xlane.xlu0 %2374
        %v2376 = vsub.f32 %v2307, %v2366
        %v2377 = vsub.f32 %v2310, %v2369
        %v2378 = vsub.f32 %v2358, %v2372
        %v2379 = vsub.f32 %v2361, %v2375
        %v2380 = vmul.f32 %v2376, 1.442695
        %v2381 = vpow.pop %v2380
        %v2382 = vmul.f32 %v2377, 1.442695
        %v2383 = vpow.pop %v2382
        %v2384 = vmul.f32 %v2378, 1.442695
        %v2385 = vpow.pop %v2384
        %v2386 = vmul.f32 %v2379, 1.442695
        %v2387 = vpow.pop %v2386
        %v2388 = vsel %vm1622, %v2381, 0.0
        %2389 = vadd.xlane.f32.xlu0 %v2388
        %v2390 = vpop.xlane.xlu0 %2389
        %v2391 = vsel %vm1622, %v2383, 0.0
        %2392 = vadd.xlane.f32.xlu0 %v2391
        %v2393 = vpop.xlane.xlu0 %2392
        %v2394 = vsel %vm1622, %v2385, 0.0
        %2395 = vadd.xlane.f32.xlu0 %v2394
        %v2396 = vpop.xlane.xlu0 %2395
        %v2397 = vsel %vm1622, %v2387, 0.0
        %2398 = vadd.xlane.f32.xlu0 %v2397
        %v2399 = vpop.xlane.xlu0 %2398
        %v2400 = vrcp.pop %v2390
        %v2401 = vrcp.pop %v2393
        %v2402 = vrcp.pop %v2396
        %v2403 = vrcp.pop %v2399
        %v2404 = vmul.f32 %v2381, %v2400
        %v2405 = vmul.f32 %v2383, %v2401
        %v2406 = vmul.f32 %v2385, %v2402
        %v2407 = vmul.f32 %v2387, %v2403
        %v2408 = vpack.c.bf16 %v2405, %v2404
        %v2409 = vpack.c.bf16 %v2407, %v2406
        %2410 = vrot.lane.b32.xlu0 %v1521, 104
        %v2411 = vpop.permute.xlu0 %2410
        %v2414 = vsel %vm1622, %v2408, 0
        %2416 = vmatprep.subr.bf16.mxu0 0
        %2417 = vmatpush1.bf16.msra.mxu0 %v2411
        %2418 = vmatprep.subr.bf16.mxu0 0
        %2419 = vmatpush1.bf16.msra.mxu0 0
        %2420 = vmatprep.subr.bf16.mxu0 0
        %2421 = vmatpush1.bf16.msra.mxu0 0
        %2422 = vmatprep.subr.bf16.mxu0 0
        %2423 = vmatpush1.bf16.msra.mxu0 0
        %2424 = vmatprep.subr.bf16.mxu0 0
        %2425 = vmatpush1.bf16.msra.mxu0 0
        %2426 = vmatprep.subr.bf16.mxu0 0
        %2427 = vmatpush1.bf16.msra.mxu0 0
        %2428 = vmatprep.subr.bf16.mxu0 0
        %2429 = vmatpush1.bf16.msra.mxu0 0
        %2430 = vmatprep.subr.bf16.mxu0 0
        %2431 = vmatpush1.bf16.msra.mxu0 0
        %2432 = vmatprep.subr.bf16.mxu0 0
        %2433 = vmatpush1.bf16.msra.mxu0 0
        %2434 = vmatprep.subr.bf16.mxu0 0
        %2435 = vmatpush1.bf16.msra.mxu0 0
        %2436 = vmatprep.subr.bf16.mxu0 0
        %2437 = vmatpush1.bf16.msra.mxu0 0
        %2438 = vmatprep.subr.bf16.mxu0 0
        %2439 = vmatpush1.bf16.msra.mxu0 0
        %2440 = vmatprep.subr.bf16.mxu0 0
        %2441 = vmatpush1.bf16.msra.mxu0 0
        %2442 = vmatprep.subr.bf16.mxu0 0
        %2443 = vmatpush1.bf16.msra.mxu0 0
        %2444 = vmatprep.subr.bf16.mxu0 0
        %2445 = vmatpush1.bf16.msra.mxu0 0
        %2446 = vmatprep.subr.bf16.mxu0 0
        %2447 = vmatpush1.bf16.msra.mxu0 0
        %2448 = vmatprep.mubr.bf16.mxu0 0
        %2449 = vmatmul.mubr.bf16.gmra.mrb[0].mxu0 %v2414
        %v2450 = vpop.f32.mrb[0].mxu0
        %v2451 = vadd.f32 0.0, %v2450
        %v2452 = vpop.f32.mrb[0].mxu0
        %v2453 = vpop.f32.mrb[0].mxu0
        %v2454 = vadd.f32 0.0, %v2453
        %v2455 = vpop.f32.mrb[0].mxu0
        %2456 = vdwg.mxu0
        %2457 = vrot.lane.b32.xlu0 %v1522, 104
        %v2458 = vpop.permute.xlu0 %2457
        %v2461 = vsel %vm1622, %v2409, 0
        %2463 = vmatprep.subr.bf16.mxu0 0
        %2464 = vmatpush1.bf16.msra.mxu0 %v2458
        %2465 = vmatprep.subr.bf16.mxu0 0
        %2466 = vmatpush1.bf16.msra.mxu0 0
        %2467 = vmatprep.subr.bf16.mxu0 0
        %2468 = vmatpush1.bf16.msra.mxu0 0
        %2469 = vmatprep.subr.bf16.mxu0 0
        %2470 = vmatpush1.bf16.msra.mxu0 0
        %2471 = vmatprep.subr.bf16.mxu0 0
        %2472 = vmatpush1.bf16.msra.mxu0 0
        %2473 = vmatprep.subr.bf16.mxu0 0
        %2474 = vmatpush1.bf16.msra.mxu0 0
        %2475 = vmatprep.subr.bf16.mxu0 0
        %2476 = vmatpush1.bf16.msra.mxu0 0
        %2477 = vmatprep.subr.bf16.mxu0 0
        %2478 = vmatpush1.bf16.msra.mxu0 0
        %2479 = vmatprep.subr.bf16.mxu0 0
        %2480 = vmatpush1.bf16.msra.mxu0 0
        %2481 = vmatprep.subr.bf16.mxu0 0
        %2482 = vmatpush1.bf16.msra.mxu0 0
        %2483 = vmatprep.subr.bf16.mxu0 0
        %2484 = vmatpush1.bf16.msra.mxu0 0
        %2485 = vmatprep.subr.bf16.mxu0 0
        %2486 = vmatpush1.bf16.msra.mxu0 0
        %2487 = vmatprep.subr.bf16.mxu0 0
        %2488 = vmatpush1.bf16.msra.mxu0 0
        %2489 = vmatprep.subr.bf16.mxu0 0
        %2490 = vmatpush1.bf16.msra.mxu0 0
        %2491 = vmatprep.subr.bf16.mxu0 0
        %2492 = vmatpush1.bf16.msra.mxu0 0
        %2493 = vmatprep.subr.bf16.mxu0 0
        %2494 = vmatpush1.bf16.msra.mxu0 0
        %2495 = vmatprep.mubr.bf16.mxu0 0
        %2496 = vmatmul.mubr.bf16.gmra.mrb[0].mxu0 %v2461
        %v2497 = vpop.f32.mrb[0].mxu0
        %v2498 = vadd.f32 0.0, %v2497
        %v2499 = vpop.f32.mrb[0].mxu0
        %v2500 = vpop.f32.mrb[0].mxu0
        %v2501 = vadd.f32 0.0, %v2500
        %v2502 = vpop.f32.mrb[0].mxu0
        %2503 = vdwg.mxu0
        %2508 = vrot.lane.b32.xlu0 %v1956, 8
        %v2509 = vpop.permute.xlu0 %2508
        %2510 = vrot.lane.b32.xlu0 %v1959, 8
        %v2511 = vpop.permute.xlu0 %2510
        %2512 = vrot.lane.b32.xlu0 %v2004, 8
        %v2513 = vpop.permute.xlu0 %2512
        %2514 = vrot.lane.b32.xlu0 %v2007, 8
        %v2515 = vpop.permute.xlu0 %2514
        %2524 = vrot.lane.b32.xlu0 %v2204, 16
        %v2525 = vpop.permute.xlu0 %2524
        %2526 = vrot.lane.b32.xlu0 %v2207, 16
        %v2527 = vpop.permute.xlu0 %2526
        %2528 = vrot.lane.b32.xlu0 %v2251, 16
        %v2529 = vpop.permute.xlu0 %2528
        %2530 = vrot.lane.b32.xlu0 %v2254, 16
        %v2531 = vpop.permute.xlu0 %2530
        %2540 = vrot.lane.b32.xlu0 %v2451, 24
        %v2541 = vpop.permute.xlu0 %2540
        %2542 = vrot.lane.b32.xlu0 %v2454, 24
        %v2543 = vpop.permute.xlu0 %2542
        %2544 = vrot.lane.b32.xlu0 %v2498, 24
        %v2545 = vpop.permute.xlu0 %2544
        %2546 = vrot.lane.b32.xlu0 %v2501, 24
        %v2547 = vpop.permute.xlu0 %2546
        %v2552 = vsel %vm1527, %v1707, %v2509
        %v2553 = vsel %vm1527, %v1710, %v2511
        %v2554 = vsel %vm1527, %v1751, %v2513
        %v2555 = vsel %vm1527, %v1754, %v2515
        %v2556 = vsel %vm1622, %v2552, %v2525
        %v2557 = vsel %vm1622, %v2553, %v2527
        %v2558 = vsel %vm1622, %v2554, %v2529
        %v2559 = vsel %vm1622, %v2555, %v2531
        %vm2560 = vcmask 195584
        %v2561 = vsel %vm2560, %v2556, %v2541
        %v2562 = vsel %vm2560, %v2557, %v2543
        %v2563 = vsel %vm2560, %v2558, %v2545
        %v2564 = vsel %vm2560, %v2559, %v2547
        %v2565 = vpack.c.bf16 %v2562, %v2561
        %v2566 = vpack.c.bf16 %v2564, %v2563
        %v2567 = vld [vmem:[%s1054] sm:$0xf]
        %v2568 = vld [vmem:[%s1054 + $0x4] sm:$0xf]
        %v2569 = vld [vmem:[%s1054 + $0x8] sm:$0xf]
        %v2570 = vld [vmem:[%s1054 + $0xc] sm:$0xf]
        %v2571 = vld [vmem:[%s1062] sm:$0x1]
        %v2573 = vlaneseq
        %v2574 = vshrl.u32 %v2573, 7
        %v2575 = vsub.s32 0, %v2574
        %v2576 = vrot.slane %v2571, %v2575
        %v2582 = vunpack.c.l.b16 %v2567
        %v2583 = vunpack.c.l.b16 %v2568
        %v2584 = vunpack.c.l.b16 %v2569
        %v2585 = vunpack.c.l.b16 %v2570
        %v2586 = vpack.c.b16 %v2583, %v2582
        %v2587 = vpack.c.b16 %v2585, %v2584
        %v2591 = vsel %vm1317, %v2565, 0
        %v2594 = vsel %vm1317, %v2566, 0
        %2596 = vmatprep.subr.bf16.mxu0 0
        %2597 = vmatpush1.bf16.msra.mxu0 %v2586
        %2598 = vmatprep.subr.bf16.mxu0 0
        %2599 = vmatpush1.bf16.msra.mxu0 %v2587
        %2600 = vmatprep.subr.bf16.mxu0 0
        %2601 = vmatpush1.bf16.msra.mxu0 0
        %2602 = vmatprep.subr.bf16.mxu0 0
        %2603 = vmatpush1.bf16.msra.mxu0 0
        %2604 = vmatprep.subr.bf16.mxu0 0
        %2605 = vmatpush1.bf16.msra.mxu0 0
        %2606 = vmatprep.subr.bf16.mxu0 0
        %2607 = vmatpush1.bf16.msra.mxu0 0
        %2608 = vmatprep.subr.bf16.mxu0 0
        %2609 = vmatpush1.bf16.msra.mxu0 0
        %2610 = vmatprep.subr.bf16.mxu0 0
        %2611 = vmatpush1.bf16.msra.mxu0 0
        %2612 = vmatprep.subr.bf16.mxu0 0
        %2613 = vmatpush1.bf16.msra.mxu0 0
        %2614 = vmatprep.subr.bf16.mxu0 0
        %2615 = vmatpush1.bf16.msra.mxu0 0
        %2616 = vmatprep.subr.bf16.mxu0 0
        %2617 = vmatpush1.bf16.msra.mxu0 0
        %2618 = vmatprep.subr.bf16.mxu0 0
        %2619 = vmatpush1.bf16.msra.mxu0 0
        %2620 = vmatprep.subr.bf16.mxu0 0
        %2621 = vmatpush1.bf16.msra.mxu0 0
        %2622 = vmatprep.subr.bf16.mxu0 0
        %2623 = vmatpush1.bf16.msra.mxu0 0
        %2624 = vmatprep.subr.bf16.mxu0 0
        %2625 = vmatpush1.bf16.msra.mxu0 0
        %2626 = vmatprep.subr.bf16.mxu0 0
        %2627 = vmatpush1.bf16.msra.mxu0 0
        %2628 = vmatprep.mubr.bf16.mxu0 0
        %2629 = vmatmul.mubr.bf16.gmra.mrb[0].mxu0 %v2591
        %v2630 = vpop.f32.mrb[0].mxu0
        %v2631 = vadd.f32 %v2576, %v2630
        %v2632 = vpop.f32.mrb[0].mxu0
        %v2633 = vpop.f32.mrb[0].mxu0
        %v2634 = vadd.f32 %v2576, %v2633
        %v2635 = vpop.f32.mrb[0].mxu0
        %2636 = vmatprep.mubr.bf16.mxu0 0
        %2637 = vmatmul.mubr.bf16.gmra.mrb[0].mxu0 %v2594
        %v2638 = vpop.f32.mrb[0].mxu0
        %v2639 = vadd.f32 %v2576, %v2638
        %v2640 = vpop.f32.mrb[0].mxu0
        %v2641 = vpop.f32.mrb[0].mxu0
        %v2642 = vadd.f32 %v2576, %v2641
        %v2643 = vpop.f32.mrb[0].mxu0
        %2644 = vdwg.mxu0
        %v2645 = vadd.f32 %v1288, %v2631
        %v2646 = vadd.f32 %v1289, %v2634
        %v2647 = vadd.f32 %v1290, %v2639
        %v2648 = vadd.f32 %v1291, %v2642
        %v2649 = vld [vmem:[%s1070] sm:$0x1]
        %v2650 = vld [vmem:[%s1078] sm:$0x1]
        %v2651 = vsel %vm1317, %v2645, 0.0
        %2652 = vadd.xlane.f32.xlu0 %v2651
        %v2653 = vpop.xlane.xlu0 %2652
        %v2654 = vsel %vm1317, %v2646, 0.0
        %2655 = vadd.xlane.f32.xlu0 %v2654
        %v2656 = vpop.xlane.xlu0 %2655
        %v2657 = vsel %vm1317, %v2647, 0.0
        %2658 = vadd.xlane.f32.xlu0 %v2657
        %v2659 = vpop.xlane.xlu0 %2658
        %v2660 = vsel %vm1317, %v2648, 0.0
        %2661 = vadd.xlane.f32.xlu0 %v2660
        %v2662 = vpop.xlane.xlu0 %2661
        %v2663 = vrcp.pop 32.0
        %v2664 = vmul.f32 %v2653, %v2663
        %v2665 = vmul.f32 %v2656, %v2663
        %v2666 = vmul.f32 %v2659, %v2663
        %v2667 = vmul.f32 %v2662, %v2663
        %v2668 = vsub.f32 %v2645, %v2664
        %v2669 = vsub.f32 %v2646, %v2665
        %v2670 = vsub.f32 %v2647, %v2666
        %v2671 = vsub.f32 %v2648, %v2667
        %v2672 = vmul.f32 %v2668, %v2668
        %v2673 = vmul.f32 %v2669, %v2669
        %v2674 = vmul.f32 %v2670, %v2670
        %v2675 = vmul.f32 %v2671, %v2671
        %v2676 = vsel %vm1317, %v2672, 0.0
        %2677 = vadd.xlane.f32.xlu0 %v2676
        %v2678 = vpop.xlane.xlu0 %2677
        %v2679 = vsel %vm1317, %v2673, 0.0
        %2680 = vadd.xlane.f32.xlu0 %v2679
        %v2681 = vpop.xlane.xlu0 %2680
        %v2682 = vsel %vm1317, %v2674, 0.0
        %2683 = vadd.xlane.f32.xlu0 %v2682
        %v2684 = vpop.xlane.xlu0 %2683
        %v2685 = vsel %vm1317, %v2675, 0.0
        %2686 = vadd.xlane.f32.xlu0 %v2685
        %v2687 = vpop.xlane.xlu0 %2686
        %v2688 = vmul.f32 %v2678, %v2663
        %v2689 = vmul.f32 %v2681, %v2663
        %v2690 = vmul.f32 %v2684, %v2663
        %v2691 = vmul.f32 %v2687, %v2663
        %v2692 = vadd.f32 %v2688, 1e-05
        %v2693 = vadd.f32 %v2689, 1e-05
        %v2694 = vadd.f32 %v2690, 1e-05
        %v2695 = vadd.f32 %v2691, 1e-05
        %v2696 = vrsqrt.pop %v2692
        %v2697 = vrsqrt.pop %v2693
        %v2698 = vrsqrt.pop %v2694
        %v2699 = vrsqrt.pop %v2695
        %v2700 = vmul.f32 %v2668, %v2696
        %v2701 = vmul.f32 %v2669, %v2697
        %v2702 = vmul.f32 %v2670, %v2698
        %v2703 = vmul.f32 %v2671, %v2699
        %v2705 = vlaneseq
        %v2706 = vshrl.u32 %v2705, 7
        %v2707 = vsub.s32 0, %v2706
        %v2708 = vrot.slane %v2649, %v2707
        %v2710 = vmul.f32 %v2700, %v2708
        %v2711 = vmul.f32 %v2701, %v2708
        %v2712 = vmul.f32 %v2702, %v2708
        %v2713 = vmul.f32 %v2703, %v2708
        %v2715 = vlaneseq
        %v2716 = vshrl.u32 %v2715, 7
        %v2717 = vsub.s32 0, %v2716
        %v2718 = vrot.slane %v2650, %v2717
        %v2720 = vadd.f32 %v2710, %v2718
        %v2721 = vadd.f32 %v2711, %v2718
        %v2722 = vadd.f32 %v2712, %v2718
        %v2723 = vadd.f32 %v2713, %v2718
        %v2724 = vpack.c.bf16 %v2721, %v2720
        %v2725 = vpack.c.bf16 %v2723, %v2722
        %v2726 = vld [vmem:[%s1087] sm:$0xf]
        %v2727 = vld [vmem:[%s1087 + $0x4] sm:$0xf]
        %v2728 = vld [vmem:[%s1087 + $0x8] sm:$0xf]
        %v2729 = vld [vmem:[%s1087 + $0xc] sm:$0xf]
        %v2730 = vld [vmem:[%s1095] sm:$0x1]
        %v2732 = vlaneseq
        %v2733 = vshrl.u32 %v2732, 7
        %v2734 = vsub.s32 0, %v2733
        %v2735 = vrot.slane %v2730, %v2734
        %v2741 = vunpack.c.l.b16 %v2726
        %v2742 = vunpack.c.l.b16 %v2727
        %v2743 = vunpack.c.l.b16 %v2728
        %v2744 = vunpack.c.l.b16 %v2729
        %v2745 = vpack.c.b16 %v2742, %v2741
        %v2746 = vpack.c.b16 %v2744, %v2743
        %v2750 = vsel %vm1317, %v2724, 0
        %v2753 = vsel %vm1317, %v2725, 0
        %2755 = vmatprep.subr.bf16.mxu0 0
        %2756 = vmatpush1.bf16.msra.mxu0 %v2745
        %2757 = vmatprep.subr.bf16.mxu0 0
        %2758 = vmatpush1.bf16.msra.mxu0 %v2746
        %2759 = vmatprep.subr.bf16.mxu0 0
        %2760 = vmatpush1.bf16.msra.mxu0 0
        %2761 = vmatprep.subr.bf16.mxu0 0
        %2762 = vmatpush1.bf16.msra.mxu0 0
        %2763 = vmatprep.subr.bf16.mxu0 0
        %2764 = vmatpush1.bf16.msra.mxu0 0
        %2765 = vmatprep.subr.bf16.mxu0 0
        %2766 = vmatpush1.bf16.msra.mxu0 0
        %2767 = vmatprep.subr.bf16.mxu0 0
        %2768 = vmatpush1.bf16.msra.mxu0 0
        %2769 = vmatprep.subr.bf16.mxu0 0
        %2770 = vmatpush1.bf16.msra.mxu0 0
        %2771 = vmatprep.subr.bf16.mxu0 0
        %2772 = vmatpush1.bf16.msra.mxu0 0
        %2773 = vmatprep.subr.bf16.mxu0 0
        %2774 = vmatpush1.bf16.msra.mxu0 0
        %2775 = vmatprep.subr.bf16.mxu0 0
        %2776 = vmatpush1.bf16.msra.mxu0 0
        %2777 = vmatprep.subr.bf16.mxu0 0
        %2778 = vmatpush1.bf16.msra.mxu0 0
        %2779 = vmatprep.subr.bf16.mxu0 0
        %2780 = vmatpush1.bf16.msra.mxu0 0
        %2781 = vmatprep.subr.bf16.mxu0 0
        %2782 = vmatpush1.bf16.msra.mxu0 0
        %2783 = vmatprep.subr.bf16.mxu0 0
        %2784 = vmatpush1.bf16.msra.mxu0 0
        %2785 = vmatprep.subr.bf16.mxu0 0
        %2786 = vmatpush1.bf16.msra.mxu0 0
        %2787 = vmatprep.mubr.bf16.mxu0 0
        %2788 = vmatmul.mubr.bf16.gmra.mrb[0].mxu0 %v2750
        %v2789 = vpop.f32.mrb[0].mxu0
        %v2790 = vadd.f32 %v2735, %v2789
        %v2791 = vpop.f32.mrb[0].mxu0
        %v2792 = vpop.f32.mrb[0].mxu0
        %v2793 = vadd.f32 %v2735, %v2792
        %v2794 = vpop.f32.mrb[0].mxu0
        %2795 = vmatprep.mubr.bf16.mxu0 0
        %2796 = vmatmul.mubr.bf16.gmra.mrb[0].mxu0 %v2753
        %v2797 = vpop.f32.mrb[0].mxu0
        %v2798 = vadd.f32 %v2735, %v2797
        %v2799 = vpop.f32.mrb[0].mxu0
        %v2800 = vpop.f32.mrb[0].mxu0
        %v2801 = vadd.f32 %v2735, %v2800
        %v2802 = vpop.f32.mrb[0].mxu0
        %2803 = vdwg.mxu0
        %v2804 = vmul.f32 %v2790, %v2790
        %v2805 = vmul.f32 %v2793, %v2793
        %v2806 = vmul.f32 %v2798, %v2798
        %v2807 = vmul.f32 %v2801, %v2801
        %v2808 = vmul.f32 %v2790, %v2804
        %v2809 = vmul.f32 %v2793, %v2805
        %v2810 = vmul.f32 %v2798, %v2806
        %v2811 = vmul.f32 %v2801, %v2807
        %v2812 = vmul.f32 %v2808, 0.044715
        %v2813 = vmul.f32 %v2809, 0.044715
        %v2814 = vmul.f32 %v2810, 0.044715
        %v2815 = vmul.f32 %v2811, 0.044715
        %v2816 = vadd.f32 %v2790, %v2812
        %v2817 = vadd.f32 %v2793, %v2813
        %v2818 = vadd.f32 %v2798, %v2814
        %v2819 = vadd.f32 %v2801, %v2815
        %v2820 = vmul.f32 %v2816, 0.7978846
        %v2821 = vmul.f32 %v2817, 0.7978846
        %v2822 = vmul.f32 %v2818, 0.7978846
        %v2823 = vmul.f32 %v2819, 0.7978846
        %v2824 = vtanh.pop %v2820
        %v2825 = vtanh.pop %v2821
        %v2826 = vtanh.pop %v2822
        %v2827 = vtanh.pop %v2823
        %v2828 = vadd.f32 %v2824, 1.0
        %v2829 = vadd.f32 %v2825, 1.0
        %v2830 = vadd.f32 %v2826, 1.0
        %v2831 = vadd.f32 %v2827, 1.0
        %v2832 = vmul.f32 %v2828, 0.5
        %v2833 = vmul.f32 %v2829, 0.5
        %v2834 = vmul.f32 %v2830, 0.5
        %v2835 = vmul.f32 %v2831, 0.5
        %v2836 = vmul.f32 %v2790, %v2832
        %v2837 = vmul.f32 %v2793, %v2833
        %v2838 = vmul.f32 %v2798, %v2834
        %v2839 = vmul.f32 %v2801, %v2835
        %v2840 = vpack.c.bf16 %v2837, %v2836
        %v2841 = vpack.c.bf16 %v2839, %v2838
        %v2842 = vld [vmem:[%s1272] sm:$0xf]
        %v2843 = vld [vmem:[%s1272 + $0x4] sm:$0xf]
        %v2844 = vld [vmem:[%s1272 + $0x8] sm:$0xf]
        %v2845 = vld [vmem:[%s1272 + $0xc] sm:$0xf]
        %v2846 = vld [vmem:[%s1272 + $0x10] sm:$0xf]
        %v2847 = vld [vmem:[%s1272 + $0x14] sm:$0xf]
        %v2848 = vld [vmem:[%s1272 + $0x18] sm:$0xf]
        %v2849 = vld [vmem:[%s1272 + $0x1c] sm:$0xf]
        %v2850 = vld [vmem:[%s1103] sm:$0x1]
        %v2852 = vlaneseq
        %v2853 = vshrl.u32 %v2852, 7
        %v2854 = vsub.s32 0, %v2853
        %v2855 = vrot.slane %v2850, %v2854
        %v2865 = vunpack.c.l.b16 %v2842
        %v2866 = vunpack.c.l.b16 %v2843
        %v2867 = vunpack.c.l.b16 %v2844
        %v2868 = vunpack.c.l.b16 %v2845
        %v2869 = vunpack.c.l.b16 %v2846
        %v2870 = vunpack.c.l.b16 %v2847
        %v2871 = vunpack.c.l.b16 %v2848
        %v2872 = vunpack.c.l.b16 %v2849
        %v2873 = vpack.c.b16 %v2866, %v2865
        %v2874 = vpack.c.b16 %v2868, %v2867
        %v2875 = vpack.c.b16 %v2870, %v2869
        %v2876 = vpack.c.b16 %v2872, %v2871
        %vm2881 = vcmask 523264
        %v2883 = vsel %vm2881, %v2840, 0
        %v2886 = vsel %vm2881, %v2841, 0
        %2888 = vmatprep.subr.bf16.mxu0 0
        %2889 = vmatpush1.bf16.msra.mxu0 %v2873
        %2890 = vmatprep.subr.bf16.mxu0 0
        %2891 = vmatpush1.bf16.msra.mxu0 %v2874
        %2892 = vmatprep.subr.bf16.mxu0 0
        %2893 = vmatpush1.bf16.msra.mxu0 %v2875
        %2894 = vmatprep.subr.bf16.mxu0 0
        %2895 = vmatpush1.bf16.msra.mxu0 %v2876
        %2896 = vmatprep.subr.bf16.mxu0 0
        %2897 = vmatpush1.bf16.msra.mxu0 0
        %2898 = vmatprep.subr.bf16.mxu0 0
        %2899 = vmatpush1.bf16.msra.mxu0 0
        %2900 = vmatprep.subr.bf16.mxu0 0
        %2901 = vmatpush1.bf16.msra.mxu0 0
        %2902 = vmatprep.subr.bf16.mxu0 0
        %2903 = vmatpush1.bf16.msra.mxu0 0
        %2904 = vmatprep.subr.bf16.mxu0 0
        %2905 = vmatpush1.bf16.msra.mxu0 0
        %2906 = vmatprep.subr.bf16.mxu0 0
        %2907 = vmatpush1.bf16.msra.mxu0 0
        %2908 = vmatprep.subr.bf16.mxu0 0
        %2909 = vmatpush1.bf16.msra.mxu0 0
        %2910 = vmatprep.subr.bf16.mxu0 0
        %2911 = vmatpush1.bf16.msra.mxu0 0
        %2912 = vmatprep.subr.bf16.mxu0 0
        %2913 = vmatpush1.bf16.msra.mxu0 0
        %2914 = vmatprep.subr.bf16.mxu0 0
        %2915 = vmatpush1.bf16.msra.mxu0 0
        %2916 = vmatprep.subr.bf16.mxu0 0
        %2917 = vmatpush1.bf16.msra.mxu0 0
        %2918 = vmatprep.subr.bf16.mxu0 0
        %2919 = vmatpush1.bf16.msra.mxu0 0
        %2920 = vmatprep.mubr.bf16.mxu0 0
        %2921 = vmatmul.mubr.bf16.gmra.mrb[0].mxu0 %v2883
        %v2922 = vpop.f32.mrb[0].mxu0
        %v2923 = vadd.f32 %v2855, %v2922
        %v2924 = vpop.f32.mrb[0].mxu0
        %v2925 = vpop.f32.mrb[0].mxu0
        %v2926 = vadd.f32 %v2855, %v2925
        %v2927 = vpop.f32.mrb[0].mxu0
        %2928 = vmatprep.mubr.bf16.mxu0 0
        %2929 = vmatmul.mubr.bf16.gmra.mrb[0].mxu0 %v2886
        %v2930 = vpop.f32.mrb[0].mxu0
        %v2931 = vadd.f32 %v2855, %v2930
        %v2932 = vpop.f32.mrb[0].mxu0
        %v2933 = vpop.f32.mrb[0].mxu0
        %v2934 = vadd.f32 %v2855, %v2933
        %v2935 = vpop.f32.mrb[0].mxu0
        %2936 = vdwg.mxu0
        %v2937 = vadd.f32 %v2720, %v2923
        %v2938 = vadd.f32 %v2721, %v2926
        %v2939 = vadd.f32 %v2722, %v2931
        %v2940 = vadd.f32 %v2723, %v2934
        %v2941 = vld [vmem:[%s1111] sm:$0x1]
        %v2942 = vld [vmem:[%s1119] sm:$0x1]
        %v2943 = vsel %vm1317, %v2937, 0.0
        %2944 = vadd.xlane.f32.xlu0 %v2943
        %v2945 = vpop.xlane.xlu0 %2944
        %v2946 = vsel %vm1317, %v2938, 0.0
        %2947 = vadd.xlane.f32.xlu0 %v2946
        %v2948 = vpop.xlane.xlu0 %2947
        %v2949 = vsel %vm1317, %v2939, 0.0
        %2950 = vadd.xlane.f32.xlu0 %v2949
        %v2951 = vpop.xlane.xlu0 %2950
        %v2952 = vsel %vm1317, %v2940, 0.0
        %2953 = vadd.xlane.f32.xlu0 %v2952
        %v2954 = vpop.xlane.xlu0 %2953
        %v2955 = vmul.f32 %v2945, %v2663
        %v2956 = vmul.f32 %v2948, %v2663
        %v2957 = vmul.f32 %v2951, %v2663
        %v2958 = vmul.f32 %v2954, %v2663
        %v2959 = vsub.f32 %v2937, %v2955
        %v2960 = vsub.f32 %v2938, %v2956
        %v2961 = vsub.f32 %v2939, %v2957
        %v2962 = vsub.f32 %v2940, %v2958
        %v2963 = vmul.f32 %v2959, %v2959
        %v2964 = vmul.f32 %v2960, %v2960
        %v2965 = vmul.f32 %v2961, %v2961
        %v2966 = vmul.f32 %v2962, %v2962
        %v2967 = vsel %vm1317, %v2963, 0.0
        %2968 = vadd.xlane.f32.xlu0 %v2967
        %v2969 = vpop.xlane.xlu0 %2968
        %v2970 = vsel %vm1317, %v2964, 0.0
        %2971 = vadd.xlane.f32.xlu0 %v2970
        %v2972 = vpop.xlane.xlu0 %2971
        %v2973 = vsel %vm1317, %v2965, 0.0
        %2974 = vadd.xlane.f32.xlu0 %v2973
        %v2975 = vpop.xlane.xlu0 %2974
        %v2976 = vsel %vm1317, %v2966, 0.0
        %2977 = vadd.xlane.f32.xlu0 %v2976
        %v2978 = vpop.xlane.xlu0 %2977
        %v2979 = vmul.f32 %v2969, %v2663
        %v2980 = vmul.f32 %v2972, %v2663
        %v2981 = vmul.f32 %v2975, %v2663
        %v2982 = vmul.f32 %v2978, %v2663
        %v2983 = vadd.f32 %v2979, 1e-05
        %v2984 = vadd.f32 %v2980, 1e-05
        %v2985 = vadd.f32 %v2981, 1e-05
        %v2986 = vadd.f32 %v2982, 1e-05
        %v2987 = vrsqrt.pop %v2983
        %v2988 = vrsqrt.pop %v2984
        %v2989 = vrsqrt.pop %v2985
        %v2990 = vrsqrt.pop %v2986
        %v2991 = vmul.f32 %v2959, %v2987
        %v2992 = vmul.f32 %v2960, %v2988
        %v2993 = vmul.f32 %v2961, %v2989
        %v2994 = vmul.f32 %v2962, %v2990
        %v2996 = vlaneseq
        %v2997 = vshrl.u32 %v2996, 7
        %v2998 = vsub.s32 0, %v2997
        %v2999 = vrot.slane %v2941, %v2998
        %v3001 = vmul.f32 %v2991, %v2999
        %v3002 = vmul.f32 %v2992, %v2999
        %v3003 = vmul.f32 %v2993, %v2999
        %v3004 = vmul.f32 %v2994, %v2999
        %v3006 = vlaneseq
        %v3007 = vshrl.u32 %v3006, 7
        %v3008 = vsub.s32 0, %v3007
        %v3009 = vrot.slane %v2942, %v3008
        %v3011 = vadd.f32 %v3001, %v3009
        %v3012 = vadd.f32 %v3002, %v3009
        %v3013 = vadd.f32 %v3003, %v3009
        %v3014 = vadd.f32 %v3004, %v3009
        %3015 = vst.msk [vmem:[#allocation2] sm:$0xff] %vm1317, %v3011
        %3016 = vst.msk [vmem:[#allocation2 + $0x8] sm:$0xff] %vm1317, %v3012
        %3017 = vst.msk [vmem:[#allocation2 + $0x10] sm:$0xff] %vm1317, %v3013
        %3018 = vst.msk [vmem:[#allocation2 + $0x18] sm:$0xff] %vm1317, %v3014
        %p3019 = scmp.eq.s32.totalorder %s63, 1
        // Predicated region
        $region177: #{tpu_custom_call.1} parent=115 // pred_check
          %p3020 = pneg %p3019
        $region178: #{tpu_custom_call.1} parent=115 // pred_check_branch
          %3022 = sbr.rel (%p3020) target = $region180
        $region179: #{tpu_custom_call.1} parent=115 // pred_region
          %v3023 = vpack.c.bf16 %v3012, %v3011
          %v3024 = vpack.c.bf16 %v3014, %v3013
          %v3025 = vld [vmem:[%s18] sm:$0xf]
          %v3026 = vld [vmem:[%s18 + $0x4] sm:$0xf]
          %v3027 = vld [vmem:[%s18 + $0x8] sm:$0xf]
          %v3028 = vld [vmem:[%s18 + $0xc] sm:$0xf]
          %v3029 = vld [vmem:[%s19] sm:$0x1]
          %v3031 = vlaneseq
          %v3032 = vshrl.u32 %v3031, 7
          %v3033 = vsub.s32 0, %v3032
          %v3034 = vrot.slane %v3029, %v3033
          %v3040 = vunpack.c.l.b16 %v3025
          %v3041 = vunpack.c.l.b16 %v3026
          %v3042 = vunpack.c.l.b16 %v3027
          %v3043 = vunpack.c.l.b16 %v3028
          %v3044 = vpack.c.b16 %v3041, %v3040
          %v3045 = vpack.c.b16 %v3043, %v3042
          %v3049 = vsel %vm1317, %v3023, 0
          %v3052 = vsel %vm1317, %v3024, 0
          %3054 = vmatprep.subr.bf16.mxu0 0
          %3055 = vmatpush1.bf16.msra.mxu0 %v3044
          %3056 = vmatprep.subr.bf16.mxu0 0
          %3057 = vmatpush1.bf16.msra.mxu0 %v3045
          %3058 = vmatprep.subr.bf16.mxu0 0
          %3059 = vmatpush1.bf16.msra.mxu0 0
          %3060 = vmatprep.subr.bf16.mxu0 0
          %3061 = vmatpush1.bf16.msra.mxu0 0
          %3062 = vmatprep.subr.bf16.mxu0 0
          %3063 = vmatpush1.bf16.msra.mxu0 0
          %3064 = vmatprep.subr.bf16.mxu0 0
          %3065 = vmatpush1.bf16.msra.mxu0 0
          %3066 = vmatprep.subr.bf16.mxu0 0
          %3067 = vmatpush1.bf16.msra.mxu0 0
          %3068 = vmatprep.subr.bf16.mxu0 0
          %3069 = vmatpush1.bf16.msra.mxu0 0
          %3070 = vmatprep.subr.bf16.mxu0 0
          %3071 = vmatpush1.bf16.msra.mxu0 0
          %3072 = vmatprep.subr.bf16.mxu0 0
          %3073 = vmatpush1.bf16.msra.mxu0 0
          %3074 = vmatprep.subr.bf16.mxu0 0
          %3075 = vmatpush1.bf16.msra.mxu0 0
          %3076 = vmatprep.subr.bf16.mxu0 0
          %3077 = vmatpush1.bf16.msra.mxu0 0
          %3078 = vmatprep.subr.bf16.mxu0 0
          %3079 = vmatpush1.bf16.msra.mxu0 0
          %3080 = vmatprep.subr.bf16.mxu0 0
          %3081 = vmatpush1.bf16.msra.mxu0 0
          %3082 = vmatprep.subr.bf16.mxu0 0
          %3083 = vmatpush1.bf16.msra.mxu0 0
          %3084 = vmatprep.subr.bf16.mxu0 0
          %3085 = vmatpush1.bf16.msra.mxu0 0
          %3086 = vmatprep.mubr.bf16.mxu0 0
          %3087 = vmatmul.mubr.bf16.gmra.mrb[0].mxu0 %v3049
          %v3088 = vpop.f32.mrb[0].mxu0
          %v3089 = vadd.f32 %v3034, %v3088
          %v3090 = vpop.f32.mrb[0].mxu0
          %v3091 = vpop.f32.mrb[0].mxu0
          %v3092 = vadd.f32 %v3034, %v3091
          %v3093 = vpop.f32.mrb[0].mxu0
          %3094 = vmatprep.mubr.bf16.mxu0 0
          %3095 = vmatmul.mubr.bf16.gmra.mrb[0].mxu0 %v3052
          %v3096 = vpop.f32.mrb[0].mxu0
          %v3097 = vadd.f32 %v3034, %v3096
          %v3098 = vpop.f32.mrb[0].mxu0
          %v3099 = vpop.f32.mrb[0].mxu0
          %v3100 = vadd.f32 %v3034, %v3099
          %v3101 = vpop.f32.mrb[0].mxu0
          %3102 = vdwg.mxu0
          %v3103 = vmul.f32 %v3089, %v3089
          %v3104 = vmul.f32 %v3092, %v3092
          %v3105 = vmul.f32 %v3097, %v3097
          %v3106 = vmul.f32 %v3100, %v3100
          %v3107 = vmul.f32 %v3089, %v3103
          %v3108 = vmul.f32 %v3092, %v3104
          %v3109 = vmul.f32 %v3097, %v3105
          %v3110 = vmul.f32 %v3100, %v3106
          %v3111 = vmul.f32 %v3107, 0.044715
          %v3112 = vmul.f32 %v3108, 0.044715
          %v3113 = vmul.f32 %v3109, 0.044715
          %v3114 = vmul.f32 %v3110, 0.044715
          %v3115 = vadd.f32 %v3089, %v3111
          %v3116 = vadd.f32 %v3092, %v3112
          %v3117 = vadd.f32 %v3097, %v3113
          %v3118 = vadd.f32 %v3100, %v3114
          %v3119 = vmul.f32 %v3115, 0.7978846
          %v3120 = vmul.f32 %v3116, 0.7978846
          %v3121 = vmul.f32 %v3117, 0.7978846
          %v3122 = vmul.f32 %v3118, 0.7978846
          %v3123 = vtanh.pop %v3119
          %v3124 = vtanh.pop %v3120
          %v3125 = vtanh.pop %v3121
          %v3126 = vtanh.pop %v3122
          %v3127 = vadd.f32 %v3123, 1.0
          %v3128 = vadd.f32 %v3124, 1.0
          %v3129 = vadd.f32 %v3125, 1.0
          %v3130 = vadd.f32 %v3126, 1.0
          %v3131 = vmul.f32 %v3127, 0.5
          %v3132 = vmul.f32 %v3128, 0.5
          %v3133 = vmul.f32 %v3129, 0.5
          %v3134 = vmul.f32 %v3130, 0.5
          %v3135 = vmul.f32 %v3089, %v3131
          %v3136 = vmul.f32 %v3092, %v3132
          %v3137 = vmul.f32 %v3097, %v3133
          %v3138 = vmul.f32 %v3100, %v3134
          %v3139 = vld [vmem:[%s20] sm:$0x1]
          %v3140 = vld [vmem:[%s21] sm:$0x1]
          %v3141 = vsel %vm1317, %v3135, 0.0
          %3142 = vadd.xlane.f32.xlu0 %v3141
          %v3143 = vpop.xlane.xlu0 %3142
          %v3144 = vsel %vm1317, %v3136, 0.0
          %3145 = vadd.xlane.f32.xlu0 %v3144
          %v3146 = vpop.xlane.xlu0 %3145
          %v3147 = vsel %vm1317, %v3137, 0.0
          %3148 = vadd.xlane.f32.xlu0 %v3147
          %v3149 = vpop.xlane.xlu0 %3148
          %v3150 = vsel %vm1317, %v3138, 0.0
          %3151 = vadd.xlane.f32.xlu0 %v3150
          %v3152 = vpop.xlane.xlu0 %3151
          %v3153 = vmul.f32 %v3143, %v2663
          %v3154 = vmul.f32 %v3146, %v2663
          %v3155 = vmul.f32 %v3149, %v2663
          %v3156 = vmul.f32 %v3152, %v2663
          %v3157 = vsub.f32 %v3135, %v3153
          %v3158 = vsub.f32 %v3136, %v3154
          %v3159 = vsub.f32 %v3137, %v3155
          %v3160 = vsub.f32 %v3138, %v3156
          %v3161 = vmul.f32 %v3157, %v3157
          %v3162 = vmul.f32 %v3158, %v3158
          %v3163 = vmul.f32 %v3159, %v3159
          %v3164 = vmul.f32 %v3160, %v3160
          %v3165 = vsel %vm1317, %v3161, 0.0
          %3166 = vadd.xlane.f32.xlu0 %v3165
          %v3167 = vpop.xlane.xlu0 %3166
          %v3168 = vsel %vm1317, %v3162, 0.0
          %3169 = vadd.xlane.f32.xlu0 %v3168
          %v3170 = vpop.xlane.xlu0 %3169
          %v3171 = vsel %vm1317, %v3163, 0.0
          %3172 = vadd.xlane.f32.xlu0 %v3171
          %v3173 = vpop.xlane.xlu0 %3172
          %v3174 = vsel %vm1317, %v3164, 0.0
          %3175 = vadd.xlane.f32.xlu0 %v3174
          %v3176 = vpop.xlane.xlu0 %3175
          %v3177 = vmul.f32 %v3167, %v2663
          %v3178 = vmul.f32 %v3170, %v2663
          %v3179 = vmul.f32 %v3173, %v2663
          %v3180 = vmul.f32 %v3176, %v2663
          %v3181 = vadd.f32 %v3177, 1e-05
          %v3182 = vadd.f32 %v3178, 1e-05
          %v3183 = vadd.f32 %v3179, 1e-05
          %v3184 = vadd.f32 %v3180, 1e-05
          %v3185 = vrsqrt.pop %v3181
          %v3186 = vrsqrt.pop %v3182
          %v3187 = vrsqrt.pop %v3183
          %v3188 = vrsqrt.pop %v3184
          %v3189 = vmul.f32 %v3157, %v3185
          %v3190 = vmul.f32 %v3158, %v3186
          %v3191 = vmul.f32 %v3159, %v3187
          %v3192 = vmul.f32 %v3160, %v3188
          %v3194 = vlaneseq
          %v3195 = vshrl.u32 %v3194, 7
          %v3196 = vsub.s32 0, %v3195
          %v3197 = vrot.slane %v3139, %v3196
          %v3199 = vmul.f32 %v3189, %v3197
          %v3200 = vmul.f32 %v3190, %v3197
          %v3201 = vmul.f32 %v3191, %v3197
          %v3202 = vmul.f32 %v3192, %v3197
          %v3204 = vlaneseq
          %v3205 = vshrl.u32 %v3204, 7
          %v3206 = vsub.s32 0, %v3205
          %v3207 = vrot.slane %v3140, %v3206
          %v3209 = vadd.f32 %v3199, %v3207
          %v3210 = vadd.f32 %v3200, %v3207
          %v3211 = vadd.f32 %v3201, %v3207
          %v3212 = vadd.f32 %v3202, %v3207
          %v3213 = vpack.c.bf16 %v3210, %v3209
          %v3214 = vpack.c.bf16 %v3212, %v3211
          %v3215 = vld [vmem:[%s22] sm:$0xf]
          %v3216 = vld [vmem:[%s22 + $0x4] sm:$0xf]
          %v3217 = vld [vmem:[%s22 + $0x8] sm:$0xf]
          %v3218 = vld [vmem:[%s22 + $0xc] sm:$0xf]
          %v3219 = vld [vmem:[%s23] sm:$0x1]
          %v3221 = vlaneseq
          %v3222 = vshrl.u32 %v3221, 7
          %v3223 = vsub.s32 0, %v3222
          %v3224 = vrot.slane %v3219, %v3223
          %v3230 = vunpack.c.l.b16 %v3215
          %v3231 = vunpack.c.l.b16 %v3216
          %v3232 = vunpack.c.l.b16 %v3217
          %v3233 = vunpack.c.l.b16 %v3218
          %v3234 = vpack.c.b16 %v3231, %v3230
          %v3235 = vpack.c.b16 %v3233, %v3232
          %v3239 = vsel %vm1317, %v3213, 0
          %v3242 = vsel %vm1317, %v3214, 0
          %3244 = vmatprep.subr.bf16.mxu0 0
          %3245 = vmatpush1.bf16.msra.mxu0 %v3234
          %3246 = vmatprep.subr.bf16.mxu0 0
          %3247 = vmatpush1.bf16.msra.mxu0 %v3235
          %3248 = vmatprep.subr.bf16.mxu0 0
          %3249 = vmatpush1.bf16.msra.mxu0 0
          %3250 = vmatprep.subr.bf16.mxu0 0
          %3251 = vmatpush1.bf16.msra.mxu0 0
          %3252 = vmatprep.subr.bf16.mxu0 0
          %3253 = vmatpush1.bf16.msra.mxu0 0
          %3254 = vmatprep.subr.bf16.mxu0 0
          %3255 = vmatpush1.bf16.msra.mxu0 0
          %3256 = vmatprep.subr.bf16.mxu0 0
          %3257 = vmatpush1.bf16.msra.mxu0 0
          %3258 = vmatprep.subr.bf16.mxu0 0
          %3259 = vmatpush1.bf16.msra.mxu0 0
          %3260 = vmatprep.subr.bf16.mxu0 0
          %3261 = vmatpush1.bf16.msra.mxu0 0
          %3262 = vmatprep.subr.bf16.mxu0 0
          %3263 = vmatpush1.bf16.msra.mxu0 0
          %3264 = vmatprep.subr.bf16.mxu0 0
          %3265 = vmatpush1.bf16.msra.mxu0 0
          %3266 = vmatprep.subr.bf16.mxu0 0
          %3267 = vmatpush1.bf16.msra.mxu0 0
          %3268 = vmatprep.subr.bf16.mxu0 0
          %3269 = vmatpush1.bf16.msra.mxu0 0
          %3270 = vmatprep.subr.bf16.mxu0 0
          %3271 = vmatpush1.bf16.msra.mxu0 0
          %3272 = vmatprep.subr.bf16.mxu0 0
          %3273 = vmatpush1.bf16.msra.mxu0 0
          %3274 = vmatprep.subr.bf16.mxu0 0
          %3275 = vmatpush1.bf16.msra.mxu0 0
          %3276 = vmatprep.mubr.bf16.mxu0 0
          %3277 = vmatmul.mubr.bf16.gmra.mrb[0].mxu0 %v3239
          %v3278 = vpop.f32.mrb[0].mxu0
          %v3279 = vadd.f32 %v3224, %v3278
          %v3280 = vpop.f32.mrb[0].mxu0
          %v3281 = vpop.f32.mrb[0].mxu0
          %v3282 = vadd.f32 %v3224, %v3281
          %v3283 = vpop.f32.mrb[0].mxu0
          %3284 = vmatprep.mubr.bf16.mxu0 0
          %3285 = vmatmul.mubr.bf16.gmra.mrb[0].mxu0 %v3242
          %v3286 = vpop.f32.mrb[0].mxu0
          %v3287 = vadd.f32 %v3224, %v3286
          %v3288 = vpop.f32.mrb[0].mxu0
          %v3289 = vpop.f32.mrb[0].mxu0
          %v3290 = vadd.f32 %v3224, %v3289
          %v3291 = vpop.f32.mrb[0].mxu0
          %3292 = vdwg.mxu0
          %3293 = vst [vmem:[#allocation26] sm:$0xff] %v3279
          %3294 = vst [vmem:[#allocation26 + $0x8] sm:$0xff] %v3282
          %3295 = vst [vmem:[#allocation26 + $0x10] sm:$0xff] %v3287
          %3296 = vst [vmem:[#allocation26 + $0x18] sm:$0xff] %v3290
        $region180: #{tpu_custom_call.1} parent=115 // pred_fallthru
          _
        // Predicated region
        $region181: #{tpu_custom_call.1} parent=115 // pred_check
          %p3297 = pneg %p682
        $region182: #{tpu_custom_call.1} parent=115 // pred_check_branch
          %3299 = sbr.rel (%p3297) target = $region184
        $region183: #{tpu_custom_call.1} parent=115 // pred_region
          %s3300 = smul.u32 2, %s62
          %s3302 = ssub.s32 512, 512
          %3303 = vsyncadd [#allocation5], %s3302
          %s3304 = smul.addr %s3300, 2
          %s3305 = smul.addr %s3304, 128
          %s3306 = scalar_lea.hbm %s24, %s3305
          %s3307 = sshll.u32 [#allocation26], 4
          %s3308 = int_to_ptr.vmem [resolvable:$true] %s3307
          %3313 = dma.vmem_to_hbm [thread:$0]  %s3308, 512, %s3306, [#allocation5], 128, 128, 8
        $region184: #{tpu_custom_call.1} parent=115 // pred_fallthru
          _
        // Predicated region
        $region185: #{tpu_custom_call.1} parent=115 // pred_check
          %p3314 = pneg %p682
        $region186: #{tpu_custom_call.1} parent=115 // pred_check_branch
          %3316 = sbr.rel (%p3314) target = $region188
        $region187: #{tpu_custom_call.1} parent=115 // pred_region
          %3317 = dma.done [#allocation5], 512
        $region188: #{tpu_custom_call.1} parent=115 // pred_fallthru
          _
      $region116: #{tpu_custom_call.1} parent=5 // pred_fallthru
        _
      %p3318 = scmp.le.s32.totalorder 2, %s53
      // Predicated region
      $region189: #{tpu_custom_call.1} parent=5 // pred_check
        %p3319 = pneg %p3318
      $region190: #{tpu_custom_call.1} parent=5 // pred_check_branch
        %3321 = sbr.rel (%p3319) target = $region192
      $region191: #{tpu_custom_call.1} parent=5 // pred_region
        %s3322 = ssub.s32 %s53, 2
      $region192: #{tpu_custom_call.1} parent=5 // pred_fallthru
        _
    $region6: #{tpu_custom_call.1} parent=1 // loop_footer
      %s57 = sadd.s32 1, %s53
    $region7: #{tpu_custom_call.1} parent=1 // loop_footer_branch
      %52 = sbr.rel target = $region3
    $region8: #{tpu_custom_call.1} parent=1 // loop_exit
      _
    %3323 = vsyncpa [#allocation4], 1
    %s3324 = scalar_lea.sflag [#allocation4], 1
    %3325 = vsyncpa %s3324, 1
    %3326 = vsyncpa [#allocation7], 1
    %s3327 = scalar_lea.sflag [#allocation7], 1
    %3328 = vsyncpa %s3327, 1
    %3329 = vsyncpa [#allocation10], 1
    %s3330 = scalar_lea.sflag [#allocation10], 1
    %3331 = vsyncpa %s3330, 1
    %3332 = vsyncpa [#allocation13], 1
    %s3333 = scalar_lea.sflag [#allocation13], 1
    %3334 = vsyncpa %s3333, 1
    %3335 = vsyncpa [#allocation16], 1
    %s3336 = scalar_lea.sflag [#allocation16], 1
    %3337 = vsyncpa %s3336, 1
    %3338 = vsyncpa [#allocation19], 1
    %s3339 = scalar_lea.sflag [#allocation19], 1
    %3340 = vsyncpa %s3339, 1
    %3341 = vsyncpa [#allocation22], 1
    %s3342 = scalar_lea.sflag [#allocation22], 1
    %3343 = vsyncpa %s3342, 1
    %3344 = vsyncpa [#allocation25], 1
    %s3345 = scalar_lea.sflag [#allocation25], 1
    %3346 = vsyncpa %s3345, 1
    %3347 = vsyncpa [#allocation5], 1
    %s3348 = scalar_lea.sflag [#allocation5], 1
    %3349 = vsyncpa %s3348, 1

// kernel: tpu_custom_call.1
$region0: #{tpu_custom_call.1}
  #allocation0 [shape = 'u32[]', space=smem, size = 0x4, offset = 0x4, fixed_abs, tag = 'smem constant byte address 0x4 - core index']
  #allocation1 [shape = 'u32[144,128]{1,0:T(1,128)}', space=vmem, size = 0x12000, scoped, tag = 'internal scratch']
  #allocation2 [shape = 'f32[32,32]{1,0:T(8,128)}', space=vmem, size = 0x4000, scoped, tag = 'scratch operand']
  %s0 = inlined_call_operand.vmem [shape: f32[2,16,32], index: 0, kind: input, shape index: {}]
  %s1 = inlined_call_operand.hbm [shape: f32[4,2,16,16], index: 1, kind: input, shape index: {}]
  %s2 = inlined_call_operand.vmem [shape: bf16[2,32,32], index: 2, kind: input, shape index: {}]
  %s3 = inlined_call_operand.hbm [shape: f32[2,1,32], index: 3, kind: input, shape index: {}]
  %s4 = inlined_call_operand.vmem [shape: bf16[2,32,32], index: 4, kind: input, shape index: {}]
  %s5 = inlined_call_operand.hbm [shape: f32[2,1,32], index: 5, kind: input, shape index: {}]
  %s6 = inlined_call_operand.hbm [shape: bf16[2,32,32], index: 6, kind: input, shape index: {}]
  %s7 = inlined_call_operand.hbm [shape: f32[2,1,32], index: 7, kind: input, shape index: {}]
  %s8 = inlined_call_operand.hbm [shape: bf16[2,32,32], index: 8, kind: input, shape index: {}]
  %s9 = inlined_call_operand.hbm [shape: f32[2,1,32], index: 9, kind: input, shape index: {}]
  %s10 = inlined_call_operand.hbm [shape: f32[2,1,32], index: 10, kind: input, shape index: {}]
  %s11 = inlined_call_operand.hbm [shape: f32[2,1,32], index: 11, kind: input, shape index: {}]
  %s12 = inlined_call_operand.hbm [shape: bf16[2,32,64], index: 12, kind: input, shape index: {}]
  %s13 = inlined_call_operand.hbm [shape: f32[2,1,64], index: 13, kind: input, shape index: {}]
  %s14 = inlined_call_operand.vmem [shape: bf16[2,64,32], index: 14, kind: input, shape index: {}]
  %s15 = inlined_call_operand.hbm [shape: f32[2,1,32], index: 15, kind: input, shape index: {}]
  %s16 = inlined_call_operand.hbm [shape: f32[2,1,32], index: 16, kind: input, shape index: {}]
  %s17 = inlined_call_operand.hbm [shape: f32[2,1,32], index: 17, kind: input, shape index: {}]
  %s18 = inlined_call_operand.vmem [shape: bf16[32,32], index: 18, kind: input, shape index: {}]
  %s19 = inlined_call_operand.vmem [shape: f32[1,32], index: 19, kind: input, shape index: {}]
  %s20 = inlined_call_operand.vmem [shape: f32[1,32], index: 20, kind: input, shape index: {}]
  %s21 = inlined_call_operand.vmem [shape: f32[1,32], index: 21, kind: input, shape index: {}]
  %s22 = inlined_call_operand.vmem [shape: bf16[32,128], index: 22, kind: input, shape index: {}]
  %s23 = inlined_call_operand.vmem [shape: f32[1,128], index: 23, kind: input, shape index: {}]
  %s24 = inlined_call_operand.hbm [shape: f32[2,16,128], index: 24, kind: output, shape index: {}]
  %s25 = sld [smem:[#allocation0]]
  $region193: #{tpu_custom_call.1} parent=0
    _
  %s27 = ssub.s32 1, %s25
  %s28 = scalar_select 0, %s27, %s25
  $region1: #{tpu_custom_call.1} parent=0
    #allocation3 [shape = 'u8[65536]{0}', space=vmem, size = 0x10000, scoped, tag = 'input window, operand 1, single buffered']
    #allocation4 [shape = 's32[2]{0}', space=sflag, size = 0x8, scoped, tag = 'scoped memory for tpu_custom_call.1']
    #allocation5 [shape = 's32[2]{0}', space=sflag, size = 0x8, scoped, tag = 'scoped memory for tpu_custom_call.1']
    #allocation6 [shape = 'u8[1024]{0}', space=vmem, size = 0x400, scoped, tag = 'input window, operand 3']
    #allocation7 [shape = 's32[2]{0}', space=sflag, size = 0x8, scoped, tag = 'scoped memory for tpu_custom_call.1']
    #allocation8 [shape = 'u8[1024]{0}', space=vmem, size = 0x400, scoped, tag = 'input window, operand 5']
    #allocation9 [shape = 'u8[16384]{0}', space=vmem, size = 0x4000, scoped, tag = 'input window, operand 6']
    #allocation10 [shape = 's32[2]{0}', space=sflag, size = 0x8, scoped, tag = 'scoped memory for tpu_custom_call.1']
    #allocation11 [shape = 'u8[1024]{0}', space=vmem, size = 0x400, scoped, tag = 'input window, operand 7']
    #allocation12 [shape = 'u8[16384]{0}', space=vmem, size = 0x4000, scoped, tag = 'input window, operand 8']
    #allocation13 [shape = 's32[2]{0}', space=sflag, size = 0x8, scoped, tag = 'scoped memory for tpu_custom_call.1']
    #allocation14 [shape = 'u8[1024]{0}', space=vmem, size = 0x400, scoped, tag = 'input window, operand 9']
    #allocation15 [shape = 'u8[1024]{0}', space=vmem, size = 0x400, scoped, tag = 'input window, operand 10']
    #allocation16 [shape = 's32[2]{0}', space=sflag, size = 0x8, scoped, tag = 'scoped memory for tpu_custom_call.1']
    #allocation17 [shape = 'u8[1024]{0}', space=vmem, size = 0x400, scoped, tag = 'input window, operand 11']
    #allocation18 [shape = 'u8[16384]{0}', space=vmem, size = 0x4000, scoped, tag = 'input window, operand 12']
    #allocation19 [shape = 's32[2]{0}', space=sflag, size = 0x8, scoped, tag = 'scoped memory for tpu_custom_call.1']
    #allocation20 [shape = 'u8[1024]{0}', space=vmem, size = 0x400, scoped, tag = 'input window, operand 13']
    #allocation21 [shape = 'u8[1024]{0}', space=vmem, size = 0x400, scoped, tag = 'input window, operand 15']
    #allocation22 [shape = 's32[2]{0}', space=sflag, size = 0x8, scoped, tag = 'scoped memory for tpu_custom_call.1']
    #allocation23 [shape = 'u8[1024]{0}', space=vmem, size = 0x400, scoped, tag = 'input window, operand 16']
    #allocation24 [shape = 'u8[1024]{0}', space=vmem, size = 0x400, scoped, tag = 'input window, operand 17']
    #allocation25 [shape = 's32[2]{0}', space=sflag, size = 0x8, scoped, tag = 'scoped memory for tpu_custom_call.1']
    #allocation26 [shape = 'u8[16384]{0}', space=vmem, size = 0x4000, scoped, tag = 'output window, operand 0, single buffered']
    %29 = vsyncpa [#allocation4], 0
    %30 = vsyncpa [#allocation7], 0
    %s31 = scalar_lea.sflag [#allocation7], 1
    %32 = vsyncpa %s31, 0
    %33 = vsyncpa [#allocation10], 0
    %s34 = scalar_lea.sflag [#allocation10], 1
    %35 = vsyncpa %s34, 0
    %36 = vsyncpa [#allocation13], 0
    %s37 = scalar_lea.sflag [#allocation13], 1
    %38 = vsyncpa %s37, 0
    %39 = vsyncpa [#allocation16], 0
    %s40 = scalar_lea.sflag [#allocation16], 1
    %41 = vsyncpa %s40, 0
    %42 = vsyncpa [#allocation19], 0
    %s43 = scalar_lea.sflag [#allocation19], 1
    %44 = vsyncpa %s43, 0
    %45 = vsyncpa [#allocation22], 0
    %s46 = scalar_lea.sflag [#allocation22], 1
    %47 = vsyncpa %s46, 0
    %48 = vsyncpa [#allocation25], 0
    %s49 = scalar_lea.sflag [#allocation25], 1
    %50 = vsyncpa %s49, 0
    %51 = vsyncpa [#allocation5], 0
    loop: start=0, step=1, limit=4
    $region2: #{tpu_custom_call.1} parent=1 // loop_pre_header
      _
    $region3: #{tpu_custom_call.1} parent=1 // loop_header
      %s53 = sphi 0, %s57
      %p54 = scmp.ge.s32.totalorder %s53, 4
      %s60 = sphi 0, %s72
      %s61 = sphi 0, %s68
      %s62 = sphi 0, %s60
      %s63 = sphi 0, %s61
      %s64 = sphi 0, %s62
      %s65 = sphi 0, %s63
      %s75 = sphi 0, %s77
      %s78 = sphi 0, %s75
      %s79 = sphi 0, %s78
      %s95 = sphi 0, %s79
      %s101 = sphi 0, %s103
      %s104 = sphi 0, %s101
      %s105 = sphi 0, %s104
      %s121 = sphi 0, %s105
      %s127 = sphi 0, %s129
      %s130 = sphi 0, %s127
      %s131 = sphi 0, %s130
      %s147 = sphi 0, %s131
      %s153 = sphi 0, %s155
      %s156 = sphi 0, %s153
      %s157 = sphi 0, %s156
      %s173 = sphi 0, %s157
      %s179 = sphi 0, %s181
      %s182 = sphi 0, %s179
      %s183 = sphi 0, %s182
      %s199 = sphi 0, %s183
      %s205 = sphi 0, %s207
      %s208 = sphi 0, %s205
      %s209 = sphi 0, %s208
      %s225 = sphi 0, %s209
      %s231 = sphi 0, %s233
      %s234 = sphi 0, %s231
      %s235 = sphi 0, %s234
      %s251 = sphi 0, %s235
      %s257 = sphi 0, %s259
      %s260 = sphi 0, %s257
      %s261 = sphi 0, %s260
      %s277 = sphi 0, %s261
      %s283 = sphi 0, %s285
      %s286 = sphi 0, %s283
      %s287 = sphi 0, %s286
      %s303 = sphi 0, %s287
      %s309 = sphi 0, %s311
      %s312 = sphi 0, %s309
      %s313 = sphi 0, %s312
      %s329 = sphi 0, %s313
      %s335 = sphi 0, %s337
      %s338 = sphi 0, %s335
      %s339 = sphi 0, %s338
      %s355 = sphi 0, %s339
      %s361 = sphi 0, %s363
      %s364 = sphi 0, %s361
      %s365 = sphi 0, %s364
      %s381 = sphi 0, %s365
      %s387 = sphi 0, %s389
      %s390 = sphi 0, %s387
      %s391 = sphi 0, %s390
      %s407 = sphi 0, %s391
      %s413 = sphi 0, %s415
      %s416 = sphi 0, %s413
      %s417 = sphi 0, %s416
      %s433 = sphi 0, %s417
      %s439 = sphi 0, %s441
      %s442 = sphi 0, %s439
      %s443 = sphi 0, %s442
      %s459 = sphi 0, %s443
      %s465 = sphi 0, %s467
      %s468 = sphi 0, %s465
      %s469 = sphi 0, %s468
      %s485 = sphi 0, %s469
      %s491 = sphi 0, %s493
      %s494 = sphi 0, %s491
      %s495 = sphi 0, %s494
      %s511 = sphi 0, %s495
      %s517 = sphi 0, %s519
      %s520 = sphi 0, %s517
      %s521 = sphi 0, %s520
      %s537 = sphi 0, %s521
      %s541 = sphi 0, %s541
      %s543 = sphi 0, %s541
      %s544 = sphi 0, %s543
      %s558 = sphi 0, %s544
      %s562 = sphi 0, %s562
      %s564 = sphi 0, %s562
      %s565 = sphi 0, %s564
      %s579 = sphi 0, %s565
      %s583 = sphi 0, %s583
      %s585 = sphi 0, %s583
      %s586 = sphi 0, %s585
      %s600 = sphi 0, %s586
      %s604 = sphi 0, %s604
      %s606 = sphi 0, %s604
      %s607 = sphi 0, %s606
      %s621 = sphi 0, %s607
      %s625 = sphi 0, %s625
      %s627 = sphi 0, %s625
      %s628 = sphi 0, %s627
      %s642 = sphi 0, %s628
      %s646 = sphi 0, %s646
      %s648 = sphi 0, %s646
      %s649 = sphi 0, %s648
      %s663 = sphi 0, %s649
      %s669 = sphi 0, %s671
      %s672 = sphi 0, %s669
      %s673 = sphi 0, %s672
      %s689 = sphi 0, %s673
    $region4: #{tpu_custom_call.1} parent=1 // loop_header_branch
      %56 = sbr.rel (%p54) target = $region8
    $region5: #{tpu_custom_call.1} parent=1 // loop_body
      %s58 = ssub.s32 %s53, 1
      %s59 = ssub.s32 %s53, 2
      %s66 = sadd.s32 1, %s61
      %p67 = scmp.ge.s32.totalorder %s66, 2
      %s68 = scalar_select %p67, 0, %s66
      %s69 = sadd.s32 1, %s60
      %s70 = scalar_select %p67, %s69, %s60
      %p71 = scmp.ge.s32.totalorder %s70, 1
      %s72 = scalar_select %p71, 0, %s70
      %s73 = ssub.s32 %s60, %s72
      %p74 = scmp.eq.s32.totalorder %s73, 0
      %s76 = sadd.s32 %s75, 1
      %s77 = scalar_select %p74, %s75, %s76
      %p80 = pneg %p74
      %p81 = scmp.eq.s32.totalorder %s53, 1
      %p82 = por %p80, %p81
      %p83 = scmp.ne.s32.totalorder %s75, %s78
      %p84 = scmp.eq.s32.totalorder %s53, 0
      %p85 = por %p83, %p84
      %p86 = scmp.ne.s32.totalorder %s75, %s78
      %p87 = scmp.eq.s32.totalorder %s58, 1
      %p88 = por %p86, %p87
      %p89 = scmp.ne.s32.totalorder %s78, %s79
      %p90 = scmp.eq.s32.totalorder %s58, 0
      %p91 = por %p89, %p90
      %p92 = scmp.ne.s32.totalorder %s78, %s79
      %p93 = scmp.eq.s32.totalorder %s59, 1
      %p94 = por %p92, %p93
      %p96 = scmp.ne.s32.totalorder %s79, %s95
      %p97 = scmp.eq.s32.totalorder %s59, 0
      %p98 = por %p96, %p97
      %s99 = ssub.s32 %s60, %s72
      %p100 = scmp.eq.s32.totalorder %s99, 0
      %s102 = sadd.s32 %s101, 1
      %s103 = scalar_select %p100, %s101, %s102
      %p106 = pneg %p100
      %p107 = scmp.eq.s32.totalorder %s53, 1
      %p108 = por %p106, %p107
      %p109 = scmp.ne.s32.totalorder %s101, %s104
      %p110 = scmp.eq.s32.totalorder %s53, 0
      %p111 = por %p109, %p110
      %p112 = scmp.ne.s32.totalorder %s101, %s104
      %p113 = scmp.eq.s32.totalorder %s58, 1
      %p114 = por %p112, %p113
      %p115 = scmp.ne.s32.totalorder %s104, %s105
      %p116 = scmp.eq.s32.totalorder %s58, 0
      %p117 = por %p115, %p116
      %p118 = scmp.ne.s32.totalorder %s104, %s105
      %p119 = scmp.eq.s32.totalorder %s59, 1
      %p120 = por %p118, %p119
      %p122 = scmp.ne.s32.totalorder %s105, %s121
      %p123 = scmp.eq.s32.totalorder %s59, 0
      %p124 = por %p122, %p123
      %s125 = ssub.s32 %s61, %s68
      %p126 = scmp.eq.s32.totalorder %s125, 0
      %s128 = sadd.s32 %s127, 1
      %s129 = scalar_select %p126, %s127, %s128
      %p132 = pneg %p126
      %p133 = scmp.eq.s32.totalorder %s53, 1
      %p134 = por %p132, %p133
      %p135 = scmp.ne.s32.totalorder %s127, %s130
      %p136 = scmp.eq.s32.totalorder %s53, 0
      %p137 = por %p135, %p136
      %p138 = scmp.ne.s32.totalorder %s127, %s130
      %p139 = scmp.eq.s32.totalorder %s58, 1
      %p140 = por %p138, %p139
      %p141 = scmp.ne.s32.totalorder %s130, %s131
      %p142 = scmp.eq.s32.totalorder %s58, 0
      %p143 = por %p141, %p142
      %p144 = scmp.ne.s32.totalorder %s130, %s131
      %p145 = scmp.eq.s32.totalorder %s59, 1
      %p146 = por %p144, %p145
      %p148 = scmp.ne.s32.totalorder %s131, %s147
      %p149 = scmp.eq.s32.totalorder %s59, 0
      %p150 = por %p148, %p149
      %s151 = ssub.s32 %s61, %s68
      %p152 = scmp.eq.s32.totalorder %s151, 0
      %s154 = sadd.s32 %s153, 1
      %s155 = scalar_select %p152, %s153, %s154
      %p158 = pneg %p152
      %p159 = scmp.eq.s32.totalorder %s53, 1
      %p160 = por %p158, %p159
      %p161 = scmp.ne.s32.totalorder %s153, %s156
      %p162 = scmp.eq.s32.totalorder %s53, 0
      %p163 = por %p161, %p162
      %p164 = scmp.ne.s32.totalorder %s153, %s156
      %p165 = scmp.eq.s32.totalorder %s58, 1
      %p166 = por %p164, %p165
      %p167 = scmp.ne.s32.totalorder %s156, %s157
      %p168 = scmp.eq.s32.totalorder %s58, 0
      %p169 = por %p167, %p168
      %p170 = scmp.ne.s32.totalorder %s156, %s157
      %p171 = scmp.eq.s32.totalorder %s59, 1
      %p172 = por %p170, %p171
      %p174 = scmp.ne.s32.totalorder %s157, %s173
      %p175 = scmp.eq.s32.totalorder %s59, 0
      %p176 = por %p174, %p175
      %s177 = ssub.s32 %s61, %s68
      %p178 = scmp.eq.s32.totalorder %s177, 0
      %s180 = sadd.s32 %s179, 1
      %s181 = scalar_select %p178, %s179, %s180
      %p184 = pneg %p178
      %p185 = scmp.eq.s32.totalorder %s53, 1
      %p186 = por %p184, %p185
      %p187 = scmp.ne.s32.totalorder %s179, %s182
      %p188 = scmp.eq.s32.totalorder %s53, 0
      %p189 = por %p187, %p188
      %p190 = scmp.ne.s32.totalorder %s179, %s182
      %p191 = scmp.eq.s32.totalorder %s58, 1
      %p192 = por %p190, %p191
      %p193 = scmp.ne.s32.totalorder %s182, %s183
      %p194 = scmp.eq.s32.totalorder %s58, 0
      %p195 = por %p193, %p194
      %p196 = scmp.ne.s32.totalorder %s182, %s183
      %p197 = scmp.eq.s32.totalorder %s59, 1
      %p198 = por %p196, %p197
      %p200 = scmp.ne.s32.totalorder %s183, %s199
      %p201 = scmp.eq.s32.totalorder %s59, 0
      %p202 = por %p200, %p201
      %s203 = ssub.s32 %s61, %s68
      %p204 = scmp.eq.s32.totalorder %s203, 0
      %s206 = sadd.s32 %s205, 1
      %s207 = scalar_select %p204, %s205, %s206
      %p210 = pneg %p204
      %p211 = scmp.eq.s32.totalorder %s53, 1
      %p212 = por %p210, %p211
      %p213 = scmp.ne.s32.totalorder %s205, %s208
      %p214 = scmp.eq.s32.totalorder %s53, 0
      %p215 = por %p213, %p214
      %p216 = scmp.ne.s32.totalorder %s205, %s208
      %p217 = scmp.eq.s32.totalorder %s58, 1
      %p218 = por %p216, %p217
      %p219 = scmp.ne.s32.totalorder %s208, %s209
      %p220 = scmp.eq.s32.totalorder %s58, 0
      %p221 = por %p219, %p220
      %p222 = scmp.ne.s32.totalorder %s208, %s209
      %p223 = scmp.eq.s32.totalorder %s59, 1
      %p224 = por %p222, %p223
      %p226 = scmp.ne.s32.totalorder %s209, %s225
      %p227 = scmp.eq.s32.totalorder %s59, 0
      %p228 = por %p226, %p227
      %s229 = ssub.s32 %s61, %s68
      %p230 = scmp.eq.s32.totalorder %s229, 0
      %s232 = sadd.s32 %s231, 1
      %s233 = scalar_select %p230, %s231, %s232
      %p236 = pneg %p230
      %p237 = scmp.eq.s32.totalorder %s53, 1
      %p238 = por %p236, %p237
      %p239 = scmp.ne.s32.totalorder %s231, %s234
      %p240 = scmp.eq.s32.totalorder %s53, 0
      %p241 = por %p239, %p240
      %p242 = scmp.ne.s32.totalorder %s231, %s234
      %p243 = scmp.eq.s32.totalorder %s58, 1
      %p244 = por %p242, %p243
      %p245 = scmp.ne.s32.totalorder %s234, %s235
      %p246 = scmp.eq.s32.totalorder %s58, 0
      %p247 = por %p245, %p246
      %p248 = scmp.ne.s32.totalorder %s234, %s235
      %p249 = scmp.eq.s32.totalorder %s59, 1
      %p250 = por %p248, %p249
      %p252 = scmp.ne.s32.totalorder %s235, %s251
      %p253 = scmp.eq.s32.totalorder %s59, 0
      %p254 = por %p252, %p253
      %s255 = ssub.s32 %s61, %s68
      %p256 = scmp.eq.s32.totalorder %s255, 0
      %s258 = sadd.s32 %s257, 1
      %s259 = scalar_select %p256, %s257, %s258
      %p262 = pneg %p256
      %p263 = scmp.eq.s32.totalorder %s53, 1
      %p264 = por %p262, %p263
      %p265 = scmp.ne.s32.totalorder %s257, %s260
      %p266 = scmp.eq.s32.totalorder %s53, 0
      %p267 = por %p265, %p266
      %p268 = scmp.ne.s32.totalorder %s257, %s260
      %p269 = scmp.eq.s32.totalorder %s58, 1
      %p270 = por %p268, %p269
      %p271 = scmp.ne.s32.totalorder %s260, %s261
      %p272 = scmp.eq.s32.totalorder %s58, 0
      %p273 = por %p271, %p272
      %p274 = scmp.ne.s32.totalorder %s260, %s261
      %p275 = scmp.eq.s32.totalorder %s59, 1
      %p276 = por %p274, %p275
      %p278 = scmp.ne.s32.totalorder %s261, %s277
      %p279 = scmp.eq.s32.totalorder %s59, 0
      %p280 = por %p278, %p279
      %s281 = ssub.s32 %s61, %s68
      %p282 = scmp.eq.s32.totalorder %s281, 0
      %s284 = sadd.s32 %s283, 1
      %s285 = scalar_select %p282, %s283, %s284
      %p288 = pneg %p282
      %p289 = scmp.eq.s32.totalorder %s53, 1
      %p290 = por %p288, %p289
      %p291 = scmp.ne.s32.totalorder %s283, %s286
      %p292 = scmp.eq.s32.totalorder %s53, 0
      %p293 = por %p291, %p292
      %p294 = scmp.ne.s32.totalorder %s283, %s286
      %p295 = scmp.eq.s32.totalorder %s58, 1
      %p296 = por %p294, %p295
      %p297 = scmp.ne.s32.totalorder %s286, %s287
      %p298 = scmp.eq.s32.totalorder %s58, 0
      %p299 = por %p297, %p298
      %p300 = scmp.ne.s32.totalorder %s286, %s287
      %p301 = scmp.eq.s32.totalorder %s59, 1
      %p302 = por %p300, %p301
      %p304 = scmp.ne.s32.totalorder %s287, %s303
      %p305 = scmp.eq.s32.totalorder %s59, 0
      %p306 = por %p304, %p305
      %s307 = ssub.s32 %s61, %s68
      %p308 = scmp.eq.s32.totalorder %s307, 0
      %s310 = sadd.s32 %s309, 1
      %s311 = scalar_select %p308, %s309, %s310
      %p314 = pneg %p308
      %p315 = scmp.eq.s32.totalorder %s53, 1
      %p316 = por %p314, %p315
      %p317 = scmp.ne.s32.totalorder %s309, %s312
      %p318 = scmp.eq.s32.totalorder %s53, 0
      %p319 = por %p317, %p318
      %p320 = scmp.ne.s32.totalorder %s309, %s312
      %p321 = scmp.eq.s32.totalorder %s58, 1
      %p322 = por %p320, %p321
      %p323 = scmp.ne.s32.totalorder %s312, %s313
      %p324 = scmp.eq.s32.totalorder %s58, 0
      %p325 = por %p323, %p324
      %p326 = scmp.ne.s32.totalorder %s312, %s313
      %p327 = scmp.eq.s32.totalorder %s59, 1
      %p328 = por %p326, %p327
      %p330 = scmp.ne.s32.totalorder %s313, %s329
      %p331 = scmp.eq.s32.totalorder %s59, 0
      %p332 = por %p330, %p331
      %s333 = ssub.s32 %s61, %s68
      %p334 = scmp.eq.s32.totalorder %s333, 0
      %s336 = sadd.s32 %s335, 1
      %s337 = scalar_select %p334, %s335, %s336
      %p340 = pneg %p334
      %p341 = scmp.eq.s32.totalorder %s53, 1
      %p342 = por %p340, %p341
      %p343 = scmp.ne.s32.totalorder %s335, %s338
      %p344 = scmp.eq.s32.totalorder %s53, 0
      %p345 = por %p343, %p344
      %p346 = scmp.ne.s32.totalorder %s335, %s338
      %p347 = scmp.eq.s32.totalorder %s58, 1
      %p348 = por %p346, %p347
      %p349 = scmp.ne.s32.totalorder %s338, %s339
      %p350 = scmp.eq.s32.totalorder %s58, 0
      %p351 = por %p349, %p350
      %p352 = scmp.ne.s32.totalorder %s338, %s339
      %p353 = scmp.eq.s32.totalorder %s59, 1
      %p354 = por %p352, %p353
      %p356 = scmp.ne.s32.totalorder %s339, %s355
      %p357 = scmp.eq.s32.totalorder %s59, 0
      %p358 = por %p356, %p357
      %s359 = ssub.s32 %s61, %s68
      %p360 = scmp.eq.s32.totalorder %s359, 0
      %s362 = sadd.s32 %s361, 1
      %s363 = scalar_select %p360, %s361, %s362
      %p366 = pneg %p360
      %p367 = scmp.eq.s32.totalorder %s53, 1
      %p368 = por %p366, %p367
      %p369 = scmp.ne.s32.totalorder %s361, %s364
      %p370 = scmp.eq.s32.totalorder %s53, 0
      %p371 = por %p369, %p370
      %p372 = scmp.ne.s32.totalorder %s361, %s364
      %p373 = scmp.eq.s32.totalorder %s58, 1
      %p374 = por %p372, %p373
      %p375 = scmp.ne.s32.totalorder %s364, %s365
      %p376 = scmp.eq.s32.totalorder %s58, 0
      %p377 = por %p375, %p376
      %p378 = scmp.ne.s32.totalorder %s364, %s365
      %p379 = scmp.eq.s32.totalorder %s59, 1
      %p380 = por %p378, %p379
      %p382 = scmp.ne.s32.totalorder %s365, %s381
      %p383 = scmp.eq.s32.totalorder %s59, 0
      %p384 = por %p382, %p383
      %s385 = ssub.s32 %s61, %s68
      %p386 = scmp.eq.s32.totalorder %s385, 0
      %s388 = sadd.s32 %s387, 1
      %s389 = scalar_select %p386, %s387, %s388
      %p392 = pneg %p386
      %p393 = scmp.eq.s32.totalorder %s53, 1
      %p394 = por %p392, %p393
      %p395 = scmp.ne.s32.totalorder %s387, %s390
      %p396 = scmp.eq.s32.totalorder %s53, 0
      %p397 = por %p395, %p396
      %p398 = scmp.ne.s32.totalorder %s387, %s390
      %p399 = scmp.eq.s32.totalorder %s58, 1
      %p400 = por %p398, %p399
      %p401 = scmp.ne.s32.totalorder %s390, %s391
      %p402 = scmp.eq.s32.totalorder %s58, 0
      %p403 = por %p401, %p402
      %p404 = scmp.ne.s32.totalorder %s390, %s391
      %p405 = scmp.eq.s32.totalorder %s59, 1
      %p406 = por %p404, %p405
      %p408 = scmp.ne.s32.totalorder %s391, %s407
      %p409 = scmp.eq.s32.totalorder %s59, 0
      %p410 = por %p408, %p409
      %s411 = ssub.s32 %s61, %s68
      %p412 = scmp.eq.s32.totalorder %s411, 0
      %s414 = sadd.s32 %s413, 1
      %s415 = scalar_select %p412, %s413, %s414
      %p418 = pneg %p412
      %p419 = scmp.eq.s32.totalorder %s53, 1
      %p420 = por %p418, %p419
      %p421 = scmp.ne.s32.totalorder %s413, %s416
      %p422 = scmp.eq.s32.totalorder %s53, 0
      %p423 = por %p421, %p422
      %p424 = scmp.ne.s32.totalorder %s413, %s416
      %p425 = scmp.eq.s32.totalorder %s58, 1
      %p426 = por %p424, %p425
      %p427 = scmp.ne.s32.totalorder %s416, %s417
      %p428 = scmp.eq.s32.totalorder %s58, 0
      %p429 = por %p427, %p428
      %p430 = scmp.ne.s32.totalorder %s416, %s417
      %p431 = scmp.eq.s32.totalorder %s59, 1
      %p432 = por %p430, %p431
      %p434 = scmp.ne.s32.totalorder %s417, %s433
      %p435 = scmp.eq.s32.totalorder %s59, 0
      %p436 = por %p434, %p435
      %s437 = ssub.s32 %s61, %s68
      %p438 = scmp.eq.s32.totalorder %s437, 0
      %s440 = sadd.s32 %s439, 1
      %s441 = scalar_select %p438, %s439, %s440
      %p444 = pneg %p438
      %p445 = scmp.eq.s32.totalorder %s53, 1
      %p446 = por %p444, %p445
      %p447 = scmp.ne.s32.totalorder %s439, %s442
      %p448 = scmp.eq.s32.totalorder %s53, 0
      %p449 = por %p447, %p448
      %p450 = scmp.ne.s32.totalorder %s439, %s442
      %p451 = scmp.eq.s32.totalorder %s58, 1
      %p452 = por %p450, %p451
      %p453 = scmp.ne.s32.totalorder %s442, %s443
      %p454 = scmp.eq.s32.totalorder %s58, 0
      %p455 = por %p453, %p454
      %p456 = scmp.ne.s32.totalorder %s442, %s443
      %p457 = scmp.eq.s32.totalorder %s59, 1
      %p458 = por %p456, %p457
      %p460 = scmp.ne.s32.totalorder %s443, %s459
      %p461 = scmp.eq.s32.totalorder %s59, 0
      %p462 = por %p460, %p461
      %s463 = ssub.s32 %s61, %s68
      %p464 = scmp.eq.s32.totalorder %s463, 0
      %s466 = sadd.s32 %s465, 1
      %s467 = scalar_select %p464, %s465, %s466
      %p470 = pneg %p464
      %p471 = scmp.eq.s32.totalorder %s53, 1
      %p472 = por %p470, %p471
      %p473 = scmp.ne.s32.totalorder %s465, %s468
      %p474 = scmp.eq.s32.totalorder %s53, 0
      %p475 = por %p473, %p474
      %p476 = scmp.ne.s32.totalorder %s465, %s468
      %p477 = scmp.eq.s32.totalorder %s58, 1
      %p478 = por %p476, %p477
      %p479 = scmp.ne.s32.totalorder %s468, %s469
      %p480 = scmp.eq.s32.totalorder %s58, 0
      %p481 = por %p479, %p480
      %p482 = scmp.ne.s32.totalorder %s468, %s469
      %p483 = scmp.eq.s32.totalorder %s59, 1
      %p484 = por %p482, %p483
      %p486 = scmp.ne.s32.totalorder %s469, %s485
      %p487 = scmp.eq.s32.totalorder %s59, 0
      %p488 = por %p486, %p487
      %s489 = ssub.s32 %s61, %s68
      %p490 = scmp.eq.s32.totalorder %s489, 0
      %s492 = sadd.s32 %s491, 1
      %s493 = scalar_select %p490, %s491, %s492
      %p496 = pneg %p490
      %p497 = scmp.eq.s32.totalorder %s53, 1
      %p498 = por %p496, %p497
      %p499 = scmp.ne.s32.totalorder %s491, %s494
      %p500 = scmp.eq.s32.totalorder %s53, 0
      %p501 = por %p499, %p500
      %p502 = scmp.ne.s32.totalorder %s491, %s494
      %p503 = scmp.eq.s32.totalorder %s58, 1
      %p504 = por %p502, %p503
      %p505 = scmp.ne.s32.totalorder %s494, %s495
      %p506 = scmp.eq.s32.totalorder %s58, 0
      %p507 = por %p505, %p506
      %p508 = scmp.ne.s32.totalorder %s494, %s495
      %p509 = scmp.eq.s32.totalorder %s59, 1
      %p510 = por %p508, %p509
      %p512 = scmp.ne.s32.totalorder %s495, %s511
      %p513 = scmp.eq.s32.totalorder %s59, 0
      %p514 = por %p512, %p513
      %s515 = ssub.s32 %s61, %s68
      %p516 = scmp.eq.s32.totalorder %s515, 0
      %s518 = sadd.s32 %s517, 1
      %s519 = scalar_select %p516, %s517, %s518
      %p522 = pneg %p516
      %p523 = scmp.eq.s32.totalorder %s53, 1
      %p524 = por %p522, %p523
      %p525 = scmp.ne.s32.totalorder %s517, %s520
      %p526 = scmp.eq.s32.totalorder %s53, 0
      %p527 = por %p525, %p526
      %p528 = scmp.ne.s32.totalorder %s517, %s520
      %p529 = scmp.eq.s32.totalorder %s58, 1
      %p530 = por %p528, %p529
      %p531 = scmp.ne.s32.totalorder %s520, %s521
      %p532 = scmp.eq.s32.totalorder %s58, 0
      %p533 = por %p531, %p532
      %p534 = scmp.ne.s32.totalorder %s520, %s521
      %p535 = scmp.eq.s32.totalorder %s59, 1
      %p536 = por %p534, %p535
      %p538 = scmp.ne.s32.totalorder %s521, %s537
      %p539 = scmp.eq.s32.totalorder %s59, 0
      %p540 = por %p538, %p539
      %s542 = sadd.s32 %s541, 1
      %p545 = scmp.eq.s32.totalorder %s53, 1
      %p546 = scmp.ne.s32.totalorder %s541, %s543
      %p547 = scmp.eq.s32.totalorder %s53, 0
      %p548 = por %p546, %p547
      %p549 = scmp.ne.s32.totalorder %s541, %s543
      %p550 = scmp.eq.s32.totalorder %s58, 1
      %p551 = por %p549, %p550
      %p552 = scmp.ne.s32.totalorder %s543, %s544
      %p553 = scmp.eq.s32.totalorder %s58, 0
      %p554 = por %p552, %p553
      %p555 = scmp.ne.s32.totalorder %s543, %s544
      %p556 = scmp.eq.s32.totalorder %s59, 1
      %p557 = por %p555, %p556
      %p559 = scmp.ne.s32.totalorder %s544, %s558
      %p560 = scmp.eq.s32.totalorder %s59, 0
      %p561 = por %p559, %p560
      %s563 = sadd.s32 %s562, 1
      %p566 = scmp.eq.s32.totalorder %s53, 1
      %p567 = scmp.ne.s32.totalorder %s562, %s564
      %p568 = scmp.eq.s32.totalorder %s53, 0
      %p569 = por %p567, %p568
      %p570 = scmp.ne.s32.totalorder %s562, %s564
      %p571 = scmp.eq.s32.totalorder %s58, 1
      %p572 = por %p570, %p571
      %p573 = scmp.ne.s32.totalorder %s564, %s565
      %p574 = scmp.eq.s32.totalorder %s58, 0
      %p575 = por %p573, %p574
      %p576 = scmp.ne.s32.totalorder %s564, %s565
      %p577 = scmp.eq.s32.totalorder %s59, 1
      %p578 = por %p576, %p577
      %p580 = scmp.ne.s32.totalorder %s565, %s579
      %p581 = scmp.eq.s32.totalorder %s59, 0
      %p582 = por %p580, %p581
      %s584 = sadd.s32 %s583, 1
      %p587 = scmp.eq.s32.totalorder %s53, 1
      %p588 = scmp.ne.s32.totalorder %s583, %s585
      %p589 = scmp.eq.s32.totalorder %s53, 0
      %p590 = por %p588, %p589
      %p591 = scmp.ne.s32.totalorder %s583, %s585
      %p592 = scmp.eq.s32.totalorder %s58, 1
      %p593 = por %p591, %p592
      %p594 = scmp.ne.s32.totalorder %s585, %s586
      %p595 = scmp.eq.s32.totalorder %s58, 0
      %p596 = por %p594, %p595
      %p597 = scmp.ne.s32.totalorder %s585, %s586
      %p598 = scmp.eq.s32.totalorder %s59, 1
      %p599 = por %p597, %p598
      %p601 = scmp.ne.s32.totalorder %s586, %s600
      %p602 = scmp.eq.s32.totalorder %s59, 0
      %p603 = por %p601, %p602
      %s605 = sadd.s32 %s604, 1
      %p608 = scmp.eq.s32.totalorder %s53, 1
      %p609 = scmp.ne.s32.totalorder %s604, %s606
      %p610 = scmp.eq.s32.totalorder %s53, 0
      %p611 = por %p609, %p610
      %p612 = scmp.ne.s32.totalorder %s604, %s606
      %p613 = scmp.eq.s32.totalorder %s58, 1
      %p614 = por %p612, %p613
      %p615 = scmp.ne.s32.totalorder %s606, %s607
      %p616 = scmp.eq.s32.totalorder %s58, 0
      %p617 = por %p615, %p616
      %p618 = scmp.ne.s32.totalorder %s606, %s607
      %p619 = scmp.eq.s32.totalorder %s59, 1
      %p620 = por %p618, %p619
      %p622 = scmp.ne.s32.totalorder %s607, %s621
      %p623 = scmp.eq.s32.totalorder %s59, 0
      %p624 = por %p622, %p623
      %s626 = sadd.s32 %s625, 1
      %p629 = scmp.eq.s32.totalorder %s53, 1
      %p630 = scmp.ne.s32.totalorder %s625, %s627
      %p631 = scmp.eq.s32.totalorder %s53, 0
      %p632 = por %p630, %p631
      %p633 = scmp.ne.s32.totalorder %s625, %s627
      %p634 = scmp.eq.s32.totalorder %s58, 1
      %p635 = por %p633, %p634
      %p636 = scmp.ne.s32.totalorder %s627, %s628
      %p637 = scmp.eq.s32.totalorder %s58, 0
      %p638 = por %p636, %p637
      %p639 = scmp.ne.s32.totalorder %s627, %s628
      %p640 = scmp.eq.s32.totalorder %s59, 1
      %p641 = por %p639, %p640
      %p643 = scmp.ne.s32.totalorder %s628, %s642
      %p644 = scmp.eq.s32.totalorder %s59, 0
      %p645 = por %p643, %p644
      %s647 = sadd.s32 %s646, 1
      %p650 = scmp.eq.s32.totalorder %s53, 1
      %p651 = scmp.ne.s32.totalorder %s646, %s648
      %p652 = scmp.eq.s32.totalorder %s53, 0
      %p653 = por %p651, %p652
      %p654 = scmp.ne.s32.totalorder %s646, %s648
      %p655 = scmp.eq.s32.totalorder %s58, 1
      %p656 = por %p654, %p655
      %p657 = scmp.ne.s32.totalorder %s648, %s649
      %p658 = scmp.eq.s32.totalorder %s58, 0
      %p659 = por %p657, %p658
      %p660 = scmp.ne.s32.totalorder %s648, %s649
      %p661 = scmp.eq.s32.totalorder %s59, 1
      %p662 = por %p660, %p661
      %p664 = scmp.ne.s32.totalorder %s649, %s663
      %p665 = scmp.eq.s32.totalorder %s59, 0
      %p666 = por %p664, %p665
      %s667 = ssub.s32 %s60, %s72
      %p668 = scmp.eq.s32.totalorder %s667, 0
      %s670 = sadd.s32 %s669, 1
      %s671 = scalar_select %p668, %s669, %s670
      %p674 = pneg %p668
      %p675 = scmp.eq.s32.totalorder %s53, 1
      %p676 = por %p674, %p675
      %p677 = scmp.ne.s32.totalorder %s669, %s672
      %p678 = scmp.eq.s32.totalorder %s53, 0
      %p679 = por %p677, %p678
      %p680 = scmp.ne.s32.totalorder %s669, %s672
      %p681 = scmp.eq.s32.totalorder %s58, 1
      %p682 = por %p680, %p681
      %p683 = scmp.ne.s32.totalorder %s672, %s673
      %p684 = scmp.eq.s32.totalorder %s58, 0
      %p685 = por %p683, %p684
      %p686 = scmp.ne.s32.totalorder %s672, %s673
      %p687 = scmp.eq.s32.totalorder %s59, 1
      %p688 = por %p686, %p687
      %p690 = scmp.ne.s32.totalorder %s673, %s689
      %p691 = scmp.eq.s32.totalorder %s59, 0
      %p692 = por %p690, %p691
      %p693 = scmp.le.s32.totalorder 1, %s53
      %p694 = scmp.lt.s32.totalorder %s53, 3
      %p695 = pnand %p693, %p694
      %p696 = pneg %p695
      // Predicated region
      $region9: #{tpu_custom_call.1} parent=5 // pred_check
        _
      $region10: #{tpu_custom_call.1} parent=5 // pred_check_branch
        %698 = sbr.rel (%p695) target = $region12
      $region11: #{tpu_custom_call.1} parent=5 // pred_region
        %s699 = ssub.s32 %s53, 1
        // Predicated region
        $region13: #{tpu_custom_call.1} parent=11 // pred_check
          %p700 = pneg %p91
        $region14: #{tpu_custom_call.1} parent=11 // pred_check_branch
          %702 = sbr.rel (%p700) target = $region16
        $region15: #{tpu_custom_call.1} parent=11 // pred_region
          %s703 = smul.u32 2, %s62
          %p704 = scmp.lt.s32.totalorder %s703, 1
          %s705 = scalar_select %p704, %s703, 1
          %s706 = smul.addr %s705, 2
          %s707 = smul.addr %s706, 8
          %s708 = scalar_lea.vmem %s0, %s707
          %s709 = smul.u32 2, %s62
        $region16: #{tpu_custom_call.1} parent=11 // pred_fallthru
          _
        // Predicated region
        $region17: #{tpu_custom_call.1} parent=11 // pred_check
          %p710 = pneg %p117
        $region18: #{tpu_custom_call.1} parent=11 // pred_check_branch
          %712 = sbr.rel (%p710) target = $region20
        $region19: #{tpu_custom_call.1} parent=11 // pred_region
          %s713 = smul.u32 2, %s62
          %s715 = ssub.s32 2048, 2048
          %716 = vsyncadd [#allocation4], %s715
          %s717 = smul.addr %s713, 2
          %s718 = smul.addr %s717, 128
          %s719 = scalar_lea.hbm %s1, %s718
          %s720 = sshll.u32 [#allocation3], 4
          %s721 = int_to_ptr.vmem [resolvable:$true] %s720
          %726 = dma.hbm_to_vmem [thread:$0]  %s719, 2048, %s721, [#allocation4], 128, 128, 8
        $region20: #{tpu_custom_call.1} parent=11 // pred_fallthru
          _
        // Predicated region
        $region21: #{tpu_custom_call.1} parent=11 // pred_check
          %p727 = pneg %p554
        $region22: #{tpu_custom_call.1} parent=11 // pred_check_branch
          %729 = sbr.rel (%p727) target = $region24
        $region23: #{tpu_custom_call.1} parent=11 // pred_region
          _
        $region24: #{tpu_custom_call.1} parent=11 // pred_fallthru
          _
        // Predicated region
        $region25: #{tpu_custom_call.1} parent=11 // pred_check
          %p730 = pneg %p575
        $region26: #{tpu_custom_call.1} parent=11 // pred_check_branch
          %732 = sbr.rel (%p730) target = $region28
        $region27: #{tpu_custom_call.1} parent=11 // pred_region
          _
        $region28: #{tpu_custom_call.1} parent=11 // pred_fallthru
          _
        // Predicated region
        $region29: #{tpu_custom_call.1} parent=11 // pred_check
          %p733 = pneg %p596
        $region30: #{tpu_custom_call.1} parent=11 // pred_check_branch
          %735 = sbr.rel (%p733) target = $region32
        $region31: #{tpu_custom_call.1} parent=11 // pred_region
          _
        $region32: #{tpu_custom_call.1} parent=11 // pred_fallthru
          _
        // Predicated region
        $region33: #{tpu_custom_call.1} parent=11 // pred_check
          %p736 = pneg %p617
        $region34: #{tpu_custom_call.1} parent=11 // pred_check_branch
          %738 = sbr.rel (%p736) target = $region36
        $region35: #{tpu_custom_call.1} parent=11 // pred_region
          _
        $region36: #{tpu_custom_call.1} parent=11 // pred_fallthru
          _
        // Predicated region
        $region37: #{tpu_custom_call.1} parent=11 // pred_check
          %p739 = pneg %p638
        $region38: #{tpu_custom_call.1} parent=11 // pred_check_branch
          %741 = sbr.rel (%p739) target = $region40
        $region39: #{tpu_custom_call.1} parent=11 // pred_region
          _
        $region40: #{tpu_custom_call.1} parent=11 // pred_fallthru
          _
        // Predicated region
        $region41: #{tpu_custom_call.1} parent=11 // pred_check
          %p742 = pneg %p659
        $region42: #{tpu_custom_call.1} parent=11 // pred_check_branch
          %744 = sbr.rel (%p742) target = $region44
        $region43: #{tpu_custom_call.1} parent=11 // pred_region
          _
        $region44: #{tpu_custom_call.1} parent=11 // pred_fallthru
          _
      $region12: #{tpu_custom_call.1} parent=5 // pred_fallthru
        _
      %p745 = scmp.lt.s32.totalorder %s53, 2
      // Predicated region
      $region45: #{tpu_custom_call.1} parent=5 // pred_check
        %p746 = pneg %p745
      $region46: #{tpu_custom_call.1} parent=5 // pred_check_branch
        %748 = sbr.rel (%p746) target = $region48
      $region47: #{tpu_custom_call.1} parent=5 // pred_region
        // Predicated region
        $region49: #{tpu_custom_call.1} parent=47 // pred_check
          %p749 = pneg %p137
        $region50: #{tpu_custom_call.1} parent=47 // pred_check_branch
          %751 = sbr.rel (%p749) target = $region52
        $region51: #{tpu_custom_call.1} parent=47 // pred_region
          %p752 = scmp.lt.s32.totalorder %s61, 1
          %s753 = scalar_select %p752, %s61, 1
          %s754 = smul.addr %s753, 4
          %s755 = smul.addr %s754, 4
          %s756 = scalar_lea.vmem %s2, %s755
        $region52: #{tpu_custom_call.1} parent=47 // pred_fallthru
          _
        // Predicated region
        $region53: #{tpu_custom_call.1} parent=47 // pred_check
          %p757 = pneg %p163
        $region54: #{tpu_custom_call.1} parent=47 // pred_check_branch
          %759 = sbr.rel (%p757) target = $region56
        $region55: #{tpu_custom_call.1} parent=47 // pred_region
          %s760 = sand.u32 %s53, 1
          %s761 = scalar_lea.sflag [#allocation7], %s760
          %s762 = sand.u32 %s153, 1
          %s763 = scalar_lea.vmem [#allocation6], %s762
          %s765 = ssub.s32 16, 16
          %766 = vsyncadd %s761, %s765
          %s767 = smul.addr %s61, 16
          %s768 = scalar_lea.hbm %s3, %s767
          %s770 = sshll.u32 %s763, 4
          %s771 = int_to_ptr.vmem [resolvable:$true] %s770
          %773 = dma.hbm_to_vmem [thread:$0]  %s768, 16, %s771, %s761
        $region56: #{tpu_custom_call.1} parent=47 // pred_fallthru
          _
        // Predicated region
        $region57: #{tpu_custom_call.1} parent=47 // pred_check
          %p774 = pneg %p189
        $region58: #{tpu_custom_call.1} parent=47 // pred_check_branch
          %776 = sbr.rel (%p774) target = $region60
        $region59: #{tpu_custom_call.1} parent=47 // pred_region
          %p777 = scmp.lt.s32.totalorder %s61, 1
          %s778 = scalar_select %p777, %s61, 1
          %s779 = smul.addr %s778, 4
          %s780 = smul.addr %s779, 4
          %s781 = scalar_lea.vmem %s4, %s780
        $region60: #{tpu_custom_call.1} parent=47 // pred_fallthru
          _
        // Predicated region
        $region61: #{tpu_custom_call.1} parent=47 // pred_check
          %p782 = pneg %p215
        $region62: #{tpu_custom_call.1} parent=47 // pred_check_branch
          %784 = sbr.rel (%p782) target = $region64
        $region63: #{tpu_custom_call.1} parent=47 // pred_region
          %s785 = sand.u32 %s53, 1
          %s786 = scalar_lea.sflag [#allocation7], %s785
          %s787 = sand.u32 %s205, 1
          %s788 = scalar_lea.vmem [#allocation8], %s787
          %s790 = ssub.s32 16, 16
          %791 = vsyncadd %s786, %s790
          %s792 = smul.addr %s61, 16
          %s793 = scalar_lea.hbm %s5, %s792
          %s795 = sshll.u32 %s788, 4
          %s796 = int_to_ptr.vmem [resolvable:$true] %s795
          %798 = dma.hbm_to_vmem [thread:$0]  %s793, 16, %s796, %s786
        $region64: #{tpu_custom_call.1} parent=47 // pred_fallthru
          _
        // Predicated region
        $region65: #{tpu_custom_call.1} parent=47 // pred_check
          %p799 = pneg %p241
        $region66: #{tpu_custom_call.1} parent=47 // pred_check_branch
          %801 = sbr.rel (%p799) target = $region68
        $region67: #{tpu_custom_call.1} parent=47 // pred_region
          %s802 = sand.u32 %s53, 1
          %s803 = scalar_lea.sflag [#allocation10], %s802
          %s804 = sand.u32 %s231, 1
          %s805 = smul.addr %s804, 16
          %s806 = scalar_lea.vmem [#allocation9], %s805
          %s808 = ssub.s32 256, 256
          %809 = vsyncadd %s803, %s808
          %s810 = smul.addr %s61, 4
          %s811 = smul.addr %s810, 64
          %s812 = scalar_lea.hbm %s6, %s811
          %s813 = sshll.u32 %s806, 4
          %s814 = int_to_ptr.vmem [resolvable:$true] %s813
          %819 = dma.hbm_to_vmem [thread:$0]  %s812, 256, %s814, %s803, 64, 64, 4
        $region68: #{tpu_custom_call.1} parent=47 // pred_fallthru
          _
        // Predicated region
        $region69: #{tpu_custom_call.1} parent=47 // pred_check
          %p820 = pneg %p267
        $region70: #{tpu_custom_call.1} parent=47 // pred_check_branch
          %822 = sbr.rel (%p820) target = $region72
        $region71: #{tpu_custom_call.1} parent=47 // pred_region
          %s823 = sand.u32 %s53, 1
          %s824 = scalar_lea.sflag [#allocation10], %s823
          %s825 = sand.u32 %s257, 1
          %s826 = scalar_lea.vmem [#allocation11], %s825
          %s828 = ssub.s32 16, 16
          %829 = vsyncadd %s824, %s828
          %s830 = smul.addr %s61, 16
          %s831 = scalar_lea.hbm %s7, %s830
          %s833 = sshll.u32 %s826, 4
          %s834 = int_to_ptr.vmem [resolvable:$true] %s833
          %836 = dma.hbm_to_vmem [thread:$0]  %s831, 16, %s834, %s824
        $region72: #{tpu_custom_call.1} parent=47 // pred_fallthru
          _
        // Predicated region
        $region73: #{tpu_custom_call.1} parent=47 // pred_check
          %p837 = pneg %p293
        $region74: #{tpu_custom_call.1} parent=47 // pred_check_branch
          %839 = sbr.rel (%p837) target = $region76
        $region75: #{tpu_custom_call.1} parent=47 // pred_region
          %s840 = sand.u32 %s53, 1
          %s841 = scalar_lea.sflag [#allocation13], %s840
          %s842 = sand.u32 %s283, 1
          %s843 = smul.addr %s842, 16
          %s844 = scalar_lea.vmem [#allocation12], %s843
          %s846 = ssub.s32 256, 256
          %847 = vsyncadd %s841, %s846
          %s848 = smul.addr %s61, 4
          %s849 = smul.addr %s848, 64
          %s850 = scalar_lea.hbm %s8, %s849
          %s851 = sshll.u32 %s844, 4
          %s852 = int_to_ptr.vmem [resolvable:$true] %s851
          %857 = dma.hbm_to_vmem [thread:$0]  %s850, 256, %s852, %s841, 64, 64, 4
        $region76: #{tpu_custom_call.1} parent=47 // pred_fallthru
          _
        // Predicated region
        $region77: #{tpu_custom_call.1} parent=47 // pred_check
          %p858 = pneg %p319
        $region78: #{tpu_custom_call.1} parent=47 // pred_check_branch
          %860 = sbr.rel (%p858) target = $region80
        $region79: #{tpu_custom_call.1} parent=47 // pred_region
          %s861 = sand.u32 %s53, 1
          %s862 = scalar_lea.sflag [#allocation13], %s861
          %s863 = sand.u32 %s309, 1
          %s864 = scalar_lea.vmem [#allocation14], %s863
          %s866 = ssub.s32 16, 16
          %867 = vsyncadd %s862, %s866
          %s868 = smul.addr %s61, 16
          %s869 = scalar_lea.hbm %s9, %s868
          %s871 = sshll.u32 %s864, 4
          %s872 = int_to_ptr.vmem [resolvable:$true] %s871
          %874 = dma.hbm_to_vmem [thread:$0]  %s869, 16, %s872, %s862
        $region80: #{tpu_custom_call.1} parent=47 // pred_fallthru
          _
        // Predicated region
        $region81: #{tpu_custom_call.1} parent=47 // pred_check
          %p875 = pneg %p345
        $region82: #{tpu_custom_call.1} parent=47 // pred_check_branch
          %877 = sbr.rel (%p875) target = $region84
        $region83: #{tpu_custom_call.1} parent=47 // pred_region
          %s878 = sand.u32 %s53, 1
          %s879 = scalar_lea.sflag [#allocation16], %s878
          %s880 = sand.u32 %s335, 1
          %s881 = scalar_lea.vmem [#allocation15], %s880
          %s883 = ssub.s32 16, 16
          %884 = vsyncadd %s879, %s883
          %s885 = smul.addr %s61, 16
          %s886 = scalar_lea.hbm %s10, %s885
          %s888 = sshll.u32 %s881, 4
          %s889 = int_to_ptr.vmem [resolvable:$true] %s888
          %891 = dma.hbm_to_vmem [thread:$0]  %s886, 16, %s889, %s879
        $region84: #{tpu_custom_call.1} parent=47 // pred_fallthru
          _
        // Predicated region
        $region85: #{tpu_custom_call.1} parent=47 // pred_check
          %p892 = pneg %p371
        $region86: #{tpu_custom_call.1} parent=47 // pred_check_branch
          %894 = sbr.rel (%p892) target = $region88
        $region87: #{tpu_custom_call.1} parent=47 // pred_region
          %s895 = sand.u32 %s53, 1
          %s896 = scalar_lea.sflag [#allocation16], %s895
          %s897 = sand.u32 %s361, 1
          %s898 = scalar_lea.vmem [#allocation17], %s897
          %s900 = ssub.s32 16, 16
          %901 = vsyncadd %s896, %s900
          %s902 = smul.addr %s61, 16
          %s903 = scalar_lea.hbm %s11, %s902
          %s905 = sshll.u32 %s898, 4
          %s906 = int_to_ptr.vmem [resolvable:$true] %s905
          %908 = dma.hbm_to_vmem [thread:$0]  %s903, 16, %s906, %s896
        $region88: #{tpu_custom_call.1} parent=47 // pred_fallthru
          _
        // Predicated region
        $region89: #{tpu_custom_call.1} parent=47 // pred_check
          %p909 = pneg %p397
        $region90: #{tpu_custom_call.1} parent=47 // pred_check_branch
          %911 = sbr.rel (%p909) target = $region92
        $region91: #{tpu_custom_call.1} parent=47 // pred_region
          %s912 = sand.u32 %s53, 1
          %s913 = scalar_lea.sflag [#allocation19], %s912
          %s914 = sand.u32 %s387, 1
          %s915 = smul.addr %s914, 16
          %s916 = scalar_lea.vmem [#allocation18], %s915
          %s918 = ssub.s32 256, 256
          %919 = vsyncadd %s913, %s918
          %s920 = smul.addr %s61, 4
          %s921 = smul.addr %s920, 64
          %s922 = scalar_lea.hbm %s12, %s921
          %s923 = sshll.u32 %s916, 4
          %s924 = int_to_ptr.vmem [resolvable:$true] %s923
          %929 = dma.hbm_to_vmem [thread:$0]  %s922, 256, %s924, %s913, 64, 64, 4
        $region92: #{tpu_custom_call.1} parent=47 // pred_fallthru
          _
        // Predicated region
        $region93: #{tpu_custom_call.1} parent=47 // pred_check
          %p930 = pneg %p423
        $region94: #{tpu_custom_call.1} parent=47 // pred_check_branch
          %932 = sbr.rel (%p930) target = $region96
        $region95: #{tpu_custom_call.1} parent=47 // pred_region
          %s933 = sand.u32 %s53, 1
          %s934 = scalar_lea.sflag [#allocation19], %s933
          %s935 = sand.u32 %s413, 1
          %s936 = scalar_lea.vmem [#allocation20], %s935
          %s938 = ssub.s32 16, 16
          %939 = vsyncadd %s934, %s938
          %s940 = smul.addr %s61, 16
          %s941 = scalar_lea.hbm %s13, %s940
          %s943 = sshll.u32 %s936, 4
          %s944 = int_to_ptr.vmem [resolvable:$true] %s943
          %946 = dma.hbm_to_vmem [thread:$0]  %s941, 16, %s944, %s934
        $region96: #{tpu_custom_call.1} parent=47 // pred_fallthru
          _
        // Predicated region
        $region97: #{tpu_custom_call.1} parent=47 // pred_check
          %p947 = pneg %p449
        $region98: #{tpu_custom_call.1} parent=47 // pred_check_branch
          %949 = sbr.rel (%p947) target = $region100
        $region99: #{tpu_custom_call.1} parent=47 // pred_region
          %p950 = scmp.lt.s32.totalorder %s61, 1
          %s951 = scalar_select %p950, %s61, 1
          %s952 = smul.addr %s951, 8
          %s953 = smul.addr %s952, 4
          %s954 = scalar_lea.vmem %s14, %s953
        $region100: #{tpu_custom_call.1} parent=47 // pred_fallthru
          _
        // Predicated region
        $region101: #{tpu_custom_call.1} parent=47 // pred_check
          %p955 = pneg %p475
        $region102: #{tpu_custom_call.1} parent=47 // pred_check_branch
          %957 = sbr.rel (%p955) target = $region104
        $region103: #{tpu_custom_call.1} parent=47 // pred_region
          %s958 = sand.u32 %s53, 1
          %s959 = scalar_lea.sflag [#allocation22], %s958
          %s960 = sand.u32 %s465, 1
          %s961 = scalar_lea.vmem [#allocation21], %s960
          %s963 = ssub.s32 16, 16
          %964 = vsyncadd %s959, %s963
          %s965 = smul.addr %s61, 16
          %s966 = scalar_lea.hbm %s15, %s965
          %s968 = sshll.u32 %s961, 4
          %s969 = int_to_ptr.vmem [resolvable:$true] %s968
          %971 = dma.hbm_to_vmem [thread:$0]  %s966, 16, %s969, %s959
        $region104: #{tpu_custom_call.1} parent=47 // pred_fallthru
          _
        // Predicated region
        $region105: #{tpu_custom_call.1} parent=47 // pred_check
          %p972 = pneg %p501
        $region106: #{tpu_custom_call.1} parent=47 // pred_check_branch
          %974 = sbr.rel (%p972) target = $region108
        $region107: #{tpu_custom_call.1} parent=47 // pred_region
          %s975 = sand.u32 %s53, 1
          %s976 = scalar_lea.sflag [#allocation22], %s975
          %s977 = sand.u32 %s491, 1
          %s978 = scalar_lea.vmem [#allocation23], %s977
          %s980 = ssub.s32 16, 16
          %981 = vsyncadd %s976, %s980
          %s982 = smul.addr %s61, 16
          %s983 = scalar_lea.hbm %s16, %s982
          %s985 = sshll.u32 %s978, 4
          %s986 = int_to_ptr.vmem [resolvable:$true] %s985
          %988 = dma.hbm_to_vmem [thread:$0]  %s983, 16, %s986, %s976
        $region108: #{tpu_custom_call.1} parent=47 // pred_fallthru
          _
        // Predicated region
        $region109: #{tpu_custom_call.1} parent=47 // pred_check
          %p989 = pneg %p527
        $region110: #{tpu_custom_call.1} parent=47 // pred_check_branch
          %991 = sbr.rel (%p989) target = $region112
        $region111: #{tpu_custom_call.1} parent=47 // pred_region
          %s992 = sand.u32 %s517, 1
          %s993 = scalar_lea.sflag [#allocation25], %s992
          %s994 = sand.u32 %s517, 1
          %s995 = scalar_lea.vmem [#allocation24], %s994
          %s997 = ssub.s32 16, 16
          %998 = vsyncadd %s993, %s997
          %s999 = smul.addr %s61, 16
          %s1000 = scalar_lea.hbm %s17, %s999
          %s1002 = sshll.u32 %s995, 4
          %s1003 = int_to_ptr.vmem [resolvable:$true] %s1002
          %1005 = dma.hbm_to_vmem [thread:$0]  %s1000, 16, %s1003, %s993
        $region112: #{tpu_custom_call.1} parent=47 // pred_fallthru
          _
      $region48: #{tpu_custom_call.1} parent=5 // pred_fallthru
        _
      %p1006 = scmp.le.s32.totalorder 1, %s53
      %p1007 = scmp.lt.s32.totalorder %s53, 3
      %p1008 = pnand %p1006, %p1007
      %p1009 = pneg %p1008
      // Predicated region
      $region113: #{tpu_custom_call.1} parent=5 // pred_check
        _
      $region114: #{tpu_custom_call.1} parent=5 // pred_check_branch
        %1011 = sbr.rel (%p1008) target = $region116
      $region115: #{tpu_custom_call.1} parent=5 // pred_region
        %s1012 = ssub.s32 %s53, 1
        // Predicated region
        $region117: #{tpu_custom_call.1} parent=115 // pred_check
          %p1013 = pneg %p117
        $region118: #{tpu_custom_call.1} parent=115 // pred_check_branch
          %1015 = sbr.rel (%p1013) target = $region120
        $region119: #{tpu_custom_call.1} parent=115 // pred_region
          %1016 = dma.done [#allocation4], 2048
        $region120: #{tpu_custom_call.1} parent=115 // pred_fallthru
          _
        %s1017 = sand.u32 %s58, 1
        %s1018 = scalar_lea.sflag [#allocation7], %s1017
        %s1019 = sand.u32 %s156, 1
        %s1020 = scalar_lea.vmem [#allocation6], %s1019
        // Predicated region
        $region121: #{tpu_custom_call.1} parent=115 // pred_check
          %p1021 = pneg %p169
        $region122: #{tpu_custom_call.1} parent=115 // pred_check_branch
          %1023 = sbr.rel (%p1021) target = $region124
        $region123: #{tpu_custom_call.1} parent=115 // pred_region
          %1024 = dma.done %s1018, 16
        $region124: #{tpu_custom_call.1} parent=115 // pred_fallthru
          _
        %s1025 = sand.u32 %s58, 1
        %s1026 = scalar_lea.sflag [#allocation7], %s1025
        %s1027 = sand.u32 %s208, 1
        %s1028 = scalar_lea.vmem [#allocation8], %s1027
        // Predicated region
        $region125: #{tpu_custom_call.1} parent=115 // pred_check
          %p1029 = pneg %p221
        $region126: #{tpu_custom_call.1} parent=115 // pred_check_branch
          %1031 = sbr.rel (%p1029) target = $region128
        $region127: #{tpu_custom_call.1} parent=115 // pred_region
          %1032 = dma.done %s1026, 16
        $region128: #{tpu_custom_call.1} parent=115 // pred_fallthru
          _
        %s1033 = sand.u32 %s58, 1
        %s1034 = scalar_lea.sflag [#allocation10], %s1033
        %s1035 = sand.u32 %s234, 1
        %s1036 = smul.addr %s1035, 16
        %s1037 = scalar_lea.vmem [#allocation9], %s1036
        // Predicated region
        $region129: #{tpu_custom_call.1} parent=115 // pred_check
          %p1038 = pneg %p247
        $region130: #{tpu_custom_call.1} parent=115 // pred_check_branch
          %1040 = sbr.rel (%p1038) target = $region132
        $region131: #{tpu_custom_call.1} parent=115 // pred_region
          %1041 = dma.done %s1034, 256
        $region132: #{tpu_custom_call.1} parent=115 // pred_fallthru
          _
        %s1042 = sand.u32 %s58, 1
        %s1043 = scalar_lea.sflag [#allocation10], %s1042
        %s1044 = sand.u32 %s260, 1
        %s1045 = scalar_lea.vmem [#allocation11], %s1044
        // Predicated region
        $region133: #{tpu_custom_call.1} parent=115 // pred_check
          %p1046 = pneg %p273
        $region134: #{tpu_custom_call.1} parent=115 // pred_check_branch
          %1048 = sbr.rel (%p1046) target = $region136
        $region135: #{tpu_custom_call.1} parent=115 // pred_region
          %1049 = dma.done %s1043, 16
        $region136: #{tpu_custom_call.1} parent=115 // pred_fallthru
          _
        %s1050 = sand.u32 %s58, 1
        %s1051 = scalar_lea.sflag [#allocation13], %s1050
        %s1052 = sand.u32 %s286, 1
        %s1053 = smul.addr %s1052, 16
        %s1054 = scalar_lea.vmem [#allocation12], %s1053
        // Predicated region
        $region137: #{tpu_custom_call.1} parent=115 // pred_check
          %p1055 = pneg %p299
        $region138: #{tpu_custom_call.1} parent=115 // pred_check_branch
          %1057 = sbr.rel (%p1055) target = $region140
        $region139: #{tpu_custom_call.1} parent=115 // pred_region
          %1058 = dma.done %s1051, 256
        $region140: #{tpu_custom_call.1} parent=115 // pred_fallthru
          _
        %s1059 = sand.u32 %s58, 1
        %s1060 = scalar_lea.sflag [#allocation13], %s1059
        %s1061 = sand.u32 %s312, 1
        %s1062 = scalar_lea.vmem [#allocation14], %s1061
        // Predicated region
        $region141: #{tpu_custom_call.1} parent=115 // pred_check
          %p1063 = pneg %p325
        $region142: #{tpu_custom_call.1} parent=115 // pred_check_branch
          %1065 = sbr.rel (%p1063) target = $region144
        $region143: #{tpu_custom_call.1} parent=115 // pred_region
          %1066 = dma.done %s1060, 16
        $region144: #{tpu_custom_call.1} parent=115 // pred_fallthru
          _
        %s1067 = sand.u32 %s58, 1
        %s1068 = scalar_lea.sflag [#allocation16], %s1067
        %s1069 = sand.u32 %s338, 1
        %s1070 = scalar_lea.vmem [#allocation15], %s1069
        // Predicated region
        $region145: #{tpu_custom_call.1} parent=115 // pred_check
          %p1071 = pneg %p351
        $region146: #{tpu_custom_call.1} parent=115 // pred_check_branch
          %1073 = sbr.rel (%p1071) target = $region148
        $region147: #{tpu_custom_call.1} parent=115 // pred_region
          %1074 = dma.done %s1068, 16
        $region148: #{tpu_custom_call.1} parent=115 // pred_fallthru
          _
        %s1075 = sand.u32 %s58, 1
        %s1076 = scalar_lea.sflag [#allocation16], %s1075
        %s1077 = sand.u32 %s364, 1
        %s1078 = scalar_lea.vmem [#allocation17], %s1077
        // Predicated region
        $region149: #{tpu_custom_call.1} parent=115 // pred_check
          %p1079 = pneg %p377
        $region150: #{tpu_custom_call.1} parent=115 // pred_check_branch
          %1081 = sbr.rel (%p1079) target = $region152
        $region151: #{tpu_custom_call.1} parent=115 // pred_region
          %1082 = dma.done %s1076, 16
        $region152: #{tpu_custom_call.1} parent=115 // pred_fallthru
          _
        %s1083 = sand.u32 %s58, 1
        %s1084 = scalar_lea.sflag [#allocation19], %s1083
        %s1085 = sand.u32 %s390, 1
        %s1086 = smul.addr %s1085, 16
        %s1087 = scalar_lea.vmem [#allocation18], %s1086
        // Predicated region
        $region153: #{tpu_custom_call.1} parent=115 // pred_check
          %p1088 = pneg %p403
        $region154: #{tpu_custom_call.1} parent=115 // pred_check_branch
          %1090 = sbr.rel (%p1088) target = $region156
        $region155: #{tpu_custom_call.1} parent=115 // pred_region
          %1091 = dma.done %s1084, 256
        $region156: #{tpu_custom_call.1} parent=115 // pred_fallthru
          _
        %s1092 = sand.u32 %s58, 1
        %s1093 = scalar_lea.sflag [#allocation19], %s1092
        %s1094 = sand.u32 %s416, 1
        %s1095 = scalar_lea.vmem [#allocation20], %s1094
        // Predicated region
        $region157: #{tpu_custom_call.1} parent=115 // pred_check
          %p1096 = pneg %p429
        $region158: #{tpu_custom_call.1} parent=115 // pred_check_branch
          %1098 = sbr.rel (%p1096) target = $region160
        $region159: #{tpu_custom_call.1} parent=115 // pred_region
          %1099 = dma.done %s1093, 16
        $region160: #{tpu_custom_call.1} parent=115 // pred_fallthru
          _
        %s1100 = sand.u32 %s58, 1
        %s1101 = scalar_lea.sflag [#allocation22], %s1100
        %s1102 = sand.u32 %s468, 1
        %s1103 = scalar_lea.vmem [#allocation21], %s1102
        // Predicated region
        $region161: #{tpu_custom_call.1} parent=115 // pred_check
          %p1104 = pneg %p481
        $region162: #{tpu_custom_call.1} parent=115 // pred_check_branch
          %1106 = sbr.rel (%p1104) target = $region164
        $region163: #{tpu_custom_call.1} parent=115 // pred_region
          %1107 = dma.done %s1101, 16
        $region164: #{tpu_custom_call.1} parent=115 // pred_fallthru
          _
        %s1108 = sand.u32 %s58, 1
        %s1109 = scalar_lea.sflag [#allocation22], %s1108
        %s1110 = sand.u32 %s494, 1
        %s1111 = scalar_lea.vmem [#allocation23], %s1110
        // Predicated region
        $region165: #{tpu_custom_call.1} parent=115 // pred_check
          %p1112 = pneg %p507
        $region166: #{tpu_custom_call.1} parent=115 // pred_check_branch
          %1114 = sbr.rel (%p1112) target = $region168
        $region167: #{tpu_custom_call.1} parent=115 // pred_region
          %1115 = dma.done %s1109, 16
        $region168: #{tpu_custom_call.1} parent=115 // pred_fallthru
          _
        %s1116 = sand.u32 %s520, 1
        %s1117 = scalar_lea.sflag [#allocation25], %s1116
        %s1118 = sand.u32 %s520, 1
        %s1119 = scalar_lea.vmem [#allocation24], %s1118
        // Predicated region
        $region169: #{tpu_custom_call.1} parent=115 // pred_check
          %p1120 = pneg %p533
        $region170: #{tpu_custom_call.1} parent=115 // pred_check_branch
          %1122 = sbr.rel (%p1120) target = $region172
        $region171: #{tpu_custom_call.1} parent=115 // pred_region
          %1123 = dma.done %s1117, 16
        $region172: #{tpu_custom_call.1} parent=115 // pred_fallthru
          _
        %s1124 = smul.u32 2, %s62
        %p1125 = scmp.lt.s32.totalorder %s1124, 1
        %s1126 = scalar_select %p1125, %s1124, 1
        %s1127 = smul.addr %s1126, 2
        %s1128 = smul.addr %s1127, 8
        %s1129 = scalar_lea.vmem %s0, %s1128
        %p1130 = pneg %p91
        %p1131 = pneg %p88
        %p1132 = pneg %p117
        %p1133 = pneg %p114
        %p1134 = scmp.lt.s32.totalorder %s63, 1
        %s1135 = scalar_select %p1134, %s63, 1
        %s1136 = smul.addr %s1135, 4
        %s1137 = smul.addr %s1136, 4
        %s1138 = scalar_lea.vmem %s2, %s1137
        %p1139 = pneg %p143
        %p1140 = pneg %p140
        %s1141 = sand.u32 %s58, 1
        %s1142 = scalar_lea.sflag [#allocation7], %s1141
        %s1143 = sand.u32 %s156, 1
        %s1144 = scalar_lea.vmem [#allocation6], %s1143
        %p1145 = pneg %p169
        %p1146 = pneg %p166
        %p1147 = scmp.lt.s32.totalorder %s63, 1
        %s1148 = scalar_select %p1147, %s63, 1
        %s1149 = smul.addr %s1148, 4
        %s1150 = smul.addr %s1149, 4
        %s1151 = scalar_lea.vmem %s4, %s1150
        %p1152 = pneg %p195
        %p1153 = pneg %p192
        %s1154 = sand.u32 %s58, 1
        %s1155 = scalar_lea.sflag [#allocation7], %s1154
        %s1156 = sand.u32 %s208, 1
        %s1157 = scalar_lea.vmem [#allocation8], %s1156
        %p1158 = pneg %p221
        %p1159 = pneg %p218
        %s1160 = sand.u32 %s58, 1
        %s1161 = scalar_lea.sflag [#allocation10], %s1160
        %s1162 = sand.u32 %s234, 1
        %s1163 = smul.addr %s1162, 16
        %s1164 = scalar_lea.vmem [#allocation9], %s1163
        %p1165 = pneg %p247
        %p1166 = pneg %p244
        %s1167 = sand.u32 %s58, 1
        %s1168 = scalar_lea.sflag [#allocation10], %s1167
        %s1169 = sand.u32 %s260, 1
        %s1170 = scalar_lea.vmem [#allocation11], %s1169
        %p1171 = pneg %p273
        %p1172 = pneg %p270
        %s1173 = sand.u32 %s58, 1
        %s1174 = scalar_lea.sflag [#allocation13], %s1173
        %s1175 = sand.u32 %s286, 1
        %s1176 = smul.addr %s1175, 16
        %s1177 = scalar_lea.vmem [#allocation12], %s1176
        %p1178 = pneg %p299
        %p1179 = pneg %p296
        %s1180 = sand.u32 %s58, 1
        %s1181 = scalar_lea.sflag [#allocation13], %s1180
        %s1182 = sand.u32 %s312, 1
        %s1183 = scalar_lea.vmem [#allocation14], %s1182
        %p1184 = pneg %p325
        %p1185 = pneg %p322
        %s1186 = sand.u32 %s58, 1
        %s1187 = scalar_lea.sflag [#allocation16], %s1186
        %s1188 = sand.u32 %s338, 1
        %s1189 = scalar_lea.vmem [#allocation15], %s1188
        %p1190 = pneg %p351
        %p1191 = pneg %p348
        %s1192 = sand.u32 %s58, 1
        %s1193 = scalar_lea.sflag [#allocation16], %s1192
        %s1194 = sand.u32 %s364, 1
        %s1195 = scalar_lea.vmem [#allocation17], %s1194
        %p1196 = pneg %p377
        %p1197 = pneg %p374
        %s1198 = sand.u32 %s58, 1
        %s1199 = scalar_lea.sflag [#allocation19], %s1198
        %s1200 = sand.u32 %s390, 1
        %s1201 = smul.addr %s1200, 16
        %s1202 = scalar_lea.vmem [#allocation18], %s1201
        %p1203 = pneg %p403
        %p1204 = pneg %p400
        %s1205 = sand.u32 %s58, 1
        %s1206 = scalar_lea.sflag [#allocation19], %s1205
        %s1207 = sand.u32 %s416, 1
        %s1208 = scalar_lea.vmem [#allocation20], %s1207
        %p1209 = pneg %p429
        %p1210 = pneg %p426
        %p1211 = scmp.lt.s32.totalorder %s63, 1
        %s1212 = scalar_select %p1211, %s63, 1
        %s1213 = smul.addr %s1212, 8
        %s1214 = smul.addr %s1213, 4
        %s1215 = scalar_lea.vmem %s14, %s1214
        %p1216 = pneg %p455
        %p1217 = pneg %p452
        %s1218 = sand.u32 %s58, 1
        %s1219 = scalar_lea.sflag [#allocation22], %s1218
        %s1220 = sand.u32 %s468, 1
        %s1221 = scalar_lea.vmem [#allocation21], %s1220
        %p1222 = pneg %p481
        %p1223 = pneg %p478
        %s1224 = sand.u32 %s58, 1
        %s1225 = scalar_lea.sflag [#allocation22], %s1224
        %s1226 = sand.u32 %s494, 1
        %s1227 = scalar_lea.vmem [#allocation23], %s1226
        %p1228 = pneg %p507
        %p1229 = pneg %p504
        %s1230 = sand.u32 %s520, 1
        %s1231 = scalar_lea.sflag [#allocation25], %s1230
        %s1232 = sand.u32 %s520, 1
        %s1233 = scalar_lea.vmem [#allocation24], %s1232
        %p1234 = pneg %p533
        %p1235 = pneg %p530
        %p1236 = pneg %p554
        %p1237 = pneg %p551
        %p1238 = pneg %p575
        %p1239 = pneg %p572
        %p1240 = pneg %p596
        %p1241 = pneg %p593
        %p1242 = pneg %p617
        %p1243 = pneg %p614
        %p1244 = pneg %p638
        %p1245 = pneg %p635
        %p1246 = pneg %p659
        %p1247 = pneg %p656
        %p1248 = pneg %p685
        %p1249 = pneg %p682
        %s1250 = smul.u32 2, %s62
        %p1251 = scmp.lt.s32.totalorder %s1250, 1
        %s1252 = scalar_select %p1251, %s1250, 1
        %s1253 = smul.addr %s1252, 2
        %s1254 = smul.addr %s1253, 8
        %s1255 = scalar_lea.vmem %s0, %s1254
        %s1256 = smul.u32 2, %s62
        %s1257 = smul.u32 2, %s62
        %p1258 = scmp.lt.s32.totalorder %s63, 1
        %s1259 = scalar_select %p1258, %s63, 1
        %s1260 = smul.addr %s1259, 4
        %s1261 = smul.addr %s1260, 4
        %s1262 = scalar_lea.vmem %s2, %s1261
        %p1263 = scmp.lt.s32.totalorder %s63, 1
        %s1264 = scalar_select %p1263, %s63, 1
        %s1265 = smul.addr %s1264, 4
        %s1266 = smul.addr %s1265, 4
        %s1267 = scalar_lea.vmem %s4, %s1266
        %p1268 = scmp.lt.s32.totalorder %s63, 1
        %s1269 = scalar_select %p1268, %s63, 1
        %s1270 = smul.addr %s1269, 8
        %s1271 = smul.addr %s1270, 4
        %s1272 = scalar_lea.vmem %s14, %s1271
        %s1273 = smul.u32 2, %s62
        %p1275 = scmp.eq.s32.totalorder %s63, 0
        // Predicated region
        $region173: #{tpu_custom_call.1} parent=115 // pred_check
          %p1276 = pneg %p1275
        $region174: #{tpu_custom_call.1} parent=115 // pred_check_branch
          %1278 = sbr.rel (%p1276) target = $region176
        $region175: #{tpu_custom_call.1} parent=115 // pred_region
          %v1279 = vld [vmem:[%s1255] sm:$0xff]
          %v1280 = vld [vmem:[%s1255 + $0x8] sm:$0xff]
          %v1281 = vld [vmem:[%s1255 + $0x10] sm:$0xff]
          %v1282 = vld [vmem:[%s1255 + $0x18] sm:$0xff]
          %vm1283 = vcmask 261120
          %1284 = vst.msk [vmem:[#allocation2] sm:$0xff] %vm1283, %v1279
          %1285 = vst.msk [vmem:[#allocation2 + $0x8] sm:$0xff] %vm1283, %v1280
          %1286 = vst.msk [vmem:[#allocation2 + $0x10] sm:$0xff] %vm1283, %v1281
          %1287 = vst.msk [vmem:[#allocation2 + $0x18] sm:$0xff] %vm1283, %v1282
        $region176: #{tpu_custom_call.1} parent=115 // pred_fallthru
          _
        %v1288 = vld [vmem:[#allocation2] sm:$0xff]
        %v1289 = vld [vmem:[#allocation2 + $0x8] sm:$0xff]
        %v1290 = vld [vmem:[#allocation2 + $0x10] sm:$0xff]
        %v1291 = vld [vmem:[#allocation2 + $0x18] sm:$0xff]
        %v1292 = vpack.c.bf16 %v1289, %v1288
        %v1293 = vpack.c.bf16 %v1291, %v1290
        %v1294 = vld [vmem:[%s1262] sm:$0xf]
        %v1295 = vld [vmem:[%s1262 + $0x4] sm:$0xf]
        %v1296 = vld [vmem:[%s1262 + $0x8] sm:$0xf]
        %v1297 = vld [vmem:[%s1262 + $0xc] sm:$0xf]
        %v1298 = vld [vmem:[%s1020] sm:$0x1]
        %v1300 = vlaneseq
        %v1301 = vshrl.u32 %v1300, 7
        %v1302 = vsub.s32 0, %v1301
        %v1303 = vrot.slane %v1298, %v1302
        %v1309 = vunpack.c.l.b16 %v1294
        %v1310 = vunpack.c.l.b16 %v1295
        %v1311 = vunpack.c.l.b16 %v1296
        %v1312 = vunpack.c.l.b16 %v1297
        %v1313 = vpack.c.b16 %v1310, %v1309
        %v1314 = vpack.c.b16 %v1312, %v1311
        %vm1317 = vcmask 261120
        %v1319 = vsel %vm1317, %v1292, 0
        %v1322 = vsel %vm1317, %v1293, 0
        %1324 = vmatprep.subr.bf16.mxu0 0
        %1325 = vmatpush1.bf16.msra.mxu0 %v1313
        %1326 = vmatprep.subr.bf16.mxu0 0
        %1327 = vmatpush1.bf16.msra.mxu0 %v1314
        %1328 = vmatprep.subr.bf16.mxu0 0
        %1329 = vmatpush1.bf16.msra.mxu0 0
        %1330 = vmatprep.subr.bf16.mxu0 0
        %1331 = vmatpush1.bf16.msra.mxu0 0
        %1332 = vmatprep.subr.bf16.mxu0 0
        %1333 = vmatpush1.bf16.msra.mxu0 0
        %1334 = vmatprep.subr.bf16.mxu0 0
        %1335 = vmatpush1.bf16.msra.mxu0 0
        %1336 = vmatprep.subr.bf16.mxu0 0
        %1337 = vmatpush1.bf16.msra.mxu0 0
        %1338 = vmatprep.subr.bf16.mxu0 0
        %1339 = vmatpush1.bf16.msra.mxu0 0
        %1340 = vmatprep.subr.bf16.mxu0 0
        %1341 = vmatpush1.bf16.msra.mxu0 0
        %1342 = vmatprep.subr.bf16.mxu0 0
        %1343 = vmatpush1.bf16.msra.mxu0 0
        %1344 = vmatprep.subr.bf16.mxu0 0
        %1345 = vmatpush1.bf16.msra.mxu0 0
        %1346 = vmatprep.subr.bf16.mxu0 0
        %1347 = vmatpush1.bf16.msra.mxu0 0
        %1348 = vmatprep.subr.bf16.mxu0 0
        %1349 = vmatpush1.bf16.msra.mxu0 0
        %1350 = vmatprep.subr.bf16.mxu0 0
        %1351 = vmatpush1.bf16.msra.mxu0 0
        %1352 = vmatprep.subr.bf16.mxu0 0
        %1353 = vmatpush1.bf16.msra.mxu0 0
        %1354 = vmatprep.subr.bf16.mxu0 0
        %1355 = vmatpush1.bf16.msra.mxu0 0
        %1356 = vmatprep.mubr.bf16.mxu0 0
        %1357 = vmatmul.mubr.bf16.gmra.mrb[0].mxu0 %v1319
        %v1358 = vpop.f32.mrb[0].mxu0
        %v1359 = vadd.f32 %v1303, %v1358
        %v1360 = vpop.f32.mrb[0].mxu0
        %v1361 = vpop.f32.mrb[0].mxu0
        %v1362 = vadd.f32 %v1303, %v1361
        %v1363 = vpop.f32.mrb[0].mxu0
        %1364 = vmatprep.mubr.bf16.mxu0 0
        %1365 = vmatmul.mubr.bf16.gmra.mrb[0].mxu0 %v1322
        %v1366 = vpop.f32.mrb[0].mxu0
        %v1367 = vadd.f32 %v1303, %v1366
        %v1368 = vpop.f32.mrb[0].mxu0
        %v1369 = vpop.f32.mrb[0].mxu0
        %v1370 = vadd.f32 %v1303, %v1369
        %v1371 = vpop.f32.mrb[0].mxu0
        %1372 = vdwg.mxu0
        %v1373 = vld [vmem:[%s1267] sm:$0xf]
        %v1374 = vld [vmem:[%s1267 + $0x4] sm:$0xf]
        %v1375 = vld [vmem:[%s1267 + $0x8] sm:$0xf]
        %v1376 = vld [vmem:[%s1267 + $0xc] sm:$0xf]
        %v1377 = vld [vmem:[%s1028] sm:$0x1]
        %v1379 = vlaneseq
        %v1380 = vshrl.u32 %v1379, 7
        %v1381 = vsub.s32 0, %v1380
        %v1382 = vrot.slane %v1377, %v1381
        %v1388 = vunpack.c.l.b16 %v1373
        %v1389 = vunpack.c.l.b16 %v1374
        %v1390 = vunpack.c.l.b16 %v1375
        %v1391 = vunpack.c.l.b16 %v1376
        %v1392 = vpack.c.b16 %v1389, %v1388
        %v1393 = vpack.c.b16 %v1391, %v1390
        %1396 = vmatprep.subr.bf16.mxu0 0
        %1397 = vmatpush1.bf16.msra.mxu0 %v1392
        %1398 = vmatprep.subr.bf16.mxu0 0
        %1399 = vmatpush1.bf16.msra.mxu0 %v1393
        %1400 = vmatprep.subr.bf16.mxu0 0
        %1401 = vmatpush1.bf16.msra.mxu0 0
        %1402 = vmatprep.subr.bf16.mxu0 0
        %1403 = vmatpush1.bf16.msra.mxu0 0
        %1404 = vmatprep.subr.bf16.mxu0 0
        %1405 = vmatpush1.bf16.msra.mxu0 0
        %1406 = vmatprep.subr.bf16.mxu0 0
        %1407 = vmatpush1.bf16.msra.mxu0 0
        %1408 = vmatprep.subr.bf16.mxu0 0
        %1409 = vmatpush1.bf16.msra.mxu0 0
        %1410 = vmatprep.subr.bf16.mxu0 0
        %1411 = vmatpush1.bf16.msra.mxu0 0
        %1412 = vmatprep.subr.bf16.mxu0 0
        %1413 = vmatpush1.bf16.msra.mxu0 0
        %1414 = vmatprep.subr.bf16.mxu0 0
        %1415 = vmatpush1.bf16.msra.mxu0 0
        %1416 = vmatprep.subr.bf16.mxu0 0
        %1417 = vmatpush1.bf16.msra.mxu0 0
        %1418 = vmatprep.subr.bf16.mxu0 0
        %1419 = vmatpush1.bf16.msra.mxu0 0
        %1420 = vmatprep.subr.bf16.mxu0 0
        %1421 = vmatpush1.bf16.msra.mxu0 0
        %1422 = vmatprep.subr.bf16.mxu0 0
        %1423 = vmatpush1.bf16.msra.mxu0 0
        %1424 = vmatprep.subr.bf16.mxu0 0
        %1425 = vmatpush1.bf16.msra.mxu0 0
        %1426 = vmatprep.subr.bf16.mxu0 0
        %1427 = vmatpush1.bf16.msra.mxu0 0
        %1428 = vmatprep.mubr.bf16.mxu0 0
        %1429 = vmatmul.mubr.bf16.gmra.mrb[0].mxu0 %v1319
        %v1430 = vpop.f32.mrb[0].mxu0
        %v1431 = vadd.f32 %v1382, %v1430
        %v1432 = vpop.f32.mrb[0].mxu0
        %v1433 = vpop.f32.mrb[0].mxu0
        %v1434 = vadd.f32 %v1382, %v1433
        %v1435 = vpop.f32.mrb[0].mxu0
        %1436 = vmatprep.mubr.bf16.mxu0 0
        %1437 = vmatmul.mubr.bf16.gmra.mrb[0].mxu0 %v1322
        %v1438 = vpop.f32.mrb[0].mxu0
        %v1439 = vadd.f32 %v1382, %v1438
        %v1440 = vpop.f32.mrb[0].mxu0
        %v1441 = vpop.f32.mrb[0].mxu0
        %v1442 = vadd.f32 %v1382, %v1441
        %v1443 = vpop.f32.mrb[0].mxu0
        %1444 = vdwg.mxu0
        %v1445 = vld [vmem:[%s1037] sm:$0xf]
        %v1446 = vld [vmem:[%s1037 + $0x4] sm:$0xf]
        %v1447 = vld [vmem:[%s1037 + $0x8] sm:$0xf]
        %v1448 = vld [vmem:[%s1037 + $0xc] sm:$0xf]
        %v1449 = vld [vmem:[%s1045] sm:$0x1]
        %v1451 = vlaneseq
        %v1452 = vshrl.u32 %v1451, 7
        %v1453 = vsub.s32 0, %v1452
        %v1454 = vrot.slane %v1449, %v1453
        %v1460 = vunpack.c.l.b16 %v1445
        %v1461 = vunpack.c.l.b16 %v1446
        %v1462 = vunpack.c.l.b16 %v1447
        %v1463 = vunpack.c.l.b16 %v1448
        %v1464 = vpack.c.b16 %v1461, %v1460
        %v1465 = vpack.c.b16 %v1463, %v1462
        %1468 = vmatprep.subr.bf16.mxu0 0
        %1469 = vmatpush1.bf16.msra.mxu0 %v1464
        %1470 = vmatprep.subr.bf16.mxu0 0
        %1471 = vmatpush1.bf16.msra.mxu0 %v1465
        %1472 = vmatprep.subr.bf16.mxu0 0
        %1473 = vmatpush1.bf16.msra.mxu0 0
        %1474 = vmatprep.subr.bf16.mxu0 0
        %1475 = vmatpush1.bf16.msra.mxu0 0
        %1476 = vmatprep.subr.bf16.mxu0 0
        %1477 = vmatpush1.bf16.msra.mxu0 0
        %1478 = vmatprep.subr.bf16.mxu0 0
        %1479 = vmatpush1.bf16.msra.mxu0 0
        %1480 = vmatprep.subr.bf16.mxu0 0
        %1481 = vmatpush1.bf16.msra.mxu0 0
        %1482 = vmatprep.subr.bf16.mxu0 0
        %1483 = vmatpush1.bf16.msra.mxu0 0
        %1484 = vmatprep.subr.bf16.mxu0 0
        %1485 = vmatpush1.bf16.msra.mxu0 0
        %1486 = vmatprep.subr.bf16.mxu0 0
        %1487 = vmatpush1.bf16.msra.mxu0 0
        %1488 = vmatprep.subr.bf16.mxu0 0
        %1489 = vmatpush1.bf16.msra.mxu0 0
        %1490 = vmatprep.subr.bf16.mxu0 0
        %1491 = vmatpush1.bf16.msra.mxu0 0
        %1492 = vmatprep.subr.bf16.mxu0 0
        %1493 = vmatpush1.bf16.msra.mxu0 0
        %1494 = vmatprep.subr.bf16.mxu0 0
        %1495 = vmatpush1.bf16.msra.mxu0 0
        %1496 = vmatprep.subr.bf16.mxu0 0
        %1497 = vmatpush1.bf16.msra.mxu0 0
        %1498 = vmatprep.subr.bf16.mxu0 0
        %1499 = vmatpush1.bf16.msra.mxu0 0
        %1500 = vmatprep.mubr.bf16.mxu0 0
        %1501 = vmatmul.mubr.bf16.gmra.mrb[0].mxu0 %v1319
        %v1502 = vpop.f32.mrb[0].mxu0
        %v1503 = vadd.f32 %v1454, %v1502
        %v1504 = vpop.f32.mrb[0].mxu0
        %v1505 = vpop.f32.mrb[0].mxu0
        %v1506 = vadd.f32 %v1454, %v1505
        %v1507 = vpop.f32.mrb[0].mxu0
        %1508 = vmatprep.mubr.bf16.mxu0 0
        %1509 = vmatmul.mubr.bf16.gmra.mrb[0].mxu0 %v1322
        %v1510 = vpop.f32.mrb[0].mxu0
        %v1511 = vadd.f32 %v1454, %v1510
        %v1512 = vpop.f32.mrb[0].mxu0
        %v1513 = vpop.f32.mrb[0].mxu0
        %v1514 = vadd.f32 %v1454, %v1513
        %v1515 = vpop.f32.mrb[0].mxu0
        %1516 = vdwg.mxu0
        %v1517 = vpack.c.bf16 %v1362, %v1359
        %v1518 = vpack.c.bf16 %v1370, %v1367
        %v1519 = vpack.c.bf16 %v1434, %v1431
        %v1520 = vpack.c.bf16 %v1442, %v1439
        %v1521 = vpack.c.bf16 %v1506, %v1503
        %v1522 = vpack.c.bf16 %v1514, %v1511
        %v1523 = vld [vmem:[#allocation3] sm:$0xff]
        %v1524 = vld [vmem:[#allocation3 + $0x8] sm:$0xff]
        %v1525 = vld [vmem:[#allocation3 + $0x10] sm:$0xff]
        %v1526 = vld [vmem:[#allocation3 + $0x18] sm:$0xff]
        %vm1527 = vcmask 64512
        %v1529 = vsel %vm1527, %v1517, 0
        %v1532 = vsel %vm1527, %v1519, 0
        %1534 = vmatprep.subr.bf16.mxu0 0
        %1535 = vmatpush1.bf16.xpose.msra.mxu0 %v1532
        %1536 = vmatprep.subr.bf16.mxu0 0
        %1537 = vmatpush1.bf16.xpose.msra.mxu0 0
        %1538 = vmatprep.subr.bf16.mxu0 0
        %1539 = vmatpush1.bf16.xpose.msra.mxu0 0
        %1540 = vmatprep.subr.bf16.mxu0 0
        %1541 = vmatpush1.bf16.xpose.msra.mxu0 0
        %1542 = vmatprep.subr.bf16.mxu0 0
        %1543 = vmatpush1.bf16.xpose.msra.mxu0 0
        %1544 = vmatprep.subr.bf16.mxu0 0
        %1545 = vmatpush1.bf16.xpose.msra.mxu0 0
        %1546 = vmatprep.subr.bf16.mxu0 0
        %1547 = vmatpush1.bf16.xpose.msra.mxu0 0
        %1548 = vmatprep.subr.bf16.mxu0 0
        %1549 = vmatpush1.bf16.xpose.msra.mxu0 0
        %1550 = vmatprep.subr.bf16.mxu0 0
        %1551 = vmatpush1.bf16.xpose.msra.mxu0 0
        %1552 = vmatprep.subr.bf16.mxu0 0
        %1553 = vmatpush1.bf16.xpose.msra.mxu0 0
        %1554 = vmatprep.subr.bf16.mxu0 0
        %1555 = vmatpush1.bf16.xpose.msra.mxu0 0
        %1556 = vmatprep.subr.bf16.mxu0 0
        %1557 = vmatpush1.bf16.xpose.msra.mxu0 0
        %1558 = vmatprep.subr.bf16.mxu0 0
        %1559 = vmatpush1.bf16.xpose.msra.mxu0 0
        %1560 = vmatprep.subr.bf16.mxu0 0
        %1561 = vmatpush1.bf16.xpose.msra.mxu0 0
        %1562 = vmatprep.subr.bf16.mxu0 0
        %1563 = vmatpush1.bf16.xpose.msra.mxu0 0
        %1564 = vmatprep.subr.bf16.mxu0 0
        %1565 = vmatpush1.bf16.xpose.msra.mxu0 0
        %1566 = vmatprep.mubr.bf16.mxu0 0
        %1567 = vmatmul.mubr.bf16.gmra.mrb[0].mxu0 %v1529
        %v1568 = vpop.f32.mrb[0].mxu0
        %v1569 = vadd.f32 %v1523, %v1568
        %v1570 = vpop.f32.mrb[0].mxu0
        %v1571 = vpop.f32.mrb[0].mxu0
        %v1572 = vadd.f32 %v1524, %v1571
        %v1573 = vpop.f32.mrb[0].mxu0
        %1574 = vdwg.mxu0
        %v1576 = vsel %vm1527, %v1518, 0
        %v1579 = vsel %vm1527, %v1520, 0
        %1581 = vmatprep.subr.bf16.mxu0 0
        %1582 = vmatpush1.bf16.xpose.msra.mxu0 %v1579
        %1583 = vmatprep.subr.bf16.mxu0 0
        %1584 = vmatpush1.bf16.xpose.msra.mxu0 0
        %1585 = vmatprep.subr.bf16.mxu0 0
        %1586 = vmatpush1.bf16.xpose.msra.mxu0 0
        %1587 = vmatprep.subr.bf16.mxu0 0
        %1588 = vmatpush1.bf16.xpose.msra.mxu0 0
        %1589 = vmatprep.subr.bf16.mxu0 0
        %1590 = vmatpush1.bf16.xpose.msra.mxu0 0
        %1591 = vmatprep.subr.bf16.mxu0 0
        %1592 = vmatpush1.bf16.xpose.msra.mxu0 0
        %1593 = vmatprep.subr.bf16.mxu0 0
        %1594 = vmatpush1.bf16.xpose.msra.mxu0 0
        %1595 = vmatprep.subr.bf16.mxu0 0
        %1596 = vmatpush1.bf16.xpose.msra.mxu0 0
        %1597 = vmatprep.subr.bf16.mxu0 0
        %1598 = vmatpush1.bf16.xpose.msra.mxu0 0
        %1599 = vmatprep.subr.bf16.mxu0 0
        %1600 = vmatpush1.bf16.xpose.msra.mxu0 0
        %1601 = vmatprep.subr.bf16.mxu0 0
        %1602 = vmatpush1.bf16.xpose.msra.mxu0 0
        %1603 = vmatprep.subr.bf16.mxu0 0
        %1604 = vmatpush1.bf16.xpose.msra.mxu0 0
        %1605 = vmatprep.subr.bf16.mxu0 0
        %1606 = vmatpush1.bf16.xpose.msra.mxu0 0
        %1607 = vmatprep.subr.bf16.mxu0 0
        %1608 = vmatpush1.bf16.xpose.msra.mxu0 0
        %1609 = vmatprep.subr.bf16.mxu0 0
        %1610 = vmatpush1.bf16.xpose.msra.mxu0 0
        %1611 = vmatprep.subr.bf16.mxu0 0
        %1612 = vmatpush1.bf16.xpose.msra.mxu0 0
        %1613 = vmatprep.mubr.bf16.mxu0 0
        %1614 = vmatmul.mubr.bf16.gmra.mrb[0].mxu0 %v1576
        %v1615 = vpop.f32.mrb[0].mxu0
        %v1616 = vadd.f32 %v1525, %v1615
        %v1617 = vpop.f32.mrb[0].mxu0
        %v1618 = vpop.f32.mrb[0].mxu0
        %v1619 = vadd.f32 %v1526, %v1618
        %v1620 = vpop.f32.mrb[0].mxu0
        %1621 = vdwg.mxu0
        %vm1622 = vcmask 130048
        %v1623 = vsel %vm1622, %v1569, -inf
        %1624 = vmax.xlane.f32.xlu0 %v1623
        %v1625 = vpop.xlane.xlu0 %1624
        %v1626 = vsel %vm1622, %v1572, -inf
        %1627 = vmax.xlane.f32.xlu0 %v1626
        %v1628 = vpop.xlane.xlu0 %1627
        %v1629 = vsel %vm1622, %v1616, -inf
        %1630 = vmax.xlane.f32.xlu0 %v1629
        %v1631 = vpop.xlane.xlu0 %1630
        %v1632 = vsel %vm1622, %v1619, -inf
        %1633 = vmax.xlane.f32.xlu0 %v1632
        %v1634 = vpop.xlane.xlu0 %1633
        %v1635 = vsub.f32 %v1569, %v1625
        %v1636 = vsub.f32 %v1572, %v1628
        %v1637 = vsub.f32 %v1616, %v1631
        %v1638 = vsub.f32 %v1619, %v1634
        %v1639 = vmul.f32 %v1635, 1.442695
        %v1640 = vpow.pop %v1639
        %v1641 = vmul.f32 %v1636, 1.442695
        %v1642 = vpow.pop %v1641
        %v1643 = vmul.f32 %v1637, 1.442695
        %v1644 = vpow.pop %v1643
        %v1645 = vmul.f32 %v1638, 1.442695
        %v1646 = vpow.pop %v1645
        %v1647 = vsel %vm1622, %v1640, 0.0
        %1648 = vadd.xlane.f32.xlu0 %v1647
        %v1649 = vpop.xlane.xlu0 %1648
        %v1650 = vsel %vm1622, %v1642, 0.0
        %1651 = vadd.xlane.f32.xlu0 %v1650
        %v1652 = vpop.xlane.xlu0 %1651
        %v1653 = vsel %vm1622, %v1644, 0.0
        %1654 = vadd.xlane.f32.xlu0 %v1653
        %v1655 = vpop.xlane.xlu0 %1654
        %v1656 = vsel %vm1622, %v1646, 0.0
        %1657 = vadd.xlane.f32.xlu0 %v1656
        %v1658 = vpop.xlane.xlu0 %1657
        %v1659 = vrcp.pop %v1649
        %v1660 = vrcp.pop %v1652
        %v1661 = vrcp.pop %v1655
        %v1662 = vrcp.pop %v1658
        %v1663 = vmul.f32 %v1640, %v1659
        %v1664 = vmul.f32 %v1642, %v1660
        %v1665 = vmul.f32 %v1644, %v1661
        %v1666 = vmul.f32 %v1646, %v1662
        %v1667 = vpack.c.bf16 %v1664, %v1663
        %v1668 = vpack.c.bf16 %v1666, %v1665
        %v1670 = vsel %vm1622, %v1667, 0
        %1672 = vmatprep.subr.bf16.mxu0 0
        %1673 = vmatpush1.bf16.msra.mxu0 %v1521
        %1674 = vmatprep.subr.bf16.mxu0 0
        %1675 = vmatpush1.bf16.msra.mxu0 0
        %1676 = vmatprep.subr.bf16.mxu0 0
        %1677 = vmatpush1.bf16.msra.mxu0 0
        %1678 = vmatprep.subr.bf16.mxu0 0
        %1679 = vmatpush1.bf16.msra.mxu0 0
        %1680 = vmatprep.subr.bf16.mxu0 0
        %1681 = vmatpush1.bf16.msra.mxu0 0
        %1682 = vmatprep.subr.bf16.mxu0 0
        %1683 = vmatpush1.bf16.msra.mxu0 0
        %1684 = vmatprep.subr.bf16.mxu0 0
        %1685 = vmatpush1.bf16.msra.mxu0 0
        %1686 = vmatprep.subr.bf16.mxu0 0
        %1687 = vmatpush1.bf16.msra.mxu0 0
        %1688 = vmatprep.subr.bf16.mxu0 0
        %1689 = vmatpush1.bf16.msra.mxu0 0
        %1690 = vmatprep.subr.bf16.mxu0 0
        %1691 = vmatpush1.bf16.msra.mxu0 0
        %1692 = vmatprep.subr.bf16.mxu0 0
        %1693 = vmatpush1.bf16.msra.mxu0 0
        %1694 = vmatprep.subr.bf16.mxu0 0
        %1695 = vmatpush1.bf16.msra.mxu0 0
        %1696 = vmatprep.subr.bf16.mxu0 0
        %1697 = vmatpush1.bf16.msra.mxu0 0
        %1698 = vmatprep.subr.bf16.mxu0 0
        %1699 = vmatpush1.bf16.msra.mxu0 0
        %1700 = vmatprep.subr.bf16.mxu0 0
        %1701 = vmatpush1.bf16.msra.mxu0 0
        %1702 = vmatprep.subr.bf16.mxu0 0
        %1703 = vmatpush1.bf16.msra.mxu0 0
        %1704 = vmatprep.mubr.bf16.mxu0 0
        %1705 = vmatmul.mubr.bf16.gmra.mrb[0].mxu0 %v1670
        %v1706 = vpop.f32.mrb[0].mxu0
        %v1707 = vadd.f32 0.0, %v1706
        %v1708 = vpop.f32.mrb[0].mxu0
        %v1709 = vpop.f32.mrb[0].mxu0
        %v1710 = vadd.f32 0.0, %v1709
        %v1711 = vpop.f32.mrb[0].mxu0
        %1712 = vdwg.mxu0
        %v1714 = vsel %vm1622, %v1668, 0
        %1716 = vmatprep.subr.bf16.mxu0 0
        %1717 = vmatpush1.bf16.msra.mxu0 %v1522
        %1718 = vmatprep.subr.bf16.mxu0 0
        %1719 = vmatpush1.bf16.msra.mxu0 0
        %1720 = vmatprep.subr.bf16.mxu0 0
        %1721 = vmatpush1.bf16.msra.mxu0 0
        %1722 = vmatprep.subr.bf16.mxu0 0
        %1723 = vmatpush1.bf16.msra.mxu0 0
        %1724 = vmatprep.subr.bf16.mxu0 0
        %1725 = vmatpush1.bf16.msra.mxu0 0
        %1726 = vmatprep.subr.bf16.mxu0 0
        %1727 = vmatpush1.bf16.msra.mxu0 0
        %1728 = vmatprep.subr.bf16.mxu0 0
        %1729 = vmatpush1.bf16.msra.mxu0 0
        %1730 = vmatprep.subr.bf16.mxu0 0
        %1731 = vmatpush1.bf16.msra.mxu0 0
        %1732 = vmatprep.subr.bf16.mxu0 0
        %1733 = vmatpush1.bf16.msra.mxu0 0
        %1734 = vmatprep.subr.bf16.mxu0 0
        %1735 = vmatpush1.bf16.msra.mxu0 0
        %1736 = vmatprep.subr.bf16.mxu0 0
        %1737 = vmatpush1.bf16.msra.mxu0 0
        %1738 = vmatprep.subr.bf16.mxu0 0
        %1739 = vmatpush1.bf16.msra.mxu0 0
        %1740 = vmatprep.subr.bf16.mxu0 0
        %1741 = vmatpush1.bf16.msra.mxu0 0
        %1742 = vmatprep.subr.bf16.mxu0 0
        %1743 = vmatpush1.bf16.msra.mxu0 0
        %1744 = vmatprep.subr.bf16.mxu0 0
        %1745 = vmatpush1.bf16.msra.mxu0 0
        %1746 = vmatprep.subr.bf16.mxu0 0
        %1747 = vmatpush1.bf16.msra.mxu0 0
        %1748 = vmatprep.mubr.bf16.mxu0 0
        %1749 = vmatmul.mubr.bf16.gmra.mrb[0].mxu0 %v1714
        %v1750 = vpop.f32.mrb[0].mxu0
        %v1751 = vadd.f32 0.0, %v1750
        %v1752 = vpop.f32.mrb[0].mxu0
        %v1753 = vpop.f32.mrb[0].mxu0
        %v1754 = vadd.f32 0.0, %v1753
        %v1755 = vpop.f32.mrb[0].mxu0
        %1756 = vdwg.mxu0
        %s1757 = scalar_lea.vmem [#allocation3], 32
        %v1758 = vld [vmem:[%s1757] sm:$0xff]
        %v1759 = vld [vmem:[%s1757 + $0x8] sm:$0xff]
        %v1760 = vld [vmem:[%s1757 + $0x10] sm:$0xff]
        %v1761 = vld [vmem:[%s1757 + $0x18] sm:$0xff]
        %1763 = vrot.lane.b32.xlu0 %v1517, 120
        %v1764 = vpop.permute.xlu0 %1763
        %1766 = vrot.lane.b32.xlu0 %v1519, 120
        %v1767 = vpop.permute.xlu0 %1766
        %v1769 = vsel %vm1527, %v1764, 0
        %v1772 = vsel %vm1527, %v1767, 0
        %1774 = vmatprep.subr.bf16.mxu0 0
        %1775 = vmatpush1.bf16.xpose.msra.mxu0 %v1772
        %1776 = vmatprep.subr.bf16.mxu0 0
        %1777 = vmatpush1.bf16.xpose.msra.mxu0 0
        %1778 = vmatprep.subr.bf16.mxu0 0
        %1779 = vmatpush1.bf16.xpose.msra.mxu0 0
        %1780 = vmatprep.subr.bf16.mxu0 0
        %1781 = vmatpush1.bf16.xpose.msra.mxu0 0
        %1782 = vmatprep.subr.bf16.mxu0 0
        %1783 = vmatpush1.bf16.xpose.msra.mxu0 0
        %1784 = vmatprep.subr.bf16.mxu0 0
        %1785 = vmatpush1.bf16.xpose.msra.mxu0 0
        %1786 = vmatprep.subr.bf16.mxu0 0
        %1787 = vmatpush1.bf16.xpose.msra.mxu0 0
        %1788 = vmatprep.subr.bf16.mxu0 0
        %1789 = vmatpush1.bf16.xpose.msra.mxu0 0
        %1790 = vmatprep.subr.bf16.mxu0 0
        %1791 = vmatpush1.bf16.xpose.msra.mxu0 0
        %1792 = vmatprep.subr.bf16.mxu0 0
        %1793 = vmatpush1.bf16.xpose.msra.mxu0 0
        %1794 = vmatprep.subr.bf16.mxu0 0
        %1795 = vmatpush1.bf16.xpose.msra.mxu0 0
        %1796 = vmatprep.subr.bf16.mxu0 0
        %1797 = vmatpush1.bf16.xpose.msra.mxu0 0
        %1798 = vmatprep.subr.bf16.mxu0 0
        %1799 = vmatpush1.bf16.xpose.msra.mxu0 0
        %1800 = vmatprep.subr.bf16.mxu0 0
        %1801 = vmatpush1.bf16.xpose.msra.mxu0 0
        %1802 = vmatprep.subr.bf16.mxu0 0
        %1803 = vmatpush1.bf16.xpose.msra.mxu0 0
        %1804 = vmatprep.subr.bf16.mxu0 0
        %1805 = vmatpush1.bf16.xpose.msra.mxu0 0
        %1806 = vmatprep.mubr.bf16.mxu0 0
        %1807 = vmatmul.mubr.bf16.gmra.mrb[0].mxu0 %v1769
        %v1808 = vpop.f32.mrb[0].mxu0
        %v1809 = vadd.f32 %v1758, %v1808
        %v1810 = vpop.f32.mrb[0].mxu0
        %v1811 = vpop.f32.mrb[0].mxu0
        %v1812 = vadd.f32 %v1759, %v1811
        %v1813 = vpop.f32.mrb[0].mxu0
        %1814 = vdwg.mxu0
        %1816 = vrot.lane.b32.xlu0 %v1518, 120
        %v1817 = vpop.permute.xlu0 %1816
        %1819 = vrot.lane.b32.xlu0 %v1520, 120
        %v1820 = vpop.permute.xlu0 %1819
        %v1822 = vsel %vm1527, %v1817, 0
        %v1825 = vsel %vm1527, %v1820, 0
        %1827 = vmatprep.subr.bf16.mxu0 0
        %1828 = vmatpush1.bf16.xpose.msra.mxu0 %v1825
        %1829 = vmatprep.subr.bf16.mxu0 0
        %1830 = vmatpush1.bf16.xpose.msra.mxu0 0
        %1831 = vmatprep.subr.bf16.mxu0 0
        %1832 = vmatpush1.bf16.xpose.msra.mxu0 0
        %1833 = vmatprep.subr.bf16.mxu0 0
        %1834 = vmatpush1.bf16.xpose.msra.mxu0 0
        %1835 = vmatprep.subr.bf16.mxu0 0
        %1836 = vmatpush1.bf16.xpose.msra.mxu0 0
        %1837 = vmatprep.subr.bf16.mxu0 0
        %1838 = vmatpush1.bf16.xpose.msra.mxu0 0
        %1839 = vmatprep.subr.bf16.mxu0 0
        %1840 = vmatpush1.bf16.xpose.msra.mxu0 0
        %1841 = vmatprep.subr.bf16.mxu0 0
        %1842 = vmatpush1.bf16.xpose.msra.mxu0 0
        %1843 = vmatprep.subr.bf16.mxu0 0
        %1844 = vmatpush1.bf16.xpose.msra.mxu0 0
        %1845 = vmatprep.subr.bf16.mxu0 0
        %1846 = vmatpush1.bf16.xpose.msra.mxu0 0
        %1847 = vmatprep.subr.bf16.mxu0 0
        %1848 = vmatpush1.bf16.xpose.msra.mxu0 0
        %1849 = vmatprep.subr.bf16.mxu0 0
        %1850 = vmatpush1.bf16.xpose.msra.mxu0 0
        %1851 = vmatprep.subr.bf16.mxu0 0
        %1852 = vmatpush1.bf16.xpose.msra.mxu0 0
        %1853 = vmatprep.subr.bf16.mxu0 0
        %1854 = vmatpush1.bf16.xpose.msra.mxu0 0
        %1855 = vmatprep.subr.bf16.mxu0 0
        %1856 = vmatpush1.bf16.xpose.msra.mxu0 0
        %1857 = vmatprep.subr.bf16.mxu0 0
        %1858 = vmatpush1.bf16.xpose.msra.mxu0 0
        %1859 = vmatprep.mubr.bf16.mxu0 0
        %1860 = vmatmul.mubr.bf16.gmra.mrb[0].mxu0 %v1822
        %v1861 = vpop.f32.mrb[0].mxu0
        %v1862 = vadd.f32 %v1760, %v1861
        %v1863 = vpop.f32.mrb[0].mxu0
        %v1864 = vpop.f32.mrb[0].mxu0
        %v1865 = vadd.f32 %v1761, %v1864
        %v1866 = vpop.f32.mrb[0].mxu0
        %1867 = vdwg.mxu0
        %v1868 = vsel %vm1622, %v1809, -inf
        %1869 = vmax.xlane.f32.xlu0 %v1868
        %v1870 = vpop.xlane.xlu0 %1869
        %v1871 = vsel %vm1622, %v1812, -inf
        %1872 = vmax.xlane.f32.xlu0 %v1871
        %v1873 = vpop.xlane.xlu0 %1872
        %v1874 = vsel %vm1622, %v1862, -inf
        %1875 = vmax.xlane.f32.xlu0 %v1874
        %v1876 = vpop.xlane.xlu0 %1875
        %v1877 = vsel %vm1622, %v1865, -inf
        %1878 = vmax.xlane.f32.xlu0 %v1877
        %v1879 = vpop.xlane.xlu0 %1878
        %v1880 = vsub.f32 %v1809, %v1870
        %v1881 = vsub.f32 %v1812, %v1873
        %v1882 = vsub.f32 %v1862, %v1876
        %v1883 = vsub.f32 %v1865, %v1879
        %v1884 = vmul.f32 %v1880, 1.442695
        %v1885 = vpow.pop %v1884
        %v1886 = vmul.f32 %v1881, 1.442695
        %v1887 = vpow.pop %v1886
        %v1888 = vmul.f32 %v1882, 1.442695
        %v1889 = vpow.pop %v1888
        %v1890 = vmul.f32 %v1883, 1.442695
        %v1891 = vpow.pop %v1890
        %v1892 = vsel %vm1622, %v1885, 0.0
        %1893 = vadd.xlane.f32.xlu0 %v1892
        %v1894 = vpop.xlane.xlu0 %1893
        %v1895 = vsel %vm1622, %v1887, 0.0
        %1896 = vadd.xlane.f32.xlu0 %v1895
        %v1897 = vpop.xlane.xlu0 %1896
        %v1898 = vsel %vm1622, %v1889, 0.0
        %1899 = vadd.xlane.f32.xlu0 %v1898
        %v1900 = vpop.xlane.xlu0 %1899
        %v1901 = vsel %vm1622, %v1891, 0.0
        %1902 = vadd.xlane.f32.xlu0 %v1901
        %v1903 = vpop.xlane.xlu0 %1902
        %v1904 = vrcp.pop %v1894
        %v1905 = vrcp.pop %v1897
        %v1906 = vrcp.pop %v1900
        %v1907 = vrcp.pop %v1903
        %v1908 = vmul.f32 %v1885, %v1904
        %v1909 = vmul.f32 %v1887, %v1905
        %v1910 = vmul.f32 %v1889, %v1906
        %v1911 = vmul.f32 %v1891, %v1907
        %v1912 = vpack.c.bf16 %v1909, %v1908
        %v1913 = vpack.c.bf16 %v1911, %v1910
        %1915 = vrot.lane.b32.xlu0 %v1521, 120
        %v1916 = vpop.permute.xlu0 %1915
        %v1919 = vsel %vm1622, %v1912, 0
        %1921 = vmatprep.subr.bf16.mxu0 0
        %1922 = vmatpush1.bf16.msra.mxu0 %v1916
        %1923 = vmatprep.subr.bf16.mxu0 0
        %1924 = vmatpush1.bf16.msra.mxu0 0
        %1925 = vmatprep.subr.bf16.mxu0 0
        %1926 = vmatpush1.bf16.msra.mxu0 0
        %1927 = vmatprep.subr.bf16.mxu0 0
        %1928 = vmatpush1.bf16.msra.mxu0 0
        %1929 = vmatprep.subr.bf16.mxu0 0
        %1930 = vmatpush1.bf16.msra.mxu0 0
        %1931 = vmatprep.subr.bf16.mxu0 0
        %1932 = vmatpush1.bf16.msra.mxu0 0
        %1933 = vmatprep.subr.bf16.mxu0 0
        %1934 = vmatpush1.bf16.msra.mxu0 0
        %1935 = vmatprep.subr.bf16.mxu0 0
        %1936 = vmatpush1.bf16.msra.mxu0 0
        %1937 = vmatprep.subr.bf16.mxu0 0
        %1938 = vmatpush1.bf16.msra.mxu0 0
        %1939 = vmatprep.subr.bf16.mxu0 0
        %1940 = vmatpush1.bf16.msra.mxu0 0
        %1941 = vmatprep.subr.bf16.mxu0 0
        %1942 = vmatpush1.bf16.msra.mxu0 0
        %1943 = vmatprep.subr.bf16.mxu0 0
        %1944 = vmatpush1.bf16.msra.mxu0 0
        %1945 = vmatprep.subr.bf16.mxu0 0
        %1946 = vmatpush1.bf16.msra.mxu0 0
        %1947 = vmatprep.subr.bf16.mxu0 0
        %1948 = vmatpush1.bf16.msra.mxu0 0
        %1949 = vmatprep.subr.bf16.mxu0 0
        %1950 = vmatpush1.bf16.msra.mxu0 0
        %1951 = vmatprep.subr.bf16.mxu0 0
        %1952 = vmatpush1.bf16.msra.mxu0 0
        %1953 = vmatprep.mubr.bf16.mxu0 0
        %1954 = vmatmul.mubr.bf16.gmra.mrb[0].mxu0 %v1919
        %v1955 = vpop.f32.mrb[0].mxu0
        %v1956 = vadd.f32 0.0, %v1955
        %v1957 = vpop.f32.mrb[0].mxu0
        %v1958 = vpop.f32.mrb[0].mxu0
        %v1959 = vadd.f32 0.0, %v1958
        %v1960 = vpop.f32.mrb[0].mxu0
        %1961 = vdwg.mxu0
        %1963 = vrot.lane.b32.xlu0 %v1522, 120
        %v1964 = vpop.permute.xlu0 %1963
        %v1967 = vsel %vm1622, %v1913, 0
        %1969 = vmatprep.subr.bf16.mxu0 0
        %1970 = vmatpush1.bf16.msra.mxu0 %v1964
        %1971 = vmatprep.subr.bf16.mxu0 0
        %1972 = vmatpush1.bf16.msra.mxu0 0
        %1973 = vmatprep.subr.bf16.mxu0 0
        %1974 = vmatpush1.bf16.msra.mxu0 0
        %1975 = vmatprep.subr.bf16.mxu0 0
        %1976 = vmatpush1.bf16.msra.mxu0 0
        %1977 = vmatprep.subr.bf16.mxu0 0
        %1978 = vmatpush1.bf16.msra.mxu0 0
        %1979 = vmatprep.subr.bf16.mxu0 0
        %1980 = vmatpush1.bf16.msra.mxu0 0
        %1981 = vmatprep.subr.bf16.mxu0 0
        %1982 = vmatpush1.bf16.msra.mxu0 0
        %1983 = vmatprep.subr.bf16.mxu0 0
        %1984 = vmatpush1.bf16.msra.mxu0 0
        %1985 = vmatprep.subr.bf16.mxu0 0
        %1986 = vmatpush1.bf16.msra.mxu0 0
        %1987 = vmatprep.subr.bf16.mxu0 0
        %1988 = vmatpush1.bf16.msra.mxu0 0
        %1989 = vmatprep.subr.bf16.mxu0 0
        %1990 = vmatpush1.bf16.msra.mxu0 0
        %1991 = vmatprep.subr.bf16.mxu0 0
        %1992 = vmatpush1.bf16.msra.mxu0 0
        %1993 = vmatprep.subr.bf16.mxu0 0
        %1994 = vmatpush1.bf16.msra.mxu0 0
        %1995 = vmatprep.subr.bf16.mxu0 0
        %1996 = vmatpush1.bf16.msra.mxu0 0
        %1997 = vmatprep.subr.bf16.mxu0 0
        %1998 = vmatpush1.bf16.msra.mxu0 0
        %1999 = vmatprep.subr.bf16.mxu0 0
        %2000 = vmatpush1.bf16.msra.mxu0 0
        %2001 = vmatprep.mubr.bf16.mxu0 0
        %2002 = vmatmul.mubr.bf16.gmra.mrb[0].mxu0 %v1967
        %v2003 = vpop.f32.mrb[0].mxu0
        %v2004 = vadd.f32 0.0, %v2003
        %v2005 = vpop.f32.mrb[0].mxu0
        %v2006 = vpop.f32.mrb[0].mxu0
        %v2007 = vadd.f32 0.0, %v2006
        %v2008 = vpop.f32.mrb[0].mxu0
        %2009 = vdwg.mxu0
        %s2010 = scalar_lea.vmem [#allocation3], 64
        %v2011 = vld [vmem:[%s2010] sm:$0xff]
        %v2012 = vld [vmem:[%s2010 + $0x8] sm:$0xff]
        %v2013 = vld [vmem:[%s2010 + $0x10] sm:$0xff]
        %v2014 = vld [vmem:[%s2010 + $0x18] sm:$0xff]
        %2015 = vrot.lane.b32.xlu0 %v1517, 112
        %v2016 = vpop.permute.xlu0 %2015
        %2017 = vrot.lane.b32.xlu0 %v1519, 112
        %v2018 = vpop.permute.xlu0 %2017
        %v2020 = vsel %vm1527, %v2016, 0
        %v2023 = vsel %vm1527, %v2018, 0
        %2025 = vmatprep.subr.bf16.mxu0 0
        %2026 = vmatpush1.bf16.xpose.msra.mxu0 %v2023
        %2027 = vmatprep.subr.bf16.mxu0 0
        %2028 = vmatpush1.bf16.xpose.msra.mxu0 0
        %2029 = vmatprep.subr.bf16.mxu0 0
        %2030 = vmatpush1.bf16.xpose.msra.mxu0 0
        %2031 = vmatprep.subr.bf16.mxu0 0
        %2032 = vmatpush1.bf16.xpose.msra.mxu0 0
        %2033 = vmatprep.subr.bf16.mxu0 0
        %2034 = vmatpush1.bf16.xpose.msra.mxu0 0
        %2035 = vmatprep.subr.bf16.mxu0 0
        %2036 = vmatpush1.bf16.xpose.msra.mxu0 0
        %2037 = vmatprep.subr.bf16.mxu0 0
        %2038 = vmatpush1.bf16.xpose.msra.mxu0 0
        %2039 = vmatprep.subr.bf16.mxu0 0
        %2040 = vmatpush1.bf16.xpose.msra.mxu0 0
        %2041 = vmatprep.subr.bf16.mxu0 0
        %2042 = vmatpush1.bf16.xpose.msra.mxu0 0
        %2043 = vmatprep.subr.bf16.mxu0 0
        %2044 = vmatpush1.bf16.xpose.msra.mxu0 0
        %2045 = vmatprep.subr.bf16.mxu0 0
        %2046 = vmatpush1.bf16.xpose.msra.mxu0 0
        %2047 = vmatprep.subr.bf16.mxu0 0
        %2048 = vmatpush1.bf16.xpose.msra.mxu0 0
        %2049 = vmatprep.subr.bf16.mxu0 0
        %2050 = vmatpush1.bf16.xpose.msra.mxu0 0
        %2051 = vmatprep.subr.bf16.mxu0 0
        %2052 = vmatpush1.bf16.xpose.msra.mxu0 0
        %2053 = vmatprep.subr.bf16.mxu0 0
        %2054 = vmatpush1.bf16.xpose.msra.mxu0 0
        %2055 = vmatprep.subr.bf16.mxu0 0
        %2056 = vmatpush1.bf16.xpose.msra.mxu0 0
        %2057 = vmatprep.mubr.bf16.mxu0 0
        %2058 = vmatmul.mubr.bf16.gmra.mrb[0].mxu0 %v2020
        %v2059 = vpop.f32.mrb[0].mxu0
        %v2060 = vadd.f32 %v2011, %v2059
        %v2061 = vpop.f32.mrb[0].mxu0
        %v2062 = vpop.f32.mrb[0].mxu0
        %v2063 = vadd.f32 %v2012, %v2062
        %v2064 = vpop.f32.mrb[0].mxu0
        %2065 = vdwg.mxu0
        %2066 = vrot.lane.b32.xlu0 %v1518, 112
        %v2067 = vpop.permute.xlu0 %2066
        %2068 = vrot.lane.b32.xlu0 %v1520, 112
        %v2069 = vpop.permute.xlu0 %2068
        %v2071 = vsel %vm1527, %v2067, 0
        %v2074 = vsel %vm1527, %v2069, 0
        %2076 = vmatprep.subr.bf16.mxu0 0
        %2077 = vmatpush1.bf16.xpose.msra.mxu0 %v2074
        %2078 = vmatprep.subr.bf16.mxu0 0
        %2079 = vmatpush1.bf16.xpose.msra.mxu0 0
        %2080 = vmatprep.subr.bf16.mxu0 0
        %2081 = vmatpush1.bf16.xpose.msra.mxu0 0
        %2082 = vmatprep.subr.bf16.mxu0 0
        %2083 = vmatpush1.bf16.xpose.msra.mxu0 0
        %2084 = vmatprep.subr.bf16.mxu0 0
        %2085 = vmatpush1.bf16.xpose.msra.mxu0 0
        %2086 = vmatprep.subr.bf16.mxu0 0
        %2087 = vmatpush1.bf16.xpose.msra.mxu0 0
        %2088 = vmatprep.subr.bf16.mxu0 0
        %2089 = vmatpush1.bf16.xpose.msra.mxu0 0
        %2090 = vmatprep.subr.bf16.mxu0 0
        %2091 = vmatpush1.bf16.xpose.msra.mxu0 0
        %2092 = vmatprep.subr.bf16.mxu0 0
        %2093 = vmatpush1.bf16.xpose.msra.mxu0 0
        %2094 = vmatprep.subr.bf16.mxu0 0
        %2095 = vmatpush1.bf16.xpose.msra.mxu0 0
        %2096 = vmatprep.subr.bf16.mxu0 0
        %2097 = vmatpush1.bf16.xpose.msra.mxu0 0
        %2098 = vmatprep.subr.bf16.mxu0 0
        %2099 = vmatpush1.bf16.xpose.msra.mxu0 0
        %2100 = vmatprep.subr.bf16.mxu0 0
        %2101 = vmatpush1.bf16.xpose.msra.mxu0 0
        %2102 = vmatprep.subr.bf16.mxu0 0
        %2103 = vmatpush1.bf16.xpose.msra.mxu0 0
        %2104 = vmatprep.subr.bf16.mxu0 0
        %2105 = vmatpush1.bf16.xpose.msra.mxu0 0
        %2106 = vmatprep.subr.bf16.mxu0 0
        %2107 = vmatpush1.bf16.xpose.msra.mxu0 0
        %2108 = vmatprep.mubr.bf16.mxu0 0
        %2109 = vmatmul.mubr.bf16.gmra.mrb[0].mxu0 %v2071
        %v2110 = vpop.f32.mrb[0].mxu0
        %v2111 = vadd.f32 %v2013, %v2110
        %v2112 = vpop.f32.mrb[0].mxu0
        %v2113 = vpop.f32.mrb[0].mxu0
        %v2114 = vadd.f32 %v2014, %v2113
        %v2115 = vpop.f32.mrb[0].mxu0
        %2116 = vdwg.mxu0
        %v2117 = vsel %vm1622, %v2060, -inf
        %2118 = vmax.xlane.f32.xlu0 %v2117
        %v2119 = vpop.xlane.xlu0 %2118
        %v2120 = vsel %vm1622, %v2063, -inf
        %2121 = vmax.xlane.f32.xlu0 %v2120
        %v2122 = vpop.xlane.xlu0 %2121
        %v2123 = vsel %vm1622, %v2111, -inf
        %2124 = vmax.xlane.f32.xlu0 %v2123
        %v2125 = vpop.xlane.xlu0 %2124
        %v2126 = vsel %vm1622, %v2114, -inf
        %2127 = vmax.xlane.f32.xlu0 %v2126
        %v2128 = vpop.xlane.xlu0 %2127
        %v2129 = vsub.f32 %v2060, %v2119
        %v2130 = vsub.f32 %v2063, %v2122
        %v2131 = vsub.f32 %v2111, %v2125
        %v2132 = vsub.f32 %v2114, %v2128
        %v2133 = vmul.f32 %v2129, 1.442695
        %v2134 = vpow.pop %v2133
        %v2135 = vmul.f32 %v2130, 1.442695
        %v2136 = vpow.pop %v2135
        %v2137 = vmul.f32 %v2131, 1.442695
        %v2138 = vpow.pop %v2137
        %v2139 = vmul.f32 %v2132, 1.442695
        %v2140 = vpow.pop %v2139
        %v2141 = vsel %vm1622, %v2134, 0.0
        %2142 = vadd.xlane.f32.xlu0 %v2141
        %v2143 = vpop.xlane.xlu0 %2142
        %v2144 = vsel %vm1622, %v2136, 0.0
        %2145 = vadd.xlane.f32.xlu0 %v2144
        %v2146 = vpop.xlane.xlu0 %2145
        %v2147 = vsel %vm1622, %v2138, 0.0
        %2148 = vadd.xlane.f32.xlu0 %v2147
        %v2149 = vpop.xlane.xlu0 %2148
        %v2150 = vsel %vm1622, %v2140, 0.0
        %2151 = vadd.xlane.f32.xlu0 %v2150
        %v2152 = vpop.xlane.xlu0 %2151
        %v2153 = vrcp.pop %v2143
        %v2154 = vrcp.pop %v2146
        %v2155 = vrcp.pop %v2149
        %v2156 = vrcp.pop %v2152
        %v2157 = vmul.f32 %v2134, %v2153
        %v2158 = vmul.f32 %v2136, %v2154
        %v2159 = vmul.f32 %v2138, %v2155
        %v2160 = vmul.f32 %v2140, %v2156
        %v2161 = vpack.c.bf16 %v2158, %v2157
        %v2162 = vpack.c.bf16 %v2160, %v2159
        %2163 = vrot.lane.b32.xlu0 %v1521, 112
        %v2164 = vpop.permute.xlu0 %2163
        %v2167 = vsel %vm1622, %v2161, 0
        %2169 = vmatprep.subr.bf16.mxu0 0
        %2170 = vmatpush1.bf16.msra.mxu0 %v2164
        %2171 = vmatprep.subr.bf16.mxu0 0
        %2172 = vmatpush1.bf16.msra.mxu0 0
        %2173 = vmatprep.subr.bf16.mxu0 0
        %2174 = vmatpush1.bf16.msra.mxu0 0
        %2175 = vmatprep.subr.bf16.mxu0 0
        %2176 = vmatpush1.bf16.msra.mxu0 0
        %2177 = vmatprep.subr.bf16.mxu0 0
        %2178 = vmatpush1.bf16.msra.mxu0 0
        %2179 = vmatprep.subr.bf16.mxu0 0
        %2180 = vmatpush1.bf16.msra.mxu0 0
        %2181 = vmatprep.subr.bf16.mxu0 0
        %2182 = vmatpush1.bf16.msra.mxu0 0
        %2183 = vmatprep.subr.bf16.mxu0 0
        %2184 = vmatpush1.bf16.msra.mxu0 0
        %2185 = vmatprep.subr.bf16.mxu0 0
        %2186 = vmatpush1.bf16.msra.mxu0 0
        %2187 = vmatprep.subr.bf16.mxu0 0
        %2188 = vmatpush1.bf16.msra.mxu0 0
        %2189 = vmatprep.subr.bf16.mxu0 0
        %2190 = vmatpush1.bf16.msra.mxu0 0
        %2191 = vmatprep.subr.bf16.mxu0 0
        %2192 = vmatpush1.bf16.msra.mxu0 0
        %2193 = vmatprep.subr.bf16.mxu0 0
        %2194 = vmatpush1.bf16.msra.mxu0 0
        %2195 = vmatprep.subr.bf16.mxu0 0
        %2196 = vmatpush1.bf16.msra.mxu0 0
        %2197 = vmatprep.subr.bf16.mxu0 0
        %2198 = vmatpush1.bf16.msra.mxu0 0
        %2199 = vmatprep.subr.bf16.mxu0 0
        %2200 = vmatpush1.bf16.msra.mxu0 0
        %2201 = vmatprep.mubr.bf16.mxu0 0
        %2202 = vmatmul.mubr.bf16.gmra.mrb[0].mxu0 %v2167
        %v2203 = vpop.f32.mrb[0].mxu0
        %v2204 = vadd.f32 0.0, %v2203
        %v2205 = vpop.f32.mrb[0].mxu0
        %v2206 = vpop.f32.mrb[0].mxu0
        %v2207 = vadd.f32 0.0, %v2206
        %v2208 = vpop.f32.mrb[0].mxu0
        %2209 = vdwg.mxu0
        %2210 = vrot.lane.b32.xlu0 %v1522, 112
        %v2211 = vpop.permute.xlu0 %2210
        %v2214 = vsel %vm1622, %v2162, 0
        %2216 = vmatprep.subr.bf16.mxu0 0
        %2217 = vmatpush1.bf16.msra.mxu0 %v2211
        %2218 = vmatprep.subr.bf16.mxu0 0
        %2219 = vmatpush1.bf16.msra.mxu0 0
        %2220 = vmatprep.subr.bf16.mxu0 0
        %2221 = vmatpush1.bf16.msra.mxu0 0
        %2222 = vmatprep.subr.bf16.mxu0 0
        %2223 = vmatpush1.bf16.msra.mxu0 0
        %2224 = vmatprep.subr.bf16.mxu0 0
        %2225 = vmatpush1.bf16.msra.mxu0 0
        %2226 = vmatprep.subr.bf16.mxu0 0
        %2227 = vmatpush1.bf16.msra.mxu0 0
        %2228 = vmatprep.subr.bf16.mxu0 0
        %2229 = vmatpush1.bf16.msra.mxu0 0
        %2230 = vmatprep.subr.bf16.mxu0 0
        %2231 = vmatpush1.bf16.msra.mxu0 0
        %2232 = vmatprep.subr.bf16.mxu0 0
        %2233 = vmatpush1.bf16.msra.mxu0 0
        %2234 = vmatprep.subr.bf16.mxu0 0
        %2235 = vmatpush1.bf16.msra.mxu0 0
        %2236 = vmatprep.subr.bf16.mxu0 0
        %2237 = vmatpush1.bf16.msra.mxu0 0
        %2238 = vmatprep.subr.bf16.mxu0 0
        %2239 = vmatpush1.bf16.msra.mxu0 0
        %2240 = vmatprep.subr.bf16.mxu0 0
        %2241 = vmatpush1.bf16.msra.mxu0 0
        %2242 = vmatprep.subr.bf16.mxu0 0
        %2243 = vmatpush1.bf16.msra.mxu0 0
        %2244 = vmatprep.subr.bf16.mxu0 0
        %2245 = vmatpush1.bf16.msra.mxu0 0
        %2246 = vmatprep.subr.bf16.mxu0 0
        %2247 = vmatpush1.bf16.msra.mxu0 0
        %2248 = vmatprep.mubr.bf16.mxu0 0
        %2249 = vmatmul.mubr.bf16.gmra.mrb[0].mxu0 %v2214
        %v2250 = vpop.f32.mrb[0].mxu0
        %v2251 = vadd.f32 0.0, %v2250
        %v2252 = vpop.f32.mrb[0].mxu0
        %v2253 = vpop.f32.mrb[0].mxu0
        %v2254 = vadd.f32 0.0, %v2253
        %v2255 = vpop.f32.mrb[0].mxu0
        %2256 = vdwg.mxu0
        %s2257 = scalar_lea.vmem [#allocation3], 96
        %v2258 = vld [vmem:[%s2257] sm:$0xff]
        %v2259 = vld [vmem:[%s2257 + $0x8] sm:$0xff]
        %v2260 = vld [vmem:[%s2257 + $0x10] sm:$0xff]
        %v2261 = vld [vmem:[%s2257 + $0x18] sm:$0xff]
        %2262 = vrot.lane.b32.xlu0 %v1517, 104
        %v2263 = vpop.permute.xlu0 %2262
        %2264 = vrot.lane.b32.xlu0 %v1519, 104
        %v2265 = vpop.permute.xlu0 %2264
        %v2267 = vsel %vm1527, %v2263, 0
        %v2270 = vsel %vm1527, %v2265, 0
        %2272 = vmatprep.subr.bf16.mxu0 0
        %2273 = vmatpush1.bf16.xpose.msra.mxu0 %v2270
        %2274 = vmatprep.subr.bf16.mxu0 0
        %2275 = vmatpush1.bf16.xpose.msra.mxu0 0
        %2276 = vmatprep.subr.bf16.mxu0 0
        %2277 = vmatpush1.bf16.xpose.msra.mxu0 0
        %2278 = vmatprep.subr.bf16.mxu0 0
        %2279 = vmatpush1.bf16.xpose.msra.mxu0 0
        %2280 = vmatprep.subr.bf16.mxu0 0
        %2281 = vmatpush1.bf16.xpose.msra.mxu0 0
        %2282 = vmatprep.subr.bf16.mxu0 0
        %2283 = vmatpush1.bf16.xpose.msra.mxu0 0
        %2284 = vmatprep.subr.bf16.mxu0 0
        %2285 = vmatpush1.bf16.xpose.msra.mxu0 0
        %2286 = vmatprep.subr.bf16.mxu0 0
        %2287 = vmatpush1.bf16.xpose.msra.mxu0 0
        %2288 = vmatprep.subr.bf16.mxu0 0
        %2289 = vmatpush1.bf16.xpose.msra.mxu0 0
        %2290 = vmatprep.subr.bf16.mxu0 0
        %2291 = vmatpush1.bf16.xpose.msra.mxu0 0
        %2292 = vmatprep.subr.bf16.mxu0 0
        %2293 = vmatpush1.bf16.xpose.msra.mxu0 0
        %2294 = vmatprep.subr.bf16.mxu0 0
        %2295 = vmatpush1.bf16.xpose.msra.mxu0 0
        %2296 = vmatprep.subr.bf16.mxu0 0
        %2297 = vmatpush1.bf16.xpose.msra.mxu0 0
        %2298 = vmatprep.subr.bf16.mxu0 0
        %2299 = vmatpush1.bf16.xpose.msra.mxu0 0
        %2300 = vmatprep.subr.bf16.mxu0 0
        %2301 = vmatpush1.bf16.xpose.msra.mxu0 0
        %2302 = vmatprep.subr.bf16.mxu0 0
        %2303 = vmatpush1.bf16.xpose.msra.mxu0 0
        %2304 = vmatprep.mubr.bf16.mxu0 0
        %2305 = vmatmul.mubr.bf16.gmra.mrb[0].mxu0 %v2267
        %v2306 = vpop.f32.mrb[0].mxu0
        %v2307 = vadd.f32 %v2258, %v2306
        %v2308 = vpop.f32.mrb[0].mxu0
        %v2309 = vpop.f32.mrb[0].mxu0
        %v2310 = vadd.f32 %v2259, %v2309
        %v2311 = vpop.f32.mrb[0].mxu0
        %2312 = vdwg.mxu0
        %2313 = vrot.lane.b32.xlu0 %v1518, 104
        %v2314 = vpop.permute.xlu0 %2313
        %2315 = vrot.lane.b32.xlu0 %v1520, 104
        %v2316 = vpop.permute.xlu0 %2315
        %v2318 = vsel %vm1527, %v2314, 0
        %v2321 = vsel %vm1527, %v2316, 0
        %2323 = vmatprep.subr.bf16.mxu0 0
        %2324 = vmatpush1.bf16.xpose.msra.mxu0 %v2321
        %2325 = vmatprep.subr.bf16.mxu0 0
        %2326 = vmatpush1.bf16.xpose.msra.mxu0 0
        %2327 = vmatprep.subr.bf16.mxu0 0
        %2328 = vmatpush1.bf16.xpose.msra.mxu0 0
        %2329 = vmatprep.subr.bf16.mxu0 0
        %2330 = vmatpush1.bf16.xpose.msra.mxu0 0
        %2331 = vmatprep.subr.bf16.mxu0 0
        %2332 = vmatpush1.bf16.xpose.msra.mxu0 0
        %2333 = vmatprep.subr.bf16.mxu0 0
        %2334 = vmatpush1.bf16.xpose.msra.mxu0 0
        %2335 = vmatprep.subr.bf16.mxu0 0
        %2336 = vmatpush1.bf16.xpose.msra.mxu0 0
        %2337 = vmatprep.subr.bf16.mxu0 0
        %2338 = vmatpush1.bf16.xpose.msra.mxu0 0
        %2339 = vmatprep.subr.bf16.mxu0 0
        %2340 = vmatpush1.bf16.xpose.msra.mxu0 0
        %2341 = vmatprep.subr.bf16.mxu0 0
        %2342 = vmatpush1.bf16.xpose.msra.mxu0 0
        %2343 = vmatprep.subr.bf16.mxu0 0
        %2344 = vmatpush1.bf16.xpose.msra.mxu0 0
        %2345 = vmatprep.subr.bf16.mxu0 0
        %2346 = vmatpush1.bf16.xpose.msra.mxu0 0
        %2347 = vmatprep.subr.bf16.mxu0 0
        %2348 = vmatpush1.bf16.xpose.msra.mxu0 0
        %2349 = vmatprep.subr.bf16.mxu0 0
        %2350 = vmatpush1.bf16.xpose.msra.mxu0 0
        %2351 = vmatprep.subr.bf16.mxu0 0
        %2352 = vmatpush1.bf16.xpose.msra.mxu0 0
        %2353 = vmatprep.subr.bf16.mxu0 0
        %2354 = vmatpush1.bf16.xpose.msra.mxu0 0
        %2355 = vmatprep.mubr.bf16.mxu0 0
        %2356 = vmatmul.mubr.bf16.gmra.mrb[0].mxu0 %v2318
        %v2357 = vpop.f32.mrb[0].mxu0
        %v2358 = vadd.f32 %v2260, %v2357
        %v2359 = vpop.f32.mrb[0].mxu0
        %v2360 = vpop.f32.mrb[0].mxu0
        %v2361 = vadd.f32 %v2261, %v2360
        %v2362 = vpop.f32.mrb[0].mxu0
        %2363 = vdwg.mxu0
        %v2364 = vsel %vm1622, %v2307, -inf
        %2365 = vmax.xlane.f32.xlu0 %v2364
        %v2366 = vpop.xlane.xlu0 %2365
        %v2367 = vsel %vm1622, %v2310, -inf
        %2368 = vmax.xlane.f32.xlu0 %v2367
        %v2369 = vpop.xlane.xlu0 %2368
        %v2370 = vsel %vm1622, %v2358, -inf
        %2371 = vmax.xlane.f32.xlu0 %v2370
        %v2372 = vpop.xlane.xlu0 %2371
        %v2373 = vsel %vm1622, %v2361, -inf
        %2374 = vmax.xlane.f32.xlu0 %v2373
        %v2375 = vpop.xlane.xlu0 %2374
        %v2376 = vsub.f32 %v2307, %v2366
        %v2377 = vsub.f32 %v2310, %v2369
        %v2378 = vsub.f32 %v2358, %v2372
        %v2379 = vsub.f32 %v2361, %v2375
        %v2380 = vmul.f32 %v2376, 1.442695
        %v2381 = vpow.pop %v2380
        %v2382 = vmul.f32 %v2377, 1.442695
        %v2383 = vpow.pop %v2382
        %v2384 = vmul.f32 %v2378, 1.442695
        %v2385 = vpow.pop %v2384
        %v2386 = vmul.f32 %v2379, 1.442695
        %v2387 = vpow.pop %v2386
        %v2388 = vsel %vm1622, %v2381, 0.0
        %2389 = vadd.xlane.f32.xlu0 %v2388
        %v2390 = vpop.xlane.xlu0 %2389
        %v2391 = vsel %vm1622, %v2383, 0.0
        %2392 = vadd.xlane.f32.xlu0 %v2391
        %v2393 = vpop.xlane.xlu0 %2392
        %v2394 = vsel %vm1622, %v2385, 0.0
        %2395 = vadd.xlane.f32.xlu0 %v2394
        %v2396 = vpop.xlane.xlu0 %2395
        %v2397 = vsel %vm1622, %v2387, 0.0
        %2398 = vadd.xlane.f32.xlu0 %v2397
        %v2399 = vpop.xlane.xlu0 %2398
        %v2400 = vrcp.pop %v2390
        %v2401 = vrcp.pop %v2393
        %v2402 = vrcp.pop %v2396
        %v2403 = vrcp.pop %v2399
        %v2404 = vmul.f32 %v2381, %v2400
        %v2405 = vmul.f32 %v2383, %v2401
        %v2406 = vmul.f32 %v2385, %v2402
        %v2407 = vmul.f32 %v2387, %v2403
        %v2408 = vpack.c.bf16 %v2405, %v2404
        %v2409 = vpack.c.bf16 %v2407, %v2406
        %2410 = vrot.lane.b32.xlu0 %v1521, 104
        %v2411 = vpop.permute.xlu0 %2410
        %v2414 = vsel %vm1622, %v2408, 0
        %2416 = vmatprep.subr.bf16.mxu0 0
        %2417 = vmatpush1.bf16.msra.mxu0 %v2411
        %2418 = vmatprep.subr.bf16.mxu0 0
        %2419 = vmatpush1.bf16.msra.mxu0 0
        %2420 = vmatprep.subr.bf16.mxu0 0
        %2421 = vmatpush1.bf16.msra.mxu0 0
        %2422 = vmatprep.subr.bf16.mxu0 0
        %2423 = vmatpush1.bf16.msra.mxu0 0
        %2424 = vmatprep.subr.bf16.mxu0 0
        %2425 = vmatpush1.bf16.msra.mxu0 0
        %2426 = vmatprep.subr.bf16.mxu0 0
        %2427 = vmatpush1.bf16.msra.mxu0 0
        %2428 = vmatprep.subr.bf16.mxu0 0
        %2429 = vmatpush1.bf16.msra.mxu0 0
        %2430 = vmatprep.subr.bf16.mxu0 0
        %2431 = vmatpush1.bf16.msra.mxu0 0
        %2432 = vmatprep.subr.bf16.mxu0 0
        %2433 = vmatpush1.bf16.msra.mxu0 0
        %2434 = vmatprep.subr.bf16.mxu0 0
        %2435 = vmatpush1.bf16.msra.mxu0 0
        %2436 = vmatprep.subr.bf16.mxu0 0
        %2437 = vmatpush1.bf16.msra.mxu0 0
        %2438 = vmatprep.subr.bf16.mxu0 0
        %2439 = vmatpush1.bf16.msra.mxu0 0
        %2440 = vmatprep.subr.bf16.mxu0 0
        %2441 = vmatpush1.bf16.msra.mxu0 0
        %2442 = vmatprep.subr.bf16.mxu0 0
        %2443 = vmatpush1.bf16.msra.mxu0 0
        %2444 = vmatprep.subr.bf16.mxu0 0
        %2445 = vmatpush1.bf16.msra.mxu0 0
        %2446 = vmatprep.subr.bf16.mxu0 0
        %2447 = vmatpush1.bf16.msra.mxu0 0
        %2448 = vmatprep.mubr.bf16.mxu0 0
        %2449 = vmatmul.mubr.bf16.gmra.mrb[0].mxu0 %v2414
        %v2450 = vpop.f32.mrb[0].mxu0
        %v2451 = vadd.f32 0.0, %v2450
        %v2452 = vpop.f32.mrb[0].mxu0
        %v2453 = vpop.f32.mrb[0].mxu0
        %v2454 = vadd.f32 0.0, %v2453
        %v2455 = vpop.f32.mrb[0].mxu0
        %2456 = vdwg.mxu0
        %2457 = vrot.lane.b32.xlu0 %v1522, 104
        %v2458 = vpop.permute.xlu0 %2457
        %v2461 = vsel %vm1622, %v2409, 0
        %2463 = vmatprep.subr.bf16.mxu0 0
        %2464 = vmatpush1.bf16.msra.mxu0 %v2458
        %2465 = vmatprep.subr.bf16.mxu0 0
        %2466 = vmatpush1.bf16.msra.mxu0 0
        %2467 = vmatprep.subr.bf16.mxu0 0
        %2468 = vmatpush1.bf16.msra.mxu0 0
        %2469 = vmatprep.subr.bf16.mxu0 0
        %2470 = vmatpush1.bf16.msra.mxu0 0
        %2471 = vmatprep.subr.bf16.mxu0 0
        %2472 = vmatpush1.bf16.msra.mxu0 0
        %2473 = vmatprep.subr.bf16.mxu0 0
        %2474 = vmatpush1.bf16.msra.mxu0 0
        %2475 = vmatprep.subr.bf16.mxu0 0
        %2476 = vmatpush1.bf16.msra.mxu0 0
        %2477 = vmatprep.subr.bf16.mxu0 0
        %2478 = vmatpush1.bf16.msra.mxu0 0
        %2479 = vmatprep.subr.bf16.mxu0 0
        %2480 = vmatpush1.bf16.msra.mxu0 0
        %2481 = vmatprep.subr.bf16.mxu0 0
        %2482 = vmatpush1.bf16.msra.mxu0 0
        %2483 = vmatprep.subr.bf16.mxu0 0
        %2484 = vmatpush1.bf16.msra.mxu0 0
        %2485 = vmatprep.subr.bf16.mxu0 0
        %2486 = vmatpush1.bf16.msra.mxu0 0
        %2487 = vmatprep.subr.bf16.mxu0 0
        %2488 = vmatpush1.bf16.msra.mxu0 0
        %2489 = vmatprep.subr.bf16.mxu0 0
        %2490 = vmatpush1.bf16.msra.mxu0 0
        %2491 = vmatprep.subr.bf16.mxu0 0
        %2492 = vmatpush1.bf16.msra.mxu0 0
        %2493 = vmatprep.subr.bf16.mxu0 0
        %2494 = vmatpush1.bf16.msra.mxu0 0
        %2495 = vmatprep.mubr.bf16.mxu0 0
        %2496 = vmatmul.mubr.bf16.gmra.mrb[0].mxu0 %v2461
        %v2497 = vpop.f32.mrb[0].mxu0
        %v2498 = vadd.f32 0.0, %v2497
        %v2499 = vpop.f32.mrb[0].mxu0
        %v2500 = vpop.f32.mrb[0].mxu0
        %v2501 = vadd.f32 0.0, %v2500
        %v2502 = vpop.f32.mrb[0].mxu0
        %2503 = vdwg.mxu0
        %2508 = vrot.lane.b32.xlu0 %v1956, 8
        %v2509 = vpop.permute.xlu0 %2508
        %2510 = vrot.lane.b32.xlu0 %v1959, 8
        %v2511 = vpop.permute.xlu0 %2510
        %2512 = vrot.lane.b32.xlu0 %v2004, 8
        %v2513 = vpop.permute.xlu0 %2512
        %2514 = vrot.lane.b32.xlu0 %v2007, 8
        %v2515 = vpop.permute.xlu0 %2514
        %2524 = vrot.lane.b32.xlu0 %v2204, 16
        %v2525 = vpop.permute.xlu0 %2524
        %2526 = vrot.lane.b32.xlu0 %v2207, 16
        %v2527 = vpop.permute.xlu0 %2526
        %2528 = vrot.lane.b32.xlu0 %v2251, 16
        %v2529 = vpop.permute.xlu0 %2528
        %2530 = vrot.lane.b32.xlu0 %v2254, 16
        %v2531 = vpop.permute.xlu0 %2530
        %2540 = vrot.lane.b32.xlu0 %v2451, 24
        %v2541 = vpop.permute.xlu0 %2540
        %2542 = vrot.lane.b32.xlu0 %v2454, 24
        %v2543 = vpop.permute.xlu0 %2542
        %2544 = vrot.lane.b32.xlu0 %v2498, 24
        %v2545 = vpop.permute.xlu0 %2544
        %2546 = vrot.lane.b32.xlu0 %v2501, 24
        %v2547 = vpop.permute.xlu0 %2546
        %v2552 = vsel %vm1527, %v1707, %v2509
        %v2553 = vsel %vm1527, %v1710, %v2511
        %v2554 = vsel %vm1527, %v1751, %v2513
        %v2555 = vsel %vm1527, %v1754, %v2515
        %v2556 = vsel %vm1622, %v2552, %v2525
        %v2557 = vsel %vm1622, %v2553, %v2527
        %v2558 = vsel %vm1622, %v2554, %v2529
        %v2559 = vsel %vm1622, %v2555, %v2531
        %vm2560 = vcmask 195584
        %v2561 = vsel %vm2560, %v2556, %v2541
        %v2562 = vsel %vm2560, %v2557, %v2543
        %v2563 = vsel %vm2560, %v2558, %v2545
        %v2564 = vsel %vm2560, %v2559, %v2547
        %v2565 = vpack.c.bf16 %v2562, %v2561
        %v2566 = vpack.c.bf16 %v2564, %v2563
        %v2567 = vld [vmem:[%s1054] sm:$0xf]
        %v2568 = vld [vmem:[%s1054 + $0x4] sm:$0xf]
        %v2569 = vld [vmem:[%s1054 + $0x8] sm:$0xf]
        %v2570 = vld [vmem:[%s1054 + $0xc] sm:$0xf]
        %v2571 = vld [vmem:[%s1062] sm:$0x1]
        %v2573 = vlaneseq
        %v2574 = vshrl.u32 %v2573, 7
        %v2575 = vsub.s32 0, %v2574
        %v2576 = vrot.slane %v2571, %v2575
        %v2582 = vunpack.c.l.b16 %v2567
        %v2583 = vunpack.c.l.b16 %v2568
        %v2584 = vunpack.c.l.b16 %v2569
        %v2585 = vunpack.c.l.b16 %v2570
        %v2586 = vpack.c.b16 %v2583, %v2582
        %v2587 = vpack.c.b16 %v2585, %v2584
        %v2591 = vsel %vm1317, %v2565, 0
        %v2594 = vsel %vm1317, %v2566, 0
        %2596 = vmatprep.subr.bf16.mxu0 0
        %2597 = vmatpush1.bf16.msra.mxu0 %v2586
        %2598 = vmatprep.subr.bf16.mxu0 0
        %2599 = vmatpush1.bf16.msra.mxu0 %v2587
        %2600 = vmatprep.subr.bf16.mxu0 0
        %2601 = vmatpush1.bf16.msra.mxu0 0
        %2602 = vmatprep.subr.bf16.mxu0 0
        %2603 = vmatpush1.bf16.msra.mxu0 0
        %2604 = vmatprep.subr.bf16.mxu0 0
        %2605 = vmatpush1.bf16.msra.mxu0 0
        %2606 = vmatprep.subr.bf16.mxu0 0
        %2607 = vmatpush1.bf16.msra.mxu0 0
        %2608 = vmatprep.subr.bf16.mxu0 0
        %2609 = vmatpush1.bf16.msra.mxu0 0
        %2610 = vmatprep.subr.bf16.mxu0 0
        %2611 = vmatpush1.bf16.msra.mxu0 0
        %2612 = vmatprep.subr.bf16.mxu0 0
        %2613 = vmatpush1.bf16.msra.mxu0 0
        %2614 = vmatprep.subr.bf16.mxu0 0
        %2615 = vmatpush1.bf16.msra.mxu0 0
        %2616 = vmatprep.subr.bf16.mxu0 0
        %2617 = vmatpush1.bf16.msra.mxu0 0
        %2618 = vmatprep.subr.bf16.mxu0 0
        %2619 = vmatpush1.bf16.msra.mxu0 0
        %2620 = vmatprep.subr.bf16.mxu0 0
        %2621 = vmatpush1.bf16.msra.mxu0 0
        %2622 = vmatprep.subr.bf16.mxu0 0
        %2623 = vmatpush1.bf16.msra.mxu0 0
        %2624 = vmatprep.subr.bf16.mxu0 0
        %2625 = vmatpush1.bf16.msra.mxu0 0
        %2626 = vmatprep.subr.bf16.mxu0 0
        %2627 = vmatpush1.bf16.msra.mxu0 0
        %2628 = vmatprep.mubr.bf16.mxu0 0
        %2629 = vmatmul.mubr.bf16.gmra.mrb[0].mxu0 %v2591
        %v2630 = vpop.f32.mrb[0].mxu0
        %v2631 = vadd.f32 %v2576, %v2630
        %v2632 = vpop.f32.mrb[0].mxu0
        %v2633 = vpop.f32.mrb[0].mxu0
        %v2634 = vadd.f32 %v2576, %v2633
        %v2635 = vpop.f32.mrb[0].mxu0
        %2636 = vmatprep.mubr.bf16.mxu0 0
        %2637 = vmatmul.mubr.bf16.gmra.mrb[0].mxu0 %v2594
        %v2638 = vpop.f32.mrb[0].mxu0
        %v2639 = vadd.f32 %v2576, %v2638
        %v2640 = vpop.f32.mrb[0].mxu0
        %v2641 = vpop.f32.mrb[0].mxu0
        %v2642 = vadd.f32 %v2576, %v2641
        %v2643 = vpop.f32.mrb[0].mxu0
        %2644 = vdwg.mxu0
        %v2645 = vadd.f32 %v1288, %v2631
        %v2646 = vadd.f32 %v1289, %v2634
        %v2647 = vadd.f32 %v1290, %v2639
        %v2648 = vadd.f32 %v1291, %v2642
        %v2649 = vld [vmem:[%s1070] sm:$0x1]
        %v2650 = vld [vmem:[%s1078] sm:$0x1]
        %v2651 = vsel %vm1317, %v2645, 0.0
        %2652 = vadd.xlane.f32.xlu0 %v2651
        %v2653 = vpop.xlane.xlu0 %2652
        %v2654 = vsel %vm1317, %v2646, 0.0
        %2655 = vadd.xlane.f32.xlu0 %v2654
        %v2656 = vpop.xlane.xlu0 %2655
        %v2657 = vsel %vm1317, %v2647, 0.0
        %2658 = vadd.xlane.f32.xlu0 %v2657
        %v2659 = vpop.xlane.xlu0 %2658
        %v2660 = vsel %vm1317, %v2648, 0.0
        %2661 = vadd.xlane.f32.xlu0 %v2660
        %v2662 = vpop.xlane.xlu0 %2661
        %v2663 = vrcp.pop 32.0
        %v2664 = vmul.f32 %v2653, %v2663
        %v2665 = vmul.f32 %v2656, %v2663
        %v2666 = vmul.f32 %v2659, %v2663
        %v2667 = vmul.f32 %v2662, %v2663
        %v2668 = vsub.f32 %v2645, %v2664
        %v2669 = vsub.f32 %v2646, %v2665
        %v2670 = vsub.f32 %v2647, %v2666
        %v2671 = vsub.f32 %v2648, %v2667
        %v2672 = vmul.f32 %v2668, %v2668
        %v2673 = vmul.f32 %v2669, %v2669
        %v2674 = vmul.f32 %v2670, %v2670
        %v2675 = vmul.f32 %v2671, %v2671
        %v2676 = vsel %vm1317, %v2672, 0.0
        %2677 = vadd.xlane.f32.xlu0 %v2676
        %v2678 = vpop.xlane.xlu0 %2677
        %v2679 = vsel %vm1317, %v2673, 0.0
        %2680 = vadd.xlane.f32.xlu0 %v2679
        %v2681 = vpop.xlane.xlu0 %2680
        %v2682 = vsel %vm1317, %v2674, 0.0
        %2683 = vadd.xlane.f32.xlu0 %v2682
        %v2684 = vpop.xlane.xlu0 %2683
        %v2685 = vsel %vm1317, %v2675, 0.0
        %2686 = vadd.xlane.f32.xlu0 %v2685
        %v2687 = vpop.xlane.xlu0 %2686
        %v2688 = vmul.f32 %v2678, %v2663
        %v2689 = vmul.f32 %v2681, %v2663
        %v2690 = vmul.f32 %v2684, %v2663
        %v2691 = vmul.f32 %v2687, %v2663
        %v2692 = vadd.f32 %v2688, 1e-05
        %v2693 = vadd.f32 %v2689, 1e-05
        %v2694 = vadd.f32 %v2690, 1e-05
        %v2695 = vadd.f32 %v2691, 1e-05
        %v2696 = vrsqrt.pop %v2692
        %v2697 = vrsqrt.pop %v2693
        %v2698 = vrsqrt.pop %v2694
        %v2699 = vrsqrt.pop %v2695
        %v2700 = vmul.f32 %v2668, %v2696
        %v2701 = vmul.f32 %v2669, %v2697
        %v2702 = vmul.f32 %v2670, %v2698
        %v2703 = vmul.f32 %v2671, %v2699
        %v2705 = vlaneseq
        %v2706 = vshrl.u32 %v2705, 7
        %v2707 = vsub.s32 0, %v2706
        %v2708 = vrot.slane %v2649, %v2707
        %v2710 = vmul.f32 %v2700, %v2708
        %v2711 = vmul.f32 %v2701, %v2708
        %v2712 = vmul.f32 %v2702, %v2708
        %v2713 = vmul.f32 %v2703, %v2708
        %v2715 = vlaneseq
        %v2716 = vshrl.u32 %v2715, 7
        %v2717 = vsub.s32 0, %v2716
        %v2718 = vrot.slane %v2650, %v2717
        %v2720 = vadd.f32 %v2710, %v2718
        %v2721 = vadd.f32 %v2711, %v2718
        %v2722 = vadd.f32 %v2712, %v2718
        %v2723 = vadd.f32 %v2713, %v2718
        %v2724 = vpack.c.bf16 %v2721, %v2720
        %v2725 = vpack.c.bf16 %v2723, %v2722
        %v2726 = vld [vmem:[%s1087] sm:$0xf]
        %v2727 = vld [vmem:[%s1087 + $0x4] sm:$0xf]
        %v2728 = vld [vmem:[%s1087 + $0x8] sm:$0xf]
        %v2729 = vld [vmem:[%s1087 + $0xc] sm:$0xf]
        %v2730 = vld [vmem:[%s1095] sm:$0x1]
        %v2732 = vlaneseq
        %v2733 = vshrl.u32 %v2732, 7
        %v2734 = vsub.s32 0, %v2733
        %v2735 = vrot.slane %v2730, %v2734
        %v2741 = vunpack.c.l.b16 %v2726
        %v2742 = vunpack.c.l.b16 %v2727
        %v2743 = vunpack.c.l.b16 %v2728
        %v2744 = vunpack.c.l.b16 %v2729
        %v2745 = vpack.c.b16 %v2742, %v2741
        %v2746 = vpack.c.b16 %v2744, %v2743
        %v2750 = vsel %vm1317, %v2724, 0
        %v2753 = vsel %vm1317, %v2725, 0
        %2755 = vmatprep.subr.bf16.mxu0 0
        %2756 = vmatpush1.bf16.msra.mxu0 %v2745
        %2757 = vmatprep.subr.bf16.mxu0 0
        %2758 = vmatpush1.bf16.msra.mxu0 %v2746
        %2759 = vmatprep.subr.bf16.mxu0 0
        %2760 = vmatpush1.bf16.msra.mxu0 0
        %2761 = vmatprep.subr.bf16.mxu0 0
        %2762 = vmatpush1.bf16.msra.mxu0 0
        %2763 = vmatprep.subr.bf16.mxu0 0
        %2764 = vmatpush1.bf16.msra.mxu0 0
        %2765 = vmatprep.subr.bf16.mxu0 0
        %2766 = vmatpush1.bf16.msra.mxu0 0
        %2767 = vmatprep.subr.bf16.mxu0 0
        %2768 = vmatpush1.bf16.msra.mxu0 0
        %2769 = vmatprep.subr.bf16.mxu0 0
        %2770 = vmatpush1.bf16.msra.mxu0 0
        %2771 = vmatprep.subr.bf16.mxu0 0
        %2772 = vmatpush1.bf16.msra.mxu0 0
        %2773 = vmatprep.subr.bf16.mxu0 0
        %2774 = vmatpush1.bf16.msra.mxu0 0
        %2775 = vmatprep.subr.bf16.mxu0 0
        %2776 = vmatpush1.bf16.msra.mxu0 0
        %2777 = vmatprep.subr.bf16.mxu0 0
        %2778 = vmatpush1.bf16.msra.mxu0 0
        %2779 = vmatprep.subr.bf16.mxu0 0
        %2780 = vmatpush1.bf16.msra.mxu0 0
        %2781 = vmatprep.subr.bf16.mxu0 0
        %2782 = vmatpush1.bf16.msra.mxu0 0
        %2783 = vmatprep.subr.bf16.mxu0 0
        %2784 = vmatpush1.bf16.msra.mxu0 0
        %2785 = vmatprep.subr.bf16.mxu0 0
        %2786 = vmatpush1.bf16.msra.mxu0 0
        %2787 = vmatprep.mubr.bf16.mxu0 0
        %2788 = vmatmul.mubr.bf16.gmra.mrb[0].mxu0 %v2750
        %v2789 = vpop.f32.mrb[0].mxu0
        %v2790 = vadd.f32 %v2735, %v2789
        %v2791 = vpop.f32.mrb[0].mxu0
        %v2792 = vpop.f32.mrb[0].mxu0
        %v2793 = vadd.f32 %v2735, %v2792
        %v2794 = vpop.f32.mrb[0].mxu0
        %2795 = vmatprep.mubr.bf16.mxu0 0
        %2796 = vmatmul.mubr.bf16.gmra.mrb[0].mxu0 %v2753
        %v2797 = vpop.f32.mrb[0].mxu0
        %v2798 = vadd.f32 %v2735, %v2797
        %v2799 = vpop.f32.mrb[0].mxu0
        %v2800 = vpop.f32.mrb[0].mxu0
        %v2801 = vadd.f32 %v2735, %v2800
        %v2802 = vpop.f32.mrb[0].mxu0
        %2803 = vdwg.mxu0
        %v2804 = vmul.f32 %v2790, %v2790
        %v2805 = vmul.f32 %v2793, %v2793
        %v2806 = vmul.f32 %v2798, %v2798
        %v2807 = vmul.f32 %v2801, %v2801
        %v2808 = vmul.f32 %v2790, %v2804
        %v2809 = vmul.f32 %v2793, %v2805
        %v2810 = vmul.f32 %v2798, %v2806
        %v2811 = vmul.f32 %v2801, %v2807
        %v2812 = vmul.f32 %v2808, 0.044715
        %v2813 = vmul.f32 %v2809, 0.044715
        %v2814 = vmul.f32 %v2810, 0.044715
        %v2815 = vmul.f32 %v2811, 0.044715
        %v2816 = vadd.f32 %v2790, %v2812
        %v2817 = vadd.f32 %v2793, %v2813
        %v2818 = vadd.f32 %v2798, %v2814
        %v2819 = vadd.f32 %v2801, %v2815
        %v2820 = vmul.f32 %v2816, 0.7978846
        %v2821 = vmul.f32 %v2817, 0.7978846
        %v2822 = vmul.f32 %v2818, 0.7978846
        %v2823 = vmul.f32 %v2819, 0.7978846
        %v2824 = vtanh.pop %v2820
        %v2825 = vtanh.pop %v2821
        %v2826 = vtanh.pop %v2822
        %v2827 = vtanh.pop %v2823
        %v2828 = vadd.f32 %v2824, 1.0
        %v2829 = vadd.f32 %v2825, 1.0
        %v2830 = vadd.f32 %v2826, 1.0
        %v2831 = vadd.f32 %v2827, 1.0
        %v2832 = vmul.f32 %v2828, 0.5
        %v2833 = vmul.f32 %v2829, 0.5
        %v2834 = vmul.f32 %v2830, 0.5
        %v2835 = vmul.f32 %v2831, 0.5
        %v2836 = vmul.f32 %v2790, %v2832
        %v2837 = vmul.f32 %v2793, %v2833
        %v2838 = vmul.f32 %v2798, %v2834
        %v2839 = vmul.f32 %v2801, %v2835
        %v2840 = vpack.c.bf16 %v2837, %v2836
        %v2841 = vpack.c.bf16 %v2839, %v2838
        %v2842 = vld [vmem:[%s1272] sm:$0xf]
        %v2843 = vld [vmem:[%s1272 + $0x4] sm:$0xf]
        %v2844 = vld [vmem:[%s1272 + $0x8] sm:$0xf]
        %v2845 = vld [vmem:[%s1272 + $0xc] sm:$0xf]
        %v2846 = vld [vmem:[%s1272 + $0x10] sm:$0xf]
        %v2847 = vld [vmem:[%s1272 + $0x14] sm:$0xf]
        %v2848 = vld [vmem:[%s1272 + $0x18] sm:$0xf]
        %v2849 = vld [vmem:[%s1272 + $0x1c] sm:$0xf]
        %v2850 = vld [vmem:[%s1103] sm:$0x1]
        %v2852 = vlaneseq
        %v2853 = vshrl.u32 %v2852, 7
        %v2854 = vsub.s32 0, %v2853
        %v2855 = vrot.slane %v2850, %v2854
        %v2865 = vunpack.c.l.b16 %v2842
        %v2866 = vunpack.c.l.b16 %v2843
        %v2867 = vunpack.c.l.b16 %v2844
        %v2868 = vunpack.c.l.b16 %v2845
        %v2869 = vunpack.c.l.b16 %v2846
        %v2870 = vunpack.c.l.b16 %v2847
        %v2871 = vunpack.c.l.b16 %v2848
        %v2872 = vunpack.c.l.b16 %v2849
        %v2873 = vpack.c.b16 %v2866, %v2865
        %v2874 = vpack.c.b16 %v2868, %v2867
        %v2875 = vpack.c.b16 %v2870, %v2869
        %v2876 = vpack.c.b16 %v2872, %v2871
        %vm2881 = vcmask 523264
        %v2883 = vsel %vm2881, %v2840, 0
        %v2886 = vsel %vm2881, %v2841, 0
        %2888 = vmatprep.subr.bf16.mxu0 0
        %2889 = vmatpush1.bf16.msra.mxu0 %v2873
        %2890 = vmatprep.subr.bf16.mxu0 0
        %2891 = vmatpush1.bf16.msra.mxu0 %v2874
        %2892 = vmatprep.subr.bf16.mxu0 0
        %2893 = vmatpush1.bf16.msra.mxu0 %v2875
        %2894 = vmatprep.subr.bf16.mxu0 0
        %2895 = vmatpush1.bf16.msra.mxu0 %v2876
        %2896 = vmatprep.subr.bf16.mxu0 0
        %2897 = vmatpush1.bf16.msra.mxu0 0
        %2898 = vmatprep.subr.bf16.mxu0 0
        %2899 = vmatpush1.bf16.msra.mxu0 0
        %2900 = vmatprep.subr.bf16.mxu0 0
        %2901 = vmatpush1.bf16.msra.mxu0 0
        %2902 = vmatprep.subr.bf16.mxu0 0
        %2903 = vmatpush1.bf16.msra.mxu0 0
        %2904 = vmatprep.subr.bf16.mxu0 0
        %2905 = vmatpush1.bf16.msra.mxu0 0
        %2906 = vmatprep.subr.bf16.mxu0 0
        %2907 = vmatpush1.bf16.msra.mxu0 0
        %2908 = vmatprep.subr.bf16.mxu0 0
        %2909 = vmatpush1.bf16.msra.mxu0 0
        %2910 = vmatprep.subr.bf16.mxu0 0
        %2911 = vmatpush1.bf16.msra.mxu0 0
        %2912 = vmatprep.subr.bf16.mxu0 0
        %2913 = vmatpush1.bf16.msra.mxu0 0
        %2914 = vmatprep.subr.bf16.mxu0 0
        %2915 = vmatpush1.bf16.msra.mxu0 0
        %2916 = vmatprep.subr.bf16.mxu0 0
        %2917 = vmatpush1.bf16.msra.mxu0 0
        %2918 = vmatprep.subr.bf16.mxu0 0
        %2919 = vmatpush1.bf16.msra.mxu0 0
        %2920 = vmatprep.mubr.bf16.mxu0 0
        %2921 = vmatmul.mubr.bf16.gmra.mrb[0].mxu0 %v2883
        %v2922 = vpop.f32.mrb[0].mxu0
        %v2923 = vadd.f32 %v2855, %v2922
        %v2924 = vpop.f32.mrb[0].mxu0
        %v2925 = vpop.f32.mrb[0].mxu0
        %v2926 = vadd.f32 %v2855, %v2925
        %v2927 = vpop.f32.mrb[0].mxu0
        %2928 = vmatprep.mubr.bf16.mxu0 0
        %2929 = vmatmul.mubr.bf16.gmra.mrb[0].mxu0 %v2886
        %v2930 = vpop.f32.mrb[0].mxu0
        %v2931 = vadd.f32 %v2855, %v2930
        %v2932 = vpop.f32.mrb[0].mxu0
        %v2933 = vpop.f32.mrb[0].mxu0
        %v2934 = vadd.f32 %v2855, %v2933
        %v2935 = vpop.f32.mrb[0].mxu0
        %2936 = vdwg.mxu0
        %v2937 = vadd.f32 %v2720, %v2923
        %v2938 = vadd.f32 %v2721, %v2926
        %v2939 = vadd.f32 %v2722, %v2931
        %v2940 = vadd.f32 %v2723, %v2934
        %v2941 = vld [vmem:[%s1111] sm:$0x1]
        %v2942 = vld [vmem:[%s1119] sm:$0x1]
        %v2943 = vsel %vm1317, %v2937, 0.0
        %2944 = vadd.xlane.f32.xlu0 %v2943
        %v2945 = vpop.xlane.xlu0 %2944
        %v2946 = vsel %vm1317, %v2938, 0.0
        %2947 = vadd.xlane.f32.xlu0 %v2946
        %v2948 = vpop.xlane.xlu0 %2947
        %v2949 = vsel %vm1317, %v2939, 0.0
        %2950 = vadd.xlane.f32.xlu0 %v2949
        %v2951 = vpop.xlane.xlu0 %2950
        %v2952 = vsel %vm1317, %v2940, 0.0
        %2953 = vadd.xlane.f32.xlu0 %v2952
        %v2954 = vpop.xlane.xlu0 %2953
        %v2955 = vmul.f32 %v2945, %v2663
        %v2956 = vmul.f32 %v2948, %v2663
        %v2957 = vmul.f32 %v2951, %v2663
        %v2958 = vmul.f32 %v2954, %v2663
        %v2959 = vsub.f32 %v2937, %v2955
        %v2960 = vsub.f32 %v2938, %v2956
        %v2961 = vsub.f32 %v2939, %v2957
        %v2962 = vsub.f32 %v2940, %v2958
        %v2963 = vmul.f32 %v2959, %v2959
        %v2964 = vmul.f32 %v2960, %v2960
        %v2965 = vmul.f32 %v2961, %v2961
        %v2966 = vmul.f32 %v2962, %v2962
        %v2967 = vsel %vm1317, %v2963, 0.0
        %2968 = vadd.xlane.f32.xlu0 %v2967
        %v2969 = vpop.xlane.xlu0 %2968
        %v2970 = vsel %vm1317, %v2964, 0.0
        %2971 = vadd.xlane.f32.xlu0 %v2970
        %v2972 = vpop.xlane.xlu0 %2971
        %v2973 = vsel %vm1317, %v2965, 0.0
        %2974 = vadd.xlane.f32.xlu0 %v2973
        %v2975 = vpop.xlane.xlu0 %2974
        %v2976 = vsel %vm1317, %v2966, 0.0
        %2977 = vadd.xlane.f32.xlu0 %v2976
        %v2978 = vpop.xlane.xlu0 %2977
        %v2979 = vmul.f32 %v2969, %v2663
        %v2980 = vmul.f32 %v2972, %v2663
        %v2981 = vmul.f32 %v2975, %v2663
        %v2982 = vmul.f32 %v2978, %v2663
        %v2983 = vadd.f32 %v2979, 1e-05
        %v2984 = vadd.f32 %v2980, 1e-05
        %v2985 = vadd.f32 %v2981, 1e-05
        %v2986 = vadd.f32 %v2982, 1e-05
        %v2987 = vrsqrt.pop %v2983
        %v2988 = vrsqrt.pop %v2984
        %v2989 = vrsqrt.pop %v2985
        %v2990 = vrsqrt.pop %v2986
        %v2991 = vmul.f32 %v2959, %v2987
        %v2992 = vmul.f32 %v2960, %v2988
        %v2993 = vmul.f32 %v2961, %v2989
        %v2994 = vmul.f32 %v2962, %v2990
        %v2996 = vlaneseq
        %v2997 = vshrl.u32 %v2996, 7
        %v2998 = vsub.s32 0, %v2997
        %v2999 = vrot.slane %v2941, %v2998
        %v3001 = vmul.f32 %v2991, %v2999
        %v3002 = vmul.f32 %v2992, %v2999
        %v3003 = vmul.f32 %v2993, %v2999
        %v3004 = vmul.f32 %v2994, %v2999
        %v3006 = vlaneseq
        %v3007 = vshrl.u32 %v3006, 7
        %v3008 = vsub.s32 0, %v3007
        %v3009 = vrot.slane %v2942, %v3008
        %v3011 = vadd.f32 %v3001, %v3009
        %v3012 = vadd.f32 %v3002, %v3009
        %v3013 = vadd.f32 %v3003, %v3009
        %v3014 = vadd.f32 %v3004, %v3009
        %3015 = vst.msk [vmem:[#allocation2] sm:$0xff] %vm1317, %v3011
        %3016 = vst.msk [vmem:[#allocation2 + $0x8] sm:$0xff] %vm1317, %v3012
        %3017 = vst.msk [vmem:[#allocation2 + $0x10] sm:$0xff] %vm1317, %v3013
        %3018 = vst.msk [vmem:[#allocation2 + $0x18] sm:$0xff] %vm1317, %v3014
        %p3019 = scmp.eq.s32.totalorder %s63, 1
        // Predicated region
        $region177: #{tpu_custom_call.1} parent=115 // pred_check
          %p3020 = pneg %p3019
        $region178: #{tpu_custom_call.1} parent=115 // pred_check_branch
          %3022 = sbr.rel (%p3020) target = $region180
        $region179: #{tpu_custom_call.1} parent=115 // pred_region
          %v3023 = vpack.c.bf16 %v3012, %v3011
          %v3024 = vpack.c.bf16 %v3014, %v3013
          %v3025 = vld [vmem:[%s18] sm:$0xf]
          %v3026 = vld [vmem:[%s18 + $0x4] sm:$0xf]
          %v3027 = vld [vmem:[%s18 + $0x8] sm:$0xf]
          %v3028 = vld [vmem:[%s18 + $0xc] sm:$0xf]
          %v3029 = vld [vmem:[%s19] sm:$0x1]
          %v3031 = vlaneseq
          %v3032 = vshrl.u32 %v3031, 7
          %v3033 = vsub.s32 0, %v3032
          %v3034 = vrot.slane %v3029, %v3033
          %v3040 = vunpack.c.l.b16 %v3025
          %v3041 = vunpack.c.l.b16 %v3026
          %v3042 = vunpack.c.l.b16 %v3027
          %v3043 = vunpack.c.l.b16 %v3028
          %v3044 = vpack.c.b16 %v3041, %v3040
          %v3045 = vpack.c.b16 %v3043, %v3042
          %v3049 = vsel %vm1317, %v3023, 0
          %v3052 = vsel %vm1317, %v3024, 0
          %3054 = vmatprep.subr.bf16.mxu0 0
          %3055 = vmatpush1.bf16.msra.mxu0 %v3044
          %3056 = vmatprep.subr.bf16.mxu0 0
          %3057 = vmatpush1.bf16.msra.mxu0 %v3045
          %3058 = vmatprep.subr.bf16.mxu0 0
          %3059 = vmatpush1.bf16.msra.mxu0 0
          %3060 = vmatprep.subr.bf16.mxu0 0
          %3061 = vmatpush1.bf16.msra.mxu0 0
          %3062 = vmatprep.subr.bf16.mxu0 0
          %3063 = vmatpush1.bf16.msra.mxu0 0
          %3064 = vmatprep.subr.bf16.mxu0 0
          %3065 = vmatpush1.bf16.msra.mxu0 0
          %3066 = vmatprep.subr.bf16.mxu0 0
          %3067 = vmatpush1.bf16.msra.mxu0 0
          %3068 = vmatprep.subr.bf16.mxu0 0
          %3069 = vmatpush1.bf16.msra.mxu0 0
          %3070 = vmatprep.subr.bf16.mxu0 0
          %3071 = vmatpush1.bf16.msra.mxu0 0
          %3072 = vmatprep.subr.bf16.mxu0 0
          %3073 = vmatpush1.bf16.msra.mxu0 0
          %3074 = vmatprep.subr.bf16.mxu0 0
          %3075 = vmatpush1.bf16.msra.mxu0 0
          %3076 = vmatprep.subr.bf16.mxu0 0
          %3077 = vmatpush1.bf16.msra.mxu0 0
          %3078 = vmatprep.subr.bf16.mxu0 0
          %3079 = vmatpush1.bf16.msra.mxu0 0
          %3080 = vmatprep.subr.bf16.mxu0 0
          %3081 = vmatpush1.bf16.msra.mxu0 0
          %3082 = vmatprep.subr.bf16.mxu0 0
          %3083 = vmatpush1.bf16.msra.mxu0 0
          %3084 = vmatprep.subr.bf16.mxu0 0
          %3085 = vmatpush1.bf16.msra.mxu0 0
          %3086 = vmatprep.mubr.bf16.mxu0 0
          %3087 = vmatmul.mubr.bf16.gmra.mrb[0].mxu0 %v3049
          %v3088 = vpop.f32.mrb[0].mxu0
          %v3089 = vadd.f32 %v3034, %v3088
          %v3090 = vpop.f32.mrb[0].mxu0
          %v3091 = vpop.f32.mrb[0].mxu0
          %v3092 = vadd.f32 %v3034, %v3091
          %v3093 = vpop.f32.mrb[0].mxu0
          %3094 = vmatprep.mubr.bf16.mxu0 0
          %3095 = vmatmul.mubr.bf16.gmra.mrb[0].mxu0 %v3052
          %v3096 = vpop.f32.mrb[0].mxu0
          %v3097 = vadd.f32 %v3034, %v3096
          %v3098 = vpop.f32.mrb[0].mxu0
          %v3099 = vpop.f32.mrb[0].mxu0
          %v3100 = vadd.f32 %v3034, %v3099
          %v3101 = vpop.f32.mrb[0].mxu0
          %3102 = vdwg.mxu0
          %v3103 = vmul.f32 %v3089, %v3089
          %v3104 = vmul.f32 %v3092, %v3092
          %v3105 = vmul.f32 %v3097, %v3097
          %v3106 = vmul.f32 %v3100, %v3100
          %v3107 = vmul.f32 %v3089, %v3103
          %v3108 = vmul.f32 %v3092, %v3104
          %v3109 = vmul.f32 %v3097, %v3105
          %v3110 = vmul.f32 %v3100, %v3106
          %v3111 = vmul.f32 %v3107, 0.044715
          %v3112 = vmul.f32 %v3108, 0.044715
          %v3113 = vmul.f32 %v3109, 0.044715
          %v3114 = vmul.f32 %v3110, 0.044715
          %v3115 = vadd.f32 %v3089, %v3111
          %v3116 = vadd.f32 %v3092, %v3112
          %v3117 = vadd.f32 %v3097, %v3113
          %v3118 = vadd.f32 %v3100, %v3114
          %v3119 = vmul.f32 %v3115, 0.7978846
          %v3120 = vmul.f32 %v3116, 0.7978846
          %v3121 = vmul.f32 %v3117, 0.7978846
          %v3122 = vmul.f32 %v3118, 0.7978846
          %v3123 = vtanh.pop %v3119
          %v3124 = vtanh.pop %v3120
          %v3125 = vtanh.pop %v3121
          %v3126 = vtanh.pop %v3122
          %v3127 = vadd.f32 %v3123, 1.0
          %v3128 = vadd.f32 %v3124, 1.0
          %v3129 = vadd.f32 %v3125, 1.0
          %v3130 = vadd.f32 %v3126, 1.0
          %v3131 = vmul.f32 %v3127, 0.5
          %v3132 = vmul.f32 %v3128, 0.5
          %v3133 = vmul.f32 %v3129, 0.5
          %v3134 = vmul.f32 %v3130, 0.5
          %v3135 = vmul.f32 %v3089, %v3131
          %v3136 = vmul.f32 %v3092, %v3132
          %v3137 = vmul.f32 %v3097, %v3133
          %v3138 = vmul.f32 %v3100, %v3134
          %v3139 = vld [vmem:[%s20] sm:$0x1]
          %v3140 = vld [vmem:[%s21] sm:$0x1]
          %v3141 = vsel %vm1317, %v3135, 0.0
          %3142 = vadd.xlane.f32.xlu0 %v3141
          %v3143 = vpop.xlane.xlu0 %3142
          %v3144 = vsel %vm1317, %v3136, 0.0
          %3145 = vadd.xlane.f32.xlu0 %v3144
          %v3146 = vpop.xlane.xlu0 %3145
          %v3147 = vsel %vm1317, %v3137, 0.0
          %3148 = vadd.xlane.f32.xlu0 %v3147
          %v3149 = vpop.xlane.xlu0 %3148
          %v3150 = vsel %vm1317, %v3138, 0.0
          %3151 = vadd.xlane.f32.xlu0 %v3150
          %v3152 = vpop.xlane.xlu0 %3151
          %v3153 = vmul.f32 %v3143, %v2663
          %v3154 = vmul.f32 %v3146, %v2663
          %v3155 = vmul.f32 %v3149, %v2663
          %v3156 = vmul.f32 %v3152, %v2663
          %v3157 = vsub.f32 %v3135, %v3153
          %v3158 = vsub.f32 %v3136, %v3154
          %v3159 = vsub.f32 %v3137, %v3155
          %v3160 = vsub.f32 %v3138, %v3156
          %v3161 = vmul.f32 %v3157, %v3157
          %v3162 = vmul.f32 %v3158, %v3158
          %v3163 = vmul.f32 %v3159, %v3159
          %v3164 = vmul.f32 %v3160, %v3160
          %v3165 = vsel %vm1317, %v3161, 0.0
          %3166 = vadd.xlane.f32.xlu0 %v3165
          %v3167 = vpop.xlane.xlu0 %3166
          %v3168 = vsel %vm1317, %v3162, 0.0
          %3169 = vadd.xlane.f32.xlu0 %v3168
          %v3170 = vpop.xlane.xlu0 %3169
          %v3171 = vsel %vm1317, %v3163, 0.0
          %3172 = vadd.xlane.f32.xlu0 %v3171
          %v3173 = vpop.xlane.xlu0 %3172
          %v3174 = vsel %vm1317, %v3164, 0.0
          %3175 = vadd.xlane.f32.xlu0 %v3174
          %v3176 = vpop.xlane.xlu0 %3175
          %v3177 = vmul.f32 %v3167, %v2663
          %v3178 = vmul.f32 %v3170, %v2663
          %v3179 = vmul.f32 %v3173, %v2663
          %v3180 = vmul.f32 %v3176, %v2663
          %v3181 = vadd.f32 %v3177, 1e-05
          %v3182 = vadd.f32 %v3178, 1e-05
          %v3183 = vadd.f32 %v3179, 1e-05
          %v3184 = vadd.f32 %v3180, 1e-05
          %v3185 = vrsqrt.pop %v3181
          %v3186 = vrsqrt.pop %v3182
          %v3187 = vrsqrt.pop %v3183
          %v3188 = vrsqrt.pop %v3184
          %v3189 = vmul.f32 %v3157, %v3185
          %v3190 = vmul.f32 %v3158, %v3186
          %v3191 = vmul.f32 %v3159, %v3187
          %v3192 = vmul.f32 %v3160, %v3188
          %v3194 = vlaneseq
          %v3195 = vshrl.u32 %v3194, 7
          %v3196 = vsub.s32 0, %v3195
          %v3197 = vrot.slane %v3139, %v3196
          %v3199 = vmul.f32 %v3189, %v3197
          %v3200 = vmul.f32 %v3190, %v3197
          %v3201 = vmul.f32 %v3191, %v3197
          %v3202 = vmul.f32 %v3192, %v3197
          %v3204 = vlaneseq
          %v3205 = vshrl.u32 %v3204, 7
          %v3206 = vsub.s32 0, %v3205
          %v3207 = vrot.slane %v3140, %v3206
          %v3209 = vadd.f32 %v3199, %v3207
          %v3210 = vadd.f32 %v3200, %v3207
          %v3211 = vadd.f32 %v3201, %v3207
          %v3212 = vadd.f32 %v3202, %v3207
          %v3213 = vpack.c.bf16 %v3210, %v3209
          %v3214 = vpack.c.bf16 %v3212, %v3211
          %v3215 = vld [vmem:[%s22] sm:$0xf]
          %v3216 = vld [vmem:[%s22 + $0x4] sm:$0xf]
          %v3217 = vld [vmem:[%s22 + $0x8] sm:$0xf]
          %v3218 = vld [vmem:[%s22 + $0xc] sm:$0xf]
          %v3219 = vld [vmem:[%s23] sm:$0x1]
          %v3221 = vlaneseq
          %v3222 = vshrl.u32 %v3221, 7
          %v3223 = vsub.s32 0, %v3222
          %v3224 = vrot.slane %v3219, %v3223
          %v3230 = vunpack.c.l.b16 %v3215
          %v3231 = vunpack.c.l.b16 %v3216
          %v3232 = vunpack.c.l.b16 %v3217
          %v3233 = vunpack.c.l.b16 %v3218
          %v3234 = vpack.c.b16 %v3231, %v3230
          %v3235 = vpack.c.b16 %v3233, %v3232
          %v3239 = vsel %vm1317, %v3213, 0
          %v3242 = vsel %vm1317, %v3214, 0
          %3244 = vmatprep.subr.bf16.mxu0 0
          %3245 = vmatpush1.bf16.msra.mxu0 %v3234
          %3246 = vmatprep.subr.bf16.mxu0 0
          %3247 = vmatpush1.bf16.msra.mxu0 %v3235
          %3248 = vmatprep.subr.bf16.mxu0 0
          %3249 = vmatpush1.bf16.msra.mxu0 0
          %3250 = vmatprep.subr.bf16.mxu0 0
          %3251 = vmatpush1.bf16.msra.mxu0 0
          %3252 = vmatprep.subr.bf16.mxu0 0
          %3253 = vmatpush1.bf16.msra.mxu0 0
          %3254 = vmatprep.subr.bf16.mxu0 0
          %3255 = vmatpush1.bf16.msra.mxu0 0
          %3256 = vmatprep.subr.bf16.mxu0 0
          %3257 = vmatpush1.bf16.msra.mxu0 0
          %3258 = vmatprep.subr.bf16.mxu0 0
          %3259 = vmatpush1.bf16.msra.mxu0 0
          %3260 = vmatprep.subr.bf16.mxu0 0
          %3261 = vmatpush1.bf16.msra.mxu0 0
          %3262 = vmatprep.subr.bf16.mxu0 0
          %3263 = vmatpush1.bf16.msra.mxu0 0
          %3264 = vmatprep.subr.bf16.mxu0 0
          %3265 = vmatpush1.bf16.msra.mxu0 0
          %3266 = vmatprep.subr.bf16.mxu0 0
          %3267 = vmatpush1.bf16.msra.mxu0 0
          %3268 = vmatprep.subr.bf16.mxu0 0
          %3269 = vmatpush1.bf16.msra.mxu0 0
          %3270 = vmatprep.subr.bf16.mxu0 0
          %3271 = vmatpush1.bf16.msra.mxu0 0
          %3272 = vmatprep.subr.bf16.mxu0 0
          %3273 = vmatpush1.bf16.msra.mxu0 0
          %3274 = vmatprep.subr.bf16.mxu0 0
          %3275 = vmatpush1.bf16.msra.mxu0 0
          %3276 = vmatprep.mubr.bf16.mxu0 0
          %3277 = vmatmul.mubr.bf16.gmra.mrb[0].mxu0 %v3239
          %v3278 = vpop.f32.mrb[0].mxu0
          %v3279 = vadd.f32 %v3224, %v3278
          %v3280 = vpop.f32.mrb[0].mxu0
          %v3281 = vpop.f32.mrb[0].mxu0
          %v3282 = vadd.f32 %v3224, %v3281
          %v3283 = vpop.f32.mrb[0].mxu0
          %3284 = vmatprep.mubr.bf16.mxu0 0
          %3285 = vmatmul.mubr.bf16.gmra.mrb[0].mxu0 %v3242
          %v3286 = vpop.f32.mrb[0].mxu0
          %v3287 = vadd.f32 %v3224, %v3286
          %v3288 = vpop.f32.mrb[0].mxu0
          %v3289 = vpop.f32.mrb[0].mxu0
          %v3290 = vadd.f32 %v3224, %v3289
          %v3291 = vpop.f32.mrb[0].mxu0
          %3292 = vdwg.mxu0
          %3293 = vst [vmem:[#allocation26] sm:$0xff] %v3279
          %3294 = vst [vmem:[#allocation26 + $0x8] sm:$0xff] %v3282
          %3295 = vst [vmem:[#allocation26 + $0x10] sm:$0xff] %v3287
          %3296 = vst [vmem:[#allocation26 + $0x18] sm:$0xff] %v3290
        $region180: #{tpu_custom_call.1} parent=115 // pred_fallthru
          _
        // Predicated region
        $region181: #{tpu_custom_call.1} parent=115 // pred_check
          %p3297 = pneg %p682
        $region182: #{tpu_custom_call.1} parent=115 // pred_check_branch
          %3299 = sbr.rel (%p3297) target = $region184
        $region183: #{tpu_custom_call.1} parent=115 // pred_region
          %s3300 = smul.u32 2, %s62
          %s3302 = ssub.s32 512, 512
          %3303 = vsyncadd [#allocation5], %s3302
          %s3304 = smul.addr %s3300, 2
          %s3305 = smul.addr %s3304, 128
          %s3306 = scalar_lea.hbm %s24, %s3305
          %s3307 = sshll.u32 [#allocation26], 4
          %s3308 = int_to_ptr.vmem [resolvable:$true] %s3307
          %3313 = dma.vmem_to_hbm [thread:$0]  %s3308, 512, %s3306, [#allocation5], 128, 128, 8
        $region184: #{tpu_custom_call.1} parent=115 // pred_fallthru
          _
        // Predicated region
        $region185: #{tpu_custom_call.1} parent=115 // pred_check
          %p3314 = pneg %p682
        $region186: #{tpu_custom_call.1} parent=115 // pred_check_branch
          %3316 = sbr.rel (%p3314) target = $region188
        $region187: #{tpu_custom_call.1} parent=115 // pred_region
          %3317 = dma.done [#allocation5], 512
        $region188: #{tpu_custom_call.1} parent=115 // pred_fallthru
          _
      $region116: #{tpu_custom_call.1} parent=5 // pred_fallthru
        _
      %p3318 = scmp.le.s32.totalorder 2, %s53
      // Predicated region
      $region189: #{tpu_custom_call.1} parent=5 // pred_check
        %p3319 = pneg %p3318
      $region190: #{tpu_custom_call.1} parent=5 // pred_check_branch
        %3321 = sbr.rel (%p3319) target = $region192
      $region191: #{tpu_custom_call.1} parent=5 // pred_region
        %s3322 = ssub.s32 %s53, 2
      $region192: #{tpu_custom_call.1} parent=5 // pred_fallthru
        _
    $region6: #{tpu_custom_call.1} parent=1 // loop_footer
      %s57 = sadd.s32 1, %s53
    $region7: #{tpu_custom_call.1} parent=1 // loop_footer_branch
      %52 = sbr.rel target = $region3
    $region8: #{tpu_custom_call.1} parent=1 // loop_exit
      _
    %3323 = vsyncpa [#allocation4], 1
    %s3324 = scalar_lea.sflag [#allocation4], 1
    %3325 = vsyncpa %s3324, 1
    %3326 = vsyncpa [#allocation7], 1
    %s3327 = scalar_lea.sflag [#allocation7], 1
    %3328 = vsyncpa %s3327, 1
    %3329 = vsyncpa [#allocation10], 1
    %s3330 = scalar_lea.sflag [#allocation10], 1
    %3331 = vsyncpa %s3330, 1
    %3332 = vsyncpa [#allocation13], 1
    %s3333 = scalar_lea.sflag [#allocation13], 1
    %3334 = vsyncpa %s3333, 1
    %3335 = vsyncpa [#allocation16], 1
    %s3336 = scalar_lea.sflag [#allocation16], 1
    %3337 = vsyncpa %s3336, 1
    %3338 = vsyncpa [#allocation19], 1
    %s3339 = scalar_lea.sflag [#allocation19], 1
    %3340 = vsyncpa %s3339, 1
    %3341 = vsyncpa [#allocation22], 1
    %s3342 = scalar_lea.sflag [#allocation22], 1
    %3343 = vsyncpa %s3342, 1
    %3344 = vsyncpa [#allocation25], 1
    %s3345 = scalar_lea.sflag [#allocation25], 1
    %3346 = vsyncpa %s3345, 1
    %3347 = vsyncpa [#allocation5], 1
    %s3348 = scalar_lea.sflag [#allocation5], 1
    %3349 = vsyncpa %s3348, 1

</llo_original>
